<compile_context>
chip_gen: v7x
topology: tpu7x:2x2x1
jax: 0.10.0
libtpu: 0.0.40
codegen_flags: <defaults>
</compile_context>

<pallas_src>
import jax
import jax.numpy as jnp
from jax import lax
from jax.experimental import pallas as pl
from jax.experimental.pallas import tpu as pltpu


def _round_up(x, m):
    return (x + m - 1) // m * m


SIZE_OF_IMG = 16                     # stand-in for max(MATRIX_SIZE, RESIZE)
CIN, COUT, K, PAD = 3, 6, 5, 2
H = W = SIZE_OF_IMG
HPAD, WPAD = H + 2 * PAD, W + 2 * PAD          # 20, 20
HP, WP, PP = H // 2, W // 2, (H // 2) * (W // 2)

BB = 16                              # samples per grid step (fixed block size)
RG = BB * CIN                        # im2col rows per conv tap (48, 16-aligned)
SROWS = K * K * RG                   # im2col stack rows (1200)
# conv-output lane width: max lane read while pooling valid pixels, lane-padded.
NA = _round_up((H - 2) * WPAD + (W - 2) + WPAD + 1 + 1, 128)          # 384
NP = NA - 1 - WPAD                   # width after the two pooling shifts (363)
# flattened padded-image width: must cover the largest tap shift of the widest
# slab read, and the raw padded image.
FW = _round_up(max(HPAD * WPAD, NA + (K - 1) * WPAD + (K - 1)), 128)  # 512


# ---------------------------------------------------------------------------
# Fused kernel (one grid step = one block of BB samples):
#   im2col -> conv (1 matmul) -> pool -> relu -> fc1 (folded) -> relu -> fc2
#   -> relu -> fc3
# ---------------------------------------------------------------------------
def _fused_kernel(x_ref, w2d_ref, cbx_ref, w1f_ref, b1_ref, w2_ref, b2_ref,
                  w3_ref, b3_ref, o_ref, stack_ref):
    f32, bf16 = jnp.float32, jnp.bfloat16

    # ---- 1. im2col stack: 25 lane-shifted copies, sublane-aligned stores ----
    # stack[t*RG + b*CIN + ci, lane] = xpad[b, ci, lane + kh*WPAD + kw]
    for kh in range(K):
        for kw in range(K):
            t = kh * K + kw
            d = kh * WPAD + kw
            stack_ref[t * RG:(t + 1) * RG, :] = x_ref[:, d:d + NA]

    # ---- 2. conv = ONE full-depth bf16 MXU matmul + per-channel bias --------
    # acc[co*BB + b, oh*WPAD + ow] = conv(b, co, oh, ow)
    acc = jnp.dot(w2d_ref[...], stack_ref[...], preferred_element_type=f32)
    acc = acc + cbx_ref[...]

    # ---- 3. 2x2 / stride-2 max-pool (elementwise VPU max) + ReLU, in f32 ----
    hmax = jnp.maximum(acc[:, :NA - 1], acc[:, 1:])        # (w, w+1)
    vmax = jnp.maximum(hmax[:, :NP], hmax[:, WPAD:])       # (h, h+1)
    # vmax[co*BB + b, 2*i*WPAD + 2*j] = maxpool(b, co, i, j)
    act = jnp.maximum(vmax, 0.0)                           # (COUT*BB, NP) f32

    # ---- 4. fc1 with pooled-lane gather + channel regroup folded into the ---
    #         weights: COUT accumulated lane-dense MXU matmuls.
    h1 = jnp.zeros((BB, w1f_ref.shape[2]), f32)
    for c in range(COUT):
        h1 = h1 + jnp.dot(act[c * BB:(c + 1) * BB, :].astype(bf16),
                          w1f_ref[c], preferred_element_type=f32)
    h1 = jnp.maximum(h1 + b1_ref[...], 0.0)

    # ---- 5. fc2 -> relu -> fc3 (bf16 MXU inputs, f32 accumulation) ----------
    # TODO(synk): nn.Dropout(p=0.2) is identity in eval mode; training-mode
    # random masking is not implemented here.
    h2 = jnp.maximum(
        jnp.dot(h1.astype(bf16), w2_ref[...], preferred_element_type=f32)
        + b2_ref[...], 0.0)
    o_ref[...] = (jnp.dot(h2.astype(bf16), w3_ref[...],
                          preferred_element_type=f32) + b3_ref[...])


# ---------------------------------------------------------------------------
# One-off parameter preparation (all input-independent packing lives here).
# Packed sizes depend only on the fixed block size BB, not on the total batch.
# ---------------------------------------------------------------------------
def prepare_params(params):
    cw, cb, w1, b1, w2, b2, w3, b3 = params
    bf16, f32 = jnp.bfloat16, jnp.float32

    # conv weights -> (COUT*BB, K*K*BB*CIN) matching the im2col stack rows
    # (block-diagonal in the batch within a block so one matmul covers it).
    wkk = jnp.transpose(cw, (2, 3, 0, 1)).reshape(K * K, COUT, CIN)
    eye = jnp.eye(BB, dtype=jnp.float32)
    w2d = jnp.einsum('toc,xy->oxtyc', wkk.astype(f32), eye)
    w2d = w2d.reshape(COUT * BB, SROWS)
    cbx = jnp.repeat(cb, BB).reshape(COUT * BB, 1)         # bias per acc row

    # fc1 fold: pooled-lane gather + channel regroup + fc1 in one weight.
    # w1f[c, lane, f] = w1[f, c*PP + i*WP + j] if lane == 2*i*WPAD + 2*j else 0
    lane = jnp.arange(NP)
    ii, rem = lane // (2 * WPAD), lane % (2 * WPAD)
    jj = rem // 2
    valid = (rem % 2 == 0) & (jj < WP) & (ii < HP)
    p_of_lane = ii * WP + jj
    gsel = (valid[:, None]
            & (p_of_lane[:, None] == jnp.arange(PP)[None, :])).astype(f32)
    w1t = w1.T.astype(f32)                                 # (COUT*PP, F1)
    w1f = jnp.stack([gsel @ w1t[c * PP:(c + 1) * PP, :] for c in range(COUT)],
                    axis=0)                                # (COUT, NP, F1)

    return (w2d.astype(bf16), cbx.astype(f32),
            w1f.astype(bf16), b1.reshape(1, -1).astype(f32),
            w2.T.astype(bf16), b2.reshape(1, -1).astype(f32),
            w3.T.astype(bf16), b3.reshape(1, -1).astype(f32))


# ---------------------------------------------------------------------------
# Wrapper: pad/flatten in XLA (tiny), grid over batch blocks ("parallel").
# ---------------------------------------------------------------------------
@jax.jit
def s1cnn_forward(x, prep):
    w2d, cbx, w1f, b1r, w2t, b2r, w3t, b3r = prep
    B, cin, h, w = x.shape
    assert cin == CIN and h == H and w == W

    nblk = pl.cdiv(B, BB)
    B_pad = nblk * BB
    # zero-pad batch (to a whole block) + spatial halo, flatten rows to lanes.
    xp = jnp.pad(x, ((0, B_pad - B), (0, 0), (PAD, PAD), (PAD, PAD)))
    flat = xp.reshape(B_pad * CIN, HPAD * WPAD)
    flat = jnp.pad(flat, ((0, 0), (0, FW - HPAD * WPAD))).astype(jnp.bfloat16)
    flat = flat.reshape(nblk, RG, FW)            # one leading dim per grid step

    out = pl.pallas_call(
        _fused_kernel,
        out_shape=jax.ShapeDtypeStruct((B_pad, 1), jnp.float32),
        grid_spec=pltpu.PrefetchScalarGridSpec(
            num_scalar_prefetch=0,
            grid=(nblk,),
            in_specs=[
                pl.BlockSpec((None, RG, FW), lambda g: (g, 0, 0)),   # images
                pl.BlockSpec(w2d.shape, lambda g: (0, 0)),           # conv W
                pl.BlockSpec(cbx.shape, lambda g: (0, 0)),           # conv b
                pl.BlockSpec(w1f.shape, lambda g: (0, 0, 0)),        # fc1 fold
                pl.BlockSpec(b1r.shape, lambda g: (0, 0)),
                pl.BlockSpec(w2t.shape, lambda g: (0, 0)),
                pl.BlockSpec(b2r.shape, lambda g: (0, 0)),
                pl.BlockSpec(w3t.shape, lambda g: (0, 0)),
                pl.BlockSpec(b3r.shape, lambda g: (0, 0)),
            ],
            out_specs=pl.BlockSpec((BB, 1), lambda g: (g, 0)),
            scratch_shapes=[pltpu.VMEM((SROWS, NA), jnp.bfloat16)],  # im2col
        ),
        compiler_params=pltpu.CompilerParams(
            dimension_semantics=("parallel",)),   # 2x on v7x when batch grows
    )(flat, w2d, cbx, w1f, b1r, w2t, b2r, w3t, b3r)
    return out[:B]


# ---------------------------------------------------------------------------
# Pure-JAX reference (eval-mode semantics; mirrors the kernel's bf16-input /
# f32-accumulate matmul precision so both paths round near-identically).
# ---------------------------------------------------------------------------
def reference(x, cw, cb, w1, b1, w2, b2, w3, b3):
    bf16, f32 = jnp.bfloat16, jnp.float32
    conv = lax.conv_general_dilated(
        x.astype(bf16), cw.astype(bf16), window_strides=(1, 1),
        padding=((PAD, PAD), (PAD, PAD)),
        dimension_numbers=("NCHW", "OIHW", "NCHW"),
        preferred_element_type=f32)
    conv = conv + cb[None, :, None, None]
    B, C, Hc, Wc = conv.shape
    pooled = conv.reshape(B, C, Hc // 2, 2, Wc // 2, 2).max(axis=(3, 5))
    flat = jnp.maximum(pooled, 0.0).reshape(B, -1).astype(bf16)
    h = jnp.maximum(jnp.dot(flat, w1.T.astype(bf16),
                            preferred_element_type=f32) + b1, 0.0)
    h = jnp.maximum(jnp.dot(h.astype(bf16), w2.T.astype(bf16),
                            preferred_element_type=f32) + b2, 0.0)
    return jnp.dot(h.astype(bf16), w3.T.astype(bf16),
                   preferred_element_type=f32) + b3


if __name__ == "__main__":
    key = jax.random.PRNGKey(0)
    ks = jax.random.split(key, 9)

    B = 2
    feat = COUT * (SIZE_OF_IMG // 2) ** 2            # 384
    cw = jax.random.normal(ks[0], (COUT, CIN, K, K), jnp.float32) * 0.1
    cb = jax.random.normal(ks[1], (COUT,), jnp.float32) * 0.1
    w1 = jax.random.normal(ks[2], (8 * 16, feat), jnp.float32) * 0.05
    b1 = jax.random.normal(ks[3], (8 * 16,), jnp.float32) * 0.05
    w2 = jax.random.normal(ks[4], (32, 8 * 16), jnp.float32) * 0.05
    b2 = jax.random.normal(ks[5], (32,), jnp.float32) * 0.05
    w3 = jax.random.normal(ks[6], (1, 32), jnp.float32) * 0.05
    b3 = jax.random.normal(ks[7], (1,), jnp.float32) * 0.05
    params = (cw, cb, w1, b1, w2, b2, w3, b3)

    x = jax.random.normal(ks[8], (B, CIN, SIZE_OF_IMG, SIZE_OF_IMG),
                          jnp.float32)

    prep = prepare_params(params)                    # one-off weight packing
    out = jax.block_until_ready(s1cnn_forward(x, prep))

    ref = reference(x, *params)
    if out.shape != (B, 1):
        raise AssertionError(f"bad output shape {out.shape}")
    if not jnp.allclose(out, ref, rtol=2e-3, atol=1e-3):
        raise AssertionError(f"mismatch vs reference:\n{out}\n{ref}")

    print("KERNEL_OK")
</pallas_src>

<mosaic_0001>
module attributes {stable_mosaic.version = 11 : i64} {
  func.func @_fused_kernel(%arg0: i32, %arg1: memref<1x48x512xbf16, #tpu.memory_space<vmem>>, %arg2: memref<96x1200xbf16, #tpu.memory_space<vmem>>, %arg3: memref<96x1xf32, #tpu.memory_space<vmem>>, %arg4: memref<6x363x128xbf16, #tpu.memory_space<vmem>>, %arg5: memref<1x128xf32, #tpu.memory_space<vmem>>, %arg6: memref<128x32xbf16, #tpu.memory_space<vmem>>, %arg7: memref<1x32xf32, #tpu.memory_space<vmem>>, %arg8: memref<32x1xbf16, #tpu.memory_space<vmem>>, %arg9: memref<1x1xf32, #tpu.memory_space<vmem>>, %arg10: memref<16x1xf32, #tpu.memory_space<vmem>>, %arg11: memref<1200x384xbf16, #tpu.memory_space<vmem>>) attributes {dimension_semantics = [#tpu.dimension_semantics<parallel>], iteration_bounds = array<i64: 1>, scalar_prefetch = 0 : i64, scratch_operands = 1 : i64, tpu.core_type = #tpu.core_type<tc>, window_params = [{transform_indices = @transform_0, window_bounds = array<i64: 1, 48, 512>}, {pipeline_mode = #tpu.pipeline_mode<synchronous>, transform_indices = @transform_1, window_bounds = array<i64: 96, 1200>}, {pipeline_mode = #tpu.pipeline_mode<synchronous>, transform_indices = @transform_2, window_bounds = array<i64: 96, 1>}, {pipeline_mode = #tpu.pipeline_mode<synchronous>, transform_indices = @transform_3, window_bounds = array<i64: 6, 363, 128>}, {pipeline_mode = #tpu.pipeline_mode<synchronous>, transform_indices = @transform_4, window_bounds = array<i64: 1, 128>}, {pipeline_mode = #tpu.pipeline_mode<synchronous>, transform_indices = @transform_5, window_bounds = array<i64: 128, 32>}, {pipeline_mode = #tpu.pipeline_mode<synchronous>, transform_indices = @transform_6, window_bounds = array<i64: 1, 32>}, {pipeline_mode = #tpu.pipeline_mode<synchronous>, transform_indices = @transform_7, window_bounds = array<i64: 32, 1>}, {pipeline_mode = #tpu.pipeline_mode<synchronous>, transform_indices = @transform_8, window_bounds = array<i64: 1, 1>}, {transform_indices = @transform_9, window_bounds = array<i64: 16, 1>}]} {
    %c0 = arith.constant 0 : index
    %c0_0 = arith.constant 0 : index
    %c0_1 = arith.constant 0 : index
    %0 = vector.load %arg1[%c0, %c0_0, %c0_1] : memref<1x48x512xbf16, #tpu.memory_space<vmem>>, vector<1x48x384xbf16>
    %1 = vector.shape_cast %0 : vector<1x48x384xbf16> to vector<48x384xbf16>
    %c0_2 = arith.constant 0 : index
    %c0_3 = arith.constant 0 : index
    %2 = vector.load %arg11[%c0_2, %c0_3] : memref<1200x384xbf16, #tpu.memory_space<vmem>>, vector<48x384xbf16>
    tpu.vector_store %arg11[%c0_2, %c0_3], %1 {strides = array<i32>} : memref<1200x384xbf16, #tpu.memory_space<vmem>>, vector<48x384xbf16>,
    %c0_4 = arith.constant 0 : index
    %c0_5 = arith.constant 0 : index
    %c1 = arith.constant 1 : index
    %3 = vector.load %arg1[%c0_4, %c0_5, %c1] : memref<1x48x512xbf16, #tpu.memory_space<vmem>>, vector<1x48x384xbf16>
    %4 = vector.shape_cast %3 : vector<1x48x384xbf16> to vector<48x384xbf16>
    %c48 = arith.constant 48 : index
    %c0_6 = arith.constant 0 : index
    %5 = vector.load %arg11[%c48, %c0_6] : memref<1200x384xbf16, #tpu.memory_space<vmem>>, vector<48x384xbf16>
    tpu.vector_store %arg11[%c48, %c0_6], %4 {strides = array<i32>} : memref<1200x384xbf16, #tpu.memory_space<vmem>>, vector<48x384xbf16>,
    %c0_7 = arith.constant 0 : index
    %c0_8 = arith.constant 0 : index
    %c2 = arith.constant 2 : index
    %6 = vector.load %arg1[%c0_7, %c0_8, %c2] : memref<1x48x512xbf16, #tpu.memory_space<vmem>>, vector<1x48x384xbf16>
    %7 = vector.shape_cast %6 : vector<1x48x384xbf16> to vector<48x384xbf16>
    %c96 = arith.constant 96 : index
    %c0_9 = arith.constant 0 : index
    %8 = vector.load %arg11[%c96, %c0_9] : memref<1200x384xbf16, #tpu.memory_space<vmem>>, vector<48x384xbf16>
    tpu.vector_store %arg11[%c96, %c0_9], %7 {strides = array<i32>} : memref<1200x384xbf16, #tpu.memory_space<vmem>>, vector<48x384xbf16>,
    %c0_10 = arith.constant 0 : index
    %c0_11 = arith.constant 0 : index
    %c3 = arith.constant 3 : index
    %9 = vector.load %arg1[%c0_10, %c0_11, %c3] : memref<1x48x512xbf16, #tpu.memory_space<vmem>>, vector<1x48x384xbf16>
    %10 = vector.shape_cast %9 : vector<1x48x384xbf16> to vector<48x384xbf16>
    %c144 = arith.constant 144 : index
    %c0_12 = arith.constant 0 : index
    %11 = vector.load %arg11[%c144, %c0_12] : memref<1200x384xbf16, #tpu.memory_space<vmem>>, vector<48x384xbf16>
    tpu.vector_store %arg11[%c144, %c0_12], %10 {strides = array<i32>} : memref<1200x384xbf16, #tpu.memory_space<vmem>>, vector<48x384xbf16>,
    %c0_13 = arith.constant 0 : index
    %c0_14 = arith.constant 0 : index
    %c4 = arith.constant 4 : index
    %12 = vector.load %arg1[%c0_13, %c0_14, %c4] : memref<1x48x512xbf16, #tpu.memory_space<vmem>>, vector<1x48x384xbf16>
    %13 = vector.shape_cast %12 : vector<1x48x384xbf16> to vector<48x384xbf16>
    %c192 = arith.constant 192 : index
    %c0_15 = arith.constant 0 : index
    %14 = vector.load %arg11[%c192, %c0_15] : memref<1200x384xbf16, #tpu.memory_space<vmem>>, vector<48x384xbf16>
    tpu.vector_store %arg11[%c192, %c0_15], %13 {strides = array<i32>} : memref<1200x384xbf16, #tpu.memory_space<vmem>>, vector<48x384xbf16>,
    %c0_16 = arith.constant 0 : index
    %c0_17 = arith.constant 0 : index
    %c20 = arith.constant 20 : index
    %15 = vector.load %arg1[%c0_16, %c0_17, %c20] : memref<1x48x512xbf16, #tpu.memory_space<vmem>>, vector<1x48x384xbf16>
    %16 = vector.shape_cast %15 : vector<1x48x384xbf16> to vector<48x384xbf16>
    %c240 = arith.constant 240 : index
    %c0_18 = arith.constant 0 : index
    %17 = vector.load %arg11[%c240, %c0_18] : memref<1200x384xbf16, #tpu.memory_space<vmem>>, vector<48x384xbf16>
    tpu.vector_store %arg11[%c240, %c0_18], %16 {strides = array<i32>} : memref<1200x384xbf16, #tpu.memory_space<vmem>>, vector<48x384xbf16>,
    %c0_19 = arith.constant 0 : index
    %c0_20 = arith.constant 0 : index
    %c21 = arith.constant 21 : index
    %18 = vector.load %arg1[%c0_19, %c0_20, %c21] : memref<1x48x512xbf16, #tpu.memory_space<vmem>>, vector<1x48x384xbf16>
    %19 = vector.shape_cast %18 : vector<1x48x384xbf16> to vector<48x384xbf16>
    %c288 = arith.constant 288 : index
    %c0_21 = arith.constant 0 : index
    %20 = vector.load %arg11[%c288, %c0_21] : memref<1200x384xbf16, #tpu.memory_space<vmem>>, vector<48x384xbf16>
    tpu.vector_store %arg11[%c288, %c0_21], %19 {strides = array<i32>} : memref<1200x384xbf16, #tpu.memory_space<vmem>>, vector<48x384xbf16>,
    %c0_22 = arith.constant 0 : index
    %c0_23 = arith.constant 0 : index
    %c22 = arith.constant 22 : index
    %21 = vector.load %arg1[%c0_22, %c0_23, %c22] : memref<1x48x512xbf16, #tpu.memory_space<vmem>>, vector<1x48x384xbf16>
    %22 = vector.shape_cast %21 : vector<1x48x384xbf16> to vector<48x384xbf16>
    %c336 = arith.constant 336 : index
    %c0_24 = arith.constant 0 : index
    %23 = vector.load %arg11[%c336, %c0_24] : memref<1200x384xbf16, #tpu.memory_space<vmem>>, vector<48x384xbf16>
    tpu.vector_store %arg11[%c336, %c0_24], %22 {strides = array<i32>} : memref<1200x384xbf16, #tpu.memory_space<vmem>>, vector<48x384xbf16>,
    %c0_25 = arith.constant 0 : index
    %c0_26 = arith.constant 0 : index
    %c23 = arith.constant 23 : index
    %24 = vector.load %arg1[%c0_25, %c0_26, %c23] : memref<1x48x512xbf16, #tpu.memory_space<vmem>>, vector<1x48x384xbf16>
    %25 = vector.shape_cast %24 : vector<1x48x384xbf16> to vector<48x384xbf16>
    %c384 = arith.constant 384 : index
    %c0_27 = arith.constant 0 : index
    %26 = vector.load %arg11[%c384, %c0_27] : memref<1200x384xbf16, #tpu.memory_space<vmem>>, vector<48x384xbf16>
    tpu.vector_store %arg11[%c384, %c0_27], %25 {strides = array<i32>} : memref<1200x384xbf16, #tpu.memory_space<vmem>>, vector<48x384xbf16>,
    %c0_28 = arith.constant 0 : index
    %c0_29 = arith.constant 0 : index
    %c24 = arith.constant 24 : index
    %27 = vector.load %arg1[%c0_28, %c0_29, %c24] : memref<1x48x512xbf16, #tpu.memory_space<vmem>>, vector<1x48x384xbf16>
    %28 = vector.shape_cast %27 : vector<1x48x384xbf16> to vector<48x384xbf16>
    %c432 = arith.constant 432 : index
    %c0_30 = arith.constant 0 : index
    %29 = vector.load %arg11[%c432, %c0_30] : memref<1200x384xbf16, #tpu.memory_space<vmem>>, vector<48x384xbf16>
    tpu.vector_store %arg11[%c432, %c0_30], %28 {strides = array<i32>} : memref<1200x384xbf16, #tpu.memory_space<vmem>>, vector<48x384xbf16>,
    %c0_31 = arith.constant 0 : index
    %c0_32 = arith.constant 0 : index
    %c40 = arith.constant 40 : index
    %30 = vector.load %arg1[%c0_31, %c0_32, %c40] : memref<1x48x512xbf16, #tpu.memory_space<vmem>>, vector<1x48x384xbf16>
    %31 = vector.shape_cast %30 : vector<1x48x384xbf16> to vector<48x384xbf16>
    %c480 = arith.constant 480 : index
    %c0_33 = arith.constant 0 : index
    %32 = vector.load %arg11[%c480, %c0_33] : memref<1200x384xbf16, #tpu.memory_space<vmem>>, vector<48x384xbf16>
    tpu.vector_store %arg11[%c480, %c0_33], %31 {strides = array<i32>} : memref<1200x384xbf16, #tpu.memory_space<vmem>>, vector<48x384xbf16>,
    %c0_34 = arith.constant 0 : index
    %c0_35 = arith.constant 0 : index
    %c41 = arith.constant 41 : index
    %33 = vector.load %arg1[%c0_34, %c0_35, %c41] : memref<1x48x512xbf16, #tpu.memory_space<vmem>>, vector<1x48x384xbf16>
    %34 = vector.shape_cast %33 : vector<1x48x384xbf16> to vector<48x384xbf16>
    %c528 = arith.constant 528 : index
    %c0_36 = arith.constant 0 : index
    %35 = vector.load %arg11[%c528, %c0_36] : memref<1200x384xbf16, #tpu.memory_space<vmem>>, vector<48x384xbf16>
    tpu.vector_store %arg11[%c528, %c0_36], %34 {strides = array<i32>} : memref<1200x384xbf16, #tpu.memory_space<vmem>>, vector<48x384xbf16>,
    %c0_37 = arith.constant 0 : index
    %c0_38 = arith.constant 0 : index
    %c42 = arith.constant 42 : index
    %36 = vector.load %arg1[%c0_37, %c0_38, %c42] : memref<1x48x512xbf16, #tpu.memory_space<vmem>>, vector<1x48x384xbf16>
    %37 = vector.shape_cast %36 : vector<1x48x384xbf16> to vector<48x384xbf16>
    %c576 = arith.constant 576 : index
    %c0_39 = arith.constant 0 : index
    %38 = vector.load %arg11[%c576, %c0_39] : memref<1200x384xbf16, #tpu.memory_space<vmem>>, vector<48x384xbf16>
    tpu.vector_store %arg11[%c576, %c0_39], %37 {strides = array<i32>} : memref<1200x384xbf16, #tpu.memory_space<vmem>>, vector<48x384xbf16>,
    %c0_40 = arith.constant 0 : index
    %c0_41 = arith.constant 0 : index
    %c43 = arith.constant 43 : index
    %39 = vector.load %arg1[%c0_40, %c0_41, %c43] : memref<1x48x512xbf16, #tpu.memory_space<vmem>>, vector<1x48x384xbf16>
    %40 = vector.shape_cast %39 : vector<1x48x384xbf16> to vector<48x384xbf16>
    %c624 = arith.constant 624 : index
    %c0_42 = arith.constant 0 : index
    %41 = vector.load %arg11[%c624, %c0_42] : memref<1200x384xbf16, #tpu.memory_space<vmem>>, vector<48x384xbf16>
    tpu.vector_store %arg11[%c624, %c0_42], %40 {strides = array<i32>} : memref<1200x384xbf16, #tpu.memory_space<vmem>>, vector<48x384xbf16>,
    %c0_43 = arith.constant 0 : index
    %c0_44 = arith.constant 0 : index
    %c44 = arith.constant 44 : index
    %42 = vector.load %arg1[%c0_43, %c0_44, %c44] : memref<1x48x512xbf16, #tpu.memory_space<vmem>>, vector<1x48x384xbf16>
    %43 = vector.shape_cast %42 : vector<1x48x384xbf16> to vector<48x384xbf16>
    %c672 = arith.constant 672 : index
    %c0_45 = arith.constant 0 : index
    %44 = vector.load %arg11[%c672, %c0_45] : memref<1200x384xbf16, #tpu.memory_space<vmem>>, vector<48x384xbf16>
    tpu.vector_store %arg11[%c672, %c0_45], %43 {strides = array<i32>} : memref<1200x384xbf16, #tpu.memory_space<vmem>>, vector<48x384xbf16>,
    %c0_46 = arith.constant 0 : index
    %c0_47 = arith.constant 0 : index
    %c60 = arith.constant 60 : index
    %45 = vector.load %arg1[%c0_46, %c0_47, %c60] : memref<1x48x512xbf16, #tpu.memory_space<vmem>>, vector<1x48x384xbf16>
    %46 = vector.shape_cast %45 : vector<1x48x384xbf16> to vector<48x384xbf16>
    %c720 = arith.constant 720 : index
    %c0_48 = arith.constant 0 : index
    %47 = vector.load %arg11[%c720, %c0_48] : memref<1200x384xbf16, #tpu.memory_space<vmem>>, vector<48x384xbf16>
    tpu.vector_store %arg11[%c720, %c0_48], %46 {strides = array<i32>} : memref<1200x384xbf16, #tpu.memory_space<vmem>>, vector<48x384xbf16>,
    %c0_49 = arith.constant 0 : index
    %c0_50 = arith.constant 0 : index
    %c61 = arith.constant 61 : index
    %48 = vector.load %arg1[%c0_49, %c0_50, %c61] : memref<1x48x512xbf16, #tpu.memory_space<vmem>>, vector<1x48x384xbf16>
    %49 = vector.shape_cast %48 : vector<1x48x384xbf16> to vector<48x384xbf16>
    %c768 = arith.constant 768 : index
    %c0_51 = arith.constant 0 : index
    %50 = vector.load %arg11[%c768, %c0_51] : memref<1200x384xbf16, #tpu.memory_space<vmem>>, vector<48x384xbf16>
    tpu.vector_store %arg11[%c768, %c0_51], %49 {strides = array<i32>} : memref<1200x384xbf16, #tpu.memory_space<vmem>>, vector<48x384xbf16>,
    %c0_52 = arith.constant 0 : index
    %c0_53 = arith.constant 0 : index
    %c62 = arith.constant 62 : index
    %51 = vector.load %arg1[%c0_52, %c0_53, %c62] : memref<1x48x512xbf16, #tpu.memory_space<vmem>>, vector<1x48x384xbf16>
    %52 = vector.shape_cast %51 : vector<1x48x384xbf16> to vector<48x384xbf16>
    %c816 = arith.constant 816 : index
    %c0_54 = arith.constant 0 : index
    %53 = vector.load %arg11[%c816, %c0_54] : memref<1200x384xbf16, #tpu.memory_space<vmem>>, vector<48x384xbf16>
    tpu.vector_store %arg11[%c816, %c0_54], %52 {strides = array<i32>} : memref<1200x384xbf16, #tpu.memory_space<vmem>>, vector<48x384xbf16>,
    %c0_55 = arith.constant 0 : index
    %c0_56 = arith.constant 0 : index
    %c63 = arith.constant 63 : index
    %54 = vector.load %arg1[%c0_55, %c0_56, %c63] : memref<1x48x512xbf16, #tpu.memory_space<vmem>>, vector<1x48x384xbf16>
    %55 = vector.shape_cast %54 : vector<1x48x384xbf16> to vector<48x384xbf16>
    %c864 = arith.constant 864 : index
    %c0_57 = arith.constant 0 : index
    %56 = vector.load %arg11[%c864, %c0_57] : memref<1200x384xbf16, #tpu.memory_space<vmem>>, vector<48x384xbf16>
    tpu.vector_store %arg11[%c864, %c0_57], %55 {strides = array<i32>} : memref<1200x384xbf16, #tpu.memory_space<vmem>>, vector<48x384xbf16>,
    %c0_58 = arith.constant 0 : index
    %c0_59 = arith.constant 0 : index
    %c64 = arith.constant 64 : index
    %57 = vector.load %arg1[%c0_58, %c0_59, %c64] : memref<1x48x512xbf16, #tpu.memory_space<vmem>>, vector<1x48x384xbf16>
    %58 = vector.shape_cast %57 : vector<1x48x384xbf16> to vector<48x384xbf16>
    %c912 = arith.constant 912 : index
    %c0_60 = arith.constant 0 : index
    %59 = vector.load %arg11[%c912, %c0_60] : memref<1200x384xbf16, #tpu.memory_space<vmem>>, vector<48x384xbf16>
    tpu.vector_store %arg11[%c912, %c0_60], %58 {strides = array<i32>} : memref<1200x384xbf16, #tpu.memory_space<vmem>>, vector<48x384xbf16>,
    %c0_61 = arith.constant 0 : index
    %c0_62 = arith.constant 0 : index
    %c80 = arith.constant 80 : index
    %60 = vector.load %arg1[%c0_61, %c0_62, %c80] : memref<1x48x512xbf16, #tpu.memory_space<vmem>>, vector<1x48x384xbf16>
    %61 = vector.shape_cast %60 : vector<1x48x384xbf16> to vector<48x384xbf16>
    %c960 = arith.constant 960 : index
    %c0_63 = arith.constant 0 : index
    %62 = vector.load %arg11[%c960, %c0_63] : memref<1200x384xbf16, #tpu.memory_space<vmem>>, vector<48x384xbf16>
    tpu.vector_store %arg11[%c960, %c0_63], %61 {strides = array<i32>} : memref<1200x384xbf16, #tpu.memory_space<vmem>>, vector<48x384xbf16>,
    %c0_64 = arith.constant 0 : index
    %c0_65 = arith.constant 0 : index
    %c81 = arith.constant 81 : index
    %63 = vector.load %arg1[%c0_64, %c0_65, %c81] : memref<1x48x512xbf16, #tpu.memory_space<vmem>>, vector<1x48x384xbf16>
    %64 = vector.shape_cast %63 : vector<1x48x384xbf16> to vector<48x384xbf16>
    %c1008 = arith.constant 1008 : index
    %c0_66 = arith.constant 0 : index
    %65 = vector.load %arg11[%c1008, %c0_66] : memref<1200x384xbf16, #tpu.memory_space<vmem>>, vector<48x384xbf16>
    tpu.vector_store %arg11[%c1008, %c0_66], %64 {strides = array<i32>} : memref<1200x384xbf16, #tpu.memory_space<vmem>>, vector<48x384xbf16>,
    %c0_67 = arith.constant 0 : index
    %c0_68 = arith.constant 0 : index
    %c82 = arith.constant 82 : index
    %66 = vector.load %arg1[%c0_67, %c0_68, %c82] : memref<1x48x512xbf16, #tpu.memory_space<vmem>>, vector<1x48x384xbf16>
    %67 = vector.shape_cast %66 : vector<1x48x384xbf16> to vector<48x384xbf16>
    %c1056 = arith.constant 1056 : index
    %c0_69 = arith.constant 0 : index
    %68 = vector.load %arg11[%c1056, %c0_69] : memref<1200x384xbf16, #tpu.memory_space<vmem>>, vector<48x384xbf16>
    tpu.vector_store %arg11[%c1056, %c0_69], %67 {strides = array<i32>} : memref<1200x384xbf16, #tpu.memory_space<vmem>>, vector<48x384xbf16>,
    %c0_70 = arith.constant 0 : index
    %c0_71 = arith.constant 0 : index
    %c83 = arith.constant 83 : index
    %69 = vector.load %arg1[%c0_70, %c0_71, %c83] : memref<1x48x512xbf16, #tpu.memory_space<vmem>>, vector<1x48x384xbf16>
    %70 = vector.shape_cast %69 : vector<1x48x384xbf16> to vector<48x384xbf16>
    %c1104 = arith.constant 1104 : index
    %c0_72 = arith.constant 0 : index
    %71 = vector.load %arg11[%c1104, %c0_72] : memref<1200x384xbf16, #tpu.memory_space<vmem>>, vector<48x384xbf16>
    tpu.vector_store %arg11[%c1104, %c0_72], %70 {strides = array<i32>} : memref<1200x384xbf16, #tpu.memory_space<vmem>>, vector<48x384xbf16>,
    %c0_73 = arith.constant 0 : index
    %c0_74 = arith.constant 0 : index
    %c84 = arith.constant 84 : index
    %72 = vector.load %arg1[%c0_73, %c0_74, %c84] : memref<1x48x512xbf16, #tpu.memory_space<vmem>>, vector<1x48x384xbf16>
    %73 = vector.shape_cast %72 : vector<1x48x384xbf16> to vector<48x384xbf16>
    %c1152 = arith.constant 1152 : index
    %c0_75 = arith.constant 0 : index
    %74 = vector.load %arg11[%c1152, %c0_75] : memref<1200x384xbf16, #tpu.memory_space<vmem>>, vector<48x384xbf16>
    tpu.vector_store %arg11[%c1152, %c0_75], %73 {strides = array<i32>} : memref<1200x384xbf16, #tpu.memory_space<vmem>>, vector<48x384xbf16>,
    %c0_76 = arith.constant 0 : index
    %c0_77 = arith.constant 0 : index
    %75 = vector.load %arg2[%c0_76, %c0_77] : memref<96x1200xbf16, #tpu.memory_space<vmem>>, vector<96x1200xbf16>
    %c0_78 = arith.constant 0 : index
    %c0_79 = arith.constant 0 : index
    %76 = vector.load %arg11[%c0_78, %c0_79] : memref<1200x384xbf16, #tpu.memory_space<vmem>>, vector<1200x384xbf16>
    %cst = arith.constant dense<0.000000e+00> : vector<96x384xf32>
    %77 = tpu.matmul %75, %76, %cst {dimension_numbers = #tpu.dot_dimension_numbers<[1], [0], [0], [1], [0, 0, 1, 1], [], []>} : vector<96x1200xbf16>, vector<1200x384xbf16>, vector<96x384xf32> -> vector<96x384xf32>
    %c0_80 = arith.constant 0 : index
    %c0_81 = arith.constant 0 : index
    %78 = vector.load %arg3[%c0_80, %c0_81] : memref<96x1xf32, #tpu.memory_space<vmem>>, vector<96x1xf32>
    %79 = vector.broadcast %78 : vector<96x1xf32> to vector<96x384xf32>
    %80 = arith.addf %77, %79 : vector<96x384xf32>
    %81 = vector.extract_strided_slice %80 {offsets = [0, 0], sizes = [96, 383], strides = [1, 1]} : vector<96x384xf32> to vector<96x383xf32>
    %82 = vector.extract_strided_slice %80 {offsets = [0, 1], sizes = [96, 383], strides = [1, 1]} : vector<96x384xf32> to vector<96x383xf32>
    %83 = arith.maximumf %81, %82 : vector<96x383xf32>
    %84 = vector.extract_strided_slice %83 {offsets = [0, 0], sizes = [96, 363], strides = [1, 1]} : vector<96x383xf32> to vector<96x363xf32>
    %85 = vector.extract_strided_slice %83 {offsets = [0, 20], sizes = [96, 363], strides = [1, 1]} : vector<96x383xf32> to vector<96x363xf32>
    %86 = arith.maximumf %84, %85 : vector<96x363xf32>
    %cst_82 = arith.constant 0.000000e+00 : f32
    %87 = vector.broadcast %cst_82 : f32 to vector<96x363xf32>
    %88 = arith.maximumf %86, %87 : vector<96x363xf32>
    %cst_83 = arith.constant 0.000000e+00 : f32
    %89 = vector.broadcast %cst_83 : f32 to vector<16x128xf32>
    %90 = vector.extract_strided_slice %88 {offsets = [0, 0], sizes = [16, 363], strides = [1, 1]} : vector<96x363xf32> to vector<16x363xf32>
    %91 = arith.truncf %90 : vector<16x363xf32> to vector<16x363xbf16>
    %c0_84 = arith.constant 0 : index
    %c0_85 = arith.constant 0 : index
    %c0_86 = arith.constant 0 : index
    %92 = vector.load %arg4[%c0_84, %c0_85, %c0_86] : memref<6x363x128xbf16, #tpu.memory_space<vmem>>, vector<1x363x128xbf16>
    %93 = vector.shape_cast %92 : vector<1x363x128xbf16> to vector<363x128xbf16>
    %cst_87 = arith.constant dense<0.000000e+00> : vector<16x128xf32>
    %94 = tpu.matmul %91, %93, %cst_87 {dimension_numbers = #tpu.dot_dimension_numbers<[1], [0], [0], [1], [0, 0, 1, 1], [], []>} : vector<16x363xbf16>, vector<363x128xbf16>, vector<16x128xf32> -> vector<16x128xf32>
    %95 = arith.addf %89, %94 : vector<16x128xf32>
    %96 = vector.extract_strided_slice %88 {offsets = [16, 0], sizes = [16, 363], strides = [1, 1]} : vector<96x363xf32> to vector<16x363xf32>
    %97 = arith.truncf %96 : vector<16x363xf32> to vector<16x363xbf16>
    %c1_88 = arith.constant 1 : index
    %c0_89 = arith.constant 0 : index
    %c0_90 = arith.constant 0 : index
    %98 = vector.load %arg4[%c1_88, %c0_89, %c0_90] : memref<6x363x128xbf16, #tpu.memory_space<vmem>>, vector<1x363x128xbf16>
    %99 = vector.shape_cast %98 : vector<1x363x128xbf16> to vector<363x128xbf16>
    %cst_91 = arith.constant dense<0.000000e+00> : vector<16x128xf32>
    %100 = tpu.matmul %97, %99, %cst_91 {dimension_numbers = #tpu.dot_dimension_numbers<[1], [0], [0], [1], [0, 0, 1, 1], [], []>} : vector<16x363xbf16>, vector<363x128xbf16>, vector<16x128xf32> -> vector<16x128xf32>
    %101 = arith.addf %95, %100 : vector<16x128xf32>
    %102 = vector.extract_strided_slice %88 {offsets = [32, 0], sizes = [16, 363], strides = [1, 1]} : vector<96x363xf32> to vector<16x363xf32>
    %103 = arith.truncf %102 : vector<16x363xf32> to vector<16x363xbf16>
    %c2_92 = arith.constant 2 : index
    %c0_93 = arith.constant 0 : index
    %c0_94 = arith.constant 0 : index
    %104 = vector.load %arg4[%c2_92, %c0_93, %c0_94] : memref<6x363x128xbf16, #tpu.memory_space<vmem>>, vector<1x363x128xbf16>
    %105 = vector.shape_cast %104 : vector<1x363x128xbf16> to vector<363x128xbf16>
    %cst_95 = arith.constant dense<0.000000e+00> : vector<16x128xf32>
    %106 = tpu.matmul %103, %105, %cst_95 {dimension_numbers = #tpu.dot_dimension_numbers<[1], [0], [0], [1], [0, 0, 1, 1], [], []>} : vector<16x363xbf16>, vector<363x128xbf16>, vector<16x128xf32> -> vector<16x128xf32>
    %107 = arith.addf %101, %106 : vector<16x128xf32>
    %108 = vector.extract_strided_slice %88 {offsets = [48, 0], sizes = [16, 363], strides = [1, 1]} : vector<96x363xf32> to vector<16x363xf32>
    %109 = arith.truncf %108 : vector<16x363xf32> to vector<16x363xbf16>
    %c3_96 = arith.constant 3 : index
    %c0_97 = arith.constant 0 : index
    %c0_98 = arith.constant 0 : index
    %110 = vector.load %arg4[%c3_96, %c0_97, %c0_98] : memref<6x363x128xbf16, #tpu.memory_space<vmem>>, vector<1x363x128xbf16>
    %111 = vector.shape_cast %110 : vector<1x363x128xbf16> to vector<363x128xbf16>
    %cst_99 = arith.constant dense<0.000000e+00> : vector<16x128xf32>
    %112 = tpu.matmul %109, %111, %cst_99 {dimension_numbers = #tpu.dot_dimension_numbers<[1], [0], [0], [1], [0, 0, 1, 1], [], []>} : vector<16x363xbf16>, vector<363x128xbf16>, vector<16x128xf32> -> vector<16x128xf32>
    %113 = arith.addf %107, %112 : vector<16x128xf32>
    %114 = vector.extract_strided_slice %88 {offsets = [64, 0], sizes = [16, 363], strides = [1, 1]} : vector<96x363xf32> to vector<16x363xf32>
    %115 = arith.truncf %114 : vector<16x363xf32> to vector<16x363xbf16>
    %c4_100 = arith.constant 4 : index
    %c0_101 = arith.constant 0 : index
    %c0_102 = arith.constant 0 : index
    %116 = vector.load %arg4[%c4_100, %c0_101, %c0_102] : memref<6x363x128xbf16, #tpu.memory_space<vmem>>, vector<1x363x128xbf16>
    %117 = vector.shape_cast %116 : vector<1x363x128xbf16> to vector<363x128xbf16>
    %cst_103 = arith.constant dense<0.000000e+00> : vector<16x128xf32>
    %118 = tpu.matmul %115, %117, %cst_103 {dimension_numbers = #tpu.dot_dimension_numbers<[1], [0], [0], [1], [0, 0, 1, 1], [], []>} : vector<16x363xbf16>, vector<363x128xbf16>, vector<16x128xf32> -> vector<16x128xf32>
    %119 = arith.addf %113, %118 : vector<16x128xf32>
    %120 = vector.extract_strided_slice %88 {offsets = [80, 0], sizes = [16, 363], strides = [1, 1]} : vector<96x363xf32> to vector<16x363xf32>
    %121 = arith.truncf %120 : vector<16x363xf32> to vector<16x363xbf16>
    %c5 = arith.constant 5 : index
    %c0_104 = arith.constant 0 : index
    %c0_105 = arith.constant 0 : index
    %122 = vector.load %arg4[%c5, %c0_104, %c0_105] : memref<6x363x128xbf16, #tpu.memory_space<vmem>>, vector<1x363x128xbf16>
    %123 = vector.shape_cast %122 : vector<1x363x128xbf16> to vector<363x128xbf16>
    %cst_106 = arith.constant dense<0.000000e+00> : vector<16x128xf32>
    %124 = tpu.matmul %121, %123, %cst_106 {dimension_numbers = #tpu.dot_dimension_numbers<[1], [0], [0], [1], [0, 0, 1, 1], [], []>} : vector<16x363xbf16>, vector<363x128xbf16>, vector<16x128xf32> -> vector<16x128xf32>
    %125 = arith.addf %119, %124 : vector<16x128xf32>
    %c0_107 = arith.constant 0 : index
    %c0_108 = arith.constant 0 : index
    %126 = vector.load %arg5[%c0_107, %c0_108] : memref<1x128xf32, #tpu.memory_space<vmem>>, vector<1x128xf32>
    %127 = vector.broadcast %126 : vector<1x128xf32> to vector<16x128xf32>
    %128 = arith.addf %125, %127 : vector<16x128xf32>
    %cst_109 = arith.constant 0.000000e+00 : f32
    %129 = vector.broadcast %cst_109 : f32 to vector<16x128xf32>
    %130 = arith.maximumf %128, %129 : vector<16x128xf32>
    %131 = arith.truncf %130 : vector<16x128xf32> to vector<16x128xbf16>
    %c0_110 = arith.constant 0 : index
    %c0_111 = arith.constant 0 : index
    %132 = vector.load %arg6[%c0_110, %c0_111] : memref<128x32xbf16, #tpu.memory_space<vmem>>, vector<128x32xbf16>
    %cst_112 = arith.constant dense<0.000000e+00> : vector<16x32xf32>
    %133 = tpu.matmul %131, %132, %cst_112 {dimension_numbers = #tpu.dot_dimension_numbers<[1], [0], [0], [1], [0, 0, 1, 1], [], []>} : vector<16x128xbf16>, vector<128x32xbf16>, vector<16x32xf32> -> vector<16x32xf32>
    %c0_113 = arith.constant 0 : index
    %c0_114 = arith.constant 0 : index
    %134 = vector.load %arg7[%c0_113, %c0_114] : memref<1x32xf32, #tpu.memory_space<vmem>>, vector<1x32xf32>
    %135 = vector.broadcast %134 : vector<1x32xf32> to vector<16x32xf32>
    %136 = arith.addf %133, %135 : vector<16x32xf32>
    %cst_115 = arith.constant 0.000000e+00 : f32
    %137 = vector.broadcast %cst_115 : f32 to vector<16x32xf32>
    %138 = arith.maximumf %136, %137 : vector<16x32xf32>
    %139 = arith.truncf %138 : vector<16x32xf32> to vector<16x32xbf16>
    %c0_116 = arith.constant 0 : index
    %c0_117 = arith.constant 0 : index
    %140 = vector.load %arg8[%c0_116, %c0_117] : memref<32x1xbf16, #tpu.memory_space<vmem>>, vector<32x1xbf16>
    %cst_118 = arith.constant dense<0.000000e+00> : vector<16x1xf32>
    %141 = tpu.matmul %139, %140, %cst_118 {dimension_numbers = #tpu.dot_dimension_numbers<[1], [0], [0], [1], [0, 0, 1, 1], [], []>} : vector<16x32xbf16>, vector<32x1xbf16>, vector<16x1xf32> -> vector<16x1xf32>
    %c0_119 = arith.constant 0 : index
    %c0_120 = arith.constant 0 : index
    %142 = vector.load %arg9[%c0_119, %c0_120] : memref<1x1xf32, #tpu.memory_space<vmem>>, vector<1x1xf32>
    %143 = vector.broadcast %142 : vector<1x1xf32> to vector<16x1xf32>
    %144 = arith.addf %141, %143 : vector<16x1xf32>
    %c0_121 = arith.constant 0 : index
    %c0_122 = arith.constant 0 : index
    %145 = vector.load %arg10[%c0_121, %c0_122] : memref<16x1xf32, #tpu.memory_space<vmem>>, vector<16x1xf32>
    tpu.vector_store %arg10[%c0_121, %c0_122], %144 {strides = array<i32>} : memref<16x1xf32, #tpu.memory_space<vmem>>, vector<16x1xf32>,
    return
  }
  func.func @transform_0(%arg0: i32) -> (i32, i32, i32) {
    %c0_i32 = arith.constant 0 : i32
    %c0_i32_0 = arith.constant 0 : i32
    %c0_i32_1 = arith.constant 0 : i32
    return %arg0, %c0_i32, %c0_i32_0 : i32, i32, i32
  }
  func.func @transform_1(%arg0: i32) -> (i32, i32) {
    %c0_i32 = arith.constant 0 : i32
    %c0_i32_0 = arith.constant 0 : i32
    %c0_i32_1 = arith.constant 0 : i32
    return %c0_i32, %c0_i32_0 : i32, i32
  }
  func.func @transform_2(%arg0: i32) -> (i32, i32) {
    %c0_i32 = arith.constant 0 : i32
    %c0_i32_0 = arith.constant 0 : i32
    %c0_i32_1 = arith.constant 0 : i32
    return %c0_i32, %c0_i32_0 : i32, i32
  }
  func.func @transform_3(%arg0: i32) -> (i32, i32, i32) {
    %c0_i32 = arith.constant 0 : i32
    %c0_i32_0 = arith.constant 0 : i32
    %c0_i32_1 = arith.constant 0 : i32
    %c0_i32_2 = arith.constant 0 : i32
    return %c0_i32, %c0_i32_0, %c0_i32_1 : i32, i32, i32
  }
  func.func @transform_4(%arg0: i32) -> (i32, i32) {
    %c0_i32 = arith.constant 0 : i32
    %c0_i32_0 = arith.constant 0 : i32
    %c0_i32_1 = arith.constant 0 : i32
    return %c0_i32, %c0_i32_0 : i32, i32
  }
  func.func @transform_5(%arg0: i32) -> (i32, i32) {
    %c0_i32 = arith.constant 0 : i32
    %c0_i32_0 = arith.constant 0 : i32
    %c0_i32_1 = arith.constant 0 : i32
    return %c0_i32, %c0_i32_0 : i32, i32
  }
  func.func @transform_6(%arg0: i32) -> (i32, i32) {
    %c0_i32 = arith.constant 0 : i32
    %c0_i32_0 = arith.constant 0 : i32
    %c0_i32_1 = arith.constant 0 : i32
    return %c0_i32, %c0_i32_0 : i32, i32
  }
  func.func @transform_7(%arg0: i32) -> (i32, i32) {
    %c0_i32 = arith.constant 0 : i32
    %c0_i32_0 = arith.constant 0 : i32
    %c0_i32_1 = arith.constant 0 : i32
    return %c0_i32, %c0_i32_0 : i32, i32
  }
  func.func @transform_8(%arg0: i32) -> (i32, i32) {
    %c0_i32 = arith.constant 0 : i32
    %c0_i32_0 = arith.constant 0 : i32
    %c0_i32_1 = arith.constant 0 : i32
    return %c0_i32, %c0_i32_0 : i32, i32
  }
  func.func @transform_9(%arg0: i32) -> (i32, i32) {
    %c0_i32 = arith.constant 0 : i32
    %c0_i32_0 = arith.constant 0 : i32
    return %arg0, %c0_i32 : i32, i32
  }
}

</mosaic_0001>

<llo_original>
// kernel: s1cnn_forward.1
$region0: #{s1cnn_forward.1}
  #allocation0 [shape = 'u32[]', space=smem, size = 0x4, offset = 0x4, fixed_abs, tag = 'smem constant byte address 0x4 - core index']
  #allocation1 [shape = 'u32[144,128]{1,0:T(1,128)}', space=vmem, size = 0x12000, scoped, tag = 'internal scratch']
  #allocation2 [shape = 'bf16[1200,384]{1,0:T(16,128)(2,1)}', space=vmem, size = 0xe1000, scoped, tag = 'scratch operand']
  #allocation3 [shape = 'f32[1,1]{1,0:T(1,128)S(1)}', space=vmem, size = 0x200, scoped, tag = 'scoped memory for s1cnn_forward.1']
  %s0 = inlined_call_operand.vmem [shape: bf16[1,48,512], index: 0, kind: input, shape index: {}]
  %s1 = inlined_call_operand.vmem [shape: bf16[96,1200], index: 1, kind: input, shape index: {}]
  %s2 = inlined_call_operand.vmem [shape: f32[96,1], index: 2, kind: input, shape index: {}]
  %s3 = inlined_call_operand.vmem [shape: bf16[6,363,128], index: 3, kind: input, shape index: {}]
  %s4 = inlined_call_operand.vmem [shape: f32[1,128], index: 4, kind: input, shape index: {}]
  %s5 = inlined_call_operand.vmem [shape: bf16[128,32], index: 5, kind: input, shape index: {}]
  %s6 = inlined_call_operand.vmem [shape: f32[1,32], index: 6, kind: input, shape index: {}]
  %s7 = inlined_call_operand.vmem [shape: bf16[32,1], index: 7, kind: input, shape index: {}]
  %s8 = inlined_call_operand.<no memory space> [shape: f32[1,1], index: 8, kind: input, shape index: {}]
  %s9 = inlined_call_operand.vmem [shape: f32[16,1], index: 9, kind: output, shape index: {}]
  %s10 = sld [smem:[#allocation0]]
  $region46: #{s1cnn_forward.1} parent=0
    _
  %s12 = ssub.s32 1, %s10
  %s13 = scalar_select 0, %s12, %s10
  %v14 = vstv %s8
  %15 = vst [vmem:[#allocation3] sm:$0x1] %v14
  // Predicated region
  $region2: #{s1cnn_forward.1} parent=0 // pred_check
    _
  $region3: #{s1cnn_forward.1} parent=0 // pred_check_branch
    %17 = sbr.rel (0) target = $region5
  $region4: #{s1cnn_forward.1} parent=0 // pred_region
    _
  $region5: #{s1cnn_forward.1} parent=0 // pred_fallthru
    _
  // Predicated region
  $region6: #{s1cnn_forward.1} parent=0 // pred_check
    _
  $region7: #{s1cnn_forward.1} parent=0 // pred_check_branch
    %19 = sbr.rel (0) target = $region9
  $region8: #{s1cnn_forward.1} parent=0 // pred_region
    _
  $region9: #{s1cnn_forward.1} parent=0 // pred_fallthru
    _
  // Predicated region
  $region10: #{s1cnn_forward.1} parent=0 // pred_check
    _
  $region11: #{s1cnn_forward.1} parent=0 // pred_check_branch
    %21 = sbr.rel (0) target = $region13
  $region12: #{s1cnn_forward.1} parent=0 // pred_region
    _
  $region13: #{s1cnn_forward.1} parent=0 // pred_fallthru
    _
  // Predicated region
  $region14: #{s1cnn_forward.1} parent=0 // pred_check
    _
  $region15: #{s1cnn_forward.1} parent=0 // pred_check_branch
    %23 = sbr.rel (0) target = $region17
  $region16: #{s1cnn_forward.1} parent=0 // pred_region
    _
  $region17: #{s1cnn_forward.1} parent=0 // pred_fallthru
    _
  // Predicated region
  $region18: #{s1cnn_forward.1} parent=0 // pred_check
    _
  $region19: #{s1cnn_forward.1} parent=0 // pred_check_branch
    %25 = sbr.rel (0) target = $region21
  $region20: #{s1cnn_forward.1} parent=0 // pred_region
    _
  $region21: #{s1cnn_forward.1} parent=0 // pred_fallthru
    _
  // Predicated region
  $region22: #{s1cnn_forward.1} parent=0 // pred_check
    _
  $region23: #{s1cnn_forward.1} parent=0 // pred_check_branch
    %27 = sbr.rel (0) target = $region25
  $region24: #{s1cnn_forward.1} parent=0 // pred_region
    _
  $region25: #{s1cnn_forward.1} parent=0 // pred_fallthru
    _
  // Predicated region
  $region26: #{s1cnn_forward.1} parent=0 // pred_check
    _
  $region27: #{s1cnn_forward.1} parent=0 // pred_check_branch
    %29 = sbr.rel (0) target = $region29
  $region28: #{s1cnn_forward.1} parent=0 // pred_region
    _
  $region29: #{s1cnn_forward.1} parent=0 // pred_fallthru
    _
  // Predicated region
  $region30: #{s1cnn_forward.1} parent=0 // pred_check
    _
  $region31: #{s1cnn_forward.1} parent=0 // pred_check_branch
    %31 = sbr.rel (0) target = $region33
  $region32: #{s1cnn_forward.1} parent=0 // pred_region
    _
  $region33: #{s1cnn_forward.1} parent=0 // pred_fallthru
    _
  // Predicated region
  $region34: #{s1cnn_forward.1} parent=0 // pred_check
    _
  $region35: #{s1cnn_forward.1} parent=0 // pred_check_branch
    %33 = sbr.rel (0) target = $region37
  $region36: #{s1cnn_forward.1} parent=0 // pred_region
    _
  $region37: #{s1cnn_forward.1} parent=0 // pred_fallthru
    _
  %v35 = vld [vmem:[%s0] sm:$0xff]
  %v36 = vld [vmem:[%s0 + $0x8] sm:$0xf]
  %v37 = vld [vmem:[%s0 + $0x10] sm:$0xff]
  %v38 = vld [vmem:[%s0 + $0x18] sm:$0xf]
  %v39 = vld [vmem:[%s0 + $0x20] sm:$0xff]
  %v40 = vld [vmem:[%s0 + $0x28] sm:$0xf]
  %v41 = vld [vmem:[%s0 + $0x30] sm:$0xff]
  %v42 = vld [vmem:[%s0 + $0x38] sm:$0xf]
  %v43 = vld [vmem:[%s0 + $0x40] sm:$0xff]
  %v44 = vld [vmem:[%s0 + $0x48] sm:$0xf]
  %v45 = vld [vmem:[%s0 + $0x50] sm:$0xff]
  %v46 = vld [vmem:[%s0 + $0x58] sm:$0xf]
  %v59 = vunpack.c.l.b16 %v35
  %v60 = vunpack.c.h.b16 %v35
  %v61 = vunpack.c.l.b16 %v36
  %v62 = vunpack.c.l.b16 %v37
  %v63 = vunpack.c.h.b16 %v37
  %v64 = vunpack.c.l.b16 %v38
  %v65 = vunpack.c.l.b16 %v39
  %v66 = vunpack.c.h.b16 %v39
  %v67 = vunpack.c.l.b16 %v40
  %v68 = vunpack.c.l.b16 %v41
  %v69 = vunpack.c.h.b16 %v41
  %v70 = vunpack.c.l.b16 %v42
  %v71 = vunpack.c.l.b16 %v43
  %v72 = vunpack.c.h.b16 %v43
  %v73 = vunpack.c.l.b16 %v44
  %v74 = vunpack.c.l.b16 %v45
  %v75 = vunpack.c.h.b16 %v45
  %v76 = vunpack.c.l.b16 %v46
  %v77 = vpack.c.b16 %v62, %v59
  %v78 = vpack.c.b16 %v63, %v60
  %v79 = vpack.c.b16 %v64, %v61
  %v80 = vpack.c.b16 %v68, %v65
  %v81 = vpack.c.b16 %v69, %v66
  %v82 = vpack.c.b16 %v70, %v67
  %v83 = vpack.c.b16 %v74, %v71
  %v84 = vpack.c.b16 %v75, %v72
  %v85 = vpack.c.b16 %v76, %v73
  %95 = vst [vmem:[#allocation2] sm:$0xff] %v77
  %96 = vst [vmem:[#allocation2 + $0x8] sm:$0xff] %v78
  %97 = vst [vmem:[#allocation2 + $0x10] sm:$0xff] %v79
  %98 = vst [vmem:[#allocation2 + $0x18] sm:$0xff] %v80
  %99 = vst [vmem:[#allocation2 + $0x20] sm:$0xff] %v81
  %100 = vst [vmem:[#allocation2 + $0x28] sm:$0xff] %v82
  %101 = vst [vmem:[#allocation2 + $0x30] sm:$0xff] %v83
  %102 = vst [vmem:[#allocation2 + $0x38] sm:$0xff] %v84
  %103 = vst [vmem:[#allocation2 + $0x40] sm:$0xff] %v85
  %v104 = vld [vmem:[%s0] sm:$0xff]
  %v105 = vld [vmem:[%s0 + $0x8] sm:$0xff]
  %v106 = vld [vmem:[%s0 + $0x10] sm:$0xff]
  %v107 = vld [vmem:[%s0 + $0x18] sm:$0xff]
  %v108 = vld [vmem:[%s0 + $0x20] sm:$0xff]
  %v109 = vld [vmem:[%s0 + $0x28] sm:$0xff]
  %v110 = vld [vmem:[%s0 + $0x30] sm:$0xff]
  %v111 = vld [vmem:[%s0 + $0x38] sm:$0xff]
  %v112 = vld [vmem:[%s0 + $0x40] sm:$0xff]
  %v113 = vld [vmem:[%s0 + $0x48] sm:$0xff]
  %v114 = vld [vmem:[%s0 + $0x50] sm:$0xff]
  %v115 = vld [vmem:[%s0 + $0x58] sm:$0xff]
  %v128 = vunpack.c.l.b16 %v104
  %v129 = vunpack.c.h.b16 %v104
  %v130 = vunpack.c.l.b16 %v105
  %v131 = vunpack.c.h.b16 %v105
  %v132 = vunpack.c.l.b16 %v106
  %v133 = vunpack.c.h.b16 %v106
  %v134 = vunpack.c.l.b16 %v107
  %v135 = vunpack.c.h.b16 %v107
  %v136 = vunpack.c.l.b16 %v108
  %v137 = vunpack.c.h.b16 %v108
  %v138 = vunpack.c.l.b16 %v109
  %v139 = vunpack.c.h.b16 %v109
  %v140 = vunpack.c.l.b16 %v110
  %v141 = vunpack.c.h.b16 %v110
  %v142 = vunpack.c.l.b16 %v111
  %v143 = vunpack.c.h.b16 %v111
  %v144 = vunpack.c.l.b16 %v112
  %v145 = vunpack.c.h.b16 %v112
  %v146 = vunpack.c.l.b16 %v113
  %v147 = vunpack.c.h.b16 %v113
  %v148 = vunpack.c.l.b16 %v114
  %v149 = vunpack.c.h.b16 %v114
  %v150 = vunpack.c.l.b16 %v115
  %v151 = vunpack.c.h.b16 %v115
  %v152 = vpack.c.b16 %v132, %v128
  %v153 = vpack.c.b16 %v133, %v129
  %v154 = vpack.c.b16 %v134, %v130
  %v155 = vpack.c.b16 %v135, %v131
  %v156 = vpack.c.b16 %v140, %v136
  %v157 = vpack.c.b16 %v141, %v137
  %v158 = vpack.c.b16 %v142, %v138
  %v159 = vpack.c.b16 %v143, %v139
  %v160 = vpack.c.b16 %v148, %v144
  %v161 = vpack.c.b16 %v149, %v145
  %v162 = vpack.c.b16 %v150, %v146
  %v163 = vpack.c.b16 %v151, %v147
  %164 = vrot.lane.b32.xlu0 %v152, 127
  %v165 = vpop.permute.xlu0 %164
  %166 = vrot.lane.b32.xlu0 %v153, 127
  %v167 = vpop.permute.xlu0 %166
  %168 = vrot.lane.b32.xlu0 %v154, 127
  %v169 = vpop.permute.xlu0 %168
  %170 = vrot.lane.b32.xlu0 %v155, 127
  %v171 = vpop.permute.xlu0 %170
  %172 = vrot.lane.b32.xlu0 %v156, 127
  %v173 = vpop.permute.xlu0 %172
  %174 = vrot.lane.b32.xlu0 %v157, 127
  %v175 = vpop.permute.xlu0 %174
  %176 = vrot.lane.b32.xlu0 %v158, 127
  %v177 = vpop.permute.xlu0 %176
  %178 = vrot.lane.b32.xlu0 %v159, 127
  %v179 = vpop.permute.xlu0 %178
  %180 = vrot.lane.b32.xlu0 %v160, 127
  %v181 = vpop.permute.xlu0 %180
  %182 = vrot.lane.b32.xlu0 %v161, 127
  %v183 = vpop.permute.xlu0 %182
  %184 = vrot.lane.b32.xlu0 %v162, 127
  %v185 = vpop.permute.xlu0 %184
  %186 = vrot.lane.b32.xlu0 %v163, 127
  %v187 = vpop.permute.xlu0 %186
  %vm188 = vcmask 1039360
  %v189 = vsel %vm188, %v165, %v167
  %v190 = vsel %vm188, %v167, %v169
  %v191 = vsel %vm188, %v169, %v171
  %v192 = vsel %vm188, %v173, %v175
  %v193 = vsel %vm188, %v175, %v177
  %v194 = vsel %vm188, %v177, %v179
  %v195 = vsel %vm188, %v181, %v183
  %v196 = vsel %vm188, %v183, %v185
  %v197 = vsel %vm188, %v185, %v187
  %207 = vst [vmem:[#allocation2 + $0x48] sm:$0xff] %v189
  %208 = vst [vmem:[#allocation2 + $0x50] sm:$0xff] %v190
  %209 = vst [vmem:[#allocation2 + $0x58] sm:$0xff] %v191
  %210 = vst [vmem:[#allocation2 + $0x60] sm:$0xff] %v192
  %211 = vst [vmem:[#allocation2 + $0x68] sm:$0xff] %v193
  %212 = vst [vmem:[#allocation2 + $0x70] sm:$0xff] %v194
  %213 = vst [vmem:[#allocation2 + $0x78] sm:$0xff] %v195
  %214 = vst [vmem:[#allocation2 + $0x80] sm:$0xff] %v196
  %215 = vst [vmem:[#allocation2 + $0x88] sm:$0xff] %v197
  %v216 = vld [vmem:[%s0] sm:$0xff]
  %v217 = vld [vmem:[%s0 + $0x8] sm:$0xff]
  %v218 = vld [vmem:[%s0 + $0x10] sm:$0xff]
  %v219 = vld [vmem:[%s0 + $0x18] sm:$0xff]
  %v220 = vld [vmem:[%s0 + $0x20] sm:$0xff]
  %v221 = vld [vmem:[%s0 + $0x28] sm:$0xff]
  %v222 = vld [vmem:[%s0 + $0x30] sm:$0xff]
  %v223 = vld [vmem:[%s0 + $0x38] sm:$0xff]
  %v224 = vld [vmem:[%s0 + $0x40] sm:$0xff]
  %v225 = vld [vmem:[%s0 + $0x48] sm:$0xff]
  %v226 = vld [vmem:[%s0 + $0x50] sm:$0xff]
  %v227 = vld [vmem:[%s0 + $0x58] sm:$0xff]
  %v240 = vunpack.c.l.b16 %v216
  %v241 = vunpack.c.h.b16 %v216
  %v242 = vunpack.c.l.b16 %v217
  %v243 = vunpack.c.h.b16 %v217
  %v244 = vunpack.c.l.b16 %v218
  %v245 = vunpack.c.h.b16 %v218
  %v246 = vunpack.c.l.b16 %v219
  %v247 = vunpack.c.h.b16 %v219
  %v248 = vunpack.c.l.b16 %v220
  %v249 = vunpack.c.h.b16 %v220
  %v250 = vunpack.c.l.b16 %v221
  %v251 = vunpack.c.h.b16 %v221
  %v252 = vunpack.c.l.b16 %v222
  %v253 = vunpack.c.h.b16 %v222
  %v254 = vunpack.c.l.b16 %v223
  %v255 = vunpack.c.h.b16 %v223
  %v256 = vunpack.c.l.b16 %v224
  %v257 = vunpack.c.h.b16 %v224
  %v258 = vunpack.c.l.b16 %v225
  %v259 = vunpack.c.h.b16 %v225
  %v260 = vunpack.c.l.b16 %v226
  %v261 = vunpack.c.h.b16 %v226
  %v262 = vunpack.c.l.b16 %v227
  %v263 = vunpack.c.h.b16 %v227
  %v264 = vpack.c.b16 %v244, %v240
  %v265 = vpack.c.b16 %v245, %v241
  %v266 = vpack.c.b16 %v246, %v242
  %v267 = vpack.c.b16 %v247, %v243
  %v268 = vpack.c.b16 %v252, %v248
  %v269 = vpack.c.b16 %v253, %v249
  %v270 = vpack.c.b16 %v254, %v250
  %v271 = vpack.c.b16 %v255, %v251
  %v272 = vpack.c.b16 %v260, %v256
  %v273 = vpack.c.b16 %v261, %v257
  %v274 = vpack.c.b16 %v262, %v258
  %v275 = vpack.c.b16 %v263, %v259
  %276 = vrot.lane.b32.xlu0 %v264, 126
  %v277 = vpop.permute.xlu0 %276
  %278 = vrot.lane.b32.xlu0 %v265, 126
  %v279 = vpop.permute.xlu0 %278
  %280 = vrot.lane.b32.xlu0 %v266, 126
  %v281 = vpop.permute.xlu0 %280
  %282 = vrot.lane.b32.xlu0 %v267, 126
  %v283 = vpop.permute.xlu0 %282
  %284 = vrot.lane.b32.xlu0 %v268, 126
  %v285 = vpop.permute.xlu0 %284
  %286 = vrot.lane.b32.xlu0 %v269, 126
  %v287 = vpop.permute.xlu0 %286
  %288 = vrot.lane.b32.xlu0 %v270, 126
  %v289 = vpop.permute.xlu0 %288
  %290 = vrot.lane.b32.xlu0 %v271, 126
  %v291 = vpop.permute.xlu0 %290
  %292 = vrot.lane.b32.xlu0 %v272, 126
  %v293 = vpop.permute.xlu0 %292
  %294 = vrot.lane.b32.xlu0 %v273, 126
  %v295 = vpop.permute.xlu0 %294
  %296 = vrot.lane.b32.xlu0 %v274, 126
  %v297 = vpop.permute.xlu0 %296
  %298 = vrot.lane.b32.xlu0 %v275, 126
  %v299 = vpop.permute.xlu0 %298
  %vm300 = vcmask 1031168
  %v301 = vsel %vm300, %v277, %v279
  %v302 = vsel %vm300, %v279, %v281
  %v303 = vsel %vm300, %v281, %v283
  %v304 = vsel %vm300, %v285, %v287
  %v305 = vsel %vm300, %v287, %v289
  %v306 = vsel %vm300, %v289, %v291
  %v307 = vsel %vm300, %v293, %v295
  %v308 = vsel %vm300, %v295, %v297
  %v309 = vsel %vm300, %v297, %v299
  %319 = vst [vmem:[#allocation2 + $0x90] sm:$0xff] %v301
  %320 = vst [vmem:[#allocation2 + $0x98] sm:$0xff] %v302
  %321 = vst [vmem:[#allocation2 + $0xa0] sm:$0xff] %v303
  %322 = vst [vmem:[#allocation2 + $0xa8] sm:$0xff] %v304
  %323 = vst [vmem:[#allocation2 + $0xb0] sm:$0xff] %v305
  %324 = vst [vmem:[#allocation2 + $0xb8] sm:$0xff] %v306
  %325 = vst [vmem:[#allocation2 + $0xc0] sm:$0xff] %v307
  %326 = vst [vmem:[#allocation2 + $0xc8] sm:$0xff] %v308
  %327 = vst [vmem:[#allocation2 + $0xd0] sm:$0xff] %v309
  %v328 = vld [vmem:[%s0] sm:$0xff]
  %v329 = vld [vmem:[%s0 + $0x8] sm:$0xff]
  %v330 = vld [vmem:[%s0 + $0x10] sm:$0xff]
  %v331 = vld [vmem:[%s0 + $0x18] sm:$0xff]
  %v332 = vld [vmem:[%s0 + $0x20] sm:$0xff]
  %v333 = vld [vmem:[%s0 + $0x28] sm:$0xff]
  %v334 = vld [vmem:[%s0 + $0x30] sm:$0xff]
  %v335 = vld [vmem:[%s0 + $0x38] sm:$0xff]
  %v336 = vld [vmem:[%s0 + $0x40] sm:$0xff]
  %v337 = vld [vmem:[%s0 + $0x48] sm:$0xff]
  %v338 = vld [vmem:[%s0 + $0x50] sm:$0xff]
  %v339 = vld [vmem:[%s0 + $0x58] sm:$0xff]
  %v352 = vunpack.c.l.b16 %v328
  %v353 = vunpack.c.h.b16 %v328
  %v354 = vunpack.c.l.b16 %v329
  %v355 = vunpack.c.h.b16 %v329
  %v356 = vunpack.c.l.b16 %v330
  %v357 = vunpack.c.h.b16 %v330
  %v358 = vunpack.c.l.b16 %v331
  %v359 = vunpack.c.h.b16 %v331
  %v360 = vunpack.c.l.b16 %v332
  %v361 = vunpack.c.h.b16 %v332
  %v362 = vunpack.c.l.b16 %v333
  %v363 = vunpack.c.h.b16 %v333
  %v364 = vunpack.c.l.b16 %v334
  %v365 = vunpack.c.h.b16 %v334
  %v366 = vunpack.c.l.b16 %v335
  %v367 = vunpack.c.h.b16 %v335
  %v368 = vunpack.c.l.b16 %v336
  %v369 = vunpack.c.h.b16 %v336
  %v370 = vunpack.c.l.b16 %v337
  %v371 = vunpack.c.h.b16 %v337
  %v372 = vunpack.c.l.b16 %v338
  %v373 = vunpack.c.h.b16 %v338
  %v374 = vunpack.c.l.b16 %v339
  %v375 = vunpack.c.h.b16 %v339
  %v376 = vpack.c.b16 %v356, %v352
  %v377 = vpack.c.b16 %v357, %v353
  %v378 = vpack.c.b16 %v358, %v354
  %v379 = vpack.c.b16 %v359, %v355
  %v380 = vpack.c.b16 %v364, %v360
  %v381 = vpack.c.b16 %v365, %v361
  %v382 = vpack.c.b16 %v366, %v362
  %v383 = vpack.c.b16 %v367, %v363
  %v384 = vpack.c.b16 %v372, %v368
  %v385 = vpack.c.b16 %v373, %v369
  %v386 = vpack.c.b16 %v374, %v370
  %v387 = vpack.c.b16 %v375, %v371
  %388 = vrot.lane.b32.xlu0 %v376, 125
  %v389 = vpop.permute.xlu0 %388
  %390 = vrot.lane.b32.xlu0 %v377, 125
  %v391 = vpop.permute.xlu0 %390
  %392 = vrot.lane.b32.xlu0 %v378, 125
  %v393 = vpop.permute.xlu0 %392
  %394 = vrot.lane.b32.xlu0 %v379, 125
  %v395 = vpop.permute.xlu0 %394
  %396 = vrot.lane.b32.xlu0 %v380, 125
  %v397 = vpop.permute.xlu0 %396
  %398 = vrot.lane.b32.xlu0 %v381, 125
  %v399 = vpop.permute.xlu0 %398
  %400 = vrot.lane.b32.xlu0 %v382, 125
  %v401 = vpop.permute.xlu0 %400
  %402 = vrot.lane.b32.xlu0 %v383, 125
  %v403 = vpop.permute.xlu0 %402
  %404 = vrot.lane.b32.xlu0 %v384, 125
  %v405 = vpop.permute.xlu0 %404
  %406 = vrot.lane.b32.xlu0 %v385, 125
  %v407 = vpop.permute.xlu0 %406
  %408 = vrot.lane.b32.xlu0 %v386, 125
  %v409 = vpop.permute.xlu0 %408
  %410 = vrot.lane.b32.xlu0 %v387, 125
  %v411 = vpop.permute.xlu0 %410
  %vm412 = vcmask 1022976
  %v413 = vsel %vm412, %v389, %v391
  %v414 = vsel %vm412, %v391, %v393
  %v415 = vsel %vm412, %v393, %v395
  %v416 = vsel %vm412, %v397, %v399
  %v417 = vsel %vm412, %v399, %v401
  %v418 = vsel %vm412, %v401, %v403
  %v419 = vsel %vm412, %v405, %v407
  %v420 = vsel %vm412, %v407, %v409
  %v421 = vsel %vm412, %v409, %v411
  %431 = vst [vmem:[#allocation2 + $0xd8] sm:$0xff] %v413
  %432 = vst [vmem:[#allocation2 + $0xe0] sm:$0xff] %v414
  %433 = vst [vmem:[#allocation2 + $0xe8] sm:$0xff] %v415
  %434 = vst [vmem:[#allocation2 + $0xf0] sm:$0xff] %v416
  %435 = vst [vmem:[#allocation2 + $0xf8] sm:$0xff] %v417
  %436 = vst [vmem:[#allocation2 + $0x100] sm:$0xff] %v418
  %437 = vst [vmem:[#allocation2 + $0x108] sm:$0xff] %v419
  %438 = vst [vmem:[#allocation2 + $0x110] sm:$0xff] %v420
  %439 = vst [vmem:[#allocation2 + $0x118] sm:$0xff] %v421
  %v440 = vld [vmem:[%s0] sm:$0xff]
  %v441 = vld [vmem:[%s0 + $0x8] sm:$0xff]
  %v442 = vld [vmem:[%s0 + $0x10] sm:$0xff]
  %v443 = vld [vmem:[%s0 + $0x18] sm:$0xff]
  %v444 = vld [vmem:[%s0 + $0x20] sm:$0xff]
  %v445 = vld [vmem:[%s0 + $0x28] sm:$0xff]
  %v446 = vld [vmem:[%s0 + $0x30] sm:$0xff]
  %v447 = vld [vmem:[%s0 + $0x38] sm:$0xff]
  %v448 = vld [vmem:[%s0 + $0x40] sm:$0xff]
  %v449 = vld [vmem:[%s0 + $0x48] sm:$0xff]
  %v450 = vld [vmem:[%s0 + $0x50] sm:$0xff]
  %v451 = vld [vmem:[%s0 + $0x58] sm:$0xff]
  %v464 = vunpack.c.l.b16 %v440
  %v465 = vunpack.c.h.b16 %v440
  %v466 = vunpack.c.l.b16 %v441
  %v467 = vunpack.c.h.b16 %v441
  %v468 = vunpack.c.l.b16 %v442
  %v469 = vunpack.c.h.b16 %v442
  %v470 = vunpack.c.l.b16 %v443
  %v471 = vunpack.c.h.b16 %v443
  %v472 = vunpack.c.l.b16 %v444
  %v473 = vunpack.c.h.b16 %v444
  %v474 = vunpack.c.l.b16 %v445
  %v475 = vunpack.c.h.b16 %v445
  %v476 = vunpack.c.l.b16 %v446
  %v477 = vunpack.c.h.b16 %v446
  %v478 = vunpack.c.l.b16 %v447
  %v479 = vunpack.c.h.b16 %v447
  %v480 = vunpack.c.l.b16 %v448
  %v481 = vunpack.c.h.b16 %v448
  %v482 = vunpack.c.l.b16 %v449
  %v483 = vunpack.c.h.b16 %v449
  %v484 = vunpack.c.l.b16 %v450
  %v485 = vunpack.c.h.b16 %v450
  %v486 = vunpack.c.l.b16 %v451
  %v487 = vunpack.c.h.b16 %v451
  %v488 = vpack.c.b16 %v468, %v464
  %v489 = vpack.c.b16 %v469, %v465
  %v490 = vpack.c.b16 %v470, %v466
  %v491 = vpack.c.b16 %v471, %v467
  %v492 = vpack.c.b16 %v476, %v472
  %v493 = vpack.c.b16 %v477, %v473
  %v494 = vpack.c.b16 %v478, %v474
  %v495 = vpack.c.b16 %v479, %v475
  %v496 = vpack.c.b16 %v484, %v480
  %v497 = vpack.c.b16 %v485, %v481
  %v498 = vpack.c.b16 %v486, %v482
  %v499 = vpack.c.b16 %v487, %v483
  %500 = vrot.lane.b32.xlu0 %v488, 124
  %v501 = vpop.permute.xlu0 %500
  %502 = vrot.lane.b32.xlu0 %v489, 124
  %v503 = vpop.permute.xlu0 %502
  %504 = vrot.lane.b32.xlu0 %v490, 124
  %v505 = vpop.permute.xlu0 %504
  %506 = vrot.lane.b32.xlu0 %v491, 124
  %v507 = vpop.permute.xlu0 %506
  %508 = vrot.lane.b32.xlu0 %v492, 124
  %v509 = vpop.permute.xlu0 %508
  %510 = vrot.lane.b32.xlu0 %v493, 124
  %v511 = vpop.permute.xlu0 %510
  %512 = vrot.lane.b32.xlu0 %v494, 124
  %v513 = vpop.permute.xlu0 %512
  %514 = vrot.lane.b32.xlu0 %v495, 124
  %v515 = vpop.permute.xlu0 %514
  %516 = vrot.lane.b32.xlu0 %v496, 124
  %v517 = vpop.permute.xlu0 %516
  %518 = vrot.lane.b32.xlu0 %v497, 124
  %v519 = vpop.permute.xlu0 %518
  %520 = vrot.lane.b32.xlu0 %v498, 124
  %v521 = vpop.permute.xlu0 %520
  %522 = vrot.lane.b32.xlu0 %v499, 124
  %v523 = vpop.permute.xlu0 %522
  %vm524 = vcmask 1014784
  %v525 = vsel %vm524, %v501, %v503
  %v526 = vsel %vm524, %v503, %v505
  %v527 = vsel %vm524, %v505, %v507
  %v528 = vsel %vm524, %v509, %v511
  %v529 = vsel %vm524, %v511, %v513
  %v530 = vsel %vm524, %v513, %v515
  %v531 = vsel %vm524, %v517, %v519
  %v532 = vsel %vm524, %v519, %v521
  %v533 = vsel %vm524, %v521, %v523
  %543 = vst [vmem:[#allocation2 + $0x120] sm:$0xff] %v525
  %544 = vst [vmem:[#allocation2 + $0x128] sm:$0xff] %v526
  %545 = vst [vmem:[#allocation2 + $0x130] sm:$0xff] %v527
  %546 = vst [vmem:[#allocation2 + $0x138] sm:$0xff] %v528
  %547 = vst [vmem:[#allocation2 + $0x140] sm:$0xff] %v529
  %548 = vst [vmem:[#allocation2 + $0x148] sm:$0xff] %v530
  %549 = vst [vmem:[#allocation2 + $0x150] sm:$0xff] %v531
  %550 = vst [vmem:[#allocation2 + $0x158] sm:$0xff] %v532
  %551 = vst [vmem:[#allocation2 + $0x160] sm:$0xff] %v533
  %v552 = vld [vmem:[%s0] sm:$0xff]
  %v553 = vld [vmem:[%s0 + $0x8] sm:$0xff]
  %v554 = vld [vmem:[%s0 + $0x10] sm:$0xff]
  %v555 = vld [vmem:[%s0 + $0x18] sm:$0xff]
  %v556 = vld [vmem:[%s0 + $0x20] sm:$0xff]
  %v557 = vld [vmem:[%s0 + $0x28] sm:$0xff]
  %v558 = vld [vmem:[%s0 + $0x30] sm:$0xff]
  %v559 = vld [vmem:[%s0 + $0x38] sm:$0xff]
  %v560 = vld [vmem:[%s0 + $0x40] sm:$0xff]
  %v561 = vld [vmem:[%s0 + $0x48] sm:$0xff]
  %v562 = vld [vmem:[%s0 + $0x50] sm:$0xff]
  %v563 = vld [vmem:[%s0 + $0x58] sm:$0xff]
  %v576 = vunpack.c.l.b16 %v552
  %v577 = vunpack.c.h.b16 %v552
  %v578 = vunpack.c.l.b16 %v553
  %v579 = vunpack.c.h.b16 %v553
  %v580 = vunpack.c.l.b16 %v554
  %v581 = vunpack.c.h.b16 %v554
  %v582 = vunpack.c.l.b16 %v555
  %v583 = vunpack.c.h.b16 %v555
  %v584 = vunpack.c.l.b16 %v556
  %v585 = vunpack.c.h.b16 %v556
  %v586 = vunpack.c.l.b16 %v557
  %v587 = vunpack.c.h.b16 %v557
  %v588 = vunpack.c.l.b16 %v558
  %v589 = vunpack.c.h.b16 %v558
  %v590 = vunpack.c.l.b16 %v559
  %v591 = vunpack.c.h.b16 %v559
  %v592 = vunpack.c.l.b16 %v560
  %v593 = vunpack.c.h.b16 %v560
  %v594 = vunpack.c.l.b16 %v561
  %v595 = vunpack.c.h.b16 %v561
  %v596 = vunpack.c.l.b16 %v562
  %v597 = vunpack.c.h.b16 %v562
  %v598 = vunpack.c.l.b16 %v563
  %v599 = vunpack.c.h.b16 %v563
  %v600 = vpack.c.b16 %v580, %v576
  %v601 = vpack.c.b16 %v581, %v577
  %v602 = vpack.c.b16 %v582, %v578
  %v603 = vpack.c.b16 %v583, %v579
  %v604 = vpack.c.b16 %v588, %v584
  %v605 = vpack.c.b16 %v589, %v585
  %v606 = vpack.c.b16 %v590, %v586
  %v607 = vpack.c.b16 %v591, %v587
  %v608 = vpack.c.b16 %v596, %v592
  %v609 = vpack.c.b16 %v597, %v593
  %v610 = vpack.c.b16 %v598, %v594
  %v611 = vpack.c.b16 %v599, %v595
  %612 = vrot.lane.b32.xlu0 %v600, 108
  %v613 = vpop.permute.xlu0 %612
  %614 = vrot.lane.b32.xlu0 %v601, 108
  %v615 = vpop.permute.xlu0 %614
  %616 = vrot.lane.b32.xlu0 %v602, 108
  %v617 = vpop.permute.xlu0 %616
  %618 = vrot.lane.b32.xlu0 %v603, 108
  %v619 = vpop.permute.xlu0 %618
  %620 = vrot.lane.b32.xlu0 %v604, 108
  %v621 = vpop.permute.xlu0 %620
  %622 = vrot.lane.b32.xlu0 %v605, 108
  %v623 = vpop.permute.xlu0 %622
  %624 = vrot.lane.b32.xlu0 %v606, 108
  %v625 = vpop.permute.xlu0 %624
  %626 = vrot.lane.b32.xlu0 %v607, 108
  %v627 = vpop.permute.xlu0 %626
  %628 = vrot.lane.b32.xlu0 %v608, 108
  %v629 = vpop.permute.xlu0 %628
  %630 = vrot.lane.b32.xlu0 %v609, 108
  %v631 = vpop.permute.xlu0 %630
  %632 = vrot.lane.b32.xlu0 %v610, 108
  %v633 = vpop.permute.xlu0 %632
  %634 = vrot.lane.b32.xlu0 %v611, 108
  %v635 = vpop.permute.xlu0 %634
  %vm636 = vcmask 883712
  %v637 = vsel %vm636, %v613, %v615
  %v638 = vsel %vm636, %v615, %v617
  %v639 = vsel %vm636, %v617, %v619
  %v640 = vsel %vm636, %v621, %v623
  %v641 = vsel %vm636, %v623, %v625
  %v642 = vsel %vm636, %v625, %v627
  %v643 = vsel %vm636, %v629, %v631
  %v644 = vsel %vm636, %v631, %v633
  %v645 = vsel %vm636, %v633, %v635
  %655 = vst [vmem:[#allocation2 + $0x168] sm:$0xff] %v637
  %656 = vst [vmem:[#allocation2 + $0x170] sm:$0xff] %v638
  %657 = vst [vmem:[#allocation2 + $0x178] sm:$0xff] %v639
  %658 = vst [vmem:[#allocation2 + $0x180] sm:$0xff] %v640
  %659 = vst [vmem:[#allocation2 + $0x188] sm:$0xff] %v641
  %660 = vst [vmem:[#allocation2 + $0x190] sm:$0xff] %v642
  %661 = vst [vmem:[#allocation2 + $0x198] sm:$0xff] %v643
  %662 = vst [vmem:[#allocation2 + $0x1a0] sm:$0xff] %v644
  %663 = vst [vmem:[#allocation2 + $0x1a8] sm:$0xff] %v645
  %v664 = vld [vmem:[%s0] sm:$0xff]
  %v665 = vld [vmem:[%s0 + $0x8] sm:$0xff]
  %v666 = vld [vmem:[%s0 + $0x10] sm:$0xff]
  %v667 = vld [vmem:[%s0 + $0x18] sm:$0xff]
  %v668 = vld [vmem:[%s0 + $0x20] sm:$0xff]
  %v669 = vld [vmem:[%s0 + $0x28] sm:$0xff]
  %v670 = vld [vmem:[%s0 + $0x30] sm:$0xff]
  %v671 = vld [vmem:[%s0 + $0x38] sm:$0xff]
  %v672 = vld [vmem:[%s0 + $0x40] sm:$0xff]
  %v673 = vld [vmem:[%s0 + $0x48] sm:$0xff]
  %v674 = vld [vmem:[%s0 + $0x50] sm:$0xff]
  %v675 = vld [vmem:[%s0 + $0x58] sm:$0xff]
  %v688 = vunpack.c.l.b16 %v664
  %v689 = vunpack.c.h.b16 %v664
  %v690 = vunpack.c.l.b16 %v665
  %v691 = vunpack.c.h.b16 %v665
  %v692 = vunpack.c.l.b16 %v666
  %v693 = vunpack.c.h.b16 %v666
  %v694 = vunpack.c.l.b16 %v667
  %v695 = vunpack.c.h.b16 %v667
  %v696 = vunpack.c.l.b16 %v668
  %v697 = vunpack.c.h.b16 %v668
  %v698 = vunpack.c.l.b16 %v669
  %v699 = vunpack.c.h.b16 %v669
  %v700 = vunpack.c.l.b16 %v670
  %v701 = vunpack.c.h.b16 %v670
  %v702 = vunpack.c.l.b16 %v671
  %v703 = vunpack.c.h.b16 %v671
  %v704 = vunpack.c.l.b16 %v672
  %v705 = vunpack.c.h.b16 %v672
  %v706 = vunpack.c.l.b16 %v673
  %v707 = vunpack.c.h.b16 %v673
  %v708 = vunpack.c.l.b16 %v674
  %v709 = vunpack.c.h.b16 %v674
  %v710 = vunpack.c.l.b16 %v675
  %v711 = vunpack.c.h.b16 %v675
  %v712 = vpack.c.b16 %v692, %v688
  %v713 = vpack.c.b16 %v693, %v689
  %v714 = vpack.c.b16 %v694, %v690
  %v715 = vpack.c.b16 %v695, %v691
  %v716 = vpack.c.b16 %v700, %v696
  %v717 = vpack.c.b16 %v701, %v697
  %v718 = vpack.c.b16 %v702, %v698
  %v719 = vpack.c.b16 %v703, %v699
  %v720 = vpack.c.b16 %v708, %v704
  %v721 = vpack.c.b16 %v709, %v705
  %v722 = vpack.c.b16 %v710, %v706
  %v723 = vpack.c.b16 %v711, %v707
  %724 = vrot.lane.b32.xlu0 %v712, 107
  %v725 = vpop.permute.xlu0 %724
  %726 = vrot.lane.b32.xlu0 %v713, 107
  %v727 = vpop.permute.xlu0 %726
  %728 = vrot.lane.b32.xlu0 %v714, 107
  %v729 = vpop.permute.xlu0 %728
  %730 = vrot.lane.b32.xlu0 %v715, 107
  %v731 = vpop.permute.xlu0 %730
  %732 = vrot.lane.b32.xlu0 %v716, 107
  %v733 = vpop.permute.xlu0 %732
  %734 = vrot.lane.b32.xlu0 %v717, 107
  %v735 = vpop.permute.xlu0 %734
  %736 = vrot.lane.b32.xlu0 %v718, 107
  %v737 = vpop.permute.xlu0 %736
  %738 = vrot.lane.b32.xlu0 %v719, 107
  %v739 = vpop.permute.xlu0 %738
  %740 = vrot.lane.b32.xlu0 %v720, 107
  %v741 = vpop.permute.xlu0 %740
  %742 = vrot.lane.b32.xlu0 %v721, 107
  %v743 = vpop.permute.xlu0 %742
  %744 = vrot.lane.b32.xlu0 %v722, 107
  %v745 = vpop.permute.xlu0 %744
  %746 = vrot.lane.b32.xlu0 %v723, 107
  %v747 = vpop.permute.xlu0 %746
  %vm748 = vcmask 875520
  %v749 = vsel %vm748, %v725, %v727
  %v750 = vsel %vm748, %v727, %v729
  %v751 = vsel %vm748, %v729, %v731
  %v752 = vsel %vm748, %v733, %v735
  %v753 = vsel %vm748, %v735, %v737
  %v754 = vsel %vm748, %v737, %v739
  %v755 = vsel %vm748, %v741, %v743
  %v756 = vsel %vm748, %v743, %v745
  %v757 = vsel %vm748, %v745, %v747
  %767 = vst [vmem:[#allocation2 + $0x1b0] sm:$0xff] %v749
  %768 = vst [vmem:[#allocation2 + $0x1b8] sm:$0xff] %v750
  %769 = vst [vmem:[#allocation2 + $0x1c0] sm:$0xff] %v751
  %770 = vst [vmem:[#allocation2 + $0x1c8] sm:$0xff] %v752
  %771 = vst [vmem:[#allocation2 + $0x1d0] sm:$0xff] %v753
  %772 = vst [vmem:[#allocation2 + $0x1d8] sm:$0xff] %v754
  %773 = vst [vmem:[#allocation2 + $0x1e0] sm:$0xff] %v755
  %774 = vst [vmem:[#allocation2 + $0x1e8] sm:$0xff] %v756
  %775 = vst [vmem:[#allocation2 + $0x1f0] sm:$0xff] %v757
  %v776 = vld [vmem:[%s0] sm:$0xff]
  %v777 = vld [vmem:[%s0 + $0x8] sm:$0xff]
  %v778 = vld [vmem:[%s0 + $0x10] sm:$0xff]
  %v779 = vld [vmem:[%s0 + $0x18] sm:$0xff]
  %v780 = vld [vmem:[%s0 + $0x20] sm:$0xff]
  %v781 = vld [vmem:[%s0 + $0x28] sm:$0xff]
  %v782 = vld [vmem:[%s0 + $0x30] sm:$0xff]
  %v783 = vld [vmem:[%s0 + $0x38] sm:$0xff]
  %v784 = vld [vmem:[%s0 + $0x40] sm:$0xff]
  %v785 = vld [vmem:[%s0 + $0x48] sm:$0xff]
  %v786 = vld [vmem:[%s0 + $0x50] sm:$0xff]
  %v787 = vld [vmem:[%s0 + $0x58] sm:$0xff]
  %v800 = vunpack.c.l.b16 %v776
  %v801 = vunpack.c.h.b16 %v776
  %v802 = vunpack.c.l.b16 %v777
  %v803 = vunpack.c.h.b16 %v777
  %v804 = vunpack.c.l.b16 %v778
  %v805 = vunpack.c.h.b16 %v778
  %v806 = vunpack.c.l.b16 %v779
  %v807 = vunpack.c.h.b16 %v779
  %v808 = vunpack.c.l.b16 %v780
  %v809 = vunpack.c.h.b16 %v780
  %v810 = vunpack.c.l.b16 %v781
  %v811 = vunpack.c.h.b16 %v781
  %v812 = vunpack.c.l.b16 %v782
  %v813 = vunpack.c.h.b16 %v782
  %v814 = vunpack.c.l.b16 %v783
  %v815 = vunpack.c.h.b16 %v783
  %v816 = vunpack.c.l.b16 %v784
  %v817 = vunpack.c.h.b16 %v784
  %v818 = vunpack.c.l.b16 %v785
  %v819 = vunpack.c.h.b16 %v785
  %v820 = vunpack.c.l.b16 %v786
  %v821 = vunpack.c.h.b16 %v786
  %v822 = vunpack.c.l.b16 %v787
  %v823 = vunpack.c.h.b16 %v787
  %v824 = vpack.c.b16 %v804, %v800
  %v825 = vpack.c.b16 %v805, %v801
  %v826 = vpack.c.b16 %v806, %v802
  %v827 = vpack.c.b16 %v807, %v803
  %v828 = vpack.c.b16 %v812, %v808
  %v829 = vpack.c.b16 %v813, %v809
  %v830 = vpack.c.b16 %v814, %v810
  %v831 = vpack.c.b16 %v815, %v811
  %v832 = vpack.c.b16 %v820, %v816
  %v833 = vpack.c.b16 %v821, %v817
  %v834 = vpack.c.b16 %v822, %v818
  %v835 = vpack.c.b16 %v823, %v819
  %836 = vrot.lane.b32.xlu0 %v824, 106
  %v837 = vpop.permute.xlu0 %836
  %838 = vrot.lane.b32.xlu0 %v825, 106
  %v839 = vpop.permute.xlu0 %838
  %840 = vrot.lane.b32.xlu0 %v826, 106
  %v841 = vpop.permute.xlu0 %840
  %842 = vrot.lane.b32.xlu0 %v827, 106
  %v843 = vpop.permute.xlu0 %842
  %844 = vrot.lane.b32.xlu0 %v828, 106
  %v845 = vpop.permute.xlu0 %844
  %846 = vrot.lane.b32.xlu0 %v829, 106
  %v847 = vpop.permute.xlu0 %846
  %848 = vrot.lane.b32.xlu0 %v830, 106
  %v849 = vpop.permute.xlu0 %848
  %850 = vrot.lane.b32.xlu0 %v831, 106
  %v851 = vpop.permute.xlu0 %850
  %852 = vrot.lane.b32.xlu0 %v832, 106
  %v853 = vpop.permute.xlu0 %852
  %854 = vrot.lane.b32.xlu0 %v833, 106
  %v855 = vpop.permute.xlu0 %854
  %856 = vrot.lane.b32.xlu0 %v834, 106
  %v857 = vpop.permute.xlu0 %856
  %858 = vrot.lane.b32.xlu0 %v835, 106
  %v859 = vpop.permute.xlu0 %858
  %vm860 = vcmask 867328
  %v861 = vsel %vm860, %v837, %v839
  %v862 = vsel %vm860, %v839, %v841
  %v863 = vsel %vm860, %v841, %v843
  %v864 = vsel %vm860, %v845, %v847
  %v865 = vsel %vm860, %v847, %v849
  %v866 = vsel %vm860, %v849, %v851
  %v867 = vsel %vm860, %v853, %v855
  %v868 = vsel %vm860, %v855, %v857
  %v869 = vsel %vm860, %v857, %v859
  %879 = vst [vmem:[#allocation2 + $0x1f8] sm:$0xff] %v861
  %880 = vst [vmem:[#allocation2 + $0x200] sm:$0xff] %v862
  %881 = vst [vmem:[#allocation2 + $0x208] sm:$0xff] %v863
  %882 = vst [vmem:[#allocation2 + $0x210] sm:$0xff] %v864
  %883 = vst [vmem:[#allocation2 + $0x218] sm:$0xff] %v865
  %884 = vst [vmem:[#allocation2 + $0x220] sm:$0xff] %v866
  %885 = vst [vmem:[#allocation2 + $0x228] sm:$0xff] %v867
  %886 = vst [vmem:[#allocation2 + $0x230] sm:$0xff] %v868
  %887 = vst [vmem:[#allocation2 + $0x238] sm:$0xff] %v869
  %v888 = vld [vmem:[%s0] sm:$0xff]
  %v889 = vld [vmem:[%s0 + $0x8] sm:$0xff]
  %v890 = vld [vmem:[%s0 + $0x10] sm:$0xff]
  %v891 = vld [vmem:[%s0 + $0x18] sm:$0xff]
  %v892 = vld [vmem:[%s0 + $0x20] sm:$0xff]
  %v893 = vld [vmem:[%s0 + $0x28] sm:$0xff]
  %v894 = vld [vmem:[%s0 + $0x30] sm:$0xff]
  %v895 = vld [vmem:[%s0 + $0x38] sm:$0xff]
  %v896 = vld [vmem:[%s0 + $0x40] sm:$0xff]
  %v897 = vld [vmem:[%s0 + $0x48] sm:$0xff]
  %v898 = vld [vmem:[%s0 + $0x50] sm:$0xff]
  %v899 = vld [vmem:[%s0 + $0x58] sm:$0xff]
  %v912 = vunpack.c.l.b16 %v888
  %v913 = vunpack.c.h.b16 %v888
  %v914 = vunpack.c.l.b16 %v889
  %v915 = vunpack.c.h.b16 %v889
  %v916 = vunpack.c.l.b16 %v890
  %v917 = vunpack.c.h.b16 %v890
  %v918 = vunpack.c.l.b16 %v891
  %v919 = vunpack.c.h.b16 %v891
  %v920 = vunpack.c.l.b16 %v892
  %v921 = vunpack.c.h.b16 %v892
  %v922 = vunpack.c.l.b16 %v893
  %v923 = vunpack.c.h.b16 %v893
  %v924 = vunpack.c.l.b16 %v894
  %v925 = vunpack.c.h.b16 %v894
  %v926 = vunpack.c.l.b16 %v895
  %v927 = vunpack.c.h.b16 %v895
  %v928 = vunpack.c.l.b16 %v896
  %v929 = vunpack.c.h.b16 %v896
  %v930 = vunpack.c.l.b16 %v897
  %v931 = vunpack.c.h.b16 %v897
  %v932 = vunpack.c.l.b16 %v898
  %v933 = vunpack.c.h.b16 %v898
  %v934 = vunpack.c.l.b16 %v899
  %v935 = vunpack.c.h.b16 %v899
  %v936 = vpack.c.b16 %v916, %v912
  %v937 = vpack.c.b16 %v917, %v913
  %v938 = vpack.c.b16 %v918, %v914
  %v939 = vpack.c.b16 %v919, %v915
  %v940 = vpack.c.b16 %v924, %v920
  %v941 = vpack.c.b16 %v925, %v921
  %v942 = vpack.c.b16 %v926, %v922
  %v943 = vpack.c.b16 %v927, %v923
  %v944 = vpack.c.b16 %v932, %v928
  %v945 = vpack.c.b16 %v933, %v929
  %v946 = vpack.c.b16 %v934, %v930
  %v947 = vpack.c.b16 %v935, %v931
  %948 = vrot.lane.b32.xlu0 %v936, 105
  %v949 = vpop.permute.xlu0 %948
  %950 = vrot.lane.b32.xlu0 %v937, 105
  %v951 = vpop.permute.xlu0 %950
  %952 = vrot.lane.b32.xlu0 %v938, 105
  %v953 = vpop.permute.xlu0 %952
  %954 = vrot.lane.b32.xlu0 %v939, 105
  %v955 = vpop.permute.xlu0 %954
  %956 = vrot.lane.b32.xlu0 %v940, 105
  %v957 = vpop.permute.xlu0 %956
  %958 = vrot.lane.b32.xlu0 %v941, 105
  %v959 = vpop.permute.xlu0 %958
  %960 = vrot.lane.b32.xlu0 %v942, 105
  %v961 = vpop.permute.xlu0 %960
  %962 = vrot.lane.b32.xlu0 %v943, 105
  %v963 = vpop.permute.xlu0 %962
  %964 = vrot.lane.b32.xlu0 %v944, 105
  %v965 = vpop.permute.xlu0 %964
  %966 = vrot.lane.b32.xlu0 %v945, 105
  %v967 = vpop.permute.xlu0 %966
  %968 = vrot.lane.b32.xlu0 %v946, 105
  %v969 = vpop.permute.xlu0 %968
  %970 = vrot.lane.b32.xlu0 %v947, 105
  %v971 = vpop.permute.xlu0 %970
  %vm972 = vcmask 859136
  %v973 = vsel %vm972, %v949, %v951
  %v974 = vsel %vm972, %v951, %v953
  %v975 = vsel %vm972, %v953, %v955
  %v976 = vsel %vm972, %v957, %v959
  %v977 = vsel %vm972, %v959, %v961
  %v978 = vsel %vm972, %v961, %v963
  %v979 = vsel %vm972, %v965, %v967
  %v980 = vsel %vm972, %v967, %v969
  %v981 = vsel %vm972, %v969, %v971
  %991 = vst [vmem:[#allocation2 + $0x240] sm:$0xff] %v973
  %992 = vst [vmem:[#allocation2 + $0x248] sm:$0xff] %v974
  %993 = vst [vmem:[#allocation2 + $0x250] sm:$0xff] %v975
  %994 = vst [vmem:[#allocation2 + $0x258] sm:$0xff] %v976
  %995 = vst [vmem:[#allocation2 + $0x260] sm:$0xff] %v977
  %996 = vst [vmem:[#allocation2 + $0x268] sm:$0xff] %v978
  %997 = vst [vmem:[#allocation2 + $0x270] sm:$0xff] %v979
  %998 = vst [vmem:[#allocation2 + $0x278] sm:$0xff] %v980
  %999 = vst [vmem:[#allocation2 + $0x280] sm:$0xff] %v981
  %v1000 = vld [vmem:[%s0] sm:$0xff]
  %v1001 = vld [vmem:[%s0 + $0x8] sm:$0xff]
  %v1002 = vld [vmem:[%s0 + $0x10] sm:$0xff]
  %v1003 = vld [vmem:[%s0 + $0x18] sm:$0xff]
  %v1004 = vld [vmem:[%s0 + $0x20] sm:$0xff]
  %v1005 = vld [vmem:[%s0 + $0x28] sm:$0xff]
  %v1006 = vld [vmem:[%s0 + $0x30] sm:$0xff]
  %v1007 = vld [vmem:[%s0 + $0x38] sm:$0xff]
  %v1008 = vld [vmem:[%s0 + $0x40] sm:$0xff]
  %v1009 = vld [vmem:[%s0 + $0x48] sm:$0xff]
  %v1010 = vld [vmem:[%s0 + $0x50] sm:$0xff]
  %v1011 = vld [vmem:[%s0 + $0x58] sm:$0xff]
  %v1024 = vunpack.c.l.b16 %v1000
  %v1025 = vunpack.c.h.b16 %v1000
  %v1026 = vunpack.c.l.b16 %v1001
  %v1027 = vunpack.c.h.b16 %v1001
  %v1028 = vunpack.c.l.b16 %v1002
  %v1029 = vunpack.c.h.b16 %v1002
  %v1030 = vunpack.c.l.b16 %v1003
  %v1031 = vunpack.c.h.b16 %v1003
  %v1032 = vunpack.c.l.b16 %v1004
  %v1033 = vunpack.c.h.b16 %v1004
  %v1034 = vunpack.c.l.b16 %v1005
  %v1035 = vunpack.c.h.b16 %v1005
  %v1036 = vunpack.c.l.b16 %v1006
  %v1037 = vunpack.c.h.b16 %v1006
  %v1038 = vunpack.c.l.b16 %v1007
  %v1039 = vunpack.c.h.b16 %v1007
  %v1040 = vunpack.c.l.b16 %v1008
  %v1041 = vunpack.c.h.b16 %v1008
  %v1042 = vunpack.c.l.b16 %v1009
  %v1043 = vunpack.c.h.b16 %v1009
  %v1044 = vunpack.c.l.b16 %v1010
  %v1045 = vunpack.c.h.b16 %v1010
  %v1046 = vunpack.c.l.b16 %v1011
  %v1047 = vunpack.c.h.b16 %v1011
  %v1048 = vpack.c.b16 %v1028, %v1024
  %v1049 = vpack.c.b16 %v1029, %v1025
  %v1050 = vpack.c.b16 %v1030, %v1026
  %v1051 = vpack.c.b16 %v1031, %v1027
  %v1052 = vpack.c.b16 %v1036, %v1032
  %v1053 = vpack.c.b16 %v1037, %v1033
  %v1054 = vpack.c.b16 %v1038, %v1034
  %v1055 = vpack.c.b16 %v1039, %v1035
  %v1056 = vpack.c.b16 %v1044, %v1040
  %v1057 = vpack.c.b16 %v1045, %v1041
  %v1058 = vpack.c.b16 %v1046, %v1042
  %v1059 = vpack.c.b16 %v1047, %v1043
  %1060 = vrot.lane.b32.xlu0 %v1048, 104
  %v1061 = vpop.permute.xlu0 %1060
  %1062 = vrot.lane.b32.xlu0 %v1049, 104
  %v1063 = vpop.permute.xlu0 %1062
  %1064 = vrot.lane.b32.xlu0 %v1050, 104
  %v1065 = vpop.permute.xlu0 %1064
  %1066 = vrot.lane.b32.xlu0 %v1051, 104
  %v1067 = vpop.permute.xlu0 %1066
  %1068 = vrot.lane.b32.xlu0 %v1052, 104
  %v1069 = vpop.permute.xlu0 %1068
  %1070 = vrot.lane.b32.xlu0 %v1053, 104
  %v1071 = vpop.permute.xlu0 %1070
  %1072 = vrot.lane.b32.xlu0 %v1054, 104
  %v1073 = vpop.permute.xlu0 %1072
  %1074 = vrot.lane.b32.xlu0 %v1055, 104
  %v1075 = vpop.permute.xlu0 %1074
  %1076 = vrot.lane.b32.xlu0 %v1056, 104
  %v1077 = vpop.permute.xlu0 %1076
  %1078 = vrot.lane.b32.xlu0 %v1057, 104
  %v1079 = vpop.permute.xlu0 %1078
  %1080 = vrot.lane.b32.xlu0 %v1058, 104
  %v1081 = vpop.permute.xlu0 %1080
  %1082 = vrot.lane.b32.xlu0 %v1059, 104
  %v1083 = vpop.permute.xlu0 %1082
  %vm1084 = vcmask 850944
  %v1085 = vsel %vm1084, %v1061, %v1063
  %v1086 = vsel %vm1084, %v1063, %v1065
  %v1087 = vsel %vm1084, %v1065, %v1067
  %v1088 = vsel %vm1084, %v1069, %v1071
  %v1089 = vsel %vm1084, %v1071, %v1073
  %v1090 = vsel %vm1084, %v1073, %v1075
  %v1091 = vsel %vm1084, %v1077, %v1079
  %v1092 = vsel %vm1084, %v1079, %v1081
  %v1093 = vsel %vm1084, %v1081, %v1083
  %1103 = vst [vmem:[#allocation2 + $0x288] sm:$0xff] %v1085
  %1104 = vst [vmem:[#allocation2 + $0x290] sm:$0xff] %v1086
  %1105 = vst [vmem:[#allocation2 + $0x298] sm:$0xff] %v1087
  %1106 = vst [vmem:[#allocation2 + $0x2a0] sm:$0xff] %v1088
  %1107 = vst [vmem:[#allocation2 + $0x2a8] sm:$0xff] %v1089
  %1108 = vst [vmem:[#allocation2 + $0x2b0] sm:$0xff] %v1090
  %1109 = vst [vmem:[#allocation2 + $0x2b8] sm:$0xff] %v1091
  %1110 = vst [vmem:[#allocation2 + $0x2c0] sm:$0xff] %v1092
  %1111 = vst [vmem:[#allocation2 + $0x2c8] sm:$0xff] %v1093
  %v1112 = vld [vmem:[%s0] sm:$0xff]
  %v1113 = vld [vmem:[%s0 + $0x8] sm:$0xff]
  %v1114 = vld [vmem:[%s0 + $0x10] sm:$0xff]
  %v1115 = vld [vmem:[%s0 + $0x18] sm:$0xff]
  %v1116 = vld [vmem:[%s0 + $0x20] sm:$0xff]
  %v1117 = vld [vmem:[%s0 + $0x28] sm:$0xff]
  %v1118 = vld [vmem:[%s0 + $0x30] sm:$0xff]
  %v1119 = vld [vmem:[%s0 + $0x38] sm:$0xff]
  %v1120 = vld [vmem:[%s0 + $0x40] sm:$0xff]
  %v1121 = vld [vmem:[%s0 + $0x48] sm:$0xff]
  %v1122 = vld [vmem:[%s0 + $0x50] sm:$0xff]
  %v1123 = vld [vmem:[%s0 + $0x58] sm:$0xff]
  %v1136 = vunpack.c.l.b16 %v1112
  %v1137 = vunpack.c.h.b16 %v1112
  %v1138 = vunpack.c.l.b16 %v1113
  %v1139 = vunpack.c.h.b16 %v1113
  %v1140 = vunpack.c.l.b16 %v1114
  %v1141 = vunpack.c.h.b16 %v1114
  %v1142 = vunpack.c.l.b16 %v1115
  %v1143 = vunpack.c.h.b16 %v1115
  %v1144 = vunpack.c.l.b16 %v1116
  %v1145 = vunpack.c.h.b16 %v1116
  %v1146 = vunpack.c.l.b16 %v1117
  %v1147 = vunpack.c.h.b16 %v1117
  %v1148 = vunpack.c.l.b16 %v1118
  %v1149 = vunpack.c.h.b16 %v1118
  %v1150 = vunpack.c.l.b16 %v1119
  %v1151 = vunpack.c.h.b16 %v1119
  %v1152 = vunpack.c.l.b16 %v1120
  %v1153 = vunpack.c.h.b16 %v1120
  %v1154 = vunpack.c.l.b16 %v1121
  %v1155 = vunpack.c.h.b16 %v1121
  %v1156 = vunpack.c.l.b16 %v1122
  %v1157 = vunpack.c.h.b16 %v1122
  %v1158 = vunpack.c.l.b16 %v1123
  %v1159 = vunpack.c.h.b16 %v1123
  %v1160 = vpack.c.b16 %v1140, %v1136
  %v1161 = vpack.c.b16 %v1141, %v1137
  %v1162 = vpack.c.b16 %v1142, %v1138
  %v1163 = vpack.c.b16 %v1143, %v1139
  %v1164 = vpack.c.b16 %v1148, %v1144
  %v1165 = vpack.c.b16 %v1149, %v1145
  %v1166 = vpack.c.b16 %v1150, %v1146
  %v1167 = vpack.c.b16 %v1151, %v1147
  %v1168 = vpack.c.b16 %v1156, %v1152
  %v1169 = vpack.c.b16 %v1157, %v1153
  %v1170 = vpack.c.b16 %v1158, %v1154
  %v1171 = vpack.c.b16 %v1159, %v1155
  %1172 = vrot.lane.b32.xlu0 %v1160, 88
  %v1173 = vpop.permute.xlu0 %1172
  %1174 = vrot.lane.b32.xlu0 %v1161, 88
  %v1175 = vpop.permute.xlu0 %1174
  %1176 = vrot.lane.b32.xlu0 %v1162, 88
  %v1177 = vpop.permute.xlu0 %1176
  %1178 = vrot.lane.b32.xlu0 %v1163, 88
  %v1179 = vpop.permute.xlu0 %1178
  %1180 = vrot.lane.b32.xlu0 %v1164, 88
  %v1181 = vpop.permute.xlu0 %1180
  %1182 = vrot.lane.b32.xlu0 %v1165, 88
  %v1183 = vpop.permute.xlu0 %1182
  %1184 = vrot.lane.b32.xlu0 %v1166, 88
  %v1185 = vpop.permute.xlu0 %1184
  %1186 = vrot.lane.b32.xlu0 %v1167, 88
  %v1187 = vpop.permute.xlu0 %1186
  %1188 = vrot.lane.b32.xlu0 %v1168, 88
  %v1189 = vpop.permute.xlu0 %1188
  %1190 = vrot.lane.b32.xlu0 %v1169, 88
  %v1191 = vpop.permute.xlu0 %1190
  %1192 = vrot.lane.b32.xlu0 %v1170, 88
  %v1193 = vpop.permute.xlu0 %1192
  %1194 = vrot.lane.b32.xlu0 %v1171, 88
  %v1195 = vpop.permute.xlu0 %1194
  %vm1196 = vcmask 719872
  %v1197 = vsel %vm1196, %v1173, %v1175
  %v1198 = vsel %vm1196, %v1175, %v1177
  %v1199 = vsel %vm1196, %v1177, %v1179
  %v1200 = vsel %vm1196, %v1181, %v1183
  %v1201 = vsel %vm1196, %v1183, %v1185
  %v1202 = vsel %vm1196, %v1185, %v1187
  %v1203 = vsel %vm1196, %v1189, %v1191
  %v1204 = vsel %vm1196, %v1191, %v1193
  %v1205 = vsel %vm1196, %v1193, %v1195
  %1215 = vst [vmem:[#allocation2 + $0x2d0] sm:$0xff] %v1197
  %1216 = vst [vmem:[#allocation2 + $0x2d8] sm:$0xff] %v1198
  %1217 = vst [vmem:[#allocation2 + $0x2e0] sm:$0xff] %v1199
  %1218 = vst [vmem:[#allocation2 + $0x2e8] sm:$0xff] %v1200
  %1219 = vst [vmem:[#allocation2 + $0x2f0] sm:$0xff] %v1201
  %1220 = vst [vmem:[#allocation2 + $0x2f8] sm:$0xff] %v1202
  %1221 = vst [vmem:[#allocation2 + $0x300] sm:$0xff] %v1203
  %1222 = vst [vmem:[#allocation2 + $0x308] sm:$0xff] %v1204
  %1223 = vst [vmem:[#allocation2 + $0x310] sm:$0xff] %v1205
  %v1224 = vld [vmem:[%s0] sm:$0xff]
  %v1225 = vld [vmem:[%s0 + $0x8] sm:$0xff]
  %v1226 = vld [vmem:[%s0 + $0x10] sm:$0xff]
  %v1227 = vld [vmem:[%s0 + $0x18] sm:$0xff]
  %v1228 = vld [vmem:[%s0 + $0x20] sm:$0xff]
  %v1229 = vld [vmem:[%s0 + $0x28] sm:$0xff]
  %v1230 = vld [vmem:[%s0 + $0x30] sm:$0xff]
  %v1231 = vld [vmem:[%s0 + $0x38] sm:$0xff]
  %v1232 = vld [vmem:[%s0 + $0x40] sm:$0xff]
  %v1233 = vld [vmem:[%s0 + $0x48] sm:$0xff]
  %v1234 = vld [vmem:[%s0 + $0x50] sm:$0xff]
  %v1235 = vld [vmem:[%s0 + $0x58] sm:$0xff]
  %v1248 = vunpack.c.l.b16 %v1224
  %v1249 = vunpack.c.h.b16 %v1224
  %v1250 = vunpack.c.l.b16 %v1225
  %v1251 = vunpack.c.h.b16 %v1225
  %v1252 = vunpack.c.l.b16 %v1226
  %v1253 = vunpack.c.h.b16 %v1226
  %v1254 = vunpack.c.l.b16 %v1227
  %v1255 = vunpack.c.h.b16 %v1227
  %v1256 = vunpack.c.l.b16 %v1228
  %v1257 = vunpack.c.h.b16 %v1228
  %v1258 = vunpack.c.l.b16 %v1229
  %v1259 = vunpack.c.h.b16 %v1229
  %v1260 = vunpack.c.l.b16 %v1230
  %v1261 = vunpack.c.h.b16 %v1230
  %v1262 = vunpack.c.l.b16 %v1231
  %v1263 = vunpack.c.h.b16 %v1231
  %v1264 = vunpack.c.l.b16 %v1232
  %v1265 = vunpack.c.h.b16 %v1232
  %v1266 = vunpack.c.l.b16 %v1233
  %v1267 = vunpack.c.h.b16 %v1233
  %v1268 = vunpack.c.l.b16 %v1234
  %v1269 = vunpack.c.h.b16 %v1234
  %v1270 = vunpack.c.l.b16 %v1235
  %v1271 = vunpack.c.h.b16 %v1235
  %v1272 = vpack.c.b16 %v1252, %v1248
  %v1273 = vpack.c.b16 %v1253, %v1249
  %v1274 = vpack.c.b16 %v1254, %v1250
  %v1275 = vpack.c.b16 %v1255, %v1251
  %v1276 = vpack.c.b16 %v1260, %v1256
  %v1277 = vpack.c.b16 %v1261, %v1257
  %v1278 = vpack.c.b16 %v1262, %v1258
  %v1279 = vpack.c.b16 %v1263, %v1259
  %v1280 = vpack.c.b16 %v1268, %v1264
  %v1281 = vpack.c.b16 %v1269, %v1265
  %v1282 = vpack.c.b16 %v1270, %v1266
  %v1283 = vpack.c.b16 %v1271, %v1267
  %1284 = vrot.lane.b32.xlu0 %v1272, 87
  %v1285 = vpop.permute.xlu0 %1284
  %1286 = vrot.lane.b32.xlu0 %v1273, 87
  %v1287 = vpop.permute.xlu0 %1286
  %1288 = vrot.lane.b32.xlu0 %v1274, 87
  %v1289 = vpop.permute.xlu0 %1288
  %1290 = vrot.lane.b32.xlu0 %v1275, 87
  %v1291 = vpop.permute.xlu0 %1290
  %1292 = vrot.lane.b32.xlu0 %v1276, 87
  %v1293 = vpop.permute.xlu0 %1292
  %1294 = vrot.lane.b32.xlu0 %v1277, 87
  %v1295 = vpop.permute.xlu0 %1294
  %1296 = vrot.lane.b32.xlu0 %v1278, 87
  %v1297 = vpop.permute.xlu0 %1296
  %1298 = vrot.lane.b32.xlu0 %v1279, 87
  %v1299 = vpop.permute.xlu0 %1298
  %1300 = vrot.lane.b32.xlu0 %v1280, 87
  %v1301 = vpop.permute.xlu0 %1300
  %1302 = vrot.lane.b32.xlu0 %v1281, 87
  %v1303 = vpop.permute.xlu0 %1302
  %1304 = vrot.lane.b32.xlu0 %v1282, 87
  %v1305 = vpop.permute.xlu0 %1304
  %1306 = vrot.lane.b32.xlu0 %v1283, 87
  %v1307 = vpop.permute.xlu0 %1306
  %vm1308 = vcmask 711680
  %v1309 = vsel %vm1308, %v1285, %v1287
  %v1310 = vsel %vm1308, %v1287, %v1289
  %v1311 = vsel %vm1308, %v1289, %v1291
  %v1312 = vsel %vm1308, %v1293, %v1295
  %v1313 = vsel %vm1308, %v1295, %v1297
  %v1314 = vsel %vm1308, %v1297, %v1299
  %v1315 = vsel %vm1308, %v1301, %v1303
  %v1316 = vsel %vm1308, %v1303, %v1305
  %v1317 = vsel %vm1308, %v1305, %v1307
  %1327 = vst [vmem:[#allocation2 + $0x318] sm:$0xff] %v1309
  %1328 = vst [vmem:[#allocation2 + $0x320] sm:$0xff] %v1310
  %1329 = vst [vmem:[#allocation2 + $0x328] sm:$0xff] %v1311
  %1330 = vst [vmem:[#allocation2 + $0x330] sm:$0xff] %v1312
  %1331 = vst [vmem:[#allocation2 + $0x338] sm:$0xff] %v1313
  %1332 = vst [vmem:[#allocation2 + $0x340] sm:$0xff] %v1314
  %1333 = vst [vmem:[#allocation2 + $0x348] sm:$0xff] %v1315
  %1334 = vst [vmem:[#allocation2 + $0x350] sm:$0xff] %v1316
  %1335 = vst [vmem:[#allocation2 + $0x358] sm:$0xff] %v1317
  %v1336 = vld [vmem:[%s0] sm:$0xff]
  %v1337 = vld [vmem:[%s0 + $0x8] sm:$0xff]
  %v1338 = vld [vmem:[%s0 + $0x10] sm:$0xff]
  %v1339 = vld [vmem:[%s0 + $0x18] sm:$0xff]
  %v1340 = vld [vmem:[%s0 + $0x20] sm:$0xff]
  %v1341 = vld [vmem:[%s0 + $0x28] sm:$0xff]
  %v1342 = vld [vmem:[%s0 + $0x30] sm:$0xff]
  %v1343 = vld [vmem:[%s0 + $0x38] sm:$0xff]
  %v1344 = vld [vmem:[%s0 + $0x40] sm:$0xff]
  %v1345 = vld [vmem:[%s0 + $0x48] sm:$0xff]
  %v1346 = vld [vmem:[%s0 + $0x50] sm:$0xff]
  %v1347 = vld [vmem:[%s0 + $0x58] sm:$0xff]
  %v1360 = vunpack.c.l.b16 %v1336
  %v1361 = vunpack.c.h.b16 %v1336
  %v1362 = vunpack.c.l.b16 %v1337
  %v1363 = vunpack.c.h.b16 %v1337
  %v1364 = vunpack.c.l.b16 %v1338
  %v1365 = vunpack.c.h.b16 %v1338
  %v1366 = vunpack.c.l.b16 %v1339
  %v1367 = vunpack.c.h.b16 %v1339
  %v1368 = vunpack.c.l.b16 %v1340
  %v1369 = vunpack.c.h.b16 %v1340
  %v1370 = vunpack.c.l.b16 %v1341
  %v1371 = vunpack.c.h.b16 %v1341
  %v1372 = vunpack.c.l.b16 %v1342
  %v1373 = vunpack.c.h.b16 %v1342
  %v1374 = vunpack.c.l.b16 %v1343
  %v1375 = vunpack.c.h.b16 %v1343
  %v1376 = vunpack.c.l.b16 %v1344
  %v1377 = vunpack.c.h.b16 %v1344
  %v1378 = vunpack.c.l.b16 %v1345
  %v1379 = vunpack.c.h.b16 %v1345
  %v1380 = vunpack.c.l.b16 %v1346
  %v1381 = vunpack.c.h.b16 %v1346
  %v1382 = vunpack.c.l.b16 %v1347
  %v1383 = vunpack.c.h.b16 %v1347
  %v1384 = vpack.c.b16 %v1364, %v1360
  %v1385 = vpack.c.b16 %v1365, %v1361
  %v1386 = vpack.c.b16 %v1366, %v1362
  %v1387 = vpack.c.b16 %v1367, %v1363
  %v1388 = vpack.c.b16 %v1372, %v1368
  %v1389 = vpack.c.b16 %v1373, %v1369
  %v1390 = vpack.c.b16 %v1374, %v1370
  %v1391 = vpack.c.b16 %v1375, %v1371
  %v1392 = vpack.c.b16 %v1380, %v1376
  %v1393 = vpack.c.b16 %v1381, %v1377
  %v1394 = vpack.c.b16 %v1382, %v1378
  %v1395 = vpack.c.b16 %v1383, %v1379
  %1396 = vrot.lane.b32.xlu0 %v1384, 86
  %v1397 = vpop.permute.xlu0 %1396
  %1398 = vrot.lane.b32.xlu0 %v1385, 86
  %v1399 = vpop.permute.xlu0 %1398
  %1400 = vrot.lane.b32.xlu0 %v1386, 86
  %v1401 = vpop.permute.xlu0 %1400
  %1402 = vrot.lane.b32.xlu0 %v1387, 86
  %v1403 = vpop.permute.xlu0 %1402
  %1404 = vrot.lane.b32.xlu0 %v1388, 86
  %v1405 = vpop.permute.xlu0 %1404
  %1406 = vrot.lane.b32.xlu0 %v1389, 86
  %v1407 = vpop.permute.xlu0 %1406
  %1408 = vrot.lane.b32.xlu0 %v1390, 86
  %v1409 = vpop.permute.xlu0 %1408
  %1410 = vrot.lane.b32.xlu0 %v1391, 86
  %v1411 = vpop.permute.xlu0 %1410
  %1412 = vrot.lane.b32.xlu0 %v1392, 86
  %v1413 = vpop.permute.xlu0 %1412
  %1414 = vrot.lane.b32.xlu0 %v1393, 86
  %v1415 = vpop.permute.xlu0 %1414
  %1416 = vrot.lane.b32.xlu0 %v1394, 86
  %v1417 = vpop.permute.xlu0 %1416
  %1418 = vrot.lane.b32.xlu0 %v1395, 86
  %v1419 = vpop.permute.xlu0 %1418
  %vm1420 = vcmask 703488
  %v1421 = vsel %vm1420, %v1397, %v1399
  %v1422 = vsel %vm1420, %v1399, %v1401
  %v1423 = vsel %vm1420, %v1401, %v1403
  %v1424 = vsel %vm1420, %v1405, %v1407
  %v1425 = vsel %vm1420, %v1407, %v1409
  %v1426 = vsel %vm1420, %v1409, %v1411
  %v1427 = vsel %vm1420, %v1413, %v1415
  %v1428 = vsel %vm1420, %v1415, %v1417
  %v1429 = vsel %vm1420, %v1417, %v1419
  %1439 = vst [vmem:[#allocation2 + $0x360] sm:$0xff] %v1421
  %1440 = vst [vmem:[#allocation2 + $0x368] sm:$0xff] %v1422
  %1441 = vst [vmem:[#allocation2 + $0x370] sm:$0xff] %v1423
  %1442 = vst [vmem:[#allocation2 + $0x378] sm:$0xff] %v1424
  %1443 = vst [vmem:[#allocation2 + $0x380] sm:$0xff] %v1425
  %1444 = vst [vmem:[#allocation2 + $0x388] sm:$0xff] %v1426
  %1445 = vst [vmem:[#allocation2 + $0x390] sm:$0xff] %v1427
  %1446 = vst [vmem:[#allocation2 + $0x398] sm:$0xff] %v1428
  %1447 = vst [vmem:[#allocation2 + $0x3a0] sm:$0xff] %v1429
  %v1448 = vld [vmem:[%s0] sm:$0xff]
  %v1449 = vld [vmem:[%s0 + $0x8] sm:$0xff]
  %v1450 = vld [vmem:[%s0 + $0x10] sm:$0xff]
  %v1451 = vld [vmem:[%s0 + $0x18] sm:$0xff]
  %v1452 = vld [vmem:[%s0 + $0x20] sm:$0xff]
  %v1453 = vld [vmem:[%s0 + $0x28] sm:$0xff]
  %v1454 = vld [vmem:[%s0 + $0x30] sm:$0xff]
  %v1455 = vld [vmem:[%s0 + $0x38] sm:$0xff]
  %v1456 = vld [vmem:[%s0 + $0x40] sm:$0xff]
  %v1457 = vld [vmem:[%s0 + $0x48] sm:$0xff]
  %v1458 = vld [vmem:[%s0 + $0x50] sm:$0xff]
  %v1459 = vld [vmem:[%s0 + $0x58] sm:$0xff]
  %v1472 = vunpack.c.l.b16 %v1448
  %v1473 = vunpack.c.h.b16 %v1448
  %v1474 = vunpack.c.l.b16 %v1449
  %v1475 = vunpack.c.h.b16 %v1449
  %v1476 = vunpack.c.l.b16 %v1450
  %v1477 = vunpack.c.h.b16 %v1450
  %v1478 = vunpack.c.l.b16 %v1451
  %v1479 = vunpack.c.h.b16 %v1451
  %v1480 = vunpack.c.l.b16 %v1452
  %v1481 = vunpack.c.h.b16 %v1452
  %v1482 = vunpack.c.l.b16 %v1453
  %v1483 = vunpack.c.h.b16 %v1453
  %v1484 = vunpack.c.l.b16 %v1454
  %v1485 = vunpack.c.h.b16 %v1454
  %v1486 = vunpack.c.l.b16 %v1455
  %v1487 = vunpack.c.h.b16 %v1455
  %v1488 = vunpack.c.l.b16 %v1456
  %v1489 = vunpack.c.h.b16 %v1456
  %v1490 = vunpack.c.l.b16 %v1457
  %v1491 = vunpack.c.h.b16 %v1457
  %v1492 = vunpack.c.l.b16 %v1458
  %v1493 = vunpack.c.h.b16 %v1458
  %v1494 = vunpack.c.l.b16 %v1459
  %v1495 = vunpack.c.h.b16 %v1459
  %v1496 = vpack.c.b16 %v1476, %v1472
  %v1497 = vpack.c.b16 %v1477, %v1473
  %v1498 = vpack.c.b16 %v1478, %v1474
  %v1499 = vpack.c.b16 %v1479, %v1475
  %v1500 = vpack.c.b16 %v1484, %v1480
  %v1501 = vpack.c.b16 %v1485, %v1481
  %v1502 = vpack.c.b16 %v1486, %v1482
  %v1503 = vpack.c.b16 %v1487, %v1483
  %v1504 = vpack.c.b16 %v1492, %v1488
  %v1505 = vpack.c.b16 %v1493, %v1489
  %v1506 = vpack.c.b16 %v1494, %v1490
  %v1507 = vpack.c.b16 %v1495, %v1491
  %1508 = vrot.lane.b32.xlu0 %v1496, 85
  %v1509 = vpop.permute.xlu0 %1508
  %1510 = vrot.lane.b32.xlu0 %v1497, 85
  %v1511 = vpop.permute.xlu0 %1510
  %1512 = vrot.lane.b32.xlu0 %v1498, 85
  %v1513 = vpop.permute.xlu0 %1512
  %1514 = vrot.lane.b32.xlu0 %v1499, 85
  %v1515 = vpop.permute.xlu0 %1514
  %1516 = vrot.lane.b32.xlu0 %v1500, 85
  %v1517 = vpop.permute.xlu0 %1516
  %1518 = vrot.lane.b32.xlu0 %v1501, 85
  %v1519 = vpop.permute.xlu0 %1518
  %1520 = vrot.lane.b32.xlu0 %v1502, 85
  %v1521 = vpop.permute.xlu0 %1520
  %1522 = vrot.lane.b32.xlu0 %v1503, 85
  %v1523 = vpop.permute.xlu0 %1522
  %1524 = vrot.lane.b32.xlu0 %v1504, 85
  %v1525 = vpop.permute.xlu0 %1524
  %1526 = vrot.lane.b32.xlu0 %v1505, 85
  %v1527 = vpop.permute.xlu0 %1526
  %1528 = vrot.lane.b32.xlu0 %v1506, 85
  %v1529 = vpop.permute.xlu0 %1528
  %1530 = vrot.lane.b32.xlu0 %v1507, 85
  %v1531 = vpop.permute.xlu0 %1530
  %vm1532 = vcmask 695296
  %v1533 = vsel %vm1532, %v1509, %v1511
  %v1534 = vsel %vm1532, %v1511, %v1513
  %v1535 = vsel %vm1532, %v1513, %v1515
  %v1536 = vsel %vm1532, %v1517, %v1519
  %v1537 = vsel %vm1532, %v1519, %v1521
  %v1538 = vsel %vm1532, %v1521, %v1523
  %v1539 = vsel %vm1532, %v1525, %v1527
  %v1540 = vsel %vm1532, %v1527, %v1529
  %v1541 = vsel %vm1532, %v1529, %v1531
  %1551 = vst [vmem:[#allocation2 + $0x3a8] sm:$0xff] %v1533
  %1552 = vst [vmem:[#allocation2 + $0x3b0] sm:$0xff] %v1534
  %1553 = vst [vmem:[#allocation2 + $0x3b8] sm:$0xff] %v1535
  %1554 = vst [vmem:[#allocation2 + $0x3c0] sm:$0xff] %v1536
  %1555 = vst [vmem:[#allocation2 + $0x3c8] sm:$0xff] %v1537
  %1556 = vst [vmem:[#allocation2 + $0x3d0] sm:$0xff] %v1538
  %1557 = vst [vmem:[#allocation2 + $0x3d8] sm:$0xff] %v1539
  %1558 = vst [vmem:[#allocation2 + $0x3e0] sm:$0xff] %v1540
  %1559 = vst [vmem:[#allocation2 + $0x3e8] sm:$0xff] %v1541
  %v1560 = vld [vmem:[%s0] sm:$0xff]
  %v1561 = vld [vmem:[%s0 + $0x8] sm:$0xff]
  %v1562 = vld [vmem:[%s0 + $0x10] sm:$0xff]
  %v1563 = vld [vmem:[%s0 + $0x18] sm:$0xff]
  %v1564 = vld [vmem:[%s0 + $0x20] sm:$0xff]
  %v1565 = vld [vmem:[%s0 + $0x28] sm:$0xff]
  %v1566 = vld [vmem:[%s0 + $0x30] sm:$0xff]
  %v1567 = vld [vmem:[%s0 + $0x38] sm:$0xff]
  %v1568 = vld [vmem:[%s0 + $0x40] sm:$0xff]
  %v1569 = vld [vmem:[%s0 + $0x48] sm:$0xff]
  %v1570 = vld [vmem:[%s0 + $0x50] sm:$0xff]
  %v1571 = vld [vmem:[%s0 + $0x58] sm:$0xff]
  %v1584 = vunpack.c.l.b16 %v1560
  %v1585 = vunpack.c.h.b16 %v1560
  %v1586 = vunpack.c.l.b16 %v1561
  %v1587 = vunpack.c.h.b16 %v1561
  %v1588 = vunpack.c.l.b16 %v1562
  %v1589 = vunpack.c.h.b16 %v1562
  %v1590 = vunpack.c.l.b16 %v1563
  %v1591 = vunpack.c.h.b16 %v1563
  %v1592 = vunpack.c.l.b16 %v1564
  %v1593 = vunpack.c.h.b16 %v1564
  %v1594 = vunpack.c.l.b16 %v1565
  %v1595 = vunpack.c.h.b16 %v1565
  %v1596 = vunpack.c.l.b16 %v1566
  %v1597 = vunpack.c.h.b16 %v1566
  %v1598 = vunpack.c.l.b16 %v1567
  %v1599 = vunpack.c.h.b16 %v1567
  %v1600 = vunpack.c.l.b16 %v1568
  %v1601 = vunpack.c.h.b16 %v1568
  %v1602 = vunpack.c.l.b16 %v1569
  %v1603 = vunpack.c.h.b16 %v1569
  %v1604 = vunpack.c.l.b16 %v1570
  %v1605 = vunpack.c.h.b16 %v1570
  %v1606 = vunpack.c.l.b16 %v1571
  %v1607 = vunpack.c.h.b16 %v1571
  %v1608 = vpack.c.b16 %v1588, %v1584
  %v1609 = vpack.c.b16 %v1589, %v1585
  %v1610 = vpack.c.b16 %v1590, %v1586
  %v1611 = vpack.c.b16 %v1591, %v1587
  %v1612 = vpack.c.b16 %v1596, %v1592
  %v1613 = vpack.c.b16 %v1597, %v1593
  %v1614 = vpack.c.b16 %v1598, %v1594
  %v1615 = vpack.c.b16 %v1599, %v1595
  %v1616 = vpack.c.b16 %v1604, %v1600
  %v1617 = vpack.c.b16 %v1605, %v1601
  %v1618 = vpack.c.b16 %v1606, %v1602
  %v1619 = vpack.c.b16 %v1607, %v1603
  %1620 = vrot.lane.b32.xlu0 %v1608, 84
  %v1621 = vpop.permute.xlu0 %1620
  %1622 = vrot.lane.b32.xlu0 %v1609, 84
  %v1623 = vpop.permute.xlu0 %1622
  %1624 = vrot.lane.b32.xlu0 %v1610, 84
  %v1625 = vpop.permute.xlu0 %1624
  %1626 = vrot.lane.b32.xlu0 %v1611, 84
  %v1627 = vpop.permute.xlu0 %1626
  %1628 = vrot.lane.b32.xlu0 %v1612, 84
  %v1629 = vpop.permute.xlu0 %1628
  %1630 = vrot.lane.b32.xlu0 %v1613, 84
  %v1631 = vpop.permute.xlu0 %1630
  %1632 = vrot.lane.b32.xlu0 %v1614, 84
  %v1633 = vpop.permute.xlu0 %1632
  %1634 = vrot.lane.b32.xlu0 %v1615, 84
  %v1635 = vpop.permute.xlu0 %1634
  %1636 = vrot.lane.b32.xlu0 %v1616, 84
  %v1637 = vpop.permute.xlu0 %1636
  %1638 = vrot.lane.b32.xlu0 %v1617, 84
  %v1639 = vpop.permute.xlu0 %1638
  %1640 = vrot.lane.b32.xlu0 %v1618, 84
  %v1641 = vpop.permute.xlu0 %1640
  %1642 = vrot.lane.b32.xlu0 %v1619, 84
  %v1643 = vpop.permute.xlu0 %1642
  %vm1644 = vcmask 687104
  %v1645 = vsel %vm1644, %v1621, %v1623
  %v1646 = vsel %vm1644, %v1623, %v1625
  %v1647 = vsel %vm1644, %v1625, %v1627
  %v1648 = vsel %vm1644, %v1629, %v1631
  %v1649 = vsel %vm1644, %v1631, %v1633
  %v1650 = vsel %vm1644, %v1633, %v1635
  %v1651 = vsel %vm1644, %v1637, %v1639
  %v1652 = vsel %vm1644, %v1639, %v1641
  %v1653 = vsel %vm1644, %v1641, %v1643
  %1663 = vst [vmem:[#allocation2 + $0x3f0] sm:$0xff] %v1645
  %1664 = vst [vmem:[#allocation2 + $0x3f8] sm:$0xff] %v1646
  %1665 = vst [vmem:[#allocation2 + $0x400] sm:$0xff] %v1647
  %1666 = vst [vmem:[#allocation2 + $0x408] sm:$0xff] %v1648
  %1667 = vst [vmem:[#allocation2 + $0x410] sm:$0xff] %v1649
  %1668 = vst [vmem:[#allocation2 + $0x418] sm:$0xff] %v1650
  %1669 = vst [vmem:[#allocation2 + $0x420] sm:$0xff] %v1651
  %1670 = vst [vmem:[#allocation2 + $0x428] sm:$0xff] %v1652
  %1671 = vst [vmem:[#allocation2 + $0x430] sm:$0xff] %v1653
  %v1672 = vld [vmem:[%s0] sm:$0xff]
  %v1673 = vld [vmem:[%s0 + $0x8] sm:$0xff]
  %v1674 = vld [vmem:[%s0 + $0x10] sm:$0xff]
  %v1675 = vld [vmem:[%s0 + $0x18] sm:$0xff]
  %v1676 = vld [vmem:[%s0 + $0x20] sm:$0xff]
  %v1677 = vld [vmem:[%s0 + $0x28] sm:$0xff]
  %v1678 = vld [vmem:[%s0 + $0x30] sm:$0xff]
  %v1679 = vld [vmem:[%s0 + $0x38] sm:$0xff]
  %v1680 = vld [vmem:[%s0 + $0x40] sm:$0xff]
  %v1681 = vld [vmem:[%s0 + $0x48] sm:$0xff]
  %v1682 = vld [vmem:[%s0 + $0x50] sm:$0xff]
  %v1683 = vld [vmem:[%s0 + $0x58] sm:$0xff]
  %v1696 = vunpack.c.l.b16 %v1672
  %v1697 = vunpack.c.h.b16 %v1672
  %v1698 = vunpack.c.l.b16 %v1673
  %v1699 = vunpack.c.h.b16 %v1673
  %v1700 = vunpack.c.l.b16 %v1674
  %v1701 = vunpack.c.h.b16 %v1674
  %v1702 = vunpack.c.l.b16 %v1675
  %v1703 = vunpack.c.h.b16 %v1675
  %v1704 = vunpack.c.l.b16 %v1676
  %v1705 = vunpack.c.h.b16 %v1676
  %v1706 = vunpack.c.l.b16 %v1677
  %v1707 = vunpack.c.h.b16 %v1677
  %v1708 = vunpack.c.l.b16 %v1678
  %v1709 = vunpack.c.h.b16 %v1678
  %v1710 = vunpack.c.l.b16 %v1679
  %v1711 = vunpack.c.h.b16 %v1679
  %v1712 = vunpack.c.l.b16 %v1680
  %v1713 = vunpack.c.h.b16 %v1680
  %v1714 = vunpack.c.l.b16 %v1681
  %v1715 = vunpack.c.h.b16 %v1681
  %v1716 = vunpack.c.l.b16 %v1682
  %v1717 = vunpack.c.h.b16 %v1682
  %v1718 = vunpack.c.l.b16 %v1683
  %v1719 = vunpack.c.h.b16 %v1683
  %v1720 = vpack.c.b16 %v1700, %v1696
  %v1721 = vpack.c.b16 %v1701, %v1697
  %v1722 = vpack.c.b16 %v1702, %v1698
  %v1723 = vpack.c.b16 %v1703, %v1699
  %v1724 = vpack.c.b16 %v1708, %v1704
  %v1725 = vpack.c.b16 %v1709, %v1705
  %v1726 = vpack.c.b16 %v1710, %v1706
  %v1727 = vpack.c.b16 %v1711, %v1707
  %v1728 = vpack.c.b16 %v1716, %v1712
  %v1729 = vpack.c.b16 %v1717, %v1713
  %v1730 = vpack.c.b16 %v1718, %v1714
  %v1731 = vpack.c.b16 %v1719, %v1715
  %1732 = vrot.lane.b32.xlu0 %v1720, 68
  %v1733 = vpop.permute.xlu0 %1732
  %1734 = vrot.lane.b32.xlu0 %v1721, 68
  %v1735 = vpop.permute.xlu0 %1734
  %1736 = vrot.lane.b32.xlu0 %v1722, 68
  %v1737 = vpop.permute.xlu0 %1736
  %1738 = vrot.lane.b32.xlu0 %v1723, 68
  %v1739 = vpop.permute.xlu0 %1738
  %1740 = vrot.lane.b32.xlu0 %v1724, 68
  %v1741 = vpop.permute.xlu0 %1740
  %1742 = vrot.lane.b32.xlu0 %v1725, 68
  %v1743 = vpop.permute.xlu0 %1742
  %1744 = vrot.lane.b32.xlu0 %v1726, 68
  %v1745 = vpop.permute.xlu0 %1744
  %1746 = vrot.lane.b32.xlu0 %v1727, 68
  %v1747 = vpop.permute.xlu0 %1746
  %1748 = vrot.lane.b32.xlu0 %v1728, 68
  %v1749 = vpop.permute.xlu0 %1748
  %1750 = vrot.lane.b32.xlu0 %v1729, 68
  %v1751 = vpop.permute.xlu0 %1750
  %1752 = vrot.lane.b32.xlu0 %v1730, 68
  %v1753 = vpop.permute.xlu0 %1752
  %1754 = vrot.lane.b32.xlu0 %v1731, 68
  %v1755 = vpop.permute.xlu0 %1754
  %vm1756 = vcmask 556032
  %v1757 = vsel %vm1756, %v1733, %v1735
  %v1758 = vsel %vm1756, %v1735, %v1737
  %v1759 = vsel %vm1756, %v1737, %v1739
  %v1760 = vsel %vm1756, %v1741, %v1743
  %v1761 = vsel %vm1756, %v1743, %v1745
  %v1762 = vsel %vm1756, %v1745, %v1747
  %v1763 = vsel %vm1756, %v1749, %v1751
  %v1764 = vsel %vm1756, %v1751, %v1753
  %v1765 = vsel %vm1756, %v1753, %v1755
  %1775 = vst [vmem:[#allocation2 + $0x438] sm:$0xff] %v1757
  %1776 = vst [vmem:[#allocation2 + $0x440] sm:$0xff] %v1758
  %1777 = vst [vmem:[#allocation2 + $0x448] sm:$0xff] %v1759
  %1778 = vst [vmem:[#allocation2 + $0x450] sm:$0xff] %v1760
  %1779 = vst [vmem:[#allocation2 + $0x458] sm:$0xff] %v1761
  %1780 = vst [vmem:[#allocation2 + $0x460] sm:$0xff] %v1762
  %1781 = vst [vmem:[#allocation2 + $0x468] sm:$0xff] %v1763
  %1782 = vst [vmem:[#allocation2 + $0x470] sm:$0xff] %v1764
  %1783 = vst [vmem:[#allocation2 + $0x478] sm:$0xff] %v1765
  %v1784 = vld [vmem:[%s0] sm:$0xff]
  %v1785 = vld [vmem:[%s0 + $0x8] sm:$0xff]
  %v1786 = vld [vmem:[%s0 + $0x10] sm:$0xff]
  %v1787 = vld [vmem:[%s0 + $0x18] sm:$0xff]
  %v1788 = vld [vmem:[%s0 + $0x20] sm:$0xff]
  %v1789 = vld [vmem:[%s0 + $0x28] sm:$0xff]
  %v1790 = vld [vmem:[%s0 + $0x30] sm:$0xff]
  %v1791 = vld [vmem:[%s0 + $0x38] sm:$0xff]
  %v1792 = vld [vmem:[%s0 + $0x40] sm:$0xff]
  %v1793 = vld [vmem:[%s0 + $0x48] sm:$0xff]
  %v1794 = vld [vmem:[%s0 + $0x50] sm:$0xff]
  %v1795 = vld [vmem:[%s0 + $0x58] sm:$0xff]
  %v1808 = vunpack.c.l.b16 %v1784
  %v1809 = vunpack.c.h.b16 %v1784
  %v1810 = vunpack.c.l.b16 %v1785
  %v1811 = vunpack.c.h.b16 %v1785
  %v1812 = vunpack.c.l.b16 %v1786
  %v1813 = vunpack.c.h.b16 %v1786
  %v1814 = vunpack.c.l.b16 %v1787
  %v1815 = vunpack.c.h.b16 %v1787
  %v1816 = vunpack.c.l.b16 %v1788
  %v1817 = vunpack.c.h.b16 %v1788
  %v1818 = vunpack.c.l.b16 %v1789
  %v1819 = vunpack.c.h.b16 %v1789
  %v1820 = vunpack.c.l.b16 %v1790
  %v1821 = vunpack.c.h.b16 %v1790
  %v1822 = vunpack.c.l.b16 %v1791
  %v1823 = vunpack.c.h.b16 %v1791
  %v1824 = vunpack.c.l.b16 %v1792
  %v1825 = vunpack.c.h.b16 %v1792
  %v1826 = vunpack.c.l.b16 %v1793
  %v1827 = vunpack.c.h.b16 %v1793
  %v1828 = vunpack.c.l.b16 %v1794
  %v1829 = vunpack.c.h.b16 %v1794
  %v1830 = vunpack.c.l.b16 %v1795
  %v1831 = vunpack.c.h.b16 %v1795
  %v1832 = vpack.c.b16 %v1812, %v1808
  %v1833 = vpack.c.b16 %v1813, %v1809
  %v1834 = vpack.c.b16 %v1814, %v1810
  %v1835 = vpack.c.b16 %v1815, %v1811
  %v1836 = vpack.c.b16 %v1820, %v1816
  %v1837 = vpack.c.b16 %v1821, %v1817
  %v1838 = vpack.c.b16 %v1822, %v1818
  %v1839 = vpack.c.b16 %v1823, %v1819
  %v1840 = vpack.c.b16 %v1828, %v1824
  %v1841 = vpack.c.b16 %v1829, %v1825
  %v1842 = vpack.c.b16 %v1830, %v1826
  %v1843 = vpack.c.b16 %v1831, %v1827
  %1844 = vrot.lane.b32.xlu0 %v1832, 67
  %v1845 = vpop.permute.xlu0 %1844
  %1846 = vrot.lane.b32.xlu0 %v1833, 67
  %v1847 = vpop.permute.xlu0 %1846
  %1848 = vrot.lane.b32.xlu0 %v1834, 67
  %v1849 = vpop.permute.xlu0 %1848
  %1850 = vrot.lane.b32.xlu0 %v1835, 67
  %v1851 = vpop.permute.xlu0 %1850
  %1852 = vrot.lane.b32.xlu0 %v1836, 67
  %v1853 = vpop.permute.xlu0 %1852
  %1854 = vrot.lane.b32.xlu0 %v1837, 67
  %v1855 = vpop.permute.xlu0 %1854
  %1856 = vrot.lane.b32.xlu0 %v1838, 67
  %v1857 = vpop.permute.xlu0 %1856
  %1858 = vrot.lane.b32.xlu0 %v1839, 67
  %v1859 = vpop.permute.xlu0 %1858
  %1860 = vrot.lane.b32.xlu0 %v1840, 67
  %v1861 = vpop.permute.xlu0 %1860
  %1862 = vrot.lane.b32.xlu0 %v1841, 67
  %v1863 = vpop.permute.xlu0 %1862
  %1864 = vrot.lane.b32.xlu0 %v1842, 67
  %v1865 = vpop.permute.xlu0 %1864
  %1866 = vrot.lane.b32.xlu0 %v1843, 67
  %v1867 = vpop.permute.xlu0 %1866
  %vm1868 = vcmask 547840
  %v1869 = vsel %vm1868, %v1845, %v1847
  %v1870 = vsel %vm1868, %v1847, %v1849
  %v1871 = vsel %vm1868, %v1849, %v1851
  %v1872 = vsel %vm1868, %v1853, %v1855
  %v1873 = vsel %vm1868, %v1855, %v1857
  %v1874 = vsel %vm1868, %v1857, %v1859
  %v1875 = vsel %vm1868, %v1861, %v1863
  %v1876 = vsel %vm1868, %v1863, %v1865
  %v1877 = vsel %vm1868, %v1865, %v1867
  %1887 = vst [vmem:[#allocation2 + $0x480] sm:$0xff] %v1869
  %1888 = vst [vmem:[#allocation2 + $0x488] sm:$0xff] %v1870
  %1889 = vst [vmem:[#allocation2 + $0x490] sm:$0xff] %v1871
  %1890 = vst [vmem:[#allocation2 + $0x498] sm:$0xff] %v1872
  %1891 = vst [vmem:[#allocation2 + $0x4a0] sm:$0xff] %v1873
  %1892 = vst [vmem:[#allocation2 + $0x4a8] sm:$0xff] %v1874
  %1893 = vst [vmem:[#allocation2 + $0x4b0] sm:$0xff] %v1875
  %1894 = vst [vmem:[#allocation2 + $0x4b8] sm:$0xff] %v1876
  %1895 = vst [vmem:[#allocation2 + $0x4c0] sm:$0xff] %v1877
  %v1896 = vld [vmem:[%s0] sm:$0xff]
  %v1897 = vld [vmem:[%s0 + $0x8] sm:$0xff]
  %v1898 = vld [vmem:[%s0 + $0x10] sm:$0xff]
  %v1899 = vld [vmem:[%s0 + $0x18] sm:$0xff]
  %v1900 = vld [vmem:[%s0 + $0x20] sm:$0xff]
  %v1901 = vld [vmem:[%s0 + $0x28] sm:$0xff]
  %v1902 = vld [vmem:[%s0 + $0x30] sm:$0xff]
  %v1903 = vld [vmem:[%s0 + $0x38] sm:$0xff]
  %v1904 = vld [vmem:[%s0 + $0x40] sm:$0xff]
  %v1905 = vld [vmem:[%s0 + $0x48] sm:$0xff]
  %v1906 = vld [vmem:[%s0 + $0x50] sm:$0xff]
  %v1907 = vld [vmem:[%s0 + $0x58] sm:$0xff]
  %v1920 = vunpack.c.l.b16 %v1896
  %v1921 = vunpack.c.h.b16 %v1896
  %v1922 = vunpack.c.l.b16 %v1897
  %v1923 = vunpack.c.h.b16 %v1897
  %v1924 = vunpack.c.l.b16 %v1898
  %v1925 = vunpack.c.h.b16 %v1898
  %v1926 = vunpack.c.l.b16 %v1899
  %v1927 = vunpack.c.h.b16 %v1899
  %v1928 = vunpack.c.l.b16 %v1900
  %v1929 = vunpack.c.h.b16 %v1900
  %v1930 = vunpack.c.l.b16 %v1901
  %v1931 = vunpack.c.h.b16 %v1901
  %v1932 = vunpack.c.l.b16 %v1902
  %v1933 = vunpack.c.h.b16 %v1902
  %v1934 = vunpack.c.l.b16 %v1903
  %v1935 = vunpack.c.h.b16 %v1903
  %v1936 = vunpack.c.l.b16 %v1904
  %v1937 = vunpack.c.h.b16 %v1904
  %v1938 = vunpack.c.l.b16 %v1905
  %v1939 = vunpack.c.h.b16 %v1905
  %v1940 = vunpack.c.l.b16 %v1906
  %v1941 = vunpack.c.h.b16 %v1906
  %v1942 = vunpack.c.l.b16 %v1907
  %v1943 = vunpack.c.h.b16 %v1907
  %v1944 = vpack.c.b16 %v1924, %v1920
  %v1945 = vpack.c.b16 %v1925, %v1921
  %v1946 = vpack.c.b16 %v1926, %v1922
  %v1947 = vpack.c.b16 %v1927, %v1923
  %v1948 = vpack.c.b16 %v1932, %v1928
  %v1949 = vpack.c.b16 %v1933, %v1929
  %v1950 = vpack.c.b16 %v1934, %v1930
  %v1951 = vpack.c.b16 %v1935, %v1931
  %v1952 = vpack.c.b16 %v1940, %v1936
  %v1953 = vpack.c.b16 %v1941, %v1937
  %v1954 = vpack.c.b16 %v1942, %v1938
  %v1955 = vpack.c.b16 %v1943, %v1939
  %1956 = vrot.lane.b32.xlu0 %v1944, 66
  %v1957 = vpop.permute.xlu0 %1956
  %1958 = vrot.lane.b32.xlu0 %v1945, 66
  %v1959 = vpop.permute.xlu0 %1958
  %1960 = vrot.lane.b32.xlu0 %v1946, 66
  %v1961 = vpop.permute.xlu0 %1960
  %1962 = vrot.lane.b32.xlu0 %v1947, 66
  %v1963 = vpop.permute.xlu0 %1962
  %1964 = vrot.lane.b32.xlu0 %v1948, 66
  %v1965 = vpop.permute.xlu0 %1964
  %1966 = vrot.lane.b32.xlu0 %v1949, 66
  %v1967 = vpop.permute.xlu0 %1966
  %1968 = vrot.lane.b32.xlu0 %v1950, 66
  %v1969 = vpop.permute.xlu0 %1968
  %1970 = vrot.lane.b32.xlu0 %v1951, 66
  %v1971 = vpop.permute.xlu0 %1970
  %1972 = vrot.lane.b32.xlu0 %v1952, 66
  %v1973 = vpop.permute.xlu0 %1972
  %1974 = vrot.lane.b32.xlu0 %v1953, 66
  %v1975 = vpop.permute.xlu0 %1974
  %1976 = vrot.lane.b32.xlu0 %v1954, 66
  %v1977 = vpop.permute.xlu0 %1976
  %1978 = vrot.lane.b32.xlu0 %v1955, 66
  %v1979 = vpop.permute.xlu0 %1978
  %vm1980 = vcmask 539648
  %v1981 = vsel %vm1980, %v1957, %v1959
  %v1982 = vsel %vm1980, %v1959, %v1961
  %v1983 = vsel %vm1980, %v1961, %v1963
  %v1984 = vsel %vm1980, %v1965, %v1967
  %v1985 = vsel %vm1980, %v1967, %v1969
  %v1986 = vsel %vm1980, %v1969, %v1971
  %v1987 = vsel %vm1980, %v1973, %v1975
  %v1988 = vsel %vm1980, %v1975, %v1977
  %v1989 = vsel %vm1980, %v1977, %v1979
  %1999 = vst [vmem:[#allocation2 + $0x4c8] sm:$0xff] %v1981
  %2000 = vst [vmem:[#allocation2 + $0x4d0] sm:$0xff] %v1982
  %2001 = vst [vmem:[#allocation2 + $0x4d8] sm:$0xff] %v1983
  %2002 = vst [vmem:[#allocation2 + $0x4e0] sm:$0xff] %v1984
  %2003 = vst [vmem:[#allocation2 + $0x4e8] sm:$0xff] %v1985
  %2004 = vst [vmem:[#allocation2 + $0x4f0] sm:$0xff] %v1986
  %2005 = vst [vmem:[#allocation2 + $0x4f8] sm:$0xff] %v1987
  %2006 = vst [vmem:[#allocation2 + $0x500] sm:$0xff] %v1988
  %2007 = vst [vmem:[#allocation2 + $0x508] sm:$0xff] %v1989
  %v2008 = vld [vmem:[%s0] sm:$0xff]
  %v2009 = vld [vmem:[%s0 + $0x8] sm:$0xff]
  %v2010 = vld [vmem:[%s0 + $0x10] sm:$0xff]
  %v2011 = vld [vmem:[%s0 + $0x18] sm:$0xff]
  %v2012 = vld [vmem:[%s0 + $0x20] sm:$0xff]
  %v2013 = vld [vmem:[%s0 + $0x28] sm:$0xff]
  %v2014 = vld [vmem:[%s0 + $0x30] sm:$0xff]
  %v2015 = vld [vmem:[%s0 + $0x38] sm:$0xff]
  %v2016 = vld [vmem:[%s0 + $0x40] sm:$0xff]
  %v2017 = vld [vmem:[%s0 + $0x48] sm:$0xff]
  %v2018 = vld [vmem:[%s0 + $0x50] sm:$0xff]
  %v2019 = vld [vmem:[%s0 + $0x58] sm:$0xff]
  %v2032 = vunpack.c.l.b16 %v2008
  %v2033 = vunpack.c.h.b16 %v2008
  %v2034 = vunpack.c.l.b16 %v2009
  %v2035 = vunpack.c.h.b16 %v2009
  %v2036 = vunpack.c.l.b16 %v2010
  %v2037 = vunpack.c.h.b16 %v2010
  %v2038 = vunpack.c.l.b16 %v2011
  %v2039 = vunpack.c.h.b16 %v2011
  %v2040 = vunpack.c.l.b16 %v2012
  %v2041 = vunpack.c.h.b16 %v2012
  %v2042 = vunpack.c.l.b16 %v2013
  %v2043 = vunpack.c.h.b16 %v2013
  %v2044 = vunpack.c.l.b16 %v2014
  %v2045 = vunpack.c.h.b16 %v2014
  %v2046 = vunpack.c.l.b16 %v2015
  %v2047 = vunpack.c.h.b16 %v2015
  %v2048 = vunpack.c.l.b16 %v2016
  %v2049 = vunpack.c.h.b16 %v2016
  %v2050 = vunpack.c.l.b16 %v2017
  %v2051 = vunpack.c.h.b16 %v2017
  %v2052 = vunpack.c.l.b16 %v2018
  %v2053 = vunpack.c.h.b16 %v2018
  %v2054 = vunpack.c.l.b16 %v2019
  %v2055 = vunpack.c.h.b16 %v2019
  %v2056 = vpack.c.b16 %v2036, %v2032
  %v2057 = vpack.c.b16 %v2037, %v2033
  %v2058 = vpack.c.b16 %v2038, %v2034
  %v2059 = vpack.c.b16 %v2039, %v2035
  %v2060 = vpack.c.b16 %v2044, %v2040
  %v2061 = vpack.c.b16 %v2045, %v2041
  %v2062 = vpack.c.b16 %v2046, %v2042
  %v2063 = vpack.c.b16 %v2047, %v2043
  %v2064 = vpack.c.b16 %v2052, %v2048
  %v2065 = vpack.c.b16 %v2053, %v2049
  %v2066 = vpack.c.b16 %v2054, %v2050
  %v2067 = vpack.c.b16 %v2055, %v2051
  %2068 = vrot.lane.b32.xlu0 %v2056, 65
  %v2069 = vpop.permute.xlu0 %2068
  %2070 = vrot.lane.b32.xlu0 %v2057, 65
  %v2071 = vpop.permute.xlu0 %2070
  %2072 = vrot.lane.b32.xlu0 %v2058, 65
  %v2073 = vpop.permute.xlu0 %2072
  %2074 = vrot.lane.b32.xlu0 %v2059, 65
  %v2075 = vpop.permute.xlu0 %2074
  %2076 = vrot.lane.b32.xlu0 %v2060, 65
  %v2077 = vpop.permute.xlu0 %2076
  %2078 = vrot.lane.b32.xlu0 %v2061, 65
  %v2079 = vpop.permute.xlu0 %2078
  %2080 = vrot.lane.b32.xlu0 %v2062, 65
  %v2081 = vpop.permute.xlu0 %2080
  %2082 = vrot.lane.b32.xlu0 %v2063, 65
  %v2083 = vpop.permute.xlu0 %2082
  %2084 = vrot.lane.b32.xlu0 %v2064, 65
  %v2085 = vpop.permute.xlu0 %2084
  %2086 = vrot.lane.b32.xlu0 %v2065, 65
  %v2087 = vpop.permute.xlu0 %2086
  %2088 = vrot.lane.b32.xlu0 %v2066, 65
  %v2089 = vpop.permute.xlu0 %2088
  %2090 = vrot.lane.b32.xlu0 %v2067, 65
  %v2091 = vpop.permute.xlu0 %2090
  %vm2092 = vcmask 531456
  %v2093 = vsel %vm2092, %v2069, %v2071
  %v2094 = vsel %vm2092, %v2071, %v2073
  %v2095 = vsel %vm2092, %v2073, %v2075
  %v2096 = vsel %vm2092, %v2077, %v2079
  %v2097 = vsel %vm2092, %v2079, %v2081
  %v2098 = vsel %vm2092, %v2081, %v2083
  %v2099 = vsel %vm2092, %v2085, %v2087
  %v2100 = vsel %vm2092, %v2087, %v2089
  %v2101 = vsel %vm2092, %v2089, %v2091
  %2111 = vst [vmem:[#allocation2 + $0x510] sm:$0xff] %v2093
  %2112 = vst [vmem:[#allocation2 + $0x518] sm:$0xff] %v2094
  %2113 = vst [vmem:[#allocation2 + $0x520] sm:$0xff] %v2095
  %2114 = vst [vmem:[#allocation2 + $0x528] sm:$0xff] %v2096
  %2115 = vst [vmem:[#allocation2 + $0x530] sm:$0xff] %v2097
  %2116 = vst [vmem:[#allocation2 + $0x538] sm:$0xff] %v2098
  %2117 = vst [vmem:[#allocation2 + $0x540] sm:$0xff] %v2099
  %2118 = vst [vmem:[#allocation2 + $0x548] sm:$0xff] %v2100
  %2119 = vst [vmem:[#allocation2 + $0x550] sm:$0xff] %v2101
  %v2120 = vld [vmem:[%s0] sm:$0xff]
  %v2121 = vld [vmem:[%s0 + $0x8] sm:$0xff]
  %v2122 = vld [vmem:[%s0 + $0x10] sm:$0xff]
  %v2123 = vld [vmem:[%s0 + $0x18] sm:$0xff]
  %v2124 = vld [vmem:[%s0 + $0x20] sm:$0xff]
  %v2125 = vld [vmem:[%s0 + $0x28] sm:$0xff]
  %v2126 = vld [vmem:[%s0 + $0x30] sm:$0xff]
  %v2127 = vld [vmem:[%s0 + $0x38] sm:$0xff]
  %v2128 = vld [vmem:[%s0 + $0x40] sm:$0xff]
  %v2129 = vld [vmem:[%s0 + $0x48] sm:$0xff]
  %v2130 = vld [vmem:[%s0 + $0x50] sm:$0xff]
  %v2131 = vld [vmem:[%s0 + $0x58] sm:$0xff]
  %v2144 = vunpack.c.l.b16 %v2120
  %v2145 = vunpack.c.h.b16 %v2120
  %v2146 = vunpack.c.l.b16 %v2121
  %v2147 = vunpack.c.h.b16 %v2121
  %v2148 = vunpack.c.l.b16 %v2122
  %v2149 = vunpack.c.h.b16 %v2122
  %v2150 = vunpack.c.l.b16 %v2123
  %v2151 = vunpack.c.h.b16 %v2123
  %v2152 = vunpack.c.l.b16 %v2124
  %v2153 = vunpack.c.h.b16 %v2124
  %v2154 = vunpack.c.l.b16 %v2125
  %v2155 = vunpack.c.h.b16 %v2125
  %v2156 = vunpack.c.l.b16 %v2126
  %v2157 = vunpack.c.h.b16 %v2126
  %v2158 = vunpack.c.l.b16 %v2127
  %v2159 = vunpack.c.h.b16 %v2127
  %v2160 = vunpack.c.l.b16 %v2128
  %v2161 = vunpack.c.h.b16 %v2128
  %v2162 = vunpack.c.l.b16 %v2129
  %v2163 = vunpack.c.h.b16 %v2129
  %v2164 = vunpack.c.l.b16 %v2130
  %v2165 = vunpack.c.h.b16 %v2130
  %v2166 = vunpack.c.l.b16 %v2131
  %v2167 = vunpack.c.h.b16 %v2131
  %v2168 = vpack.c.b16 %v2148, %v2144
  %v2169 = vpack.c.b16 %v2149, %v2145
  %v2170 = vpack.c.b16 %v2150, %v2146
  %v2171 = vpack.c.b16 %v2151, %v2147
  %v2172 = vpack.c.b16 %v2156, %v2152
  %v2173 = vpack.c.b16 %v2157, %v2153
  %v2174 = vpack.c.b16 %v2158, %v2154
  %v2175 = vpack.c.b16 %v2159, %v2155
  %v2176 = vpack.c.b16 %v2164, %v2160
  %v2177 = vpack.c.b16 %v2165, %v2161
  %v2178 = vpack.c.b16 %v2166, %v2162
  %v2179 = vpack.c.b16 %v2167, %v2163
  %2180 = vrot.lane.b32.xlu0 %v2168, 64
  %v2181 = vpop.permute.xlu0 %2180
  %2182 = vrot.lane.b32.xlu0 %v2169, 64
  %v2183 = vpop.permute.xlu0 %2182
  %2184 = vrot.lane.b32.xlu0 %v2170, 64
  %v2185 = vpop.permute.xlu0 %2184
  %2186 = vrot.lane.b32.xlu0 %v2171, 64
  %v2187 = vpop.permute.xlu0 %2186
  %2188 = vrot.lane.b32.xlu0 %v2172, 64
  %v2189 = vpop.permute.xlu0 %2188
  %2190 = vrot.lane.b32.xlu0 %v2173, 64
  %v2191 = vpop.permute.xlu0 %2190
  %2192 = vrot.lane.b32.xlu0 %v2174, 64
  %v2193 = vpop.permute.xlu0 %2192
  %2194 = vrot.lane.b32.xlu0 %v2175, 64
  %v2195 = vpop.permute.xlu0 %2194
  %2196 = vrot.lane.b32.xlu0 %v2176, 64
  %v2197 = vpop.permute.xlu0 %2196
  %2198 = vrot.lane.b32.xlu0 %v2177, 64
  %v2199 = vpop.permute.xlu0 %2198
  %2200 = vrot.lane.b32.xlu0 %v2178, 64
  %v2201 = vpop.permute.xlu0 %2200
  %2202 = vrot.lane.b32.xlu0 %v2179, 64
  %v2203 = vpop.permute.xlu0 %2202
  %vm2204 = vcmask 523264
  %v2205 = vsel %vm2204, %v2181, %v2183
  %v2206 = vsel %vm2204, %v2183, %v2185
  %v2207 = vsel %vm2204, %v2185, %v2187
  %v2208 = vsel %vm2204, %v2189, %v2191
  %v2209 = vsel %vm2204, %v2191, %v2193
  %v2210 = vsel %vm2204, %v2193, %v2195
  %v2211 = vsel %vm2204, %v2197, %v2199
  %v2212 = vsel %vm2204, %v2199, %v2201
  %v2213 = vsel %vm2204, %v2201, %v2203
  %2223 = vst [vmem:[#allocation2 + $0x558] sm:$0xff] %v2205
  %2224 = vst [vmem:[#allocation2 + $0x560] sm:$0xff] %v2206
  %2225 = vst [vmem:[#allocation2 + $0x568] sm:$0xff] %v2207
  %2226 = vst [vmem:[#allocation2 + $0x570] sm:$0xff] %v2208
  %2227 = vst [vmem:[#allocation2 + $0x578] sm:$0xff] %v2209
  %2228 = vst [vmem:[#allocation2 + $0x580] sm:$0xff] %v2210
  %2229 = vst [vmem:[#allocation2 + $0x588] sm:$0xff] %v2211
  %2230 = vst [vmem:[#allocation2 + $0x590] sm:$0xff] %v2212
  %2231 = vst [vmem:[#allocation2 + $0x598] sm:$0xff] %v2213
  %v2232 = vld [vmem:[%s0] sm:$0xff]
  %v2233 = vld [vmem:[%s0 + $0x8] sm:$0xff]
  %v2234 = vld [vmem:[%s0 + $0x10] sm:$0xff]
  %v2235 = vld [vmem:[%s0 + $0x18] sm:$0xff]
  %v2236 = vld [vmem:[%s0 + $0x20] sm:$0xff]
  %v2237 = vld [vmem:[%s0 + $0x28] sm:$0xff]
  %v2238 = vld [vmem:[%s0 + $0x30] sm:$0xff]
  %v2239 = vld [vmem:[%s0 + $0x38] sm:$0xff]
  %v2240 = vld [vmem:[%s0 + $0x40] sm:$0xff]
  %v2241 = vld [vmem:[%s0 + $0x48] sm:$0xff]
  %v2242 = vld [vmem:[%s0 + $0x50] sm:$0xff]
  %v2243 = vld [vmem:[%s0 + $0x58] sm:$0xff]
  %v2256 = vunpack.c.l.b16 %v2232
  %v2257 = vunpack.c.h.b16 %v2232
  %v2258 = vunpack.c.l.b16 %v2233
  %v2259 = vunpack.c.h.b16 %v2233
  %v2260 = vunpack.c.l.b16 %v2234
  %v2261 = vunpack.c.h.b16 %v2234
  %v2262 = vunpack.c.l.b16 %v2235
  %v2263 = vunpack.c.h.b16 %v2235
  %v2264 = vunpack.c.l.b16 %v2236
  %v2265 = vunpack.c.h.b16 %v2236
  %v2266 = vunpack.c.l.b16 %v2237
  %v2267 = vunpack.c.h.b16 %v2237
  %v2268 = vunpack.c.l.b16 %v2238
  %v2269 = vunpack.c.h.b16 %v2238
  %v2270 = vunpack.c.l.b16 %v2239
  %v2271 = vunpack.c.h.b16 %v2239
  %v2272 = vunpack.c.l.b16 %v2240
  %v2273 = vunpack.c.h.b16 %v2240
  %v2274 = vunpack.c.l.b16 %v2241
  %v2275 = vunpack.c.h.b16 %v2241
  %v2276 = vunpack.c.l.b16 %v2242
  %v2277 = vunpack.c.h.b16 %v2242
  %v2278 = vunpack.c.l.b16 %v2243
  %v2279 = vunpack.c.h.b16 %v2243
  %v2280 = vpack.c.b16 %v2260, %v2256
  %v2281 = vpack.c.b16 %v2261, %v2257
  %v2282 = vpack.c.b16 %v2262, %v2258
  %v2283 = vpack.c.b16 %v2263, %v2259
  %v2284 = vpack.c.b16 %v2268, %v2264
  %v2285 = vpack.c.b16 %v2269, %v2265
  %v2286 = vpack.c.b16 %v2270, %v2266
  %v2287 = vpack.c.b16 %v2271, %v2267
  %v2288 = vpack.c.b16 %v2276, %v2272
  %v2289 = vpack.c.b16 %v2277, %v2273
  %v2290 = vpack.c.b16 %v2278, %v2274
  %v2291 = vpack.c.b16 %v2279, %v2275
  %2292 = vrot.lane.b32.xlu0 %v2280, 48
  %v2293 = vpop.permute.xlu0 %2292
  %2294 = vrot.lane.b32.xlu0 %v2281, 48
  %v2295 = vpop.permute.xlu0 %2294
  %2296 = vrot.lane.b32.xlu0 %v2282, 48
  %v2297 = vpop.permute.xlu0 %2296
  %2298 = vrot.lane.b32.xlu0 %v2283, 48
  %v2299 = vpop.permute.xlu0 %2298
  %2300 = vrot.lane.b32.xlu0 %v2284, 48
  %v2301 = vpop.permute.xlu0 %2300
  %2302 = vrot.lane.b32.xlu0 %v2285, 48
  %v2303 = vpop.permute.xlu0 %2302
  %2304 = vrot.lane.b32.xlu0 %v2286, 48
  %v2305 = vpop.permute.xlu0 %2304
  %2306 = vrot.lane.b32.xlu0 %v2287, 48
  %v2307 = vpop.permute.xlu0 %2306
  %2308 = vrot.lane.b32.xlu0 %v2288, 48
  %v2309 = vpop.permute.xlu0 %2308
  %2310 = vrot.lane.b32.xlu0 %v2289, 48
  %v2311 = vpop.permute.xlu0 %2310
  %2312 = vrot.lane.b32.xlu0 %v2290, 48
  %v2313 = vpop.permute.xlu0 %2312
  %2314 = vrot.lane.b32.xlu0 %v2291, 48
  %v2315 = vpop.permute.xlu0 %2314
  %vm2316 = vcmask 392192
  %v2317 = vsel %vm2316, %v2293, %v2295
  %v2318 = vsel %vm2316, %v2295, %v2297
  %v2319 = vsel %vm2316, %v2297, %v2299
  %v2320 = vsel %vm2316, %v2301, %v2303
  %v2321 = vsel %vm2316, %v2303, %v2305
  %v2322 = vsel %vm2316, %v2305, %v2307
  %v2323 = vsel %vm2316, %v2309, %v2311
  %v2324 = vsel %vm2316, %v2311, %v2313
  %v2325 = vsel %vm2316, %v2313, %v2315
  %2335 = vst [vmem:[#allocation2 + $0x5a0] sm:$0xff] %v2317
  %2336 = vst [vmem:[#allocation2 + $0x5a8] sm:$0xff] %v2318
  %2337 = vst [vmem:[#allocation2 + $0x5b0] sm:$0xff] %v2319
  %2338 = vst [vmem:[#allocation2 + $0x5b8] sm:$0xff] %v2320
  %2339 = vst [vmem:[#allocation2 + $0x5c0] sm:$0xff] %v2321
  %2340 = vst [vmem:[#allocation2 + $0x5c8] sm:$0xff] %v2322
  %2341 = vst [vmem:[#allocation2 + $0x5d0] sm:$0xff] %v2323
  %2342 = vst [vmem:[#allocation2 + $0x5d8] sm:$0xff] %v2324
  %2343 = vst [vmem:[#allocation2 + $0x5e0] sm:$0xff] %v2325
  %v2344 = vld [vmem:[%s0] sm:$0xff]
  %v2345 = vld [vmem:[%s0 + $0x8] sm:$0xff]
  %v2346 = vld [vmem:[%s0 + $0x10] sm:$0xff]
  %v2347 = vld [vmem:[%s0 + $0x18] sm:$0xff]
  %v2348 = vld [vmem:[%s0 + $0x20] sm:$0xff]
  %v2349 = vld [vmem:[%s0 + $0x28] sm:$0xff]
  %v2350 = vld [vmem:[%s0 + $0x30] sm:$0xff]
  %v2351 = vld [vmem:[%s0 + $0x38] sm:$0xff]
  %v2352 = vld [vmem:[%s0 + $0x40] sm:$0xff]
  %v2353 = vld [vmem:[%s0 + $0x48] sm:$0xff]
  %v2354 = vld [vmem:[%s0 + $0x50] sm:$0xff]
  %v2355 = vld [vmem:[%s0 + $0x58] sm:$0xff]
  %v2368 = vunpack.c.l.b16 %v2344
  %v2369 = vunpack.c.h.b16 %v2344
  %v2370 = vunpack.c.l.b16 %v2345
  %v2371 = vunpack.c.h.b16 %v2345
  %v2372 = vunpack.c.l.b16 %v2346
  %v2373 = vunpack.c.h.b16 %v2346
  %v2374 = vunpack.c.l.b16 %v2347
  %v2375 = vunpack.c.h.b16 %v2347
  %v2376 = vunpack.c.l.b16 %v2348
  %v2377 = vunpack.c.h.b16 %v2348
  %v2378 = vunpack.c.l.b16 %v2349
  %v2379 = vunpack.c.h.b16 %v2349
  %v2380 = vunpack.c.l.b16 %v2350
  %v2381 = vunpack.c.h.b16 %v2350
  %v2382 = vunpack.c.l.b16 %v2351
  %v2383 = vunpack.c.h.b16 %v2351
  %v2384 = vunpack.c.l.b16 %v2352
  %v2385 = vunpack.c.h.b16 %v2352
  %v2386 = vunpack.c.l.b16 %v2353
  %v2387 = vunpack.c.h.b16 %v2353
  %v2388 = vunpack.c.l.b16 %v2354
  %v2389 = vunpack.c.h.b16 %v2354
  %v2390 = vunpack.c.l.b16 %v2355
  %v2391 = vunpack.c.h.b16 %v2355
  %v2392 = vpack.c.b16 %v2372, %v2368
  %v2393 = vpack.c.b16 %v2373, %v2369
  %v2394 = vpack.c.b16 %v2374, %v2370
  %v2395 = vpack.c.b16 %v2375, %v2371
  %v2396 = vpack.c.b16 %v2380, %v2376
  %v2397 = vpack.c.b16 %v2381, %v2377
  %v2398 = vpack.c.b16 %v2382, %v2378
  %v2399 = vpack.c.b16 %v2383, %v2379
  %v2400 = vpack.c.b16 %v2388, %v2384
  %v2401 = vpack.c.b16 %v2389, %v2385
  %v2402 = vpack.c.b16 %v2390, %v2386
  %v2403 = vpack.c.b16 %v2391, %v2387
  %2404 = vrot.lane.b32.xlu0 %v2392, 47
  %v2405 = vpop.permute.xlu0 %2404
  %2406 = vrot.lane.b32.xlu0 %v2393, 47
  %v2407 = vpop.permute.xlu0 %2406
  %2408 = vrot.lane.b32.xlu0 %v2394, 47
  %v2409 = vpop.permute.xlu0 %2408
  %2410 = vrot.lane.b32.xlu0 %v2395, 47
  %v2411 = vpop.permute.xlu0 %2410
  %2412 = vrot.lane.b32.xlu0 %v2396, 47
  %v2413 = vpop.permute.xlu0 %2412
  %2414 = vrot.lane.b32.xlu0 %v2397, 47
  %v2415 = vpop.permute.xlu0 %2414
  %2416 = vrot.lane.b32.xlu0 %v2398, 47
  %v2417 = vpop.permute.xlu0 %2416
  %2418 = vrot.lane.b32.xlu0 %v2399, 47
  %v2419 = vpop.permute.xlu0 %2418
  %2420 = vrot.lane.b32.xlu0 %v2400, 47
  %v2421 = vpop.permute.xlu0 %2420
  %2422 = vrot.lane.b32.xlu0 %v2401, 47
  %v2423 = vpop.permute.xlu0 %2422
  %2424 = vrot.lane.b32.xlu0 %v2402, 47
  %v2425 = vpop.permute.xlu0 %2424
  %2426 = vrot.lane.b32.xlu0 %v2403, 47
  %v2427 = vpop.permute.xlu0 %2426
  %vm2428 = vcmask 384000
  %v2429 = vsel %vm2428, %v2405, %v2407
  %v2430 = vsel %vm2428, %v2407, %v2409
  %v2431 = vsel %vm2428, %v2409, %v2411
  %v2432 = vsel %vm2428, %v2413, %v2415
  %v2433 = vsel %vm2428, %v2415, %v2417
  %v2434 = vsel %vm2428, %v2417, %v2419
  %v2435 = vsel %vm2428, %v2421, %v2423
  %v2436 = vsel %vm2428, %v2423, %v2425
  %v2437 = vsel %vm2428, %v2425, %v2427
  %2447 = vst [vmem:[#allocation2 + $0x5e8] sm:$0xff] %v2429
  %2448 = vst [vmem:[#allocation2 + $0x5f0] sm:$0xff] %v2430
  %2449 = vst [vmem:[#allocation2 + $0x5f8] sm:$0xff] %v2431
  %2450 = vst [vmem:[#allocation2 + $0x600] sm:$0xff] %v2432
  %2451 = vst [vmem:[#allocation2 + $0x608] sm:$0xff] %v2433
  %2452 = vst [vmem:[#allocation2 + $0x610] sm:$0xff] %v2434
  %2453 = vst [vmem:[#allocation2 + $0x618] sm:$0xff] %v2435
  %2454 = vst [vmem:[#allocation2 + $0x620] sm:$0xff] %v2436
  %2455 = vst [vmem:[#allocation2 + $0x628] sm:$0xff] %v2437
  %v2456 = vld [vmem:[%s0] sm:$0xff]
  %v2457 = vld [vmem:[%s0 + $0x8] sm:$0xff]
  %v2458 = vld [vmem:[%s0 + $0x10] sm:$0xff]
  %v2459 = vld [vmem:[%s0 + $0x18] sm:$0xff]
  %v2460 = vld [vmem:[%s0 + $0x20] sm:$0xff]
  %v2461 = vld [vmem:[%s0 + $0x28] sm:$0xff]
  %v2462 = vld [vmem:[%s0 + $0x30] sm:$0xff]
  %v2463 = vld [vmem:[%s0 + $0x38] sm:$0xff]
  %v2464 = vld [vmem:[%s0 + $0x40] sm:$0xff]
  %v2465 = vld [vmem:[%s0 + $0x48] sm:$0xff]
  %v2466 = vld [vmem:[%s0 + $0x50] sm:$0xff]
  %v2467 = vld [vmem:[%s0 + $0x58] sm:$0xff]
  %v2480 = vunpack.c.l.b16 %v2456
  %v2481 = vunpack.c.h.b16 %v2456
  %v2482 = vunpack.c.l.b16 %v2457
  %v2483 = vunpack.c.h.b16 %v2457
  %v2484 = vunpack.c.l.b16 %v2458
  %v2485 = vunpack.c.h.b16 %v2458
  %v2486 = vunpack.c.l.b16 %v2459
  %v2487 = vunpack.c.h.b16 %v2459
  %v2488 = vunpack.c.l.b16 %v2460
  %v2489 = vunpack.c.h.b16 %v2460
  %v2490 = vunpack.c.l.b16 %v2461
  %v2491 = vunpack.c.h.b16 %v2461
  %v2492 = vunpack.c.l.b16 %v2462
  %v2493 = vunpack.c.h.b16 %v2462
  %v2494 = vunpack.c.l.b16 %v2463
  %v2495 = vunpack.c.h.b16 %v2463
  %v2496 = vunpack.c.l.b16 %v2464
  %v2497 = vunpack.c.h.b16 %v2464
  %v2498 = vunpack.c.l.b16 %v2465
  %v2499 = vunpack.c.h.b16 %v2465
  %v2500 = vunpack.c.l.b16 %v2466
  %v2501 = vunpack.c.h.b16 %v2466
  %v2502 = vunpack.c.l.b16 %v2467
  %v2503 = vunpack.c.h.b16 %v2467
  %v2504 = vpack.c.b16 %v2484, %v2480
  %v2505 = vpack.c.b16 %v2485, %v2481
  %v2506 = vpack.c.b16 %v2486, %v2482
  %v2507 = vpack.c.b16 %v2487, %v2483
  %v2508 = vpack.c.b16 %v2492, %v2488
  %v2509 = vpack.c.b16 %v2493, %v2489
  %v2510 = vpack.c.b16 %v2494, %v2490
  %v2511 = vpack.c.b16 %v2495, %v2491
  %v2512 = vpack.c.b16 %v2500, %v2496
  %v2513 = vpack.c.b16 %v2501, %v2497
  %v2514 = vpack.c.b16 %v2502, %v2498
  %v2515 = vpack.c.b16 %v2503, %v2499
  %2516 = vrot.lane.b32.xlu0 %v2504, 46
  %v2517 = vpop.permute.xlu0 %2516
  %2518 = vrot.lane.b32.xlu0 %v2505, 46
  %v2519 = vpop.permute.xlu0 %2518
  %2520 = vrot.lane.b32.xlu0 %v2506, 46
  %v2521 = vpop.permute.xlu0 %2520
  %2522 = vrot.lane.b32.xlu0 %v2507, 46
  %v2523 = vpop.permute.xlu0 %2522
  %2524 = vrot.lane.b32.xlu0 %v2508, 46
  %v2525 = vpop.permute.xlu0 %2524
  %2526 = vrot.lane.b32.xlu0 %v2509, 46
  %v2527 = vpop.permute.xlu0 %2526
  %2528 = vrot.lane.b32.xlu0 %v2510, 46
  %v2529 = vpop.permute.xlu0 %2528
  %2530 = vrot.lane.b32.xlu0 %v2511, 46
  %v2531 = vpop.permute.xlu0 %2530
  %2532 = vrot.lane.b32.xlu0 %v2512, 46
  %v2533 = vpop.permute.xlu0 %2532
  %2534 = vrot.lane.b32.xlu0 %v2513, 46
  %v2535 = vpop.permute.xlu0 %2534
  %2536 = vrot.lane.b32.xlu0 %v2514, 46
  %v2537 = vpop.permute.xlu0 %2536
  %2538 = vrot.lane.b32.xlu0 %v2515, 46
  %v2539 = vpop.permute.xlu0 %2538
  %vm2540 = vcmask 375808
  %v2541 = vsel %vm2540, %v2517, %v2519
  %v2542 = vsel %vm2540, %v2519, %v2521
  %v2543 = vsel %vm2540, %v2521, %v2523
  %v2544 = vsel %vm2540, %v2525, %v2527
  %v2545 = vsel %vm2540, %v2527, %v2529
  %v2546 = vsel %vm2540, %v2529, %v2531
  %v2547 = vsel %vm2540, %v2533, %v2535
  %v2548 = vsel %vm2540, %v2535, %v2537
  %v2549 = vsel %vm2540, %v2537, %v2539
  %2559 = vst [vmem:[#allocation2 + $0x630] sm:$0xff] %v2541
  %2560 = vst [vmem:[#allocation2 + $0x638] sm:$0xff] %v2542
  %2561 = vst [vmem:[#allocation2 + $0x640] sm:$0xff] %v2543
  %2562 = vst [vmem:[#allocation2 + $0x648] sm:$0xff] %v2544
  %2563 = vst [vmem:[#allocation2 + $0x650] sm:$0xff] %v2545
  %2564 = vst [vmem:[#allocation2 + $0x658] sm:$0xff] %v2546
  %2565 = vst [vmem:[#allocation2 + $0x660] sm:$0xff] %v2547
  %2566 = vst [vmem:[#allocation2 + $0x668] sm:$0xff] %v2548
  %2567 = vst [vmem:[#allocation2 + $0x670] sm:$0xff] %v2549
  %v2568 = vld [vmem:[%s0] sm:$0xff]
  %v2569 = vld [vmem:[%s0 + $0x8] sm:$0xff]
  %v2570 = vld [vmem:[%s0 + $0x10] sm:$0xff]
  %v2571 = vld [vmem:[%s0 + $0x18] sm:$0xff]
  %v2572 = vld [vmem:[%s0 + $0x20] sm:$0xff]
  %v2573 = vld [vmem:[%s0 + $0x28] sm:$0xff]
  %v2574 = vld [vmem:[%s0 + $0x30] sm:$0xff]
  %v2575 = vld [vmem:[%s0 + $0x38] sm:$0xff]
  %v2576 = vld [vmem:[%s0 + $0x40] sm:$0xff]
  %v2577 = vld [vmem:[%s0 + $0x48] sm:$0xff]
  %v2578 = vld [vmem:[%s0 + $0x50] sm:$0xff]
  %v2579 = vld [vmem:[%s0 + $0x58] sm:$0xff]
  %v2592 = vunpack.c.l.b16 %v2568
  %v2593 = vunpack.c.h.b16 %v2568
  %v2594 = vunpack.c.l.b16 %v2569
  %v2595 = vunpack.c.h.b16 %v2569
  %v2596 = vunpack.c.l.b16 %v2570
  %v2597 = vunpack.c.h.b16 %v2570
  %v2598 = vunpack.c.l.b16 %v2571
  %v2599 = vunpack.c.h.b16 %v2571
  %v2600 = vunpack.c.l.b16 %v2572
  %v2601 = vunpack.c.h.b16 %v2572
  %v2602 = vunpack.c.l.b16 %v2573
  %v2603 = vunpack.c.h.b16 %v2573
  %v2604 = vunpack.c.l.b16 %v2574
  %v2605 = vunpack.c.h.b16 %v2574
  %v2606 = vunpack.c.l.b16 %v2575
  %v2607 = vunpack.c.h.b16 %v2575
  %v2608 = vunpack.c.l.b16 %v2576
  %v2609 = vunpack.c.h.b16 %v2576
  %v2610 = vunpack.c.l.b16 %v2577
  %v2611 = vunpack.c.h.b16 %v2577
  %v2612 = vunpack.c.l.b16 %v2578
  %v2613 = vunpack.c.h.b16 %v2578
  %v2614 = vunpack.c.l.b16 %v2579
  %v2615 = vunpack.c.h.b16 %v2579
  %v2616 = vpack.c.b16 %v2596, %v2592
  %v2617 = vpack.c.b16 %v2597, %v2593
  %v2618 = vpack.c.b16 %v2598, %v2594
  %v2619 = vpack.c.b16 %v2599, %v2595
  %v2620 = vpack.c.b16 %v2604, %v2600
  %v2621 = vpack.c.b16 %v2605, %v2601
  %v2622 = vpack.c.b16 %v2606, %v2602
  %v2623 = vpack.c.b16 %v2607, %v2603
  %v2624 = vpack.c.b16 %v2612, %v2608
  %v2625 = vpack.c.b16 %v2613, %v2609
  %v2626 = vpack.c.b16 %v2614, %v2610
  %v2627 = vpack.c.b16 %v2615, %v2611
  %2628 = vrot.lane.b32.xlu0 %v2616, 45
  %v2629 = vpop.permute.xlu0 %2628
  %2630 = vrot.lane.b32.xlu0 %v2617, 45
  %v2631 = vpop.permute.xlu0 %2630
  %2632 = vrot.lane.b32.xlu0 %v2618, 45
  %v2633 = vpop.permute.xlu0 %2632
  %2634 = vrot.lane.b32.xlu0 %v2619, 45
  %v2635 = vpop.permute.xlu0 %2634
  %2636 = vrot.lane.b32.xlu0 %v2620, 45
  %v2637 = vpop.permute.xlu0 %2636
  %2638 = vrot.lane.b32.xlu0 %v2621, 45
  %v2639 = vpop.permute.xlu0 %2638
  %2640 = vrot.lane.b32.xlu0 %v2622, 45
  %v2641 = vpop.permute.xlu0 %2640
  %2642 = vrot.lane.b32.xlu0 %v2623, 45
  %v2643 = vpop.permute.xlu0 %2642
  %2644 = vrot.lane.b32.xlu0 %v2624, 45
  %v2645 = vpop.permute.xlu0 %2644
  %2646 = vrot.lane.b32.xlu0 %v2625, 45
  %v2647 = vpop.permute.xlu0 %2646
  %2648 = vrot.lane.b32.xlu0 %v2626, 45
  %v2649 = vpop.permute.xlu0 %2648
  %2650 = vrot.lane.b32.xlu0 %v2627, 45
  %v2651 = vpop.permute.xlu0 %2650
  %vm2652 = vcmask 367616
  %v2653 = vsel %vm2652, %v2629, %v2631
  %v2654 = vsel %vm2652, %v2631, %v2633
  %v2655 = vsel %vm2652, %v2633, %v2635
  %v2656 = vsel %vm2652, %v2637, %v2639
  %v2657 = vsel %vm2652, %v2639, %v2641
  %v2658 = vsel %vm2652, %v2641, %v2643
  %v2659 = vsel %vm2652, %v2645, %v2647
  %v2660 = vsel %vm2652, %v2647, %v2649
  %v2661 = vsel %vm2652, %v2649, %v2651
  %2671 = vst [vmem:[#allocation2 + $0x678] sm:$0xff] %v2653
  %2672 = vst [vmem:[#allocation2 + $0x680] sm:$0xff] %v2654
  %2673 = vst [vmem:[#allocation2 + $0x688] sm:$0xff] %v2655
  %2674 = vst [vmem:[#allocation2 + $0x690] sm:$0xff] %v2656
  %2675 = vst [vmem:[#allocation2 + $0x698] sm:$0xff] %v2657
  %2676 = vst [vmem:[#allocation2 + $0x6a0] sm:$0xff] %v2658
  %2677 = vst [vmem:[#allocation2 + $0x6a8] sm:$0xff] %v2659
  %2678 = vst [vmem:[#allocation2 + $0x6b0] sm:$0xff] %v2660
  %2679 = vst [vmem:[#allocation2 + $0x6b8] sm:$0xff] %v2661
  %v2680 = vld [vmem:[%s0] sm:$0xff]
  %v2681 = vld [vmem:[%s0 + $0x8] sm:$0xff]
  %v2682 = vld [vmem:[%s0 + $0x10] sm:$0xff]
  %v2683 = vld [vmem:[%s0 + $0x18] sm:$0xff]
  %v2684 = vld [vmem:[%s0 + $0x20] sm:$0xff]
  %v2685 = vld [vmem:[%s0 + $0x28] sm:$0xff]
  %v2686 = vld [vmem:[%s0 + $0x30] sm:$0xff]
  %v2687 = vld [vmem:[%s0 + $0x38] sm:$0xff]
  %v2688 = vld [vmem:[%s0 + $0x40] sm:$0xff]
  %v2689 = vld [vmem:[%s0 + $0x48] sm:$0xff]
  %v2690 = vld [vmem:[%s0 + $0x50] sm:$0xff]
  %v2691 = vld [vmem:[%s0 + $0x58] sm:$0xff]
  %v2704 = vunpack.c.l.b16 %v2680
  %v2705 = vunpack.c.h.b16 %v2680
  %v2706 = vunpack.c.l.b16 %v2681
  %v2707 = vunpack.c.h.b16 %v2681
  %v2708 = vunpack.c.l.b16 %v2682
  %v2709 = vunpack.c.h.b16 %v2682
  %v2710 = vunpack.c.l.b16 %v2683
  %v2711 = vunpack.c.h.b16 %v2683
  %v2712 = vunpack.c.l.b16 %v2684
  %v2713 = vunpack.c.h.b16 %v2684
  %v2714 = vunpack.c.l.b16 %v2685
  %v2715 = vunpack.c.h.b16 %v2685
  %v2716 = vunpack.c.l.b16 %v2686
  %v2717 = vunpack.c.h.b16 %v2686
  %v2718 = vunpack.c.l.b16 %v2687
  %v2719 = vunpack.c.h.b16 %v2687
  %v2720 = vunpack.c.l.b16 %v2688
  %v2721 = vunpack.c.h.b16 %v2688
  %v2722 = vunpack.c.l.b16 %v2689
  %v2723 = vunpack.c.h.b16 %v2689
  %v2724 = vunpack.c.l.b16 %v2690
  %v2725 = vunpack.c.h.b16 %v2690
  %v2726 = vunpack.c.l.b16 %v2691
  %v2727 = vunpack.c.h.b16 %v2691
  %v2728 = vpack.c.b16 %v2708, %v2704
  %v2729 = vpack.c.b16 %v2709, %v2705
  %v2730 = vpack.c.b16 %v2710, %v2706
  %v2731 = vpack.c.b16 %v2711, %v2707
  %v2732 = vpack.c.b16 %v2716, %v2712
  %v2733 = vpack.c.b16 %v2717, %v2713
  %v2734 = vpack.c.b16 %v2718, %v2714
  %v2735 = vpack.c.b16 %v2719, %v2715
  %v2736 = vpack.c.b16 %v2724, %v2720
  %v2737 = vpack.c.b16 %v2725, %v2721
  %v2738 = vpack.c.b16 %v2726, %v2722
  %v2739 = vpack.c.b16 %v2727, %v2723
  %2740 = vrot.lane.b32.xlu0 %v2728, 44
  %v2741 = vpop.permute.xlu0 %2740
  %2742 = vrot.lane.b32.xlu0 %v2729, 44
  %v2743 = vpop.permute.xlu0 %2742
  %2744 = vrot.lane.b32.xlu0 %v2730, 44
  %v2745 = vpop.permute.xlu0 %2744
  %2746 = vrot.lane.b32.xlu0 %v2731, 44
  %v2747 = vpop.permute.xlu0 %2746
  %2748 = vrot.lane.b32.xlu0 %v2732, 44
  %v2749 = vpop.permute.xlu0 %2748
  %2750 = vrot.lane.b32.xlu0 %v2733, 44
  %v2751 = vpop.permute.xlu0 %2750
  %2752 = vrot.lane.b32.xlu0 %v2734, 44
  %v2753 = vpop.permute.xlu0 %2752
  %2754 = vrot.lane.b32.xlu0 %v2735, 44
  %v2755 = vpop.permute.xlu0 %2754
  %2756 = vrot.lane.b32.xlu0 %v2736, 44
  %v2757 = vpop.permute.xlu0 %2756
  %2758 = vrot.lane.b32.xlu0 %v2737, 44
  %v2759 = vpop.permute.xlu0 %2758
  %2760 = vrot.lane.b32.xlu0 %v2738, 44
  %v2761 = vpop.permute.xlu0 %2760
  %2762 = vrot.lane.b32.xlu0 %v2739, 44
  %v2763 = vpop.permute.xlu0 %2762
  %vm2764 = vcmask 359424
  %v2765 = vsel %vm2764, %v2741, %v2743
  %v2766 = vsel %vm2764, %v2743, %v2745
  %v2767 = vsel %vm2764, %v2745, %v2747
  %v2768 = vsel %vm2764, %v2749, %v2751
  %v2769 = vsel %vm2764, %v2751, %v2753
  %v2770 = vsel %vm2764, %v2753, %v2755
  %v2771 = vsel %vm2764, %v2757, %v2759
  %v2772 = vsel %vm2764, %v2759, %v2761
  %v2773 = vsel %vm2764, %v2761, %v2763
  %2783 = vst [vmem:[#allocation2 + $0x6c0] sm:$0xff] %v2765
  %2784 = vst [vmem:[#allocation2 + $0x6c8] sm:$0xff] %v2766
  %2785 = vst [vmem:[#allocation2 + $0x6d0] sm:$0xff] %v2767
  %2786 = vst [vmem:[#allocation2 + $0x6d8] sm:$0xff] %v2768
  %2787 = vst [vmem:[#allocation2 + $0x6e0] sm:$0xff] %v2769
  %2788 = vst [vmem:[#allocation2 + $0x6e8] sm:$0xff] %v2770
  %2789 = vst [vmem:[#allocation2 + $0x6f0] sm:$0xff] %v2771
  %2790 = vst [vmem:[#allocation2 + $0x6f8] sm:$0xff] %v2772
  %2791 = vst [vmem:[#allocation2 + $0x700] sm:$0xff] %v2773
  %v2792 = vld [vmem:[%s1] sm:$0xff]
  %v2793 = vld [vmem:[%s1 + $0x8] sm:$0xff]
  %v2794 = vld [vmem:[%s1 + $0x10] sm:$0xff]
  %v2795 = vld [vmem:[%s1 + $0x18] sm:$0xff]
  %v2796 = vld [vmem:[%s1 + $0x20] sm:$0xff]
  %v2797 = vld [vmem:[%s1 + $0x28] sm:$0xff]
  %v2798 = vld [vmem:[%s1 + $0x30] sm:$0xff]
  %v2799 = vld [vmem:[%s1 + $0x38] sm:$0xff]
  %v2800 = vld [vmem:[%s1 + $0x40] sm:$0xff]
  %v2801 = vld [vmem:[%s1 + $0x48] sm:$0xff]
  %v2802 = vld [vmem:[%s1 + $0x50] sm:$0xff]
  %v2803 = vld [vmem:[%s1 + $0x58] sm:$0xff]
  %v2804 = vld [vmem:[%s1 + $0x60] sm:$0xff]
  %v2805 = vld [vmem:[%s1 + $0x68] sm:$0xff]
  %v2806 = vld [vmem:[%s1 + $0x70] sm:$0xff]
  %v2807 = vld [vmem:[%s1 + $0x78] sm:$0xff]
  %v2808 = vld [vmem:[%s1 + $0x80] sm:$0xff]
  %v2809 = vld [vmem:[%s1 + $0x88] sm:$0xff]
  %v2810 = vld [vmem:[%s1 + $0x90] sm:$0xff]
  %v2811 = vld [vmem:[%s1 + $0x98] sm:$0xff]
  %v2812 = vld [vmem:[%s1 + $0xa0] sm:$0xff]
  %v2813 = vld [vmem:[%s1 + $0xa8] sm:$0xff]
  %v2814 = vld [vmem:[%s1 + $0xb0] sm:$0xff]
  %v2815 = vld [vmem:[%s1 + $0xb8] sm:$0xff]
  %v2816 = vld [vmem:[%s1 + $0xc0] sm:$0xff]
  %v2817 = vld [vmem:[%s1 + $0xc8] sm:$0xff]
  %v2818 = vld [vmem:[%s1 + $0xd0] sm:$0xff]
  %v2819 = vld [vmem:[%s1 + $0xd8] sm:$0xff]
  %v2820 = vld [vmem:[%s1 + $0xe0] sm:$0xff]
  %v2821 = vld [vmem:[%s1 + $0xe8] sm:$0xff]
  %v2822 = vld [vmem:[%s1 + $0xf0] sm:$0xff]
  %v2823 = vld [vmem:[%s1 + $0xf8] sm:$0xff]
  %v2824 = vld [vmem:[%s1 + $0x100] sm:$0xff]
  %v2825 = vld [vmem:[%s1 + $0x108] sm:$0xff]
  %v2826 = vld [vmem:[%s1 + $0x110] sm:$0xff]
  %v2827 = vld [vmem:[%s1 + $0x118] sm:$0xff]
  %v2828 = vld [vmem:[%s1 + $0x120] sm:$0xff]
  %v2829 = vld [vmem:[%s1 + $0x128] sm:$0xff]
  %v2830 = vld [vmem:[%s1 + $0x130] sm:$0xff]
  %v2831 = vld [vmem:[%s1 + $0x138] sm:$0xff]
  %v2832 = vld [vmem:[%s1 + $0x140] sm:$0xff]
  %v2833 = vld [vmem:[%s1 + $0x148] sm:$0xff]
  %v2834 = vld [vmem:[%s1 + $0x150] sm:$0xff]
  %v2835 = vld [vmem:[%s1 + $0x158] sm:$0xff]
  %v2836 = vld [vmem:[%s1 + $0x160] sm:$0xff]
  %v2837 = vld [vmem:[%s1 + $0x168] sm:$0xff]
  %v2838 = vld [vmem:[%s1 + $0x170] sm:$0xff]
  %v2839 = vld [vmem:[%s1 + $0x178] sm:$0xff]
  %v2840 = vld [vmem:[%s1 + $0x180] sm:$0xff]
  %v2841 = vld [vmem:[%s1 + $0x188] sm:$0xff]
  %v2842 = vld [vmem:[%s1 + $0x190] sm:$0xff]
  %v2843 = vld [vmem:[%s1 + $0x198] sm:$0xff]
  %v2844 = vld [vmem:[%s1 + $0x1a0] sm:$0xff]
  %v2845 = vld [vmem:[%s1 + $0x1a8] sm:$0xff]
  %v2846 = vld [vmem:[%s1 + $0x1b0] sm:$0xff]
  %v2847 = vld [vmem:[%s1 + $0x1b8] sm:$0xff]
  %v2848 = vld [vmem:[%s1 + $0x1c0] sm:$0xff]
  %v2849 = vld [vmem:[%s1 + $0x1c8] sm:$0xff]
  %v2850 = vld [vmem:[%s1 + $0x1d0] sm:$0xff]
  %v2851 = vld [vmem:[%s1 + $0x1d8] sm:$0xff]
  %v2852 = vld [vmem:[#allocation2] sm:$0xff]
  %v2853 = vld [vmem:[#allocation2 + $0x8] sm:$0xff]
  %v2854 = vld [vmem:[#allocation2 + $0x10] sm:$0xff]
  %v2855 = vld [vmem:[#allocation2 + $0x18] sm:$0xff]
  %v2856 = vld [vmem:[#allocation2 + $0x20] sm:$0xff]
  %v2857 = vld [vmem:[#allocation2 + $0x28] sm:$0xff]
  %v2858 = vld [vmem:[#allocation2 + $0x30] sm:$0xff]
  %v2859 = vld [vmem:[#allocation2 + $0x38] sm:$0xff]
  %v2860 = vld [vmem:[#allocation2 + $0x40] sm:$0xff]
  %v2861 = vld [vmem:[#allocation2 + $0x48] sm:$0xff]
  %v2862 = vld [vmem:[#allocation2 + $0x50] sm:$0xff]
  %v2863 = vld [vmem:[#allocation2 + $0x58] sm:$0xff]
  %v2864 = vld [vmem:[#allocation2 + $0x60] sm:$0xff]
  %v2865 = vld [vmem:[#allocation2 + $0x68] sm:$0xff]
  %v2866 = vld [vmem:[#allocation2 + $0x70] sm:$0xff]
  %v2867 = vld [vmem:[#allocation2 + $0x78] sm:$0xff]
  %v2868 = vld [vmem:[#allocation2 + $0x80] sm:$0xff]
  %v2869 = vld [vmem:[#allocation2 + $0x88] sm:$0xff]
  %v2870 = vld [vmem:[#allocation2 + $0x90] sm:$0xff]
  %v2871 = vld [vmem:[#allocation2 + $0x98] sm:$0xff]
  %v2872 = vld [vmem:[#allocation2 + $0xa0] sm:$0xff]
  %v2873 = vld [vmem:[#allocation2 + $0xa8] sm:$0xff]
  %v2874 = vld [vmem:[#allocation2 + $0xb0] sm:$0xff]
  %v2875 = vld [vmem:[#allocation2 + $0xb8] sm:$0xff]
  %v2876 = vld [vmem:[#allocation2 + $0xc0] sm:$0xff]
  %v2877 = vld [vmem:[#allocation2 + $0xc8] sm:$0xff]
  %v2878 = vld [vmem:[#allocation2 + $0xd0] sm:$0xff]
  %v2879 = vld [vmem:[#allocation2 + $0xd8] sm:$0xff]
  %v2880 = vld [vmem:[#allocation2 + $0xe0] sm:$0xff]
  %v2881 = vld [vmem:[#allocation2 + $0xe8] sm:$0xff]
  %v2882 = vld [vmem:[#allocation2 + $0xf0] sm:$0xff]
  %v2883 = vld [vmem:[#allocation2 + $0xf8] sm:$0xff]
  %v2884 = vld [vmem:[#allocation2 + $0x100] sm:$0xff]
  %v2885 = vld [vmem:[#allocation2 + $0x108] sm:$0xff]
  %v2886 = vld [vmem:[#allocation2 + $0x110] sm:$0xff]
  %v2887 = vld [vmem:[#allocation2 + $0x118] sm:$0xff]
  %v2888 = vld [vmem:[#allocation2 + $0x120] sm:$0xff]
  %v2889 = vld [vmem:[#allocation2 + $0x128] sm:$0xff]
  %v2890 = vld [vmem:[#allocation2 + $0x130] sm:$0xff]
  %v2891 = vld [vmem:[#allocation2 + $0x138] sm:$0xff]
  %v2892 = vld [vmem:[#allocation2 + $0x140] sm:$0xff]
  %v2893 = vld [vmem:[#allocation2 + $0x148] sm:$0xff]
  %v2894 = vld [vmem:[#allocation2 + $0x150] sm:$0xff]
  %v2895 = vld [vmem:[#allocation2 + $0x158] sm:$0xff]
  %v2896 = vld [vmem:[#allocation2 + $0x160] sm:$0xff]
  %v2897 = vld [vmem:[#allocation2 + $0x168] sm:$0xff]
  %v2898 = vld [vmem:[#allocation2 + $0x170] sm:$0xff]
  %v2899 = vld [vmem:[#allocation2 + $0x178] sm:$0xff]
  %v2900 = vld [vmem:[#allocation2 + $0x180] sm:$0xff]
  %v2901 = vld [vmem:[#allocation2 + $0x188] sm:$0xff]
  %v2902 = vld [vmem:[#allocation2 + $0x190] sm:$0xff]
  %v2903 = vld [vmem:[#allocation2 + $0x198] sm:$0xff]
  %v2904 = vld [vmem:[#allocation2 + $0x1a0] sm:$0xff]
  %v2905 = vld [vmem:[#allocation2 + $0x1a8] sm:$0xff]
  %v2906 = vld [vmem:[#allocation2 + $0x1b0] sm:$0xff]
  %v2907 = vld [vmem:[#allocation2 + $0x1b8] sm:$0xff]
  %v2908 = vld [vmem:[#allocation2 + $0x1c0] sm:$0xff]
  %v2909 = vld [vmem:[#allocation2 + $0x1c8] sm:$0xff]
  %v2910 = vld [vmem:[#allocation2 + $0x1d0] sm:$0xff]
  %v2911 = vld [vmem:[#allocation2 + $0x1d8] sm:$0xff]
  %v2912 = vld [vmem:[#allocation2 + $0x1e0] sm:$0xff]
  %v2913 = vld [vmem:[#allocation2 + $0x1e8] sm:$0xff]
  %v2914 = vld [vmem:[#allocation2 + $0x1f0] sm:$0xff]
  %v2915 = vld [vmem:[#allocation2 + $0x1f8] sm:$0xff]
  %v2916 = vld [vmem:[#allocation2 + $0x200] sm:$0xff]
  %v2917 = vld [vmem:[#allocation2 + $0x208] sm:$0xff]
  %v2918 = vld [vmem:[#allocation2 + $0x210] sm:$0xff]
  %v2919 = vld [vmem:[#allocation2 + $0x218] sm:$0xff]
  %v2920 = vld [vmem:[#allocation2 + $0x220] sm:$0xff]
  %v2921 = vld [vmem:[#allocation2 + $0x228] sm:$0xff]
  %v2922 = vld [vmem:[#allocation2 + $0x230] sm:$0xff]
  %v2923 = vld [vmem:[#allocation2 + $0x238] sm:$0xff]
  %v2924 = vld [vmem:[#allocation2 + $0x240] sm:$0xff]
  %v2925 = vld [vmem:[#allocation2 + $0x248] sm:$0xff]
  %v2926 = vld [vmem:[#allocation2 + $0x250] sm:$0xff]
  %v2927 = vld [vmem:[#allocation2 + $0x258] sm:$0xff]
  %v2928 = vld [vmem:[#allocation2 + $0x260] sm:$0xff]
  %v2929 = vld [vmem:[#allocation2 + $0x268] sm:$0xff]
  %v2930 = vld [vmem:[#allocation2 + $0x270] sm:$0xff]
  %v2931 = vld [vmem:[#allocation2 + $0x278] sm:$0xff]
  %v2932 = vld [vmem:[#allocation2 + $0x280] sm:$0xff]
  %v2933 = vld [vmem:[#allocation2 + $0x288] sm:$0xff]
  %v2934 = vld [vmem:[#allocation2 + $0x290] sm:$0xff]
  %v2935 = vld [vmem:[#allocation2 + $0x298] sm:$0xff]
  %v2936 = vld [vmem:[#allocation2 + $0x2a0] sm:$0xff]
  %v2937 = vld [vmem:[#allocation2 + $0x2a8] sm:$0xff]
  %v2938 = vld [vmem:[#allocation2 + $0x2b0] sm:$0xff]
  %v2939 = vld [vmem:[#allocation2 + $0x2b8] sm:$0xff]
  %v2940 = vld [vmem:[#allocation2 + $0x2c0] sm:$0xff]
  %v2941 = vld [vmem:[#allocation2 + $0x2c8] sm:$0xff]
  %v2942 = vld [vmem:[#allocation2 + $0x2d0] sm:$0xff]
  %v2943 = vld [vmem:[#allocation2 + $0x2d8] sm:$0xff]
  %v2944 = vld [vmem:[#allocation2 + $0x2e0] sm:$0xff]
  %v2945 = vld [vmem:[#allocation2 + $0x2e8] sm:$0xff]
  %v2946 = vld [vmem:[#allocation2 + $0x2f0] sm:$0xff]
  %v2947 = vld [vmem:[#allocation2 + $0x2f8] sm:$0xff]
  %v2948 = vld [vmem:[#allocation2 + $0x300] sm:$0xff]
  %v2949 = vld [vmem:[#allocation2 + $0x308] sm:$0xff]
  %v2950 = vld [vmem:[#allocation2 + $0x310] sm:$0xff]
  %v2951 = vld [vmem:[#allocation2 + $0x318] sm:$0xff]
  %v2952 = vld [vmem:[#allocation2 + $0x320] sm:$0xff]
  %v2953 = vld [vmem:[#allocation2 + $0x328] sm:$0xff]
  %v2954 = vld [vmem:[#allocation2 + $0x330] sm:$0xff]
  %v2955 = vld [vmem:[#allocation2 + $0x338] sm:$0xff]
  %v2956 = vld [vmem:[#allocation2 + $0x340] sm:$0xff]
  %v2957 = vld [vmem:[#allocation2 + $0x348] sm:$0xff]
  %v2958 = vld [vmem:[#allocation2 + $0x350] sm:$0xff]
  %v2959 = vld [vmem:[#allocation2 + $0x358] sm:$0xff]
  %v2960 = vld [vmem:[#allocation2 + $0x360] sm:$0xff]
  %v2961 = vld [vmem:[#allocation2 + $0x368] sm:$0xff]
  %v2962 = vld [vmem:[#allocation2 + $0x370] sm:$0xff]
  %v2963 = vld [vmem:[#allocation2 + $0x378] sm:$0xff]
  %v2964 = vld [vmem:[#allocation2 + $0x380] sm:$0xff]
  %v2965 = vld [vmem:[#allocation2 + $0x388] sm:$0xff]
  %v2966 = vld [vmem:[#allocation2 + $0x390] sm:$0xff]
  %v2967 = vld [vmem:[#allocation2 + $0x398] sm:$0xff]
  %v2968 = vld [vmem:[#allocation2 + $0x3a0] sm:$0xff]
  %v2969 = vld [vmem:[#allocation2 + $0x3a8] sm:$0xff]
  %v2970 = vld [vmem:[#allocation2 + $0x3b0] sm:$0xff]
  %v2971 = vld [vmem:[#allocation2 + $0x3b8] sm:$0xff]
  %v2972 = vld [vmem:[#allocation2 + $0x3c0] sm:$0xff]
  %v2973 = vld [vmem:[#allocation2 + $0x3c8] sm:$0xff]
  %v2974 = vld [vmem:[#allocation2 + $0x3d0] sm:$0xff]
  %v2975 = vld [vmem:[#allocation2 + $0x3d8] sm:$0xff]
  %v2976 = vld [vmem:[#allocation2 + $0x3e0] sm:$0xff]
  %v2977 = vld [vmem:[#allocation2 + $0x3e8] sm:$0xff]
  %v2978 = vld [vmem:[#allocation2 + $0x3f0] sm:$0xff]
  %v2979 = vld [vmem:[#allocation2 + $0x3f8] sm:$0xff]
  %v2980 = vld [vmem:[#allocation2 + $0x400] sm:$0xff]
  %v2981 = vld [vmem:[#allocation2 + $0x408] sm:$0xff]
  %v2982 = vld [vmem:[#allocation2 + $0x410] sm:$0xff]
  %v2983 = vld [vmem:[#allocation2 + $0x418] sm:$0xff]
  %v2984 = vld [vmem:[#allocation2 + $0x420] sm:$0xff]
  %v2985 = vld [vmem:[#allocation2 + $0x428] sm:$0xff]
  %v2986 = vld [vmem:[#allocation2 + $0x430] sm:$0xff]
  %v2987 = vld [vmem:[#allocation2 + $0x438] sm:$0xff]
  %v2988 = vld [vmem:[#allocation2 + $0x440] sm:$0xff]
  %v2989 = vld [vmem:[#allocation2 + $0x448] sm:$0xff]
  %v2990 = vld [vmem:[#allocation2 + $0x450] sm:$0xff]
  %v2991 = vld [vmem:[#allocation2 + $0x458] sm:$0xff]
  %v2992 = vld [vmem:[#allocation2 + $0x460] sm:$0xff]
  %v2993 = vld [vmem:[#allocation2 + $0x468] sm:$0xff]
  %v2994 = vld [vmem:[#allocation2 + $0x470] sm:$0xff]
  %v2995 = vld [vmem:[#allocation2 + $0x478] sm:$0xff]
  %v2996 = vld [vmem:[#allocation2 + $0x480] sm:$0xff]
  %v2997 = vld [vmem:[#allocation2 + $0x488] sm:$0xff]
  %v2998 = vld [vmem:[#allocation2 + $0x490] sm:$0xff]
  %v2999 = vld [vmem:[#allocation2 + $0x498] sm:$0xff]
  %v3000 = vld [vmem:[#allocation2 + $0x4a0] sm:$0xff]
  %v3001 = vld [vmem:[#allocation2 + $0x4a8] sm:$0xff]
  %v3002 = vld [vmem:[#allocation2 + $0x4b0] sm:$0xff]
  %v3003 = vld [vmem:[#allocation2 + $0x4b8] sm:$0xff]
  %v3004 = vld [vmem:[#allocation2 + $0x4c0] sm:$0xff]
  %v3005 = vld [vmem:[#allocation2 + $0x4c8] sm:$0xff]
  %v3006 = vld [vmem:[#allocation2 + $0x4d0] sm:$0xff]
  %v3007 = vld [vmem:[#allocation2 + $0x4d8] sm:$0xff]
  %v3008 = vld [vmem:[#allocation2 + $0x4e0] sm:$0xff]
  %v3009 = vld [vmem:[#allocation2 + $0x4e8] sm:$0xff]
  %v3010 = vld [vmem:[#allocation2 + $0x4f0] sm:$0xff]
  %v3011 = vld [vmem:[#allocation2 + $0x4f8] sm:$0xff]
  %v3012 = vld [vmem:[#allocation2 + $0x500] sm:$0xff]
  %v3013 = vld [vmem:[#allocation2 + $0x508] sm:$0xff]
  %v3014 = vld [vmem:[#allocation2 + $0x510] sm:$0xff]
  %v3015 = vld [vmem:[#allocation2 + $0x518] sm:$0xff]
  %v3016 = vld [vmem:[#allocation2 + $0x520] sm:$0xff]
  %v3017 = vld [vmem:[#allocation2 + $0x528] sm:$0xff]
  %v3018 = vld [vmem:[#allocation2 + $0x530] sm:$0xff]
  %v3019 = vld [vmem:[#allocation2 + $0x538] sm:$0xff]
  %v3020 = vld [vmem:[#allocation2 + $0x540] sm:$0xff]
  %v3021 = vld [vmem:[#allocation2 + $0x548] sm:$0xff]
  %v3022 = vld [vmem:[#allocation2 + $0x550] sm:$0xff]
  %v3023 = vld [vmem:[#allocation2 + $0x558] sm:$0xff]
  %v3024 = vld [vmem:[#allocation2 + $0x560] sm:$0xff]
  %v3025 = vld [vmem:[#allocation2 + $0x568] sm:$0xff]
  %v3026 = vld [vmem:[#allocation2 + $0x570] sm:$0xff]
  %v3027 = vld [vmem:[#allocation2 + $0x578] sm:$0xff]
  %v3028 = vld [vmem:[#allocation2 + $0x580] sm:$0xff]
  %v3029 = vld [vmem:[#allocation2 + $0x588] sm:$0xff]
  %v3030 = vld [vmem:[#allocation2 + $0x590] sm:$0xff]
  %v3031 = vld [vmem:[#allocation2 + $0x598] sm:$0xff]
  %v3032 = vld [vmem:[#allocation2 + $0x5a0] sm:$0xff]
  %v3033 = vld [vmem:[#allocation2 + $0x5a8] sm:$0xff]
  %v3034 = vld [vmem:[#allocation2 + $0x5b0] sm:$0xff]
  %v3035 = vld [vmem:[#allocation2 + $0x5b8] sm:$0xff]
  %v3036 = vld [vmem:[#allocation2 + $0x5c0] sm:$0xff]
  %v3037 = vld [vmem:[#allocation2 + $0x5c8] sm:$0xff]
  %v3038 = vld [vmem:[#allocation2 + $0x5d0] sm:$0xff]
  %v3039 = vld [vmem:[#allocation2 + $0x5d8] sm:$0xff]
  %v3040 = vld [vmem:[#allocation2 + $0x5e0] sm:$0xff]
  %v3041 = vld [vmem:[#allocation2 + $0x5e8] sm:$0xff]
  %v3042 = vld [vmem:[#allocation2 + $0x5f0] sm:$0xff]
  %v3043 = vld [vmem:[#allocation2 + $0x5f8] sm:$0xff]
  %v3044 = vld [vmem:[#allocation2 + $0x600] sm:$0xff]
  %v3045 = vld [vmem:[#allocation2 + $0x608] sm:$0xff]
  %v3046 = vld [vmem:[#allocation2 + $0x610] sm:$0xff]
  %v3047 = vld [vmem:[#allocation2 + $0x618] sm:$0xff]
  %v3048 = vld [vmem:[#allocation2 + $0x620] sm:$0xff]
  %v3049 = vld [vmem:[#allocation2 + $0x628] sm:$0xff]
  %v3050 = vld [vmem:[#allocation2 + $0x630] sm:$0xff]
  %v3051 = vld [vmem:[#allocation2 + $0x638] sm:$0xff]
  %v3052 = vld [vmem:[#allocation2 + $0x640] sm:$0xff]
  %v3053 = vld [vmem:[#allocation2 + $0x648] sm:$0xff]
  %v3054 = vld [vmem:[#allocation2 + $0x650] sm:$0xff]
  %v3055 = vld [vmem:[#allocation2 + $0x658] sm:$0xff]
  %v3056 = vld [vmem:[#allocation2 + $0x660] sm:$0xff]
  %v3057 = vld [vmem:[#allocation2 + $0x668] sm:$0xff]
  %v3058 = vld [vmem:[#allocation2 + $0x670] sm:$0xff]
  %v3059 = vld [vmem:[#allocation2 + $0x678] sm:$0xff]
  %v3060 = vld [vmem:[#allocation2 + $0x680] sm:$0xff]
  %v3061 = vld [vmem:[#allocation2 + $0x688] sm:$0xff]
  %v3062 = vld [vmem:[#allocation2 + $0x690] sm:$0xff]
  %v3063 = vld [vmem:[#allocation2 + $0x698] sm:$0xff]
  %v3064 = vld [vmem:[#allocation2 + $0x6a0] sm:$0xff]
  %v3065 = vld [vmem:[#allocation2 + $0x6a8] sm:$0xff]
  %v3066 = vld [vmem:[#allocation2 + $0x6b0] sm:$0xff]
  %v3067 = vld [vmem:[#allocation2 + $0x6b8] sm:$0xff]
  %v3068 = vld [vmem:[#allocation2 + $0x6c0] sm:$0xff]
  %v3069 = vld [vmem:[#allocation2 + $0x6c8] sm:$0xff]
  %v3070 = vld [vmem:[#allocation2 + $0x6d0] sm:$0xff]
  %v3071 = vld [vmem:[#allocation2 + $0x6d8] sm:$0xff]
  %v3072 = vld [vmem:[#allocation2 + $0x6e0] sm:$0xff]
  %v3073 = vld [vmem:[#allocation2 + $0x6e8] sm:$0xff]
  %v3074 = vld [vmem:[#allocation2 + $0x6f0] sm:$0xff]
  %v3075 = vld [vmem:[#allocation2 + $0x6f8] sm:$0xff]
  %v3076 = vld [vmem:[#allocation2 + $0x700] sm:$0xff]
  %v3077 = vld [vmem:[%s2] sm:$0xff]
  %v3078 = vld [vmem:[%s2 + $0x8] sm:$0xff]
  %v3079 = vld [vmem:[%s2 + $0x10] sm:$0xff]
  %v3080 = vld [vmem:[%s2 + $0x18] sm:$0xff]
  %v3081 = vld [vmem:[%s2 + $0x20] sm:$0xff]
  %v3082 = vld [vmem:[%s2 + $0x28] sm:$0xff]
  %v3083 = vld [vmem:[%s2 + $0x30] sm:$0xff]
  %v3084 = vld [vmem:[%s2 + $0x38] sm:$0xff]
  %v3085 = vld [vmem:[%s2 + $0x40] sm:$0xff]
  %v3086 = vld [vmem:[%s2 + $0x48] sm:$0xff]
  %v3087 = vld [vmem:[%s2 + $0x50] sm:$0xff]
  %v3088 = vld [vmem:[%s2 + $0x58] sm:$0xff]
  %3090 = vset.pattern.permute.xlu0 0
  %3091 = vperm.xlu0 %3090, %v3077
  %v3092 = vpop.permute.xlu0 %3091
  %3095 = vset.pattern.permute.xlu0 0
  %3096 = vperm.xlu0 %3095, %v3078
  %v3097 = vpop.permute.xlu0 %3096
  %3100 = vset.pattern.permute.xlu0 0
  %3101 = vperm.xlu0 %3100, %v3079
  %v3102 = vpop.permute.xlu0 %3101
  %3105 = vset.pattern.permute.xlu0 0
  %3106 = vperm.xlu0 %3105, %v3080
  %v3107 = vpop.permute.xlu0 %3106
  %3110 = vset.pattern.permute.xlu0 0
  %3111 = vperm.xlu0 %3110, %v3081
  %v3112 = vpop.permute.xlu0 %3111
  %3115 = vset.pattern.permute.xlu0 0
  %3116 = vperm.xlu0 %3115, %v3082
  %v3117 = vpop.permute.xlu0 %3116
  %3120 = vset.pattern.permute.xlu0 0
  %3121 = vperm.xlu0 %3120, %v3083
  %v3122 = vpop.permute.xlu0 %3121
  %3125 = vset.pattern.permute.xlu0 0
  %3126 = vperm.xlu0 %3125, %v3084
  %v3127 = vpop.permute.xlu0 %3126
  %3130 = vset.pattern.permute.xlu0 0
  %3131 = vperm.xlu0 %3130, %v3085
  %v3132 = vpop.permute.xlu0 %3131
  %3135 = vset.pattern.permute.xlu0 0
  %3136 = vperm.xlu0 %3135, %v3086
  %v3137 = vpop.permute.xlu0 %3136
  %3140 = vset.pattern.permute.xlu0 0
  %3141 = vperm.xlu0 %3140, %v3087
  %v3142 = vpop.permute.xlu0 %3141
  %3145 = vset.pattern.permute.xlu0 0
  %3146 = vperm.xlu0 %3145, %v3088
  %v3147 = vpop.permute.xlu0 %3146
  %v3209 = vunpack.c.l.b16 %v2792
  %v3210 = vunpack.c.h.b16 %v2792
  %v3211 = vunpack.c.l.b16 %v2793
  %v3212 = vunpack.c.h.b16 %v2793
  %v3213 = vunpack.c.l.b16 %v2794
  %v3214 = vunpack.c.h.b16 %v2794
  %v3215 = vunpack.c.l.b16 %v2795
  %v3216 = vunpack.c.h.b16 %v2795
  %v3217 = vunpack.c.l.b16 %v2796
  %v3218 = vunpack.c.h.b16 %v2796
  %v3219 = vunpack.c.l.b16 %v2797
  %v3220 = vunpack.c.h.b16 %v2797
  %v3221 = vunpack.c.l.b16 %v2798
  %v3222 = vunpack.c.h.b16 %v2798
  %v3223 = vunpack.c.l.b16 %v2799
  %v3224 = vunpack.c.h.b16 %v2799
  %v3225 = vunpack.c.l.b16 %v2800
  %v3226 = vunpack.c.h.b16 %v2800
  %v3227 = vunpack.c.l.b16 %v2801
  %v3228 = vunpack.c.h.b16 %v2801
  %v3229 = vunpack.c.l.b16 %v2802
  %v3230 = vunpack.c.h.b16 %v2802
  %v3231 = vunpack.c.l.b16 %v2803
  %v3232 = vunpack.c.h.b16 %v2803
  %v3233 = vunpack.c.l.b16 %v2804
  %v3234 = vunpack.c.h.b16 %v2804
  %v3235 = vunpack.c.l.b16 %v2805
  %v3236 = vunpack.c.h.b16 %v2805
  %v3237 = vunpack.c.l.b16 %v2806
  %v3238 = vunpack.c.h.b16 %v2806
  %v3239 = vunpack.c.l.b16 %v2807
  %v3240 = vunpack.c.h.b16 %v2807
  %v3241 = vunpack.c.l.b16 %v2808
  %v3242 = vunpack.c.h.b16 %v2808
  %v3243 = vunpack.c.l.b16 %v2809
  %v3244 = vunpack.c.h.b16 %v2809
  %v3245 = vunpack.c.l.b16 %v2810
  %v3246 = vunpack.c.h.b16 %v2810
  %v3247 = vunpack.c.l.b16 %v2811
  %v3248 = vunpack.c.h.b16 %v2811
  %v3249 = vunpack.c.l.b16 %v2812
  %v3250 = vunpack.c.h.b16 %v2812
  %v3251 = vunpack.c.l.b16 %v2813
  %v3252 = vunpack.c.h.b16 %v2813
  %v3253 = vunpack.c.l.b16 %v2814
  %v3254 = vunpack.c.h.b16 %v2814
  %v3255 = vunpack.c.l.b16 %v2815
  %v3256 = vunpack.c.h.b16 %v2815
  %v3257 = vunpack.c.l.b16 %v2816
  %v3258 = vunpack.c.h.b16 %v2816
  %v3259 = vunpack.c.l.b16 %v2817
  %v3260 = vunpack.c.h.b16 %v2817
  %v3261 = vunpack.c.l.b16 %v2818
  %v3262 = vunpack.c.h.b16 %v2818
  %v3263 = vunpack.c.l.b16 %v2819
  %v3264 = vunpack.c.h.b16 %v2819
  %v3265 = vunpack.c.l.b16 %v2820
  %v3266 = vunpack.c.h.b16 %v2820
  %v3267 = vunpack.c.l.b16 %v2821
  %v3268 = vunpack.c.h.b16 %v2821
  %v3269 = vunpack.c.l.b16 %v2822
  %v3270 = vunpack.c.h.b16 %v2822
  %v3271 = vunpack.c.l.b16 %v2823
  %v3272 = vunpack.c.h.b16 %v2823
  %v3273 = vunpack.c.l.b16 %v2824
  %v3274 = vunpack.c.h.b16 %v2824
  %v3275 = vunpack.c.l.b16 %v2825
  %v3276 = vunpack.c.h.b16 %v2825
  %v3277 = vunpack.c.l.b16 %v2826
  %v3278 = vunpack.c.h.b16 %v2826
  %v3279 = vunpack.c.l.b16 %v2827
  %v3280 = vunpack.c.h.b16 %v2827
  %v3281 = vunpack.c.l.b16 %v2828
  %v3282 = vunpack.c.h.b16 %v2828
  %v3283 = vunpack.c.l.b16 %v2829
  %v3284 = vunpack.c.h.b16 %v2829
  %v3285 = vunpack.c.l.b16 %v2830
  %v3286 = vunpack.c.h.b16 %v2830
  %v3287 = vunpack.c.l.b16 %v2831
  %v3288 = vunpack.c.h.b16 %v2831
  %v3289 = vunpack.c.l.b16 %v2832
  %v3290 = vunpack.c.h.b16 %v2832
  %v3291 = vunpack.c.l.b16 %v2833
  %v3292 = vunpack.c.h.b16 %v2833
  %v3293 = vunpack.c.l.b16 %v2834
  %v3294 = vunpack.c.h.b16 %v2834
  %v3295 = vunpack.c.l.b16 %v2835
  %v3296 = vunpack.c.h.b16 %v2835
  %v3297 = vunpack.c.l.b16 %v2836
  %v3298 = vunpack.c.h.b16 %v2836
  %v3299 = vunpack.c.l.b16 %v2837
  %v3300 = vunpack.c.h.b16 %v2837
  %v3301 = vunpack.c.l.b16 %v2838
  %v3302 = vunpack.c.h.b16 %v2838
  %v3303 = vunpack.c.l.b16 %v2839
  %v3304 = vunpack.c.h.b16 %v2839
  %v3305 = vunpack.c.l.b16 %v2840
  %v3306 = vunpack.c.h.b16 %v2840
  %v3307 = vunpack.c.l.b16 %v2841
  %v3308 = vunpack.c.h.b16 %v2841
  %v3309 = vunpack.c.l.b16 %v2842
  %v3310 = vunpack.c.h.b16 %v2842
  %v3311 = vunpack.c.l.b16 %v2843
  %v3312 = vunpack.c.h.b16 %v2843
  %v3313 = vunpack.c.l.b16 %v2844
  %v3314 = vunpack.c.h.b16 %v2844
  %v3315 = vunpack.c.l.b16 %v2845
  %v3316 = vunpack.c.h.b16 %v2845
  %v3317 = vunpack.c.l.b16 %v2846
  %v3318 = vunpack.c.h.b16 %v2846
  %v3319 = vunpack.c.l.b16 %v2847
  %v3320 = vunpack.c.h.b16 %v2847
  %v3321 = vunpack.c.l.b16 %v2848
  %v3322 = vunpack.c.h.b16 %v2848
  %v3323 = vunpack.c.l.b16 %v2849
  %v3324 = vunpack.c.h.b16 %v2849
  %v3325 = vunpack.c.l.b16 %v2850
  %v3326 = vunpack.c.h.b16 %v2850
  %v3327 = vunpack.c.l.b16 %v2851
  %v3328 = vunpack.c.h.b16 %v2851
  %v3329 = vpack.c.b16 %v3219, %v3209
  %v3330 = vpack.c.b16 %v3220, %v3210
  %v3331 = vpack.c.b16 %v3221, %v3211
  %v3332 = vpack.c.b16 %v3222, %v3212
  %v3333 = vpack.c.b16 %v3223, %v3213
  %v3334 = vpack.c.b16 %v3224, %v3214
  %v3335 = vpack.c.b16 %v3225, %v3215
  %v3336 = vpack.c.b16 %v3226, %v3216
  %v3337 = vpack.c.b16 %v3227, %v3217
  %v3338 = vpack.c.b16 %v3228, %v3218
  %v3339 = vpack.c.b16 %v3239, %v3229
  %v3340 = vpack.c.b16 %v3240, %v3230
  %v3341 = vpack.c.b16 %v3241, %v3231
  %v3342 = vpack.c.b16 %v3242, %v3232
  %v3343 = vpack.c.b16 %v3243, %v3233
  %v3344 = vpack.c.b16 %v3244, %v3234
  %v3345 = vpack.c.b16 %v3245, %v3235
  %v3346 = vpack.c.b16 %v3246, %v3236
  %v3347 = vpack.c.b16 %v3247, %v3237
  %v3348 = vpack.c.b16 %v3248, %v3238
  %v3349 = vpack.c.b16 %v3259, %v3249
  %v3350 = vpack.c.b16 %v3260, %v3250
  %v3351 = vpack.c.b16 %v3261, %v3251
  %v3352 = vpack.c.b16 %v3262, %v3252
  %v3353 = vpack.c.b16 %v3263, %v3253
  %v3354 = vpack.c.b16 %v3264, %v3254
  %v3355 = vpack.c.b16 %v3265, %v3255
  %v3356 = vpack.c.b16 %v3266, %v3256
  %v3357 = vpack.c.b16 %v3267, %v3257
  %v3358 = vpack.c.b16 %v3268, %v3258
  %v3359 = vpack.c.b16 %v3279, %v3269
  %v3360 = vpack.c.b16 %v3280, %v3270
  %v3361 = vpack.c.b16 %v3281, %v3271
  %v3362 = vpack.c.b16 %v3282, %v3272
  %v3363 = vpack.c.b16 %v3283, %v3273
  %v3364 = vpack.c.b16 %v3284, %v3274
  %v3365 = vpack.c.b16 %v3285, %v3275
  %v3366 = vpack.c.b16 %v3286, %v3276
  %v3367 = vpack.c.b16 %v3287, %v3277
  %v3368 = vpack.c.b16 %v3288, %v3278
  %v3369 = vpack.c.b16 %v3299, %v3289
  %v3370 = vpack.c.b16 %v3300, %v3290
  %v3371 = vpack.c.b16 %v3301, %v3291
  %v3372 = vpack.c.b16 %v3302, %v3292
  %v3373 = vpack.c.b16 %v3303, %v3293
  %v3374 = vpack.c.b16 %v3304, %v3294
  %v3375 = vpack.c.b16 %v3305, %v3295
  %v3376 = vpack.c.b16 %v3306, %v3296
  %v3377 = vpack.c.b16 %v3307, %v3297
  %v3378 = vpack.c.b16 %v3308, %v3298
  %v3379 = vpack.c.b16 %v3319, %v3309
  %v3380 = vpack.c.b16 %v3320, %v3310
  %v3381 = vpack.c.b16 %v3321, %v3311
  %v3382 = vpack.c.b16 %v3322, %v3312
  %v3383 = vpack.c.b16 %v3323, %v3313
  %v3384 = vpack.c.b16 %v3324, %v3314
  %v3385 = vpack.c.b16 %v3325, %v3315
  %v3386 = vpack.c.b16 %v3326, %v3316
  %v3387 = vpack.c.b16 %v3327, %v3317
  %v3388 = vpack.c.b16 %v3328, %v3318
  %vm3443 = vcmask 392192
  %v3445 = vsel %vm3443, %v3338, 0
  %v3448 = vsel %vm3443, %v3348, 0
  %v3451 = vsel %vm3443, %v3358, 0
  %v3454 = vsel %vm3443, %v3368, 0
  %v3457 = vsel %vm3443, %v3378, 0
  %v3460 = vsel %vm3443, %v3388, 0
  %3462 = vmatprep.subr.bf16.mxu0 %v2853
  %3463 = vmatpush1.bf16.msra.mxu0 %v2852
  %3464 = vmatprep.subr.bf16.mxu0 %v2856
  %3465 = vmatpush1.bf16.msra.mxu0 %v2855
  %3466 = vmatprep.subr.bf16.mxu0 %v2859
  %3467 = vmatpush1.bf16.msra.mxu0 %v2858
  %3468 = vmatprep.subr.bf16.mxu0 %v2862
  %3469 = vmatpush1.bf16.msra.mxu0 %v2861
  %3470 = vmatprep.subr.bf16.mxu0 %v2865
  %3471 = vmatpush1.bf16.msra.mxu0 %v2864
  %3472 = vmatprep.subr.bf16.mxu0 %v2868
  %3473 = vmatpush1.bf16.msra.mxu0 %v2867
  %3474 = vmatprep.subr.bf16.mxu0 %v2871
  %3475 = vmatpush1.bf16.msra.mxu0 %v2870
  %3476 = vmatprep.subr.bf16.mxu0 %v2874
  %3477 = vmatpush1.bf16.msra.mxu0 %v2873
  %3478 = vmatprep.subr.bf16.mxu0 %v2877
  %3479 = vmatpush1.bf16.msra.mxu0 %v2876
  %3480 = vmatprep.subr.bf16.mxu0 %v2880
  %3481 = vmatpush1.bf16.msra.mxu0 %v2879
  %3482 = vmatprep.subr.bf16.mxu0 %v2883
  %3483 = vmatpush1.bf16.msra.mxu0 %v2882
  %3484 = vmatprep.subr.bf16.mxu0 %v2886
  %3485 = vmatpush1.bf16.msra.mxu0 %v2885
  %3486 = vmatprep.subr.bf16.mxu0 %v2889
  %3487 = vmatpush1.bf16.msra.mxu0 %v2888
  %3488 = vmatprep.subr.bf16.mxu0 %v2892
  %3489 = vmatpush1.bf16.msra.mxu0 %v2891
  %3490 = vmatprep.subr.bf16.mxu0 %v2895
  %3491 = vmatpush1.bf16.msra.mxu0 %v2894
  %3492 = vmatprep.subr.bf16.mxu0 %v2898
  %3493 = vmatpush1.bf16.msra.mxu0 %v2897
  %3494 = vmatprep.mubr.bf16.mxu0 %v3330
  %3495 = vmatmul.mubr.bf16.gmra.mrb[0].mxu0 %v3329
  %v3496 = vpop.f32.mrb[0].mxu0
  %v3497 = vadd.f32 %v3092, %v3496
  %v3498 = vpop.f32.mrb[0].mxu0
  %v3499 = vadd.f32 %v3092, %v3498
  %v3500 = vpop.f32.mrb[0].mxu0
  %v3501 = vadd.f32 %v3097, %v3500
  %v3502 = vpop.f32.mrb[0].mxu0
  %v3503 = vadd.f32 %v3097, %v3502
  %3504 = vmatprep.mubr.bf16.mxu0 %v3340
  %3505 = vmatmul.mubr.bf16.gmra.mrb[0].mxu0 %v3339
  %v3506 = vpop.f32.mrb[0].mxu0
  %v3507 = vadd.f32 %v3102, %v3506
  %v3508 = vpop.f32.mrb[0].mxu0
  %v3509 = vadd.f32 %v3102, %v3508
  %v3510 = vpop.f32.mrb[0].mxu0
  %v3511 = vadd.f32 %v3107, %v3510
  %v3512 = vpop.f32.mrb[0].mxu0
  %v3513 = vadd.f32 %v3107, %v3512
  %3514 = vmatprep.mubr.bf16.mxu0 %v3350
  %3515 = vmatmul.mubr.bf16.gmra.mrb[0].mxu0 %v3349
  %v3516 = vpop.f32.mrb[0].mxu0
  %v3517 = vadd.f32 %v3112, %v3516
  %v3518 = vpop.f32.mrb[0].mxu0
  %v3519 = vadd.f32 %v3112, %v3518
  %v3520 = vpop.f32.mrb[0].mxu0
  %v3521 = vadd.f32 %v3117, %v3520
  %v3522 = vpop.f32.mrb[0].mxu0
  %v3523 = vadd.f32 %v3117, %v3522
  %3524 = vmatprep.mubr.bf16.mxu0 %v3360
  %3525 = vmatmul.mubr.bf16.gmra.mrb[0].mxu0 %v3359
  %v3526 = vpop.f32.mrb[0].mxu0
  %v3527 = vadd.f32 %v3122, %v3526
  %v3528 = vpop.f32.mrb[0].mxu0
  %v3529 = vadd.f32 %v3122, %v3528
  %v3530 = vpop.f32.mrb[0].mxu0
  %v3531 = vadd.f32 %v3127, %v3530
  %v3532 = vpop.f32.mrb[0].mxu0
  %v3533 = vadd.f32 %v3127, %v3532
  %3534 = vmatprep.mubr.bf16.mxu0 %v3370
  %3535 = vmatmul.mubr.bf16.gmra.mrb[0].mxu0 %v3369
  %v3536 = vpop.f32.mrb[0].mxu0
  %v3537 = vadd.f32 %v3132, %v3536
  %v3538 = vpop.f32.mrb[0].mxu0
  %v3539 = vadd.f32 %v3132, %v3538
  %v3540 = vpop.f32.mrb[0].mxu0
  %v3541 = vadd.f32 %v3137, %v3540
  %v3542 = vpop.f32.mrb[0].mxu0
  %v3543 = vadd.f32 %v3137, %v3542
  %3544 = vmatprep.mubr.bf16.mxu0 %v3380
  %3545 = vmatmul.mubr.bf16.gmra.mrb[0].mxu0 %v3379
  %v3546 = vpop.f32.mrb[0].mxu0
  %v3547 = vadd.f32 %v3142, %v3546
  %v3548 = vpop.f32.mrb[0].mxu0
  %v3549 = vadd.f32 %v3142, %v3548
  %v3550 = vpop.f32.mrb[0].mxu0
  %v3551 = vadd.f32 %v3147, %v3550
  %v3552 = vpop.f32.mrb[0].mxu0
  %v3553 = vadd.f32 %v3147, %v3552
  %3554 = vdwg.mxu0
  %3555 = vmatprep.subr.bf16.mxu0 %v2901
  %3556 = vmatpush1.bf16.msra.mxu0 %v2900
  %3557 = vmatprep.subr.bf16.mxu0 %v2904
  %3558 = vmatpush1.bf16.msra.mxu0 %v2903
  %3559 = vmatprep.subr.bf16.mxu0 %v2907
  %3560 = vmatpush1.bf16.msra.mxu0 %v2906
  %3561 = vmatprep.subr.bf16.mxu0 %v2910
  %3562 = vmatpush1.bf16.msra.mxu0 %v2909
  %3563 = vmatprep.subr.bf16.mxu0 %v2913
  %3564 = vmatpush1.bf16.msra.mxu0 %v2912
  %3565 = vmatprep.subr.bf16.mxu0 %v2916
  %3566 = vmatpush1.bf16.msra.mxu0 %v2915
  %3567 = vmatprep.subr.bf16.mxu0 %v2919
  %3568 = vmatpush1.bf16.msra.mxu0 %v2918
  %3569 = vmatprep.subr.bf16.mxu0 %v2922
  %3570 = vmatpush1.bf16.msra.mxu0 %v2921
  %3571 = vmatprep.subr.bf16.mxu0 %v2925
  %3572 = vmatpush1.bf16.msra.mxu0 %v2924
  %3573 = vmatprep.subr.bf16.mxu0 %v2928
  %3574 = vmatpush1.bf16.msra.mxu0 %v2927
  %3575 = vmatprep.subr.bf16.mxu0 %v2931
  %3576 = vmatpush1.bf16.msra.mxu0 %v2930
  %3577 = vmatprep.subr.bf16.mxu0 %v2934
  %3578 = vmatpush1.bf16.msra.mxu0 %v2933
  %3579 = vmatprep.subr.bf16.mxu0 %v2937
  %3580 = vmatpush1.bf16.msra.mxu0 %v2936
  %3581 = vmatprep.subr.bf16.mxu0 %v2940
  %3582 = vmatpush1.bf16.msra.mxu0 %v2939
  %3583 = vmatprep.subr.bf16.mxu0 %v2943
  %3584 = vmatpush1.bf16.msra.mxu0 %v2942
  %3585 = vmatprep.subr.bf16.mxu0 %v2946
  %3586 = vmatpush1.bf16.msra.mxu0 %v2945
  %3587 = vmatprep.mubr.bf16.mxu0 %v3332
  %3588 = vmatmul.mubr.bf16.gmra.mrb[0].mxu0 %v3331
  %v3589 = vpop.f32.mrb[0].mxu0
  %v3590 = vadd.f32 %v3497, %v3589
  %v3591 = vpop.f32.mrb[0].mxu0
  %v3592 = vadd.f32 %v3499, %v3591
  %v3593 = vpop.f32.mrb[0].mxu0
  %v3594 = vadd.f32 %v3501, %v3593
  %v3595 = vpop.f32.mrb[0].mxu0
  %v3596 = vadd.f32 %v3503, %v3595
  %3597 = vmatprep.mubr.bf16.mxu0 %v3342
  %3598 = vmatmul.mubr.bf16.gmra.mrb[0].mxu0 %v3341
  %v3599 = vpop.f32.mrb[0].mxu0
  %v3600 = vadd.f32 %v3507, %v3599
  %v3601 = vpop.f32.mrb[0].mxu0
  %v3602 = vadd.f32 %v3509, %v3601
  %v3603 = vpop.f32.mrb[0].mxu0
  %v3604 = vadd.f32 %v3511, %v3603
  %v3605 = vpop.f32.mrb[0].mxu0
  %v3606 = vadd.f32 %v3513, %v3605
  %3607 = vmatprep.mubr.bf16.mxu0 %v3352
  %3608 = vmatmul.mubr.bf16.gmra.mrb[0].mxu0 %v3351
  %v3609 = vpop.f32.mrb[0].mxu0
  %v3610 = vadd.f32 %v3517, %v3609
  %v3611 = vpop.f32.mrb[0].mxu0
  %v3612 = vadd.f32 %v3519, %v3611
  %v3613 = vpop.f32.mrb[0].mxu0
  %v3614 = vadd.f32 %v3521, %v3613
  %v3615 = vpop.f32.mrb[0].mxu0
  %v3616 = vadd.f32 %v3523, %v3615
  %3617 = vmatprep.mubr.bf16.mxu0 %v3362
  %3618 = vmatmul.mubr.bf16.gmra.mrb[0].mxu0 %v3361
  %v3619 = vpop.f32.mrb[0].mxu0
  %v3620 = vadd.f32 %v3527, %v3619
  %v3621 = vpop.f32.mrb[0].mxu0
  %v3622 = vadd.f32 %v3529, %v3621
  %v3623 = vpop.f32.mrb[0].mxu0
  %v3624 = vadd.f32 %v3531, %v3623
  %v3625 = vpop.f32.mrb[0].mxu0
  %v3626 = vadd.f32 %v3533, %v3625
  %3627 = vmatprep.mubr.bf16.mxu0 %v3372
  %3628 = vmatmul.mubr.bf16.gmra.mrb[0].mxu0 %v3371
  %v3629 = vpop.f32.mrb[0].mxu0
  %v3630 = vadd.f32 %v3537, %v3629
  %v3631 = vpop.f32.mrb[0].mxu0
  %v3632 = vadd.f32 %v3539, %v3631
  %v3633 = vpop.f32.mrb[0].mxu0
  %v3634 = vadd.f32 %v3541, %v3633
  %v3635 = vpop.f32.mrb[0].mxu0
  %v3636 = vadd.f32 %v3543, %v3635
  %3637 = vmatprep.mubr.bf16.mxu0 %v3382
  %3638 = vmatmul.mubr.bf16.gmra.mrb[0].mxu0 %v3381
  %v3639 = vpop.f32.mrb[0].mxu0
  %v3640 = vadd.f32 %v3547, %v3639
  %v3641 = vpop.f32.mrb[0].mxu0
  %v3642 = vadd.f32 %v3549, %v3641
  %v3643 = vpop.f32.mrb[0].mxu0
  %v3644 = vadd.f32 %v3551, %v3643
  %v3645 = vpop.f32.mrb[0].mxu0
  %v3646 = vadd.f32 %v3553, %v3645
  %3647 = vdwg.mxu0
  %3648 = vmatprep.subr.bf16.mxu0 %v2949
  %3649 = vmatpush1.bf16.msra.mxu0 %v2948
  %3650 = vmatprep.subr.bf16.mxu0 %v2952
  %3651 = vmatpush1.bf16.msra.mxu0 %v2951
  %3652 = vmatprep.subr.bf16.mxu0 %v2955
  %3653 = vmatpush1.bf16.msra.mxu0 %v2954
  %3654 = vmatprep.subr.bf16.mxu0 %v2958
  %3655 = vmatpush1.bf16.msra.mxu0 %v2957
  %3656 = vmatprep.subr.bf16.mxu0 %v2961
  %3657 = vmatpush1.bf16.msra.mxu0 %v2960
  %3658 = vmatprep.subr.bf16.mxu0 %v2964
  %3659 = vmatpush1.bf16.msra.mxu0 %v2963
  %3660 = vmatprep.subr.bf16.mxu0 %v2967
  %3661 = vmatpush1.bf16.msra.mxu0 %v2966
  %3662 = vmatprep.subr.bf16.mxu0 %v2970
  %3663 = vmatpush1.bf16.msra.mxu0 %v2969
  %3664 = vmatprep.subr.bf16.mxu0 %v2973
  %3665 = vmatpush1.bf16.msra.mxu0 %v2972
  %3666 = vmatprep.subr.bf16.mxu0 %v2976
  %3667 = vmatpush1.bf16.msra.mxu0 %v2975
  %3668 = vmatprep.subr.bf16.mxu0 %v2979
  %3669 = vmatpush1.bf16.msra.mxu0 %v2978
  %3670 = vmatprep.subr.bf16.mxu0 %v2982
  %3671 = vmatpush1.bf16.msra.mxu0 %v2981
  %3672 = vmatprep.subr.bf16.mxu0 %v2985
  %3673 = vmatpush1.bf16.msra.mxu0 %v2984
  %3674 = vmatprep.subr.bf16.mxu0 %v2988
  %3675 = vmatpush1.bf16.msra.mxu0 %v2987
  %3676 = vmatprep.subr.bf16.mxu0 %v2991
  %3677 = vmatpush1.bf16.msra.mxu0 %v2990
  %3678 = vmatprep.subr.bf16.mxu0 %v2994
  %3679 = vmatpush1.bf16.msra.mxu0 %v2993
  %3680 = vmatprep.mubr.bf16.mxu0 %v3334
  %3681 = vmatmul.mubr.bf16.gmra.mrb[0].mxu0 %v3333
  %v3682 = vpop.f32.mrb[0].mxu0
  %v3683 = vadd.f32 %v3590, %v3682
  %v3684 = vpop.f32.mrb[0].mxu0
  %v3685 = vadd.f32 %v3592, %v3684
  %v3686 = vpop.f32.mrb[0].mxu0
  %v3687 = vadd.f32 %v3594, %v3686
  %v3688 = vpop.f32.mrb[0].mxu0
  %v3689 = vadd.f32 %v3596, %v3688
  %3690 = vmatprep.mubr.bf16.mxu0 %v3344
  %3691 = vmatmul.mubr.bf16.gmra.mrb[0].mxu0 %v3343
  %v3692 = vpop.f32.mrb[0].mxu0
  %v3693 = vadd.f32 %v3600, %v3692
  %v3694 = vpop.f32.mrb[0].mxu0
  %v3695 = vadd.f32 %v3602, %v3694
  %v3696 = vpop.f32.mrb[0].mxu0
  %v3697 = vadd.f32 %v3604, %v3696
  %v3698 = vpop.f32.mrb[0].mxu0
  %v3699 = vadd.f32 %v3606, %v3698
  %3700 = vmatprep.mubr.bf16.mxu0 %v3354
  %3701 = vmatmul.mubr.bf16.gmra.mrb[0].mxu0 %v3353
  %v3702 = vpop.f32.mrb[0].mxu0
  %v3703 = vadd.f32 %v3610, %v3702
  %v3704 = vpop.f32.mrb[0].mxu0
  %v3705 = vadd.f32 %v3612, %v3704
  %v3706 = vpop.f32.mrb[0].mxu0
  %v3707 = vadd.f32 %v3614, %v3706
  %v3708 = vpop.f32.mrb[0].mxu0
  %v3709 = vadd.f32 %v3616, %v3708
  %3710 = vmatprep.mubr.bf16.mxu0 %v3364
  %3711 = vmatmul.mubr.bf16.gmra.mrb[0].mxu0 %v3363
  %v3712 = vpop.f32.mrb[0].mxu0
  %v3713 = vadd.f32 %v3620, %v3712
  %v3714 = vpop.f32.mrb[0].mxu0
  %v3715 = vadd.f32 %v3622, %v3714
  %v3716 = vpop.f32.mrb[0].mxu0
  %v3717 = vadd.f32 %v3624, %v3716
  %v3718 = vpop.f32.mrb[0].mxu0
  %v3719 = vadd.f32 %v3626, %v3718
  %3720 = vmatprep.mubr.bf16.mxu0 %v3374
  %3721 = vmatmul.mubr.bf16.gmra.mrb[0].mxu0 %v3373
  %v3722 = vpop.f32.mrb[0].mxu0
  %v3723 = vadd.f32 %v3630, %v3722
  %v3724 = vpop.f32.mrb[0].mxu0
  %v3725 = vadd.f32 %v3632, %v3724
  %v3726 = vpop.f32.mrb[0].mxu0
  %v3727 = vadd.f32 %v3634, %v3726
  %v3728 = vpop.f32.mrb[0].mxu0
  %v3729 = vadd.f32 %v3636, %v3728
  %3730 = vmatprep.mubr.bf16.mxu0 %v3384
  %3731 = vmatmul.mubr.bf16.gmra.mrb[0].mxu0 %v3383
  %v3732 = vpop.f32.mrb[0].mxu0
  %v3733 = vadd.f32 %v3640, %v3732
  %v3734 = vpop.f32.mrb[0].mxu0
  %v3735 = vadd.f32 %v3642, %v3734
  %v3736 = vpop.f32.mrb[0].mxu0
  %v3737 = vadd.f32 %v3644, %v3736
  %v3738 = vpop.f32.mrb[0].mxu0
  %v3739 = vadd.f32 %v3646, %v3738
  %3740 = vdwg.mxu0
  %3741 = vmatprep.subr.bf16.mxu0 %v2997
  %3742 = vmatpush1.bf16.msra.mxu0 %v2996
  %3743 = vmatprep.subr.bf16.mxu0 %v3000
  %3744 = vmatpush1.bf16.msra.mxu0 %v2999
  %3745 = vmatprep.subr.bf16.mxu0 %v3003
  %3746 = vmatpush1.bf16.msra.mxu0 %v3002
  %3747 = vmatprep.subr.bf16.mxu0 %v3006
  %3748 = vmatpush1.bf16.msra.mxu0 %v3005
  %3749 = vmatprep.subr.bf16.mxu0 %v3009
  %3750 = vmatpush1.bf16.msra.mxu0 %v3008
  %3751 = vmatprep.subr.bf16.mxu0 %v3012
  %3752 = vmatpush1.bf16.msra.mxu0 %v3011
  %3753 = vmatprep.subr.bf16.mxu0 %v3015
  %3754 = vmatpush1.bf16.msra.mxu0 %v3014
  %3755 = vmatprep.subr.bf16.mxu0 %v3018
  %3756 = vmatpush1.bf16.msra.mxu0 %v3017
  %3757 = vmatprep.subr.bf16.mxu0 %v3021
  %3758 = vmatpush1.bf16.msra.mxu0 %v3020
  %3759 = vmatprep.subr.bf16.mxu0 %v3024
  %3760 = vmatpush1.bf16.msra.mxu0 %v3023
  %3761 = vmatprep.subr.bf16.mxu0 %v3027
  %3762 = vmatpush1.bf16.msra.mxu0 %v3026
  %3763 = vmatprep.subr.bf16.mxu0 %v3030
  %3764 = vmatpush1.bf16.msra.mxu0 %v3029
  %3765 = vmatprep.subr.bf16.mxu0 %v3033
  %3766 = vmatpush1.bf16.msra.mxu0 %v3032
  %3767 = vmatprep.subr.bf16.mxu0 %v3036
  %3768 = vmatpush1.bf16.msra.mxu0 %v3035
  %3769 = vmatprep.subr.bf16.mxu0 %v3039
  %3770 = vmatpush1.bf16.msra.mxu0 %v3038
  %3771 = vmatprep.subr.bf16.mxu0 %v3042
  %3772 = vmatpush1.bf16.msra.mxu0 %v3041
  %3773 = vmatprep.mubr.bf16.mxu0 %v3336
  %3774 = vmatmul.mubr.bf16.gmra.mrb[0].mxu0 %v3335
  %v3775 = vpop.f32.mrb[0].mxu0
  %v3776 = vadd.f32 %v3683, %v3775
  %v3777 = vpop.f32.mrb[0].mxu0
  %v3778 = vadd.f32 %v3685, %v3777
  %v3779 = vpop.f32.mrb[0].mxu0
  %v3780 = vadd.f32 %v3687, %v3779
  %v3781 = vpop.f32.mrb[0].mxu0
  %v3782 = vadd.f32 %v3689, %v3781
  %3783 = vmatprep.mubr.bf16.mxu0 %v3346
  %3784 = vmatmul.mubr.bf16.gmra.mrb[0].mxu0 %v3345
  %v3785 = vpop.f32.mrb[0].mxu0
  %v3786 = vadd.f32 %v3693, %v3785
  %v3787 = vpop.f32.mrb[0].mxu0
  %v3788 = vadd.f32 %v3695, %v3787
  %v3789 = vpop.f32.mrb[0].mxu0
  %v3790 = vadd.f32 %v3697, %v3789
  %v3791 = vpop.f32.mrb[0].mxu0
  %v3792 = vadd.f32 %v3699, %v3791
  %3793 = vmatprep.mubr.bf16.mxu0 %v3356
  %3794 = vmatmul.mubr.bf16.gmra.mrb[0].mxu0 %v3355
  %v3795 = vpop.f32.mrb[0].mxu0
  %v3796 = vadd.f32 %v3703, %v3795
  %v3797 = vpop.f32.mrb[0].mxu0
  %v3798 = vadd.f32 %v3705, %v3797
  %v3799 = vpop.f32.mrb[0].mxu0
  %v3800 = vadd.f32 %v3707, %v3799
  %v3801 = vpop.f32.mrb[0].mxu0
  %v3802 = vadd.f32 %v3709, %v3801
  %3803 = vmatprep.mubr.bf16.mxu0 %v3366
  %3804 = vmatmul.mubr.bf16.gmra.mrb[0].mxu0 %v3365
  %v3805 = vpop.f32.mrb[0].mxu0
  %v3806 = vadd.f32 %v3713, %v3805
  %v3807 = vpop.f32.mrb[0].mxu0
  %v3808 = vadd.f32 %v3715, %v3807
  %v3809 = vpop.f32.mrb[0].mxu0
  %v3810 = vadd.f32 %v3717, %v3809
  %v3811 = vpop.f32.mrb[0].mxu0
  %v3812 = vadd.f32 %v3719, %v3811
  %3813 = vmatprep.mubr.bf16.mxu0 %v3376
  %3814 = vmatmul.mubr.bf16.gmra.mrb[0].mxu0 %v3375
  %v3815 = vpop.f32.mrb[0].mxu0
  %v3816 = vadd.f32 %v3723, %v3815
  %v3817 = vpop.f32.mrb[0].mxu0
  %v3818 = vadd.f32 %v3725, %v3817
  %v3819 = vpop.f32.mrb[0].mxu0
  %v3820 = vadd.f32 %v3727, %v3819
  %v3821 = vpop.f32.mrb[0].mxu0
  %v3822 = vadd.f32 %v3729, %v3821
  %3823 = vmatprep.mubr.bf16.mxu0 %v3386
  %3824 = vmatmul.mubr.bf16.gmra.mrb[0].mxu0 %v3385
  %v3825 = vpop.f32.mrb[0].mxu0
  %v3826 = vadd.f32 %v3733, %v3825
  %v3827 = vpop.f32.mrb[0].mxu0
  %v3828 = vadd.f32 %v3735, %v3827
  %v3829 = vpop.f32.mrb[0].mxu0
  %v3830 = vadd.f32 %v3737, %v3829
  %v3831 = vpop.f32.mrb[0].mxu0
  %v3832 = vadd.f32 %v3739, %v3831
  %3833 = vdwg.mxu0
  %3834 = vmatprep.subr.bf16.mxu0 %v3045
  %3835 = vmatpush1.bf16.msra.mxu0 %v3044
  %3836 = vmatprep.subr.bf16.mxu0 %v3048
  %3837 = vmatpush1.bf16.msra.mxu0 %v3047
  %3838 = vmatprep.subr.bf16.mxu0 %v3051
  %3839 = vmatpush1.bf16.msra.mxu0 %v3050
  %3840 = vmatprep.subr.bf16.mxu0 %v3054
  %3841 = vmatpush1.bf16.msra.mxu0 %v3053
  %3842 = vmatprep.subr.bf16.mxu0 %v3057
  %3843 = vmatpush1.bf16.msra.mxu0 %v3056
  %3844 = vmatprep.subr.bf16.mxu0 %v3060
  %3845 = vmatpush1.bf16.msra.mxu0 %v3059
  %3846 = vmatprep.subr.bf16.mxu0 %v3063
  %3847 = vmatpush1.bf16.msra.mxu0 %v3062
  %3848 = vmatprep.subr.bf16.mxu0 %v3066
  %3849 = vmatpush1.bf16.msra.mxu0 %v3065
  %3850 = vmatprep.subr.bf16.mxu0 %v3069
  %3851 = vmatpush1.bf16.msra.mxu0 %v3068
  %3852 = vmatprep.subr.bf16.mxu0 %v3072
  %3853 = vmatpush1.bf16.msra.mxu0 %v3071
  %3854 = vmatprep.subr.bf16.mxu0 %v3075
  %3855 = vmatpush1.bf16.msra.mxu0 %v3074
  %3856 = vmatprep.subr.bf16.mxu0 0
  %3857 = vmatpush1.bf16.msra.mxu0 0
  %3858 = vmatprep.subr.bf16.mxu0 0
  %3859 = vmatpush1.bf16.msra.mxu0 0
  %3860 = vmatprep.subr.bf16.mxu0 0
  %3861 = vmatpush1.bf16.msra.mxu0 0
  %3862 = vmatprep.subr.bf16.mxu0 0
  %3863 = vmatpush1.bf16.msra.mxu0 0
  %3864 = vmatprep.subr.bf16.mxu0 0
  %3865 = vmatpush1.bf16.msra.mxu0 0
  %3866 = vmatprep.mubr.bf16.mxu0 %v3445
  %3867 = vmatmul.mubr.bf16.gmra.mrb[0].mxu0 %v3337
  %v3868 = vpop.f32.mrb[0].mxu0
  %v3869 = vadd.f32 %v3776, %v3868
  %v3870 = vpop.f32.mrb[0].mxu0
  %v3871 = vadd.f32 %v3778, %v3870
  %v3872 = vpop.f32.mrb[0].mxu0
  %v3873 = vadd.f32 %v3780, %v3872
  %v3874 = vpop.f32.mrb[0].mxu0
  %v3875 = vadd.f32 %v3782, %v3874
  %3876 = vmatprep.mubr.bf16.mxu0 %v3448
  %3877 = vmatmul.mubr.bf16.gmra.mrb[0].mxu0 %v3347
  %v3878 = vpop.f32.mrb[0].mxu0
  %v3879 = vadd.f32 %v3786, %v3878
  %v3880 = vpop.f32.mrb[0].mxu0
  %v3881 = vadd.f32 %v3788, %v3880
  %v3882 = vpop.f32.mrb[0].mxu0
  %v3883 = vadd.f32 %v3790, %v3882
  %v3884 = vpop.f32.mrb[0].mxu0
  %v3885 = vadd.f32 %v3792, %v3884
  %3886 = vmatprep.mubr.bf16.mxu0 %v3451
  %3887 = vmatmul.mubr.bf16.gmra.mrb[0].mxu0 %v3357
  %v3888 = vpop.f32.mrb[0].mxu0
  %v3889 = vadd.f32 %v3796, %v3888
  %v3890 = vpop.f32.mrb[0].mxu0
  %v3891 = vadd.f32 %v3798, %v3890
  %v3892 = vpop.f32.mrb[0].mxu0
  %v3893 = vadd.f32 %v3800, %v3892
  %v3894 = vpop.f32.mrb[0].mxu0
  %v3895 = vadd.f32 %v3802, %v3894
  %3896 = vmatprep.mubr.bf16.mxu0 %v3454
  %3897 = vmatmul.mubr.bf16.gmra.mrb[0].mxu0 %v3367
  %v3898 = vpop.f32.mrb[0].mxu0
  %v3899 = vadd.f32 %v3806, %v3898
  %v3900 = vpop.f32.mrb[0].mxu0
  %v3901 = vadd.f32 %v3808, %v3900
  %v3902 = vpop.f32.mrb[0].mxu0
  %v3903 = vadd.f32 %v3810, %v3902
  %v3904 = vpop.f32.mrb[0].mxu0
  %v3905 = vadd.f32 %v3812, %v3904
  %3906 = vmatprep.mubr.bf16.mxu0 %v3457
  %3907 = vmatmul.mubr.bf16.gmra.mrb[0].mxu0 %v3377
  %v3908 = vpop.f32.mrb[0].mxu0
  %v3909 = vadd.f32 %v3816, %v3908
  %v3910 = vpop.f32.mrb[0].mxu0
  %v3911 = vadd.f32 %v3818, %v3910
  %v3912 = vpop.f32.mrb[0].mxu0
  %v3913 = vadd.f32 %v3820, %v3912
  %v3914 = vpop.f32.mrb[0].mxu0
  %v3915 = vadd.f32 %v3822, %v3914
  %3916 = vmatprep.mubr.bf16.mxu0 %v3460
  %3917 = vmatmul.mubr.bf16.gmra.mrb[0].mxu0 %v3387
  %v3918 = vpop.f32.mrb[0].mxu0
  %v3919 = vadd.f32 %v3826, %v3918
  %v3920 = vpop.f32.mrb[0].mxu0
  %v3921 = vadd.f32 %v3828, %v3920
  %v3922 = vpop.f32.mrb[0].mxu0
  %v3923 = vadd.f32 %v3830, %v3922
  %v3924 = vpop.f32.mrb[0].mxu0
  %v3925 = vadd.f32 %v3832, %v3924
  %3926 = vdwg.mxu0
  %3927 = vmatprep.subr.bf16.mxu0 0
  %3928 = vmatpush1.bf16.msra.mxu0 %v2854
  %3929 = vmatprep.subr.bf16.mxu0 0
  %3930 = vmatpush1.bf16.msra.mxu0 %v2857
  %3931 = vmatprep.subr.bf16.mxu0 0
  %3932 = vmatpush1.bf16.msra.mxu0 %v2860
  %3933 = vmatprep.subr.bf16.mxu0 0
  %3934 = vmatpush1.bf16.msra.mxu0 %v2863
  %3935 = vmatprep.subr.bf16.mxu0 0
  %3936 = vmatpush1.bf16.msra.mxu0 %v2866
  %3937 = vmatprep.subr.bf16.mxu0 0
  %3938 = vmatpush1.bf16.msra.mxu0 %v2869
  %3939 = vmatprep.subr.bf16.mxu0 0
  %3940 = vmatpush1.bf16.msra.mxu0 %v2872
  %3941 = vmatprep.subr.bf16.mxu0 0
  %3942 = vmatpush1.bf16.msra.mxu0 %v2875
  %3943 = vmatprep.subr.bf16.mxu0 0
  %3944 = vmatpush1.bf16.msra.mxu0 %v2878
  %3945 = vmatprep.subr.bf16.mxu0 0
  %3946 = vmatpush1.bf16.msra.mxu0 %v2881
  %3947 = vmatprep.subr.bf16.mxu0 0
  %3948 = vmatpush1.bf16.msra.mxu0 %v2884
  %3949 = vmatprep.subr.bf16.mxu0 0
  %3950 = vmatpush1.bf16.msra.mxu0 %v2887
  %3951 = vmatprep.subr.bf16.mxu0 0
  %3952 = vmatpush1.bf16.msra.mxu0 %v2890
  %3953 = vmatprep.subr.bf16.mxu0 0
  %3954 = vmatpush1.bf16.msra.mxu0 %v2893
  %3955 = vmatprep.subr.bf16.mxu0 0
  %3956 = vmatpush1.bf16.msra.mxu0 %v2896
  %3957 = vmatprep.subr.bf16.mxu0 0
  %3958 = vmatpush1.bf16.msra.mxu0 %v2899
  %3959 = vmatprep.mubr.bf16.mxu0 %v3330
  %3960 = vmatmul.mubr.bf16.gmra.mrb[0].mxu0 %v3329
  %v3961 = vpop.f32.mrb[0].mxu0
  %v3962 = vadd.f32 %v3092, %v3961
  %v3963 = vpop.f32.mrb[0].mxu0
  %v3964 = vpop.f32.mrb[0].mxu0
  %v3965 = vadd.f32 %v3097, %v3964
  %v3966 = vpop.f32.mrb[0].mxu0
  %3967 = vmatprep.mubr.bf16.mxu0 %v3340
  %3968 = vmatmul.mubr.bf16.gmra.mrb[0].mxu0 %v3339
  %v3969 = vpop.f32.mrb[0].mxu0
  %v3970 = vadd.f32 %v3102, %v3969
  %v3971 = vpop.f32.mrb[0].mxu0
  %v3972 = vpop.f32.mrb[0].mxu0
  %v3973 = vadd.f32 %v3107, %v3972
  %v3974 = vpop.f32.mrb[0].mxu0
  %3975 = vmatprep.mubr.bf16.mxu0 %v3350
  %3976 = vmatmul.mubr.bf16.gmra.mrb[0].mxu0 %v3349
  %v3977 = vpop.f32.mrb[0].mxu0
  %v3978 = vadd.f32 %v3112, %v3977
  %v3979 = vpop.f32.mrb[0].mxu0
  %v3980 = vpop.f32.mrb[0].mxu0
  %v3981 = vadd.f32 %v3117, %v3980
  %v3982 = vpop.f32.mrb[0].mxu0
  %3983 = vmatprep.mubr.bf16.mxu0 %v3360
  %3984 = vmatmul.mubr.bf16.gmra.mrb[0].mxu0 %v3359
  %v3985 = vpop.f32.mrb[0].mxu0
  %v3986 = vadd.f32 %v3122, %v3985
  %v3987 = vpop.f32.mrb[0].mxu0
  %v3988 = vpop.f32.mrb[0].mxu0
  %v3989 = vadd.f32 %v3127, %v3988
  %v3990 = vpop.f32.mrb[0].mxu0
  %3991 = vmatprep.mubr.bf16.mxu0 %v3370
  %3992 = vmatmul.mubr.bf16.gmra.mrb[0].mxu0 %v3369
  %v3993 = vpop.f32.mrb[0].mxu0
  %v3994 = vadd.f32 %v3132, %v3993
  %v3995 = vpop.f32.mrb[0].mxu0
  %v3996 = vpop.f32.mrb[0].mxu0
  %v3997 = vadd.f32 %v3137, %v3996
  %v3998 = vpop.f32.mrb[0].mxu0
  %3999 = vmatprep.mubr.bf16.mxu0 %v3380
  %4000 = vmatmul.mubr.bf16.gmra.mrb[0].mxu0 %v3379
  %v4001 = vpop.f32.mrb[0].mxu0
  %v4002 = vadd.f32 %v3142, %v4001
  %v4003 = vpop.f32.mrb[0].mxu0
  %v4004 = vpop.f32.mrb[0].mxu0
  %v4005 = vadd.f32 %v3147, %v4004
  %v4006 = vpop.f32.mrb[0].mxu0
  %4007 = vdwg.mxu0
  %4008 = vmatprep.subr.bf16.mxu0 0
  %4009 = vmatpush1.bf16.msra.mxu0 %v2902
  %4010 = vmatprep.subr.bf16.mxu0 0
  %4011 = vmatpush1.bf16.msra.mxu0 %v2905
  %4012 = vmatprep.subr.bf16.mxu0 0
  %4013 = vmatpush1.bf16.msra.mxu0 %v2908
  %4014 = vmatprep.subr.bf16.mxu0 0
  %4015 = vmatpush1.bf16.msra.mxu0 %v2911
  %4016 = vmatprep.subr.bf16.mxu0 0
  %4017 = vmatpush1.bf16.msra.mxu0 %v2914
  %4018 = vmatprep.subr.bf16.mxu0 0
  %4019 = vmatpush1.bf16.msra.mxu0 %v2917
  %4020 = vmatprep.subr.bf16.mxu0 0
  %4021 = vmatpush1.bf16.msra.mxu0 %v2920
  %4022 = vmatprep.subr.bf16.mxu0 0
  %4023 = vmatpush1.bf16.msra.mxu0 %v2923
  %4024 = vmatprep.subr.bf16.mxu0 0
  %4025 = vmatpush1.bf16.msra.mxu0 %v2926
  %4026 = vmatprep.subr.bf16.mxu0 0
  %4027 = vmatpush1.bf16.msra.mxu0 %v2929
  %4028 = vmatprep.subr.bf16.mxu0 0
  %4029 = vmatpush1.bf16.msra.mxu0 %v2932
  %4030 = vmatprep.subr.bf16.mxu0 0
  %4031 = vmatpush1.bf16.msra.mxu0 %v2935
  %4032 = vmatprep.subr.bf16.mxu0 0
  %4033 = vmatpush1.bf16.msra.mxu0 %v2938
  %4034 = vmatprep.subr.bf16.mxu0 0
  %4035 = vmatpush1.bf16.msra.mxu0 %v2941
  %4036 = vmatprep.subr.bf16.mxu0 0
  %4037 = vmatpush1.bf16.msra.mxu0 %v2944
  %4038 = vmatprep.subr.bf16.mxu0 0
  %4039 = vmatpush1.bf16.msra.mxu0 %v2947
  %4040 = vmatprep.mubr.bf16.mxu0 %v3332
  %4041 = vmatmul.mubr.bf16.gmra.mrb[0].mxu0 %v3331
  %v4042 = vpop.f32.mrb[0].mxu0
  %v4043 = vadd.f32 %v3962, %v4042
  %v4044 = vpop.f32.mrb[0].mxu0
  %v4045 = vpop.f32.mrb[0].mxu0
  %v4046 = vadd.f32 %v3965, %v4045
  %v4047 = vpop.f32.mrb[0].mxu0
  %4048 = vmatprep.mubr.bf16.mxu0 %v3342
  %4049 = vmatmul.mubr.bf16.gmra.mrb[0].mxu0 %v3341
  %v4050 = vpop.f32.mrb[0].mxu0
  %v4051 = vadd.f32 %v3970, %v4050
  %v4052 = vpop.f32.mrb[0].mxu0
  %v4053 = vpop.f32.mrb[0].mxu0
  %v4054 = vadd.f32 %v3973, %v4053
  %v4055 = vpop.f32.mrb[0].mxu0
  %4056 = vmatprep.mubr.bf16.mxu0 %v3352
  %4057 = vmatmul.mubr.bf16.gmra.mrb[0].mxu0 %v3351
  %v4058 = vpop.f32.mrb[0].mxu0
  %v4059 = vadd.f32 %v3978, %v4058
  %v4060 = vpop.f32.mrb[0].mxu0
  %v4061 = vpop.f32.mrb[0].mxu0
  %v4062 = vadd.f32 %v3981, %v4061
  %v4063 = vpop.f32.mrb[0].mxu0
  %4064 = vmatprep.mubr.bf16.mxu0 %v3362
  %4065 = vmatmul.mubr.bf16.gmra.mrb[0].mxu0 %v3361
  %v4066 = vpop.f32.mrb[0].mxu0
  %v4067 = vadd.f32 %v3986, %v4066
  %v4068 = vpop.f32.mrb[0].mxu0
  %v4069 = vpop.f32.mrb[0].mxu0
  %v4070 = vadd.f32 %v3989, %v4069
  %v4071 = vpop.f32.mrb[0].mxu0
  %4072 = vmatprep.mubr.bf16.mxu0 %v3372
  %4073 = vmatmul.mubr.bf16.gmra.mrb[0].mxu0 %v3371
  %v4074 = vpop.f32.mrb[0].mxu0
  %v4075 = vadd.f32 %v3994, %v4074
  %v4076 = vpop.f32.mrb[0].mxu0
  %v4077 = vpop.f32.mrb[0].mxu0
  %v4078 = vadd.f32 %v3997, %v4077
  %v4079 = vpop.f32.mrb[0].mxu0
  %4080 = vmatprep.mubr.bf16.mxu0 %v3382
  %4081 = vmatmul.mubr.bf16.gmra.mrb[0].mxu0 %v3381
  %v4082 = vpop.f32.mrb[0].mxu0
  %v4083 = vadd.f32 %v4002, %v4082
  %v4084 = vpop.f32.mrb[0].mxu0
  %v4085 = vpop.f32.mrb[0].mxu0
  %v4086 = vadd.f32 %v4005, %v4085
  %v4087 = vpop.f32.mrb[0].mxu0
  %4088 = vdwg.mxu0
  %4089 = vmatprep.subr.bf16.mxu0 0
  %4090 = vmatpush1.bf16.msra.mxu0 %v2950
  %4091 = vmatprep.subr.bf16.mxu0 0
  %4092 = vmatpush1.bf16.msra.mxu0 %v2953
  %4093 = vmatprep.subr.bf16.mxu0 0
  %4094 = vmatpush1.bf16.msra.mxu0 %v2956
  %4095 = vmatprep.subr.bf16.mxu0 0
  %4096 = vmatpush1.bf16.msra.mxu0 %v2959
  %4097 = vmatprep.subr.bf16.mxu0 0
  %4098 = vmatpush1.bf16.msra.mxu0 %v2962
  %4099 = vmatprep.subr.bf16.mxu0 0
  %4100 = vmatpush1.bf16.msra.mxu0 %v2965
  %4101 = vmatprep.subr.bf16.mxu0 0
  %4102 = vmatpush1.bf16.msra.mxu0 %v2968
  %4103 = vmatprep.subr.bf16.mxu0 0
  %4104 = vmatpush1.bf16.msra.mxu0 %v2971
  %4105 = vmatprep.subr.bf16.mxu0 0
  %4106 = vmatpush1.bf16.msra.mxu0 %v2974
  %4107 = vmatprep.subr.bf16.mxu0 0
  %4108 = vmatpush1.bf16.msra.mxu0 %v2977
  %4109 = vmatprep.subr.bf16.mxu0 0
  %4110 = vmatpush1.bf16.msra.mxu0 %v2980
  %4111 = vmatprep.subr.bf16.mxu0 0
  %4112 = vmatpush1.bf16.msra.mxu0 %v2983
  %4113 = vmatprep.subr.bf16.mxu0 0
  %4114 = vmatpush1.bf16.msra.mxu0 %v2986
  %4115 = vmatprep.subr.bf16.mxu0 0
  %4116 = vmatpush1.bf16.msra.mxu0 %v2989
  %4117 = vmatprep.subr.bf16.mxu0 0
  %4118 = vmatpush1.bf16.msra.mxu0 %v2992
  %4119 = vmatprep.subr.bf16.mxu0 0
  %4120 = vmatpush1.bf16.msra.mxu0 %v2995
  %4121 = vmatprep.mubr.bf16.mxu0 %v3334
  %4122 = vmatmul.mubr.bf16.gmra.mrb[0].mxu0 %v3333
  %v4123 = vpop.f32.mrb[0].mxu0
  %v4124 = vadd.f32 %v4043, %v4123
  %v4125 = vpop.f32.mrb[0].mxu0
  %v4126 = vpop.f32.mrb[0].mxu0
  %v4127 = vadd.f32 %v4046, %v4126
  %v4128 = vpop.f32.mrb[0].mxu0
  %4129 = vmatprep.mubr.bf16.mxu0 %v3344
  %4130 = vmatmul.mubr.bf16.gmra.mrb[0].mxu0 %v3343
  %v4131 = vpop.f32.mrb[0].mxu0
  %v4132 = vadd.f32 %v4051, %v4131
  %v4133 = vpop.f32.mrb[0].mxu0
  %v4134 = vpop.f32.mrb[0].mxu0
  %v4135 = vadd.f32 %v4054, %v4134
  %v4136 = vpop.f32.mrb[0].mxu0
  %4137 = vmatprep.mubr.bf16.mxu0 %v3354
  %4138 = vmatmul.mubr.bf16.gmra.mrb[0].mxu0 %v3353
  %v4139 = vpop.f32.mrb[0].mxu0
  %v4140 = vadd.f32 %v4059, %v4139
  %v4141 = vpop.f32.mrb[0].mxu0
  %v4142 = vpop.f32.mrb[0].mxu0
  %v4143 = vadd.f32 %v4062, %v4142
  %v4144 = vpop.f32.mrb[0].mxu0
  %4145 = vmatprep.mubr.bf16.mxu0 %v3364
  %4146 = vmatmul.mubr.bf16.gmra.mrb[0].mxu0 %v3363
  %v4147 = vpop.f32.mrb[0].mxu0
  %v4148 = vadd.f32 %v4067, %v4147
  %v4149 = vpop.f32.mrb[0].mxu0
  %v4150 = vpop.f32.mrb[0].mxu0
  %v4151 = vadd.f32 %v4070, %v4150
  %v4152 = vpop.f32.mrb[0].mxu0
  %4153 = vmatprep.mubr.bf16.mxu0 %v3374
  %4154 = vmatmul.mubr.bf16.gmra.mrb[0].mxu0 %v3373
  %v4155 = vpop.f32.mrb[0].mxu0
  %v4156 = vadd.f32 %v4075, %v4155
  %v4157 = vpop.f32.mrb[0].mxu0
  %v4158 = vpop.f32.mrb[0].mxu0
  %v4159 = vadd.f32 %v4078, %v4158
  %v4160 = vpop.f32.mrb[0].mxu0
  %4161 = vmatprep.mubr.bf16.mxu0 %v3384
  %4162 = vmatmul.mubr.bf16.gmra.mrb[0].mxu0 %v3383
  %v4163 = vpop.f32.mrb[0].mxu0
  %v4164 = vadd.f32 %v4083, %v4163
  %v4165 = vpop.f32.mrb[0].mxu0
  %v4166 = vpop.f32.mrb[0].mxu0
  %v4167 = vadd.f32 %v4086, %v4166
  %v4168 = vpop.f32.mrb[0].mxu0
  %4169 = vdwg.mxu0
  %4170 = vmatprep.subr.bf16.mxu0 0
  %4171 = vmatpush1.bf16.msra.mxu0 %v2998
  %4172 = vmatprep.subr.bf16.mxu0 0
  %4173 = vmatpush1.bf16.msra.mxu0 %v3001
  %4174 = vmatprep.subr.bf16.mxu0 0
  %4175 = vmatpush1.bf16.msra.mxu0 %v3004
  %4176 = vmatprep.subr.bf16.mxu0 0
  %4177 = vmatpush1.bf16.msra.mxu0 %v3007
  %4178 = vmatprep.subr.bf16.mxu0 0
  %4179 = vmatpush1.bf16.msra.mxu0 %v3010
  %4180 = vmatprep.subr.bf16.mxu0 0
  %4181 = vmatpush1.bf16.msra.mxu0 %v3013
  %4182 = vmatprep.subr.bf16.mxu0 0
  %4183 = vmatpush1.bf16.msra.mxu0 %v3016
  %4184 = vmatprep.subr.bf16.mxu0 0
  %4185 = vmatpush1.bf16.msra.mxu0 %v3019
  %4186 = vmatprep.subr.bf16.mxu0 0
  %4187 = vmatpush1.bf16.msra.mxu0 %v3022
  %4188 = vmatprep.subr.bf16.mxu0 0
  %4189 = vmatpush1.bf16.msra.mxu0 %v3025
  %4190 = vmatprep.subr.bf16.mxu0 0
  %4191 = vmatpush1.bf16.msra.mxu0 %v3028
  %4192 = vmatprep.subr.bf16.mxu0 0
  %4193 = vmatpush1.bf16.msra.mxu0 %v3031
  %4194 = vmatprep.subr.bf16.mxu0 0
  %4195 = vmatpush1.bf16.msra.mxu0 %v3034
  %4196 = vmatprep.subr.bf16.mxu0 0
  %4197 = vmatpush1.bf16.msra.mxu0 %v3037
  %4198 = vmatprep.subr.bf16.mxu0 0
  %4199 = vmatpush1.bf16.msra.mxu0 %v3040
  %4200 = vmatprep.subr.bf16.mxu0 0
  %4201 = vmatpush1.bf16.msra.mxu0 %v3043
  %4202 = vmatprep.mubr.bf16.mxu0 %v3336
  %4203 = vmatmul.mubr.bf16.gmra.mrb[0].mxu0 %v3335
  %v4204 = vpop.f32.mrb[0].mxu0
  %v4205 = vadd.f32 %v4124, %v4204
  %v4206 = vpop.f32.mrb[0].mxu0
  %v4207 = vpop.f32.mrb[0].mxu0
  %v4208 = vadd.f32 %v4127, %v4207
  %v4209 = vpop.f32.mrb[0].mxu0
  %4210 = vmatprep.mubr.bf16.mxu0 %v3346
  %4211 = vmatmul.mubr.bf16.gmra.mrb[0].mxu0 %v3345
  %v4212 = vpop.f32.mrb[0].mxu0
  %v4213 = vadd.f32 %v4132, %v4212
  %v4214 = vpop.f32.mrb[0].mxu0
  %v4215 = vpop.f32.mrb[0].mxu0
  %v4216 = vadd.f32 %v4135, %v4215
  %v4217 = vpop.f32.mrb[0].mxu0
  %4218 = vmatprep.mubr.bf16.mxu0 %v3356
  %4219 = vmatmul.mubr.bf16.gmra.mrb[0].mxu0 %v3355
  %v4220 = vpop.f32.mrb[0].mxu0
  %v4221 = vadd.f32 %v4140, %v4220
  %v4222 = vpop.f32.mrb[0].mxu0
  %v4223 = vpop.f32.mrb[0].mxu0
  %v4224 = vadd.f32 %v4143, %v4223
  %v4225 = vpop.f32.mrb[0].mxu0
  %4226 = vmatprep.mubr.bf16.mxu0 %v3366
  %4227 = vmatmul.mubr.bf16.gmra.mrb[0].mxu0 %v3365
  %v4228 = vpop.f32.mrb[0].mxu0
  %v4229 = vadd.f32 %v4148, %v4228
  %v4230 = vpop.f32.mrb[0].mxu0
  %v4231 = vpop.f32.mrb[0].mxu0
  %v4232 = vadd.f32 %v4151, %v4231
  %v4233 = vpop.f32.mrb[0].mxu0
  %4234 = vmatprep.mubr.bf16.mxu0 %v3376
  %4235 = vmatmul.mubr.bf16.gmra.mrb[0].mxu0 %v3375
  %v4236 = vpop.f32.mrb[0].mxu0
  %v4237 = vadd.f32 %v4156, %v4236
  %v4238 = vpop.f32.mrb[0].mxu0
  %v4239 = vpop.f32.mrb[0].mxu0
  %v4240 = vadd.f32 %v4159, %v4239
  %v4241 = vpop.f32.mrb[0].mxu0
  %4242 = vmatprep.mubr.bf16.mxu0 %v3386
  %4243 = vmatmul.mubr.bf16.gmra.mrb[0].mxu0 %v3385
  %v4244 = vpop.f32.mrb[0].mxu0
  %v4245 = vadd.f32 %v4164, %v4244
  %v4246 = vpop.f32.mrb[0].mxu0
  %v4247 = vpop.f32.mrb[0].mxu0
  %v4248 = vadd.f32 %v4167, %v4247
  %v4249 = vpop.f32.mrb[0].mxu0
  %4250 = vdwg.mxu0
  %4251 = vmatprep.subr.bf16.mxu0 0
  %4252 = vmatpush1.bf16.msra.mxu0 %v3046
  %4253 = vmatprep.subr.bf16.mxu0 0
  %4254 = vmatpush1.bf16.msra.mxu0 %v3049
  %4255 = vmatprep.subr.bf16.mxu0 0
  %4256 = vmatpush1.bf16.msra.mxu0 %v3052
  %4257 = vmatprep.subr.bf16.mxu0 0
  %4258 = vmatpush1.bf16.msra.mxu0 %v3055
  %4259 = vmatprep.subr.bf16.mxu0 0
  %4260 = vmatpush1.bf16.msra.mxu0 %v3058
  %4261 = vmatprep.subr.bf16.mxu0 0
  %4262 = vmatpush1.bf16.msra.mxu0 %v3061
  %4263 = vmatprep.subr.bf16.mxu0 0
  %4264 = vmatpush1.bf16.msra.mxu0 %v3064
  %4265 = vmatprep.subr.bf16.mxu0 0
  %4266 = vmatpush1.bf16.msra.mxu0 %v3067
  %4267 = vmatprep.subr.bf16.mxu0 0
  %4268 = vmatpush1.bf16.msra.mxu0 %v3070
  %4269 = vmatprep.subr.bf16.mxu0 0
  %4270 = vmatpush1.bf16.msra.mxu0 %v3073
  %4271 = vmatprep.subr.bf16.mxu0 0
  %4272 = vmatpush1.bf16.msra.mxu0 %v3076
  %4273 = vmatprep.subr.bf16.mxu0 0
  %4274 = vmatpush1.bf16.msra.mxu0 0
  %4275 = vmatprep.subr.bf16.mxu0 0
  %4276 = vmatpush1.bf16.msra.mxu0 0
  %4277 = vmatprep.subr.bf16.mxu0 0
  %4278 = vmatpush1.bf16.msra.mxu0 0
  %4279 = vmatprep.subr.bf16.mxu0 0
  %4280 = vmatpush1.bf16.msra.mxu0 0
  %4281 = vmatprep.subr.bf16.mxu0 0
  %4282 = vmatpush1.bf16.msra.mxu0 0
  %4283 = vmatprep.mubr.bf16.mxu0 %v3445
  %4284 = vmatmul.mubr.bf16.gmra.mrb[0].mxu0 %v3337
  %v4285 = vpop.f32.mrb[0].mxu0
  %v4286 = vadd.f32 %v4205, %v4285
  %v4287 = vpop.f32.mrb[0].mxu0
  %v4288 = vpop.f32.mrb[0].mxu0
  %v4289 = vadd.f32 %v4208, %v4288
  %v4290 = vpop.f32.mrb[0].mxu0
  %4291 = vmatprep.mubr.bf16.mxu0 %v3448
  %4292 = vmatmul.mubr.bf16.gmra.mrb[0].mxu0 %v3347
  %v4293 = vpop.f32.mrb[0].mxu0
  %v4294 = vadd.f32 %v4213, %v4293
  %v4295 = vpop.f32.mrb[0].mxu0
  %v4296 = vpop.f32.mrb[0].mxu0
  %v4297 = vadd.f32 %v4216, %v4296
  %v4298 = vpop.f32.mrb[0].mxu0
  %4299 = vmatprep.mubr.bf16.mxu0 %v3451
  %4300 = vmatmul.mubr.bf16.gmra.mrb[0].mxu0 %v3357
  %v4301 = vpop.f32.mrb[0].mxu0
  %v4302 = vadd.f32 %v4221, %v4301
  %v4303 = vpop.f32.mrb[0].mxu0
  %v4304 = vpop.f32.mrb[0].mxu0
  %v4305 = vadd.f32 %v4224, %v4304
  %v4306 = vpop.f32.mrb[0].mxu0
  %4307 = vmatprep.mubr.bf16.mxu0 %v3454
  %4308 = vmatmul.mubr.bf16.gmra.mrb[0].mxu0 %v3367
  %v4309 = vpop.f32.mrb[0].mxu0
  %v4310 = vadd.f32 %v4229, %v4309
  %v4311 = vpop.f32.mrb[0].mxu0
  %v4312 = vpop.f32.mrb[0].mxu0
  %v4313 = vadd.f32 %v4232, %v4312
  %v4314 = vpop.f32.mrb[0].mxu0
  %4315 = vmatprep.mubr.bf16.mxu0 %v3457
  %4316 = vmatmul.mubr.bf16.gmra.mrb[0].mxu0 %v3377
  %v4317 = vpop.f32.mrb[0].mxu0
  %v4318 = vadd.f32 %v4237, %v4317
  %v4319 = vpop.f32.mrb[0].mxu0
  %v4320 = vpop.f32.mrb[0].mxu0
  %v4321 = vadd.f32 %v4240, %v4320
  %v4322 = vpop.f32.mrb[0].mxu0
  %4323 = vmatprep.mubr.bf16.mxu0 %v3460
  %4324 = vmatmul.mubr.bf16.gmra.mrb[0].mxu0 %v3387
  %v4325 = vpop.f32.mrb[0].mxu0
  %v4326 = vadd.f32 %v4245, %v4325
  %v4327 = vpop.f32.mrb[0].mxu0
  %v4328 = vpop.f32.mrb[0].mxu0
  %v4329 = vadd.f32 %v4248, %v4328
  %v4330 = vpop.f32.mrb[0].mxu0
  %4331 = vdwg.mxu0
  %4368 = vrot.lane.b32.xlu0 %v3869, 127
  %v4369 = vpop.permute.xlu0 %4368
  %4370 = vrot.lane.b32.xlu0 %v3871, 127
  %v4371 = vpop.permute.xlu0 %4370
  %4372 = vrot.lane.b32.xlu0 %v4286, 127
  %v4373 = vpop.permute.xlu0 %4372
  %4374 = vrot.lane.b32.xlu0 %v3873, 127
  %v4375 = vpop.permute.xlu0 %4374
  %4376 = vrot.lane.b32.xlu0 %v3875, 127
  %v4377 = vpop.permute.xlu0 %4376
  %4378 = vrot.lane.b32.xlu0 %v4289, 127
  %v4379 = vpop.permute.xlu0 %4378
  %4380 = vrot.lane.b32.xlu0 %v3879, 127
  %v4381 = vpop.permute.xlu0 %4380
  %4382 = vrot.lane.b32.xlu0 %v3881, 127
  %v4383 = vpop.permute.xlu0 %4382
  %4384 = vrot.lane.b32.xlu0 %v4294, 127
  %v4385 = vpop.permute.xlu0 %4384
  %4386 = vrot.lane.b32.xlu0 %v3883, 127
  %v4387 = vpop.permute.xlu0 %4386
  %4388 = vrot.lane.b32.xlu0 %v3885, 127
  %v4389 = vpop.permute.xlu0 %4388
  %4390 = vrot.lane.b32.xlu0 %v4297, 127
  %v4391 = vpop.permute.xlu0 %4390
  %4392 = vrot.lane.b32.xlu0 %v3889, 127
  %v4393 = vpop.permute.xlu0 %4392
  %4394 = vrot.lane.b32.xlu0 %v3891, 127
  %v4395 = vpop.permute.xlu0 %4394
  %4396 = vrot.lane.b32.xlu0 %v4302, 127
  %v4397 = vpop.permute.xlu0 %4396
  %4398 = vrot.lane.b32.xlu0 %v3893, 127
  %v4399 = vpop.permute.xlu0 %4398
  %4400 = vrot.lane.b32.xlu0 %v3895, 127
  %v4401 = vpop.permute.xlu0 %4400
  %4402 = vrot.lane.b32.xlu0 %v4305, 127
  %v4403 = vpop.permute.xlu0 %4402
  %4404 = vrot.lane.b32.xlu0 %v3899, 127
  %v4405 = vpop.permute.xlu0 %4404
  %4406 = vrot.lane.b32.xlu0 %v3901, 127
  %v4407 = vpop.permute.xlu0 %4406
  %4408 = vrot.lane.b32.xlu0 %v4310, 127
  %v4409 = vpop.permute.xlu0 %4408
  %4410 = vrot.lane.b32.xlu0 %v3903, 127
  %v4411 = vpop.permute.xlu0 %4410
  %4412 = vrot.lane.b32.xlu0 %v3905, 127
  %v4413 = vpop.permute.xlu0 %4412
  %4414 = vrot.lane.b32.xlu0 %v4313, 127
  %v4415 = vpop.permute.xlu0 %4414
  %4416 = vrot.lane.b32.xlu0 %v3909, 127
  %v4417 = vpop.permute.xlu0 %4416
  %4418 = vrot.lane.b32.xlu0 %v3911, 127
  %v4419 = vpop.permute.xlu0 %4418
  %4420 = vrot.lane.b32.xlu0 %v4318, 127
  %v4421 = vpop.permute.xlu0 %4420
  %4422 = vrot.lane.b32.xlu0 %v3913, 127
  %v4423 = vpop.permute.xlu0 %4422
  %4424 = vrot.lane.b32.xlu0 %v3915, 127
  %v4425 = vpop.permute.xlu0 %4424
  %4426 = vrot.lane.b32.xlu0 %v4321, 127
  %v4427 = vpop.permute.xlu0 %4426
  %4428 = vrot.lane.b32.xlu0 %v3919, 127
  %v4429 = vpop.permute.xlu0 %4428
  %4430 = vrot.lane.b32.xlu0 %v3921, 127
  %v4431 = vpop.permute.xlu0 %4430
  %4432 = vrot.lane.b32.xlu0 %v4326, 127
  %v4433 = vpop.permute.xlu0 %4432
  %4434 = vrot.lane.b32.xlu0 %v3923, 127
  %v4435 = vpop.permute.xlu0 %4434
  %4436 = vrot.lane.b32.xlu0 %v3925, 127
  %v4437 = vpop.permute.xlu0 %4436
  %4438 = vrot.lane.b32.xlu0 %v4329, 127
  %v4439 = vpop.permute.xlu0 %4438
  %vm4440 = vcmask 1039360
  %v4441 = vsel %vm4440, %v4369, %v4371
  %v4442 = vsel %vm4440, %v4371, %v4373
  %v4443 = vsel %vm4440, %v4375, %v4377
  %v4444 = vsel %vm4440, %v4377, %v4379
  %v4445 = vsel %vm4440, %v4381, %v4383
  %v4446 = vsel %vm4440, %v4383, %v4385
  %v4447 = vsel %vm4440, %v4387, %v4389
  %v4448 = vsel %vm4440, %v4389, %v4391
  %v4449 = vsel %vm4440, %v4393, %v4395
  %v4450 = vsel %vm4440, %v4395, %v4397
  %v4451 = vsel %vm4440, %v4399, %v4401
  %v4452 = vsel %vm4440, %v4401, %v4403
  %v4453 = vsel %vm4440, %v4405, %v4407
  %v4454 = vsel %vm4440, %v4407, %v4409
  %v4455 = vsel %vm4440, %v4411, %v4413
  %v4456 = vsel %vm4440, %v4413, %v4415
  %v4457 = vsel %vm4440, %v4417, %v4419
  %v4458 = vsel %vm4440, %v4419, %v4421
  %v4459 = vsel %vm4440, %v4423, %v4425
  %v4460 = vsel %vm4440, %v4425, %v4427
  %v4461 = vsel %vm4440, %v4429, %v4431
  %v4462 = vsel %vm4440, %v4431, %v4433
  %v4463 = vsel %vm4440, %v4435, %v4437
  %v4464 = vsel %vm4440, %v4437, %v4439
  %v4501 = vmax.f32 %v3869, %v4441
  %v4502 = vmax.f32 %v3871, %v4442
  %v4503 = vmax.f32 %v4286, %v4373
  %v4504 = vmax.f32 %v3873, %v4443
  %v4505 = vmax.f32 %v3875, %v4444
  %v4506 = vmax.f32 %v4289, %v4379
  %v4507 = vmax.f32 %v3879, %v4445
  %v4508 = vmax.f32 %v3881, %v4446
  %v4509 = vmax.f32 %v4294, %v4385
  %v4510 = vmax.f32 %v3883, %v4447
  %v4511 = vmax.f32 %v3885, %v4448
  %v4512 = vmax.f32 %v4297, %v4391
  %v4513 = vmax.f32 %v3889, %v4449
  %v4514 = vmax.f32 %v3891, %v4450
  %v4515 = vmax.f32 %v4302, %v4397
  %v4516 = vmax.f32 %v3893, %v4451
  %v4517 = vmax.f32 %v3895, %v4452
  %v4518 = vmax.f32 %v4305, %v4403
  %v4519 = vmax.f32 %v3899, %v4453
  %v4520 = vmax.f32 %v3901, %v4454
  %v4521 = vmax.f32 %v4310, %v4409
  %v4522 = vmax.f32 %v3903, %v4455
  %v4523 = vmax.f32 %v3905, %v4456
  %v4524 = vmax.f32 %v4313, %v4415
  %v4525 = vmax.f32 %v3909, %v4457
  %v4526 = vmax.f32 %v3911, %v4458
  %v4527 = vmax.f32 %v4318, %v4421
  %v4528 = vmax.f32 %v3913, %v4459
  %v4529 = vmax.f32 %v3915, %v4460
  %v4530 = vmax.f32 %v4321, %v4427
  %v4531 = vmax.f32 %v3919, %v4461
  %v4532 = vmax.f32 %v3921, %v4462
  %v4533 = vmax.f32 %v4326, %v4433
  %v4534 = vmax.f32 %v3923, %v4463
  %v4535 = vmax.f32 %v3925, %v4464
  %v4536 = vmax.f32 %v4329, %v4439
  %4573 = vrot.lane.b32.xlu0 %v4501, 108
  %v4574 = vpop.permute.xlu0 %4573
  %4575 = vrot.lane.b32.xlu0 %v4502, 108
  %v4576 = vpop.permute.xlu0 %4575
  %4577 = vrot.lane.b32.xlu0 %v4503, 108
  %v4578 = vpop.permute.xlu0 %4577
  %4579 = vrot.lane.b32.xlu0 %v4504, 108
  %v4580 = vpop.permute.xlu0 %4579
  %4581 = vrot.lane.b32.xlu0 %v4505, 108
  %v4582 = vpop.permute.xlu0 %4581
  %4583 = vrot.lane.b32.xlu0 %v4506, 108
  %v4584 = vpop.permute.xlu0 %4583
  %4585 = vrot.lane.b32.xlu0 %v4507, 108
  %v4586 = vpop.permute.xlu0 %4585
  %4587 = vrot.lane.b32.xlu0 %v4508, 108
  %v4588 = vpop.permute.xlu0 %4587
  %4589 = vrot.lane.b32.xlu0 %v4509, 108
  %v4590 = vpop.permute.xlu0 %4589
  %4591 = vrot.lane.b32.xlu0 %v4510, 108
  %v4592 = vpop.permute.xlu0 %4591
  %4593 = vrot.lane.b32.xlu0 %v4511, 108
  %v4594 = vpop.permute.xlu0 %4593
  %4595 = vrot.lane.b32.xlu0 %v4512, 108
  %v4596 = vpop.permute.xlu0 %4595
  %4597 = vrot.lane.b32.xlu0 %v4513, 108
  %v4598 = vpop.permute.xlu0 %4597
  %4599 = vrot.lane.b32.xlu0 %v4514, 108
  %v4600 = vpop.permute.xlu0 %4599
  %4601 = vrot.lane.b32.xlu0 %v4515, 108
  %v4602 = vpop.permute.xlu0 %4601
  %4603 = vrot.lane.b32.xlu0 %v4516, 108
  %v4604 = vpop.permute.xlu0 %4603
  %4605 = vrot.lane.b32.xlu0 %v4517, 108
  %v4606 = vpop.permute.xlu0 %4605
  %4607 = vrot.lane.b32.xlu0 %v4518, 108
  %v4608 = vpop.permute.xlu0 %4607
  %4609 = vrot.lane.b32.xlu0 %v4519, 108
  %v4610 = vpop.permute.xlu0 %4609
  %4611 = vrot.lane.b32.xlu0 %v4520, 108
  %v4612 = vpop.permute.xlu0 %4611
  %4613 = vrot.lane.b32.xlu0 %v4521, 108
  %v4614 = vpop.permute.xlu0 %4613
  %4615 = vrot.lane.b32.xlu0 %v4522, 108
  %v4616 = vpop.permute.xlu0 %4615
  %4617 = vrot.lane.b32.xlu0 %v4523, 108
  %v4618 = vpop.permute.xlu0 %4617
  %4619 = vrot.lane.b32.xlu0 %v4524, 108
  %v4620 = vpop.permute.xlu0 %4619
  %4621 = vrot.lane.b32.xlu0 %v4525, 108
  %v4622 = vpop.permute.xlu0 %4621
  %4623 = vrot.lane.b32.xlu0 %v4526, 108
  %v4624 = vpop.permute.xlu0 %4623
  %4625 = vrot.lane.b32.xlu0 %v4527, 108
  %v4626 = vpop.permute.xlu0 %4625
  %4627 = vrot.lane.b32.xlu0 %v4528, 108
  %v4628 = vpop.permute.xlu0 %4627
  %4629 = vrot.lane.b32.xlu0 %v4529, 108
  %v4630 = vpop.permute.xlu0 %4629
  %4631 = vrot.lane.b32.xlu0 %v4530, 108
  %v4632 = vpop.permute.xlu0 %4631
  %4633 = vrot.lane.b32.xlu0 %v4531, 108
  %v4634 = vpop.permute.xlu0 %4633
  %4635 = vrot.lane.b32.xlu0 %v4532, 108
  %v4636 = vpop.permute.xlu0 %4635
  %4637 = vrot.lane.b32.xlu0 %v4533, 108
  %v4638 = vpop.permute.xlu0 %4637
  %4639 = vrot.lane.b32.xlu0 %v4534, 108
  %v4640 = vpop.permute.xlu0 %4639
  %4641 = vrot.lane.b32.xlu0 %v4535, 108
  %v4642 = vpop.permute.xlu0 %4641
  %4643 = vrot.lane.b32.xlu0 %v4536, 108
  %v4644 = vpop.permute.xlu0 %4643
  %vm4645 = vcmask 883712
  %v4646 = vsel %vm4645, %v4574, %v4576
  %v4647 = vsel %vm4645, %v4576, %v4578
  %v4648 = vsel %vm4645, %v4580, %v4582
  %v4649 = vsel %vm4645, %v4582, %v4584
  %v4650 = vsel %vm4645, %v4586, %v4588
  %v4651 = vsel %vm4645, %v4588, %v4590
  %v4652 = vsel %vm4645, %v4592, %v4594
  %v4653 = vsel %vm4645, %v4594, %v4596
  %v4654 = vsel %vm4645, %v4598, %v4600
  %v4655 = vsel %vm4645, %v4600, %v4602
  %v4656 = vsel %vm4645, %v4604, %v4606
  %v4657 = vsel %vm4645, %v4606, %v4608
  %v4658 = vsel %vm4645, %v4610, %v4612
  %v4659 = vsel %vm4645, %v4612, %v4614
  %v4660 = vsel %vm4645, %v4616, %v4618
  %v4661 = vsel %vm4645, %v4618, %v4620
  %v4662 = vsel %vm4645, %v4622, %v4624
  %v4663 = vsel %vm4645, %v4624, %v4626
  %v4664 = vsel %vm4645, %v4628, %v4630
  %v4665 = vsel %vm4645, %v4630, %v4632
  %v4666 = vsel %vm4645, %v4634, %v4636
  %v4667 = vsel %vm4645, %v4636, %v4638
  %v4668 = vsel %vm4645, %v4640, %v4642
  %v4669 = vsel %vm4645, %v4642, %v4644
  %v4706 = vmax.f32 %v4501, %v4646
  %v4707 = vmax.f32 %v4502, %v4647
  %v4708 = vmax.f32 %v4503, %v4578
  %v4709 = vmax.f32 %v4504, %v4648
  %v4710 = vmax.f32 %v4505, %v4649
  %v4711 = vmax.f32 %v4506, %v4584
  %v4712 = vmax.f32 %v4507, %v4650
  %v4713 = vmax.f32 %v4508, %v4651
  %v4714 = vmax.f32 %v4509, %v4590
  %v4715 = vmax.f32 %v4510, %v4652
  %v4716 = vmax.f32 %v4511, %v4653
  %v4717 = vmax.f32 %v4512, %v4596
  %v4718 = vmax.f32 %v4513, %v4654
  %v4719 = vmax.f32 %v4514, %v4655
  %v4720 = vmax.f32 %v4515, %v4602
  %v4721 = vmax.f32 %v4516, %v4656
  %v4722 = vmax.f32 %v4517, %v4657
  %v4723 = vmax.f32 %v4518, %v4608
  %v4724 = vmax.f32 %v4519, %v4658
  %v4725 = vmax.f32 %v4520, %v4659
  %v4726 = vmax.f32 %v4521, %v4614
  %v4727 = vmax.f32 %v4522, %v4660
  %v4728 = vmax.f32 %v4523, %v4661
  %v4729 = vmax.f32 %v4524, %v4620
  %v4730 = vmax.f32 %v4525, %v4662
  %v4731 = vmax.f32 %v4526, %v4663
  %v4732 = vmax.f32 %v4527, %v4626
  %v4733 = vmax.f32 %v4528, %v4664
  %v4734 = vmax.f32 %v4529, %v4665
  %v4735 = vmax.f32 %v4530, %v4632
  %v4736 = vmax.f32 %v4531, %v4666
  %v4737 = vmax.f32 %v4532, %v4667
  %v4738 = vmax.f32 %v4533, %v4638
  %v4739 = vmax.f32 %v4534, %v4668
  %v4740 = vmax.f32 %v4535, %v4669
  %v4741 = vmax.f32 %v4536, %v4644
  %v4742 = vmax.f32 %v4706, 0.0
  %v4743 = vmax.f32 %v4707, 0.0
  %v4744 = vmax.f32 %v4708, 0.0
  %v4745 = vmax.f32 %v4709, 0.0
  %v4746 = vmax.f32 %v4710, 0.0
  %v4747 = vmax.f32 %v4711, 0.0
  %v4748 = vmax.f32 %v4712, 0.0
  %v4749 = vmax.f32 %v4713, 0.0
  %v4750 = vmax.f32 %v4714, 0.0
  %v4751 = vmax.f32 %v4715, 0.0
  %v4752 = vmax.f32 %v4716, 0.0
  %v4753 = vmax.f32 %v4717, 0.0
  %v4754 = vmax.f32 %v4718, 0.0
  %v4755 = vmax.f32 %v4719, 0.0
  %v4756 = vmax.f32 %v4720, 0.0
  %v4757 = vmax.f32 %v4721, 0.0
  %v4758 = vmax.f32 %v4722, 0.0
  %v4759 = vmax.f32 %v4723, 0.0
  %v4760 = vmax.f32 %v4724, 0.0
  %v4761 = vmax.f32 %v4725, 0.0
  %v4762 = vmax.f32 %v4726, 0.0
  %v4763 = vmax.f32 %v4727, 0.0
  %v4764 = vmax.f32 %v4728, 0.0
  %v4765 = vmax.f32 %v4729, 0.0
  %v4766 = vmax.f32 %v4730, 0.0
  %v4767 = vmax.f32 %v4731, 0.0
  %v4768 = vmax.f32 %v4732, 0.0
  %v4769 = vmax.f32 %v4733, 0.0
  %v4770 = vmax.f32 %v4734, 0.0
  %v4771 = vmax.f32 %v4735, 0.0
  %v4772 = vmax.f32 %v4736, 0.0
  %v4773 = vmax.f32 %v4737, 0.0
  %v4774 = vmax.f32 %v4738, 0.0
  %v4775 = vmax.f32 %v4739, 0.0
  %v4776 = vmax.f32 %v4740, 0.0
  %v4777 = vmax.f32 %v4741, 0.0
  %v4778 = vpack.c.bf16 %v4745, %v4742
  %v4779 = vpack.c.bf16 %v4746, %v4743
  %v4780 = vpack.c.bf16 %v4747, %v4744
  %v4781 = vld [vmem:[%s3] sm:$0xf]
  %v4782 = vld [vmem:[%s3 + $0x4] sm:$0xf]
  %v4783 = vld [vmem:[%s3 + $0x8] sm:$0xf]
  %v4784 = vld [vmem:[%s3 + $0xc] sm:$0xf]
  %v4785 = vld [vmem:[%s3 + $0x10] sm:$0xf]
  %v4786 = vld [vmem:[%s3 + $0x14] sm:$0xf]
  %v4787 = vld [vmem:[%s3 + $0x18] sm:$0xf]
  %v4788 = vld [vmem:[%s3 + $0x1c] sm:$0xf]
  %v4789 = vld [vmem:[%s3 + $0x20] sm:$0xf]
  %v4790 = vld [vmem:[%s3 + $0x24] sm:$0xf]
  %v4791 = vld [vmem:[%s3 + $0x28] sm:$0xf]
  %v4792 = vld [vmem:[%s3 + $0x2c] sm:$0xf]
  %v4793 = vld [vmem:[%s3 + $0x30] sm:$0xf]
  %v4794 = vld [vmem:[%s3 + $0x34] sm:$0xf]
  %v4795 = vld [vmem:[%s3 + $0x38] sm:$0xf]
  %v4796 = vld [vmem:[%s3 + $0x3c] sm:$0xf]
  %v4797 = vld [vmem:[%s3 + $0x40] sm:$0xf]
  %v4798 = vld [vmem:[%s3 + $0x44] sm:$0xf]
  %v4799 = vld [vmem:[%s3 + $0x48] sm:$0xf]
  %v4800 = vld [vmem:[%s3 + $0x4c] sm:$0xf]
  %v4801 = vld [vmem:[%s3 + $0x50] sm:$0xf]
  %v4802 = vld [vmem:[%s3 + $0x54] sm:$0xf]
  %v4803 = vld [vmem:[%s3 + $0x58] sm:$0xf]
  %v4804 = vld [vmem:[%s3 + $0x5c] sm:$0xf]
  %v4805 = vld [vmem:[%s3 + $0x60] sm:$0xf]
  %v4806 = vld [vmem:[%s3 + $0x64] sm:$0xf]
  %v4807 = vld [vmem:[%s3 + $0x68] sm:$0xf]
  %v4808 = vld [vmem:[%s3 + $0x6c] sm:$0xf]
  %v4809 = vld [vmem:[%s3 + $0x70] sm:$0xf]
  %v4810 = vld [vmem:[%s3 + $0x74] sm:$0xf]
  %v4811 = vld [vmem:[%s3 + $0x78] sm:$0xf]
  %v4812 = vld [vmem:[%s3 + $0x7c] sm:$0xf]
  %v4813 = vld [vmem:[%s3 + $0x80] sm:$0xf]
  %v4814 = vld [vmem:[%s3 + $0x84] sm:$0xf]
  %v4815 = vld [vmem:[%s3 + $0x88] sm:$0xf]
  %v4816 = vld [vmem:[%s3 + $0x8c] sm:$0xf]
  %v4817 = vld [vmem:[%s3 + $0x90] sm:$0xf]
  %v4818 = vld [vmem:[%s3 + $0x94] sm:$0xf]
  %v4819 = vld [vmem:[%s3 + $0x98] sm:$0xf]
  %v4820 = vld [vmem:[%s3 + $0x9c] sm:$0xf]
  %v4821 = vld [vmem:[%s3 + $0xa0] sm:$0xf]
  %v4822 = vld [vmem:[%s3 + $0xa4] sm:$0xf]
  %v4823 = vld [vmem:[%s3 + $0xa8] sm:$0xf]
  %v4824 = vld [vmem:[%s3 + $0xac] sm:$0xf]
  %v4825 = vld [vmem:[%s3 + $0xb0] sm:$0xf]
  %v4826 = vld [vmem:[%s3 + $0xb4] sm:$0x3]
  %v4827 = vpack.c.bf16 %v4751, %v4748
  %v4828 = vpack.c.bf16 %v4752, %v4749
  %v4829 = vpack.c.bf16 %v4753, %v4750
  %s4830 = scalar_lea.vmem %s3, 184
  %v4831 = vld [vmem:[%s4830] sm:$0xf]
  %v4832 = vld [vmem:[%s4830 + $0x4] sm:$0xf]
  %v4833 = vld [vmem:[%s4830 + $0x8] sm:$0xf]
  %v4834 = vld [vmem:[%s4830 + $0xc] sm:$0xf]
  %v4835 = vld [vmem:[%s4830 + $0x10] sm:$0xf]
  %v4836 = vld [vmem:[%s4830 + $0x14] sm:$0xf]
  %v4837 = vld [vmem:[%s4830 + $0x18] sm:$0xf]
  %v4838 = vld [vmem:[%s4830 + $0x1c] sm:$0xf]
  %v4839 = vld [vmem:[%s4830 + $0x20] sm:$0xf]
  %v4840 = vld [vmem:[%s4830 + $0x24] sm:$0xf]
  %v4841 = vld [vmem:[%s4830 + $0x28] sm:$0xf]
  %v4842 = vld [vmem:[%s4830 + $0x2c] sm:$0xf]
  %v4843 = vld [vmem:[%s4830 + $0x30] sm:$0xf]
  %v4844 = vld [vmem:[%s4830 + $0x34] sm:$0xf]
  %v4845 = vld [vmem:[%s4830 + $0x38] sm:$0xf]
  %v4846 = vld [vmem:[%s4830 + $0x3c] sm:$0xf]
  %v4847 = vld [vmem:[%s4830 + $0x40] sm:$0xf]
  %v4848 = vld [vmem:[%s4830 + $0x44] sm:$0xf]
  %v4849 = vld [vmem:[%s4830 + $0x48] sm:$0xf]
  %v4850 = vld [vmem:[%s4830 + $0x4c] sm:$0xf]
  %v4851 = vld [vmem:[%s4830 + $0x50] sm:$0xf]
  %v4852 = vld [vmem:[%s4830 + $0x54] sm:$0xf]
  %v4853 = vld [vmem:[%s4830 + $0x58] sm:$0xf]
  %v4854 = vld [vmem:[%s4830 + $0x5c] sm:$0xf]
  %v4855 = vld [vmem:[%s4830 + $0x60] sm:$0xf]
  %v4856 = vld [vmem:[%s4830 + $0x64] sm:$0xf]
  %v4857 = vld [vmem:[%s4830 + $0x68] sm:$0xf]
  %v4858 = vld [vmem:[%s4830 + $0x6c] sm:$0xf]
  %v4859 = vld [vmem:[%s4830 + $0x70] sm:$0xf]
  %v4860 = vld [vmem:[%s4830 + $0x74] sm:$0xf]
  %v4861 = vld [vmem:[%s4830 + $0x78] sm:$0xf]
  %v4862 = vld [vmem:[%s4830 + $0x7c] sm:$0xf]
  %v4863 = vld [vmem:[%s4830 + $0x80] sm:$0xf]
  %v4864 = vld [vmem:[%s4830 + $0x84] sm:$0xf]
  %v4865 = vld [vmem:[%s4830 + $0x88] sm:$0xf]
  %v4866 = vld [vmem:[%s4830 + $0x8c] sm:$0xf]
  %v4867 = vld [vmem:[%s4830 + $0x90] sm:$0xf]
  %v4868 = vld [vmem:[%s4830 + $0x94] sm:$0xf]
  %v4869 = vld [vmem:[%s4830 + $0x98] sm:$0xf]
  %v4870 = vld [vmem:[%s4830 + $0x9c] sm:$0xf]
  %v4871 = vld [vmem:[%s4830 + $0xa0] sm:$0xf]
  %v4872 = vld [vmem:[%s4830 + $0xa4] sm:$0xf]
  %v4873 = vld [vmem:[%s4830 + $0xa8] sm:$0xf]
  %v4874 = vld [vmem:[%s4830 + $0xac] sm:$0xf]
  %v4875 = vld [vmem:[%s4830 + $0xb0] sm:$0xf]
  %v4876 = vld [vmem:[%s4830 + $0xb4] sm:$0x3]
  %v4923 = vunpack.c.l.b16 %v4831
  %v4924 = vunpack.c.l.b16 %v4832
  %v4925 = vunpack.c.l.b16 %v4833
  %v4926 = vunpack.c.l.b16 %v4834
  %v4927 = vunpack.c.l.b16 %v4835
  %v4928 = vunpack.c.l.b16 %v4836
  %v4929 = vunpack.c.l.b16 %v4837
  %v4930 = vunpack.c.l.b16 %v4838
  %v4931 = vunpack.c.l.b16 %v4839
  %v4932 = vunpack.c.l.b16 %v4840
  %v4933 = vunpack.c.l.b16 %v4841
  %v4934 = vunpack.c.l.b16 %v4842
  %v4935 = vunpack.c.l.b16 %v4843
  %v4936 = vunpack.c.l.b16 %v4844
  %v4937 = vunpack.c.l.b16 %v4845
  %v4938 = vunpack.c.l.b16 %v4846
  %v4939 = vunpack.c.l.b16 %v4847
  %v4940 = vunpack.c.l.b16 %v4848
  %v4941 = vunpack.c.l.b16 %v4849
  %v4942 = vunpack.c.l.b16 %v4850
  %v4943 = vunpack.c.l.b16 %v4851
  %v4944 = vunpack.c.l.b16 %v4852
  %v4945 = vunpack.c.l.b16 %v4853
  %v4946 = vunpack.c.l.b16 %v4854
  %v4947 = vunpack.c.l.b16 %v4855
  %v4948 = vunpack.c.l.b16 %v4856
  %v4949 = vunpack.c.l.b16 %v4857
  %v4950 = vunpack.c.l.b16 %v4858
  %v4951 = vunpack.c.l.b16 %v4859
  %v4952 = vunpack.c.l.b16 %v4860
  %v4953 = vunpack.c.l.b16 %v4861
  %v4954 = vunpack.c.l.b16 %v4862
  %v4955 = vunpack.c.l.b16 %v4863
  %v4956 = vunpack.c.l.b16 %v4864
  %v4957 = vunpack.c.l.b16 %v4865
  %v4958 = vunpack.c.l.b16 %v4866
  %v4959 = vunpack.c.l.b16 %v4867
  %v4960 = vunpack.c.l.b16 %v4868
  %v4961 = vunpack.c.l.b16 %v4869
  %v4962 = vunpack.c.l.b16 %v4870
  %v4963 = vunpack.c.l.b16 %v4871
  %v4964 = vunpack.c.l.b16 %v4872
  %v4965 = vunpack.c.l.b16 %v4873
  %v4966 = vunpack.c.l.b16 %v4874
  %v4967 = vunpack.c.l.b16 %v4875
  %v4968 = vunpack.c.l.b16 %v4876
  %v4969 = vpack.c.b16 %v4924, %v4923
  %v4970 = vpack.c.b16 %v4926, %v4925
  %v4971 = vpack.c.b16 %v4928, %v4927
  %v4972 = vpack.c.b16 %v4930, %v4929
  %v4973 = vpack.c.b16 %v4932, %v4931
  %v4974 = vpack.c.b16 %v4934, %v4933
  %v4975 = vpack.c.b16 %v4936, %v4935
  %v4976 = vpack.c.b16 %v4938, %v4937
  %v4977 = vpack.c.b16 %v4940, %v4939
  %v4978 = vpack.c.b16 %v4942, %v4941
  %v4979 = vpack.c.b16 %v4944, %v4943
  %v4980 = vpack.c.b16 %v4946, %v4945
  %v4981 = vpack.c.b16 %v4948, %v4947
  %v4982 = vpack.c.b16 %v4950, %v4949
  %v4983 = vpack.c.b16 %v4952, %v4951
  %v4984 = vpack.c.b16 %v4954, %v4953
  %v4985 = vpack.c.b16 %v4956, %v4955
  %v4986 = vpack.c.b16 %v4958, %v4957
  %v4987 = vpack.c.b16 %v4960, %v4959
  %v4988 = vpack.c.b16 %v4962, %v4961
  %v4989 = vpack.c.b16 %v4964, %v4963
  %v4990 = vpack.c.b16 %v4966, %v4965
  %v4991 = vpack.c.b16 %v4968, %v4967
  %vm5014 = vcmask 875520
  %v5016 = vsel %vm5014, %v4829, 0
  %vm5018 = vcmask 1044480
  %vm5019 = vcmask 1045504
  %v5020 = vsel %vm5018, 4294967295, 65535
  %v5021 = vsel %vm5019, %v5020, 0
  %v5023 = vand.u32 %v4991, %v5021
  %5025 = vmatprep.subr.bf16.mxu0 0
  %5026 = vmatpush1.bf16.msra.mxu0 %v4969
  %5027 = vmatprep.subr.bf16.mxu0 0
  %5028 = vmatpush1.bf16.msra.mxu0 %v4970
  %5029 = vmatprep.subr.bf16.mxu0 0
  %5030 = vmatpush1.bf16.msra.mxu0 %v4971
  %5031 = vmatprep.subr.bf16.mxu0 0
  %5032 = vmatpush1.bf16.msra.mxu0 %v4972
  %5033 = vmatprep.subr.bf16.mxu0 0
  %5034 = vmatpush1.bf16.msra.mxu0 %v4973
  %5035 = vmatprep.subr.bf16.mxu0 0
  %5036 = vmatpush1.bf16.msra.mxu0 %v4974
  %5037 = vmatprep.subr.bf16.mxu0 0
  %5038 = vmatpush1.bf16.msra.mxu0 %v4975
  %5039 = vmatprep.subr.bf16.mxu0 0
  %5040 = vmatpush1.bf16.msra.mxu0 %v4976
  %5041 = vmatprep.subr.bf16.mxu0 0
  %5042 = vmatpush1.bf16.msra.mxu0 %v4977
  %5043 = vmatprep.subr.bf16.mxu0 0
  %5044 = vmatpush1.bf16.msra.mxu0 %v4978
  %5045 = vmatprep.subr.bf16.mxu0 0
  %5046 = vmatpush1.bf16.msra.mxu0 %v4979
  %5047 = vmatprep.subr.bf16.mxu0 0
  %5048 = vmatpush1.bf16.msra.mxu0 %v4980
  %5049 = vmatprep.subr.bf16.mxu0 0
  %5050 = vmatpush1.bf16.msra.mxu0 %v4981
  %5051 = vmatprep.subr.bf16.mxu0 0
  %5052 = vmatpush1.bf16.msra.mxu0 %v4982
  %5053 = vmatprep.subr.bf16.mxu0 0
  %5054 = vmatpush1.bf16.msra.mxu0 %v4983
  %5055 = vmatprep.subr.bf16.mxu0 0
  %5056 = vmatpush1.bf16.msra.mxu0 %v4984
  %5057 = vmatprep.mubr.bf16.mxu0 %v4828
  %5058 = vmatmul.mubr.bf16.gmra.mrb[0].mxu0 %v4827
  %v5059 = vpop.f32.mrb[0].mxu0
  %v5060 = vadd.f32 0.0, %v5059
  %v5061 = vpop.f32.mrb[0].mxu0
  %v5062 = vpop.f32.mrb[0].mxu0
  %v5063 = vadd.f32 0.0, %v5062
  %v5064 = vpop.f32.mrb[0].mxu0
  %5065 = vdwg.mxu0
  %5066 = vmatprep.subr.bf16.mxu0 0
  %5067 = vmatpush1.bf16.msra.mxu0 %v4985
  %5068 = vmatprep.subr.bf16.mxu0 0
  %5069 = vmatpush1.bf16.msra.mxu0 %v4986
  %5070 = vmatprep.subr.bf16.mxu0 0
  %5071 = vmatpush1.bf16.msra.mxu0 %v4987
  %5072 = vmatprep.subr.bf16.mxu0 0
  %5073 = vmatpush1.bf16.msra.mxu0 %v4988
  %5074 = vmatprep.subr.bf16.mxu0 0
  %5075 = vmatpush1.bf16.msra.mxu0 %v4989
  %5076 = vmatprep.subr.bf16.mxu0 0
  %5077 = vmatpush1.bf16.msra.mxu0 %v4990
  %5078 = vmatprep.subr.bf16.mxu0 0
  %5079 = vmatpush1.bf16.msra.mxu0 %v5023
  %5080 = vmatprep.subr.bf16.mxu0 0
  %5081 = vmatpush1.bf16.msra.mxu0 0
  %5082 = vmatprep.subr.bf16.mxu0 0
  %5083 = vmatpush1.bf16.msra.mxu0 0
  %5084 = vmatprep.subr.bf16.mxu0 0
  %5085 = vmatpush1.bf16.msra.mxu0 0
  %5086 = vmatprep.subr.bf16.mxu0 0
  %5087 = vmatpush1.bf16.msra.mxu0 0
  %5088 = vmatprep.subr.bf16.mxu0 0
  %5089 = vmatpush1.bf16.msra.mxu0 0
  %5090 = vmatprep.subr.bf16.mxu0 0
  %5091 = vmatpush1.bf16.msra.mxu0 0
  %5092 = vmatprep.subr.bf16.mxu0 0
  %5093 = vmatpush1.bf16.msra.mxu0 0
  %5094 = vmatprep.subr.bf16.mxu0 0
  %5095 = vmatpush1.bf16.msra.mxu0 0
  %5096 = vmatprep.subr.bf16.mxu0 0
  %5097 = vmatpush1.bf16.msra.mxu0 0
  %5098 = vmatprep.mubr.bf16.mxu0 0
  %5099 = vmatmul.mubr.bf16.gmra.mrb[0].mxu0 %v5016
  %v5100 = vpop.f32.mrb[0].mxu0
  %v5101 = vadd.f32 %v5060, %v5100
  %v5102 = vpop.f32.mrb[0].mxu0
  %v5103 = vpop.f32.mrb[0].mxu0
  %v5104 = vadd.f32 %v5063, %v5103
  %v5105 = vpop.f32.mrb[0].mxu0
  %5106 = vdwg.mxu0
  %v5153 = vunpack.c.l.b16 %v4781
  %v5154 = vunpack.c.l.b16 %v4782
  %v5155 = vunpack.c.l.b16 %v4783
  %v5156 = vunpack.c.l.b16 %v4784
  %v5157 = vunpack.c.l.b16 %v4785
  %v5158 = vunpack.c.l.b16 %v4786
  %v5159 = vunpack.c.l.b16 %v4787
  %v5160 = vunpack.c.l.b16 %v4788
  %v5161 = vunpack.c.l.b16 %v4789
  %v5162 = vunpack.c.l.b16 %v4790
  %v5163 = vunpack.c.l.b16 %v4791
  %v5164 = vunpack.c.l.b16 %v4792
  %v5165 = vunpack.c.l.b16 %v4793
  %v5166 = vunpack.c.l.b16 %v4794
  %v5167 = vunpack.c.l.b16 %v4795
  %v5168 = vunpack.c.l.b16 %v4796
  %v5169 = vunpack.c.l.b16 %v4797
  %v5170 = vunpack.c.l.b16 %v4798
  %v5171 = vunpack.c.l.b16 %v4799
  %v5172 = vunpack.c.l.b16 %v4800
  %v5173 = vunpack.c.l.b16 %v4801
  %v5174 = vunpack.c.l.b16 %v4802
  %v5175 = vunpack.c.l.b16 %v4803
  %v5176 = vunpack.c.l.b16 %v4804
  %v5177 = vunpack.c.l.b16 %v4805
  %v5178 = vunpack.c.l.b16 %v4806
  %v5179 = vunpack.c.l.b16 %v4807
  %v5180 = vunpack.c.l.b16 %v4808
  %v5181 = vunpack.c.l.b16 %v4809
  %v5182 = vunpack.c.l.b16 %v4810
  %v5183 = vunpack.c.l.b16 %v4811
  %v5184 = vunpack.c.l.b16 %v4812
  %v5185 = vunpack.c.l.b16 %v4813
  %v5186 = vunpack.c.l.b16 %v4814
  %v5187 = vunpack.c.l.b16 %v4815
  %v5188 = vunpack.c.l.b16 %v4816
  %v5189 = vunpack.c.l.b16 %v4817
  %v5190 = vunpack.c.l.b16 %v4818
  %v5191 = vunpack.c.l.b16 %v4819
  %v5192 = vunpack.c.l.b16 %v4820
  %v5193 = vunpack.c.l.b16 %v4821
  %v5194 = vunpack.c.l.b16 %v4822
  %v5195 = vunpack.c.l.b16 %v4823
  %v5196 = vunpack.c.l.b16 %v4824
  %v5197 = vunpack.c.l.b16 %v4825
  %v5198 = vunpack.c.l.b16 %v4826
  %v5199 = vpack.c.b16 %v5154, %v5153
  %v5200 = vpack.c.b16 %v5156, %v5155
  %v5201 = vpack.c.b16 %v5158, %v5157
  %v5202 = vpack.c.b16 %v5160, %v5159
  %v5203 = vpack.c.b16 %v5162, %v5161
  %v5204 = vpack.c.b16 %v5164, %v5163
  %v5205 = vpack.c.b16 %v5166, %v5165
  %v5206 = vpack.c.b16 %v5168, %v5167
  %v5207 = vpack.c.b16 %v5170, %v5169
  %v5208 = vpack.c.b16 %v5172, %v5171
  %v5209 = vpack.c.b16 %v5174, %v5173
  %v5210 = vpack.c.b16 %v5176, %v5175
  %v5211 = vpack.c.b16 %v5178, %v5177
  %v5212 = vpack.c.b16 %v5180, %v5179
  %v5213 = vpack.c.b16 %v5182, %v5181
  %v5214 = vpack.c.b16 %v5184, %v5183
  %v5215 = vpack.c.b16 %v5186, %v5185
  %v5216 = vpack.c.b16 %v5188, %v5187
  %v5217 = vpack.c.b16 %v5190, %v5189
  %v5218 = vpack.c.b16 %v5192, %v5191
  %v5219 = vpack.c.b16 %v5194, %v5193
  %v5220 = vpack.c.b16 %v5196, %v5195
  %v5221 = vpack.c.b16 %v5198, %v5197
  %v5245 = vsel %vm5014, %v4780, 0
  %v5248 = vand.u32 %v5221, %v5021
  %5250 = vmatprep.subr.bf16.mxu0 0
  %5251 = vmatpush1.bf16.msra.mxu0 %v5199
  %5252 = vmatprep.subr.bf16.mxu0 0
  %5253 = vmatpush1.bf16.msra.mxu0 %v5200
  %5254 = vmatprep.subr.bf16.mxu0 0
  %5255 = vmatpush1.bf16.msra.mxu0 %v5201
  %5256 = vmatprep.subr.bf16.mxu0 0
  %5257 = vmatpush1.bf16.msra.mxu0 %v5202
  %5258 = vmatprep.subr.bf16.mxu0 0
  %5259 = vmatpush1.bf16.msra.mxu0 %v5203
  %5260 = vmatprep.subr.bf16.mxu0 0
  %5261 = vmatpush1.bf16.msra.mxu0 %v5204
  %5262 = vmatprep.subr.bf16.mxu0 0
  %5263 = vmatpush1.bf16.msra.mxu0 %v5205
  %5264 = vmatprep.subr.bf16.mxu0 0
  %5265 = vmatpush1.bf16.msra.mxu0 %v5206
  %5266 = vmatprep.subr.bf16.mxu0 0
  %5267 = vmatpush1.bf16.msra.mxu0 %v5207
  %5268 = vmatprep.subr.bf16.mxu0 0
  %5269 = vmatpush1.bf16.msra.mxu0 %v5208
  %5270 = vmatprep.subr.bf16.mxu0 0
  %5271 = vmatpush1.bf16.msra.mxu0 %v5209
  %5272 = vmatprep.subr.bf16.mxu0 0
  %5273 = vmatpush1.bf16.msra.mxu0 %v5210
  %5274 = vmatprep.subr.bf16.mxu0 0
  %5275 = vmatpush1.bf16.msra.mxu0 %v5211
  %5276 = vmatprep.subr.bf16.mxu0 0
  %5277 = vmatpush1.bf16.msra.mxu0 %v5212
  %5278 = vmatprep.subr.bf16.mxu0 0
  %5279 = vmatpush1.bf16.msra.mxu0 %v5213
  %5280 = vmatprep.subr.bf16.mxu0 0
  %5281 = vmatpush1.bf16.msra.mxu0 %v5214
  %5282 = vmatprep.mubr.bf16.mxu0 %v4779
  %5283 = vmatmul.mubr.bf16.gmra.mrb[0].mxu0 %v4778
  %v5284 = vpop.f32.mrb[0].mxu0
  %v5285 = vadd.f32 %v5101, %v5284
  %v5286 = vpop.f32.mrb[0].mxu0
  %v5287 = vpop.f32.mrb[0].mxu0
  %v5288 = vadd.f32 %v5104, %v5287
  %v5289 = vpop.f32.mrb[0].mxu0
  %5290 = vdwg.mxu0
  %5291 = vmatprep.subr.bf16.mxu0 0
  %5292 = vmatpush1.bf16.msra.mxu0 %v5215
  %5293 = vmatprep.subr.bf16.mxu0 0
  %5294 = vmatpush1.bf16.msra.mxu0 %v5216
  %5295 = vmatprep.subr.bf16.mxu0 0
  %5296 = vmatpush1.bf16.msra.mxu0 %v5217
  %5297 = vmatprep.subr.bf16.mxu0 0
  %5298 = vmatpush1.bf16.msra.mxu0 %v5218
  %5299 = vmatprep.subr.bf16.mxu0 0
  %5300 = vmatpush1.bf16.msra.mxu0 %v5219
  %5301 = vmatprep.subr.bf16.mxu0 0
  %5302 = vmatpush1.bf16.msra.mxu0 %v5220
  %5303 = vmatprep.subr.bf16.mxu0 0
  %5304 = vmatpush1.bf16.msra.mxu0 %v5248
  %5305 = vmatprep.subr.bf16.mxu0 0
  %5306 = vmatpush1.bf16.msra.mxu0 0
  %5307 = vmatprep.subr.bf16.mxu0 0
  %5308 = vmatpush1.bf16.msra.mxu0 0
  %5309 = vmatprep.subr.bf16.mxu0 0
  %5310 = vmatpush1.bf16.msra.mxu0 0
  %5311 = vmatprep.subr.bf16.mxu0 0
  %5312 = vmatpush1.bf16.msra.mxu0 0
  %5313 = vmatprep.subr.bf16.mxu0 0
  %5314 = vmatpush1.bf16.msra.mxu0 0
  %5315 = vmatprep.subr.bf16.mxu0 0
  %5316 = vmatpush1.bf16.msra.mxu0 0
  %5317 = vmatprep.subr.bf16.mxu0 0
  %5318 = vmatpush1.bf16.msra.mxu0 0
  %5319 = vmatprep.subr.bf16.mxu0 0
  %5320 = vmatpush1.bf16.msra.mxu0 0
  %5321 = vmatprep.subr.bf16.mxu0 0
  %5322 = vmatpush1.bf16.msra.mxu0 0
  %5323 = vmatprep.mubr.bf16.mxu0 0
  %5324 = vmatmul.mubr.bf16.gmra.mrb[0].mxu0 %v5245
  %v5325 = vpop.f32.mrb[0].mxu0
  %v5326 = vadd.f32 %v5285, %v5325
  %v5327 = vpop.f32.mrb[0].mxu0
  %v5328 = vpop.f32.mrb[0].mxu0
  %v5329 = vadd.f32 %v5288, %v5328
  %v5330 = vpop.f32.mrb[0].mxu0
  %5331 = vdwg.mxu0
  %v5332 = vpack.c.bf16 %v4757, %v4754
  %v5333 = vpack.c.bf16 %v4758, %v4755
  %v5334 = vpack.c.bf16 %v4759, %v4756
  %s5335 = scalar_lea.vmem %s3, 368
  %v5336 = vld [vmem:[%s5335] sm:$0xf]
  %v5337 = vld [vmem:[%s5335 + $0x4] sm:$0xf]
  %v5338 = vld [vmem:[%s5335 + $0x8] sm:$0xf]
  %v5339 = vld [vmem:[%s5335 + $0xc] sm:$0xf]
  %v5340 = vld [vmem:[%s5335 + $0x10] sm:$0xf]
  %v5341 = vld [vmem:[%s5335 + $0x14] sm:$0xf]
  %v5342 = vld [vmem:[%s5335 + $0x18] sm:$0xf]
  %v5343 = vld [vmem:[%s5335 + $0x1c] sm:$0xf]
  %v5344 = vld [vmem:[%s5335 + $0x20] sm:$0xf]
  %v5345 = vld [vmem:[%s5335 + $0x24] sm:$0xf]
  %v5346 = vld [vmem:[%s5335 + $0x28] sm:$0xf]
  %v5347 = vld [vmem:[%s5335 + $0x2c] sm:$0xf]
  %v5348 = vld [vmem:[%s5335 + $0x30] sm:$0xf]
  %v5349 = vld [vmem:[%s5335 + $0x34] sm:$0xf]
  %v5350 = vld [vmem:[%s5335 + $0x38] sm:$0xf]
  %v5351 = vld [vmem:[%s5335 + $0x3c] sm:$0xf]
  %v5352 = vld [vmem:[%s5335 + $0x40] sm:$0xf]
  %v5353 = vld [vmem:[%s5335 + $0x44] sm:$0xf]
  %v5354 = vld [vmem:[%s5335 + $0x48] sm:$0xf]
  %v5355 = vld [vmem:[%s5335 + $0x4c] sm:$0xf]
  %v5356 = vld [vmem:[%s5335 + $0x50] sm:$0xf]
  %v5357 = vld [vmem:[%s5335 + $0x54] sm:$0xf]
  %v5358 = vld [vmem:[%s5335 + $0x58] sm:$0xf]
  %v5359 = vld [vmem:[%s5335 + $0x5c] sm:$0xf]
  %v5360 = vld [vmem:[%s5335 + $0x60] sm:$0xf]
  %v5361 = vld [vmem:[%s5335 + $0x64] sm:$0xf]
  %v5362 = vld [vmem:[%s5335 + $0x68] sm:$0xf]
  %v5363 = vld [vmem:[%s5335 + $0x6c] sm:$0xf]
  %v5364 = vld [vmem:[%s5335 + $0x70] sm:$0xf]
  %v5365 = vld [vmem:[%s5335 + $0x74] sm:$0xf]
  %v5366 = vld [vmem:[%s5335 + $0x78] sm:$0xf]
  %v5367 = vld [vmem:[%s5335 + $0x7c] sm:$0xf]
  %v5368 = vld [vmem:[%s5335 + $0x80] sm:$0xf]
  %v5369 = vld [vmem:[%s5335 + $0x84] sm:$0xf]
  %v5370 = vld [vmem:[%s5335 + $0x88] sm:$0xf]
  %v5371 = vld [vmem:[%s5335 + $0x8c] sm:$0xf]
  %v5372 = vld [vmem:[%s5335 + $0x90] sm:$0xf]
  %v5373 = vld [vmem:[%s5335 + $0x94] sm:$0xf]
  %v5374 = vld [vmem:[%s5335 + $0x98] sm:$0xf]
  %v5375 = vld [vmem:[%s5335 + $0x9c] sm:$0xf]
  %v5376 = vld [vmem:[%s5335 + $0xa0] sm:$0xf]
  %v5377 = vld [vmem:[%s5335 + $0xa4] sm:$0xf]
  %v5378 = vld [vmem:[%s5335 + $0xa8] sm:$0xf]
  %v5379 = vld [vmem:[%s5335 + $0xac] sm:$0xf]
  %v5380 = vld [vmem:[%s5335 + $0xb0] sm:$0xf]
  %v5381 = vld [vmem:[%s5335 + $0xb4] sm:$0x3]
  %v5428 = vunpack.c.l.b16 %v5336
  %v5429 = vunpack.c.l.b16 %v5337
  %v5430 = vunpack.c.l.b16 %v5338
  %v5431 = vunpack.c.l.b16 %v5339
  %v5432 = vunpack.c.l.b16 %v5340
  %v5433 = vunpack.c.l.b16 %v5341
  %v5434 = vunpack.c.l.b16 %v5342
  %v5435 = vunpack.c.l.b16 %v5343
  %v5436 = vunpack.c.l.b16 %v5344
  %v5437 = vunpack.c.l.b16 %v5345
  %v5438 = vunpack.c.l.b16 %v5346
  %v5439 = vunpack.c.l.b16 %v5347
  %v5440 = vunpack.c.l.b16 %v5348
  %v5441 = vunpack.c.l.b16 %v5349
  %v5442 = vunpack.c.l.b16 %v5350
  %v5443 = vunpack.c.l.b16 %v5351
  %v5444 = vunpack.c.l.b16 %v5352
  %v5445 = vunpack.c.l.b16 %v5353
  %v5446 = vunpack.c.l.b16 %v5354
  %v5447 = vunpack.c.l.b16 %v5355
  %v5448 = vunpack.c.l.b16 %v5356
  %v5449 = vunpack.c.l.b16 %v5357
  %v5450 = vunpack.c.l.b16 %v5358
  %v5451 = vunpack.c.l.b16 %v5359
  %v5452 = vunpack.c.l.b16 %v5360
  %v5453 = vunpack.c.l.b16 %v5361
  %v5454 = vunpack.c.l.b16 %v5362
  %v5455 = vunpack.c.l.b16 %v5363
  %v5456 = vunpack.c.l.b16 %v5364
  %v5457 = vunpack.c.l.b16 %v5365
  %v5458 = vunpack.c.l.b16 %v5366
  %v5459 = vunpack.c.l.b16 %v5367
  %v5460 = vunpack.c.l.b16 %v5368
  %v5461 = vunpack.c.l.b16 %v5369
  %v5462 = vunpack.c.l.b16 %v5370
  %v5463 = vunpack.c.l.b16 %v5371
  %v5464 = vunpack.c.l.b16 %v5372
  %v5465 = vunpack.c.l.b16 %v5373
  %v5466 = vunpack.c.l.b16 %v5374
  %v5467 = vunpack.c.l.b16 %v5375
  %v5468 = vunpack.c.l.b16 %v5376
  %v5469 = vunpack.c.l.b16 %v5377
  %v5470 = vunpack.c.l.b16 %v5378
  %v5471 = vunpack.c.l.b16 %v5379
  %v5472 = vunpack.c.l.b16 %v5380
  %v5473 = vunpack.c.l.b16 %v5381
  %v5474 = vpack.c.b16 %v5429, %v5428
  %v5475 = vpack.c.b16 %v5431, %v5430
  %v5476 = vpack.c.b16 %v5433, %v5432
  %v5477 = vpack.c.b16 %v5435, %v5434
  %v5478 = vpack.c.b16 %v5437, %v5436
  %v5479 = vpack.c.b16 %v5439, %v5438
  %v5480 = vpack.c.b16 %v5441, %v5440
  %v5481 = vpack.c.b16 %v5443, %v5442
  %v5482 = vpack.c.b16 %v5445, %v5444
  %v5483 = vpack.c.b16 %v5447, %v5446
  %v5484 = vpack.c.b16 %v5449, %v5448
  %v5485 = vpack.c.b16 %v5451, %v5450
  %v5486 = vpack.c.b16 %v5453, %v5452
  %v5487 = vpack.c.b16 %v5455, %v5454
  %v5488 = vpack.c.b16 %v5457, %v5456
  %v5489 = vpack.c.b16 %v5459, %v5458
  %v5490 = vpack.c.b16 %v5461, %v5460
  %v5491 = vpack.c.b16 %v5463, %v5462
  %v5492 = vpack.c.b16 %v5465, %v5464
  %v5493 = vpack.c.b16 %v5467, %v5466
  %v5494 = vpack.c.b16 %v5469, %v5468
  %v5495 = vpack.c.b16 %v5471, %v5470
  %v5496 = vpack.c.b16 %v5473, %v5472
  %v5520 = vsel %vm5014, %v5334, 0
  %v5523 = vand.u32 %v5496, %v5021
  %5525 = vmatprep.subr.bf16.mxu0 0
  %5526 = vmatpush1.bf16.msra.mxu0 %v5474
  %5527 = vmatprep.subr.bf16.mxu0 0
  %5528 = vmatpush1.bf16.msra.mxu0 %v5475
  %5529 = vmatprep.subr.bf16.mxu0 0
  %5530 = vmatpush1.bf16.msra.mxu0 %v5476
  %5531 = vmatprep.subr.bf16.mxu0 0
  %5532 = vmatpush1.bf16.msra.mxu0 %v5477
  %5533 = vmatprep.subr.bf16.mxu0 0
  %5534 = vmatpush1.bf16.msra.mxu0 %v5478
  %5535 = vmatprep.subr.bf16.mxu0 0
  %5536 = vmatpush1.bf16.msra.mxu0 %v5479
  %5537 = vmatprep.subr.bf16.mxu0 0
  %5538 = vmatpush1.bf16.msra.mxu0 %v5480
  %5539 = vmatprep.subr.bf16.mxu0 0
  %5540 = vmatpush1.bf16.msra.mxu0 %v5481
  %5541 = vmatprep.subr.bf16.mxu0 0
  %5542 = vmatpush1.bf16.msra.mxu0 %v5482
  %5543 = vmatprep.subr.bf16.mxu0 0
  %5544 = vmatpush1.bf16.msra.mxu0 %v5483
  %5545 = vmatprep.subr.bf16.mxu0 0
  %5546 = vmatpush1.bf16.msra.mxu0 %v5484
  %5547 = vmatprep.subr.bf16.mxu0 0
  %5548 = vmatpush1.bf16.msra.mxu0 %v5485
  %5549 = vmatprep.subr.bf16.mxu0 0
  %5550 = vmatpush1.bf16.msra.mxu0 %v5486
  %5551 = vmatprep.subr.bf16.mxu0 0
  %5552 = vmatpush1.bf16.msra.mxu0 %v5487
  %5553 = vmatprep.subr.bf16.mxu0 0
  %5554 = vmatpush1.bf16.msra.mxu0 %v5488
  %5555 = vmatprep.subr.bf16.mxu0 0
  %5556 = vmatpush1.bf16.msra.mxu0 %v5489
  %5557 = vmatprep.mubr.bf16.mxu0 %v5333
  %5558 = vmatmul.mubr.bf16.gmra.mrb[0].mxu0 %v5332
  %v5559 = vpop.f32.mrb[0].mxu0
  %v5560 = vadd.f32 0.0, %v5559
  %v5561 = vpop.f32.mrb[0].mxu0
  %v5562 = vpop.f32.mrb[0].mxu0
  %v5563 = vadd.f32 0.0, %v5562
  %v5564 = vpop.f32.mrb[0].mxu0
  %5565 = vdwg.mxu0
  %5566 = vmatprep.subr.bf16.mxu0 0
  %5567 = vmatpush1.bf16.msra.mxu0 %v5490
  %5568 = vmatprep.subr.bf16.mxu0 0
  %5569 = vmatpush1.bf16.msra.mxu0 %v5491
  %5570 = vmatprep.subr.bf16.mxu0 0
  %5571 = vmatpush1.bf16.msra.mxu0 %v5492
  %5572 = vmatprep.subr.bf16.mxu0 0
  %5573 = vmatpush1.bf16.msra.mxu0 %v5493
  %5574 = vmatprep.subr.bf16.mxu0 0
  %5575 = vmatpush1.bf16.msra.mxu0 %v5494
  %5576 = vmatprep.subr.bf16.mxu0 0
  %5577 = vmatpush1.bf16.msra.mxu0 %v5495
  %5578 = vmatprep.subr.bf16.mxu0 0
  %5579 = vmatpush1.bf16.msra.mxu0 %v5523
  %5580 = vmatprep.subr.bf16.mxu0 0
  %5581 = vmatpush1.bf16.msra.mxu0 0
  %5582 = vmatprep.subr.bf16.mxu0 0
  %5583 = vmatpush1.bf16.msra.mxu0 0
  %5584 = vmatprep.subr.bf16.mxu0 0
  %5585 = vmatpush1.bf16.msra.mxu0 0
  %5586 = vmatprep.subr.bf16.mxu0 0
  %5587 = vmatpush1.bf16.msra.mxu0 0
  %5588 = vmatprep.subr.bf16.mxu0 0
  %5589 = vmatpush1.bf16.msra.mxu0 0
  %5590 = vmatprep.subr.bf16.mxu0 0
  %5591 = vmatpush1.bf16.msra.mxu0 0
  %5592 = vmatprep.subr.bf16.mxu0 0
  %5593 = vmatpush1.bf16.msra.mxu0 0
  %5594 = vmatprep.subr.bf16.mxu0 0
  %5595 = vmatpush1.bf16.msra.mxu0 0
  %5596 = vmatprep.subr.bf16.mxu0 0
  %5597 = vmatpush1.bf16.msra.mxu0 0
  %5598 = vmatprep.mubr.bf16.mxu0 0
  %5599 = vmatmul.mubr.bf16.gmra.mrb[0].mxu0 %v5520
  %v5600 = vpop.f32.mrb[0].mxu0
  %v5601 = vadd.f32 %v5560, %v5600
  %v5602 = vpop.f32.mrb[0].mxu0
  %v5603 = vpop.f32.mrb[0].mxu0
  %v5604 = vadd.f32 %v5563, %v5603
  %v5605 = vpop.f32.mrb[0].mxu0
  %5606 = vdwg.mxu0
  %v5607 = vadd.f32 %v5326, %v5601
  %v5608 = vadd.f32 %v5329, %v5604
  %v5609 = vpack.c.bf16 %v4763, %v4760
  %v5610 = vpack.c.bf16 %v4764, %v4761
  %v5611 = vpack.c.bf16 %v4765, %v4762
  %s5612 = scalar_lea.vmem %s3, 552
  %v5613 = vld [vmem:[%s5612] sm:$0xf]
  %v5614 = vld [vmem:[%s5612 + $0x4] sm:$0xf]
  %v5615 = vld [vmem:[%s5612 + $0x8] sm:$0xf]
  %v5616 = vld [vmem:[%s5612 + $0xc] sm:$0xf]
  %v5617 = vld [vmem:[%s5612 + $0x10] sm:$0xf]
  %v5618 = vld [vmem:[%s5612 + $0x14] sm:$0xf]
  %v5619 = vld [vmem:[%s5612 + $0x18] sm:$0xf]
  %v5620 = vld [vmem:[%s5612 + $0x1c] sm:$0xf]
  %v5621 = vld [vmem:[%s5612 + $0x20] sm:$0xf]
  %v5622 = vld [vmem:[%s5612 + $0x24] sm:$0xf]
  %v5623 = vld [vmem:[%s5612 + $0x28] sm:$0xf]
  %v5624 = vld [vmem:[%s5612 + $0x2c] sm:$0xf]
  %v5625 = vld [vmem:[%s5612 + $0x30] sm:$0xf]
  %v5626 = vld [vmem:[%s5612 + $0x34] sm:$0xf]
  %v5627 = vld [vmem:[%s5612 + $0x38] sm:$0xf]
  %v5628 = vld [vmem:[%s5612 + $0x3c] sm:$0xf]
  %v5629 = vld [vmem:[%s5612 + $0x40] sm:$0xf]
  %v5630 = vld [vmem:[%s5612 + $0x44] sm:$0xf]
  %v5631 = vld [vmem:[%s5612 + $0x48] sm:$0xf]
  %v5632 = vld [vmem:[%s5612 + $0x4c] sm:$0xf]
  %v5633 = vld [vmem:[%s5612 + $0x50] sm:$0xf]
  %v5634 = vld [vmem:[%s5612 + $0x54] sm:$0xf]
  %v5635 = vld [vmem:[%s5612 + $0x58] sm:$0xf]
  %v5636 = vld [vmem:[%s5612 + $0x5c] sm:$0xf]
  %v5637 = vld [vmem:[%s5612 + $0x60] sm:$0xf]
  %v5638 = vld [vmem:[%s5612 + $0x64] sm:$0xf]
  %v5639 = vld [vmem:[%s5612 + $0x68] sm:$0xf]
  %v5640 = vld [vmem:[%s5612 + $0x6c] sm:$0xf]
  %v5641 = vld [vmem:[%s5612 + $0x70] sm:$0xf]
  %v5642 = vld [vmem:[%s5612 + $0x74] sm:$0xf]
  %v5643 = vld [vmem:[%s5612 + $0x78] sm:$0xf]
  %v5644 = vld [vmem:[%s5612 + $0x7c] sm:$0xf]
  %v5645 = vld [vmem:[%s5612 + $0x80] sm:$0xf]
  %v5646 = vld [vmem:[%s5612 + $0x84] sm:$0xf]
  %v5647 = vld [vmem:[%s5612 + $0x88] sm:$0xf]
  %v5648 = vld [vmem:[%s5612 + $0x8c] sm:$0xf]
  %v5649 = vld [vmem:[%s5612 + $0x90] sm:$0xf]
  %v5650 = vld [vmem:[%s5612 + $0x94] sm:$0xf]
  %v5651 = vld [vmem:[%s5612 + $0x98] sm:$0xf]
  %v5652 = vld [vmem:[%s5612 + $0x9c] sm:$0xf]
  %v5653 = vld [vmem:[%s5612 + $0xa0] sm:$0xf]
  %v5654 = vld [vmem:[%s5612 + $0xa4] sm:$0xf]
  %v5655 = vld [vmem:[%s5612 + $0xa8] sm:$0xf]
  %v5656 = vld [vmem:[%s5612 + $0xac] sm:$0xf]
  %v5657 = vld [vmem:[%s5612 + $0xb0] sm:$0xf]
  %v5658 = vld [vmem:[%s5612 + $0xb4] sm:$0x3]
  %v5705 = vunpack.c.l.b16 %v5613
  %v5706 = vunpack.c.l.b16 %v5614
  %v5707 = vunpack.c.l.b16 %v5615
  %v5708 = vunpack.c.l.b16 %v5616
  %v5709 = vunpack.c.l.b16 %v5617
  %v5710 = vunpack.c.l.b16 %v5618
  %v5711 = vunpack.c.l.b16 %v5619
  %v5712 = vunpack.c.l.b16 %v5620
  %v5713 = vunpack.c.l.b16 %v5621
  %v5714 = vunpack.c.l.b16 %v5622
  %v5715 = vunpack.c.l.b16 %v5623
  %v5716 = vunpack.c.l.b16 %v5624
  %v5717 = vunpack.c.l.b16 %v5625
  %v5718 = vunpack.c.l.b16 %v5626
  %v5719 = vunpack.c.l.b16 %v5627
  %v5720 = vunpack.c.l.b16 %v5628
  %v5721 = vunpack.c.l.b16 %v5629
  %v5722 = vunpack.c.l.b16 %v5630
  %v5723 = vunpack.c.l.b16 %v5631
  %v5724 = vunpack.c.l.b16 %v5632
  %v5725 = vunpack.c.l.b16 %v5633
  %v5726 = vunpack.c.l.b16 %v5634
  %v5727 = vunpack.c.l.b16 %v5635
  %v5728 = vunpack.c.l.b16 %v5636
  %v5729 = vunpack.c.l.b16 %v5637
  %v5730 = vunpack.c.l.b16 %v5638
  %v5731 = vunpack.c.l.b16 %v5639
  %v5732 = vunpack.c.l.b16 %v5640
  %v5733 = vunpack.c.l.b16 %v5641
  %v5734 = vunpack.c.l.b16 %v5642
  %v5735 = vunpack.c.l.b16 %v5643
  %v5736 = vunpack.c.l.b16 %v5644
  %v5737 = vunpack.c.l.b16 %v5645
  %v5738 = vunpack.c.l.b16 %v5646
  %v5739 = vunpack.c.l.b16 %v5647
  %v5740 = vunpack.c.l.b16 %v5648
  %v5741 = vunpack.c.l.b16 %v5649
  %v5742 = vunpack.c.l.b16 %v5650
  %v5743 = vunpack.c.l.b16 %v5651
  %v5744 = vunpack.c.l.b16 %v5652
  %v5745 = vunpack.c.l.b16 %v5653
  %v5746 = vunpack.c.l.b16 %v5654
  %v5747 = vunpack.c.l.b16 %v5655
  %v5748 = vunpack.c.l.b16 %v5656
  %v5749 = vunpack.c.l.b16 %v5657
  %v5750 = vunpack.c.l.b16 %v5658
  %v5751 = vpack.c.b16 %v5706, %v5705
  %v5752 = vpack.c.b16 %v5708, %v5707
  %v5753 = vpack.c.b16 %v5710, %v5709
  %v5754 = vpack.c.b16 %v5712, %v5711
  %v5755 = vpack.c.b16 %v5714, %v5713
  %v5756 = vpack.c.b16 %v5716, %v5715
  %v5757 = vpack.c.b16 %v5718, %v5717
  %v5758 = vpack.c.b16 %v5720, %v5719
  %v5759 = vpack.c.b16 %v5722, %v5721
  %v5760 = vpack.c.b16 %v5724, %v5723
  %v5761 = vpack.c.b16 %v5726, %v5725
  %v5762 = vpack.c.b16 %v5728, %v5727
  %v5763 = vpack.c.b16 %v5730, %v5729
  %v5764 = vpack.c.b16 %v5732, %v5731
  %v5765 = vpack.c.b16 %v5734, %v5733
  %v5766 = vpack.c.b16 %v5736, %v5735
  %v5767 = vpack.c.b16 %v5738, %v5737
  %v5768 = vpack.c.b16 %v5740, %v5739
  %v5769 = vpack.c.b16 %v5742, %v5741
  %v5770 = vpack.c.b16 %v5744, %v5743
  %v5771 = vpack.c.b16 %v5746, %v5745
  %v5772 = vpack.c.b16 %v5748, %v5747
  %v5773 = vpack.c.b16 %v5750, %v5749
  %v5797 = vsel %vm5014, %v5611, 0
  %v5800 = vand.u32 %v5773, %v5021
  %5802 = vmatprep.subr.bf16.mxu0 0
  %5803 = vmatpush1.bf16.msra.mxu0 %v5751
  %5804 = vmatprep.subr.bf16.mxu0 0
  %5805 = vmatpush1.bf16.msra.mxu0 %v5752
  %5806 = vmatprep.subr.bf16.mxu0 0
  %5807 = vmatpush1.bf16.msra.mxu0 %v5753
  %5808 = vmatprep.subr.bf16.mxu0 0
  %5809 = vmatpush1.bf16.msra.mxu0 %v5754
  %5810 = vmatprep.subr.bf16.mxu0 0
  %5811 = vmatpush1.bf16.msra.mxu0 %v5755
  %5812 = vmatprep.subr.bf16.mxu0 0
  %5813 = vmatpush1.bf16.msra.mxu0 %v5756
  %5814 = vmatprep.subr.bf16.mxu0 0
  %5815 = vmatpush1.bf16.msra.mxu0 %v5757
  %5816 = vmatprep.subr.bf16.mxu0 0
  %5817 = vmatpush1.bf16.msra.mxu0 %v5758
  %5818 = vmatprep.subr.bf16.mxu0 0
  %5819 = vmatpush1.bf16.msra.mxu0 %v5759
  %5820 = vmatprep.subr.bf16.mxu0 0
  %5821 = vmatpush1.bf16.msra.mxu0 %v5760
  %5822 = vmatprep.subr.bf16.mxu0 0
  %5823 = vmatpush1.bf16.msra.mxu0 %v5761
  %5824 = vmatprep.subr.bf16.mxu0 0
  %5825 = vmatpush1.bf16.msra.mxu0 %v5762
  %5826 = vmatprep.subr.bf16.mxu0 0
  %5827 = vmatpush1.bf16.msra.mxu0 %v5763
  %5828 = vmatprep.subr.bf16.mxu0 0
  %5829 = vmatpush1.bf16.msra.mxu0 %v5764
  %5830 = vmatprep.subr.bf16.mxu0 0
  %5831 = vmatpush1.bf16.msra.mxu0 %v5765
  %5832 = vmatprep.subr.bf16.mxu0 0
  %5833 = vmatpush1.bf16.msra.mxu0 %v5766
  %5834 = vmatprep.mubr.bf16.mxu0 %v5610
  %5835 = vmatmul.mubr.bf16.gmra.mrb[0].mxu0 %v5609
  %v5836 = vpop.f32.mrb[0].mxu0
  %v5837 = vadd.f32 0.0, %v5836
  %v5838 = vpop.f32.mrb[0].mxu0
  %v5839 = vpop.f32.mrb[0].mxu0
  %v5840 = vadd.f32 0.0, %v5839
  %v5841 = vpop.f32.mrb[0].mxu0
  %5842 = vdwg.mxu0
  %5843 = vmatprep.subr.bf16.mxu0 0
  %5844 = vmatpush1.bf16.msra.mxu0 %v5767
  %5845 = vmatprep.subr.bf16.mxu0 0
  %5846 = vmatpush1.bf16.msra.mxu0 %v5768
  %5847 = vmatprep.subr.bf16.mxu0 0
  %5848 = vmatpush1.bf16.msra.mxu0 %v5769
  %5849 = vmatprep.subr.bf16.mxu0 0
  %5850 = vmatpush1.bf16.msra.mxu0 %v5770
  %5851 = vmatprep.subr.bf16.mxu0 0
  %5852 = vmatpush1.bf16.msra.mxu0 %v5771
  %5853 = vmatprep.subr.bf16.mxu0 0
  %5854 = vmatpush1.bf16.msra.mxu0 %v5772
  %5855 = vmatprep.subr.bf16.mxu0 0
  %5856 = vmatpush1.bf16.msra.mxu0 %v5800
  %5857 = vmatprep.subr.bf16.mxu0 0
  %5858 = vmatpush1.bf16.msra.mxu0 0
  %5859 = vmatprep.subr.bf16.mxu0 0
  %5860 = vmatpush1.bf16.msra.mxu0 0
  %5861 = vmatprep.subr.bf16.mxu0 0
  %5862 = vmatpush1.bf16.msra.mxu0 0
  %5863 = vmatprep.subr.bf16.mxu0 0
  %5864 = vmatpush1.bf16.msra.mxu0 0
  %5865 = vmatprep.subr.bf16.mxu0 0
  %5866 = vmatpush1.bf16.msra.mxu0 0
  %5867 = vmatprep.subr.bf16.mxu0 0
  %5868 = vmatpush1.bf16.msra.mxu0 0
  %5869 = vmatprep.subr.bf16.mxu0 0
  %5870 = vmatpush1.bf16.msra.mxu0 0
  %5871 = vmatprep.subr.bf16.mxu0 0
  %5872 = vmatpush1.bf16.msra.mxu0 0
  %5873 = vmatprep.subr.bf16.mxu0 0
  %5874 = vmatpush1.bf16.msra.mxu0 0
  %5875 = vmatprep.mubr.bf16.mxu0 0
  %5876 = vmatmul.mubr.bf16.gmra.mrb[0].mxu0 %v5797
  %v5877 = vpop.f32.mrb[0].mxu0
  %v5878 = vadd.f32 %v5837, %v5877
  %v5879 = vpop.f32.mrb[0].mxu0
  %v5880 = vpop.f32.mrb[0].mxu0
  %v5881 = vadd.f32 %v5840, %v5880
  %v5882 = vpop.f32.mrb[0].mxu0
  %5883 = vdwg.mxu0
  %v5884 = vadd.f32 %v5607, %v5878
  %v5885 = vadd.f32 %v5608, %v5881
  %v5886 = vpack.c.bf16 %v4769, %v4766
  %v5887 = vpack.c.bf16 %v4770, %v4767
  %v5888 = vpack.c.bf16 %v4771, %v4768
  %s5889 = scalar_lea.vmem %s3, 736
  %v5890 = vld [vmem:[%s5889] sm:$0xf]
  %v5891 = vld [vmem:[%s5889 + $0x4] sm:$0xf]
  %v5892 = vld [vmem:[%s5889 + $0x8] sm:$0xf]
  %v5893 = vld [vmem:[%s5889 + $0xc] sm:$0xf]
  %v5894 = vld [vmem:[%s5889 + $0x10] sm:$0xf]
  %v5895 = vld [vmem:[%s5889 + $0x14] sm:$0xf]
  %v5896 = vld [vmem:[%s5889 + $0x18] sm:$0xf]
  %v5897 = vld [vmem:[%s5889 + $0x1c] sm:$0xf]
  %v5898 = vld [vmem:[%s5889 + $0x20] sm:$0xf]
  %v5899 = vld [vmem:[%s5889 + $0x24] sm:$0xf]
  %v5900 = vld [vmem:[%s5889 + $0x28] sm:$0xf]
  %v5901 = vld [vmem:[%s5889 + $0x2c] sm:$0xf]
  %v5902 = vld [vmem:[%s5889 + $0x30] sm:$0xf]
  %v5903 = vld [vmem:[%s5889 + $0x34] sm:$0xf]
  %v5904 = vld [vmem:[%s5889 + $0x38] sm:$0xf]
  %v5905 = vld [vmem:[%s5889 + $0x3c] sm:$0xf]
  %v5906 = vld [vmem:[%s5889 + $0x40] sm:$0xf]
  %v5907 = vld [vmem:[%s5889 + $0x44] sm:$0xf]
  %v5908 = vld [vmem:[%s5889 + $0x48] sm:$0xf]
  %v5909 = vld [vmem:[%s5889 + $0x4c] sm:$0xf]
  %v5910 = vld [vmem:[%s5889 + $0x50] sm:$0xf]
  %v5911 = vld [vmem:[%s5889 + $0x54] sm:$0xf]
  %v5912 = vld [vmem:[%s5889 + $0x58] sm:$0xf]
  %v5913 = vld [vmem:[%s5889 + $0x5c] sm:$0xf]
  %v5914 = vld [vmem:[%s5889 + $0x60] sm:$0xf]
  %v5915 = vld [vmem:[%s5889 + $0x64] sm:$0xf]
  %v5916 = vld [vmem:[%s5889 + $0x68] sm:$0xf]
  %v5917 = vld [vmem:[%s5889 + $0x6c] sm:$0xf]
  %v5918 = vld [vmem:[%s5889 + $0x70] sm:$0xf]
  %v5919 = vld [vmem:[%s5889 + $0x74] sm:$0xf]
  %v5920 = vld [vmem:[%s5889 + $0x78] sm:$0xf]
  %v5921 = vld [vmem:[%s5889 + $0x7c] sm:$0xf]
  %v5922 = vld [vmem:[%s5889 + $0x80] sm:$0xf]
  %v5923 = vld [vmem:[%s5889 + $0x84] sm:$0xf]
  %v5924 = vld [vmem:[%s5889 + $0x88] sm:$0xf]
  %v5925 = vld [vmem:[%s5889 + $0x8c] sm:$0xf]
  %v5926 = vld [vmem:[%s5889 + $0x90] sm:$0xf]
  %v5927 = vld [vmem:[%s5889 + $0x94] sm:$0xf]
  %v5928 = vld [vmem:[%s5889 + $0x98] sm:$0xf]
  %v5929 = vld [vmem:[%s5889 + $0x9c] sm:$0xf]
  %v5930 = vld [vmem:[%s5889 + $0xa0] sm:$0xf]
  %v5931 = vld [vmem:[%s5889 + $0xa4] sm:$0xf]
  %v5932 = vld [vmem:[%s5889 + $0xa8] sm:$0xf]
  %v5933 = vld [vmem:[%s5889 + $0xac] sm:$0xf]
  %v5934 = vld [vmem:[%s5889 + $0xb0] sm:$0xf]
  %v5935 = vld [vmem:[%s5889 + $0xb4] sm:$0x3]
  %v5982 = vunpack.c.l.b16 %v5890
  %v5983 = vunpack.c.l.b16 %v5891
  %v5984 = vunpack.c.l.b16 %v5892
  %v5985 = vunpack.c.l.b16 %v5893
  %v5986 = vunpack.c.l.b16 %v5894
  %v5987 = vunpack.c.l.b16 %v5895
  %v5988 = vunpack.c.l.b16 %v5896
  %v5989 = vunpack.c.l.b16 %v5897
  %v5990 = vunpack.c.l.b16 %v5898
  %v5991 = vunpack.c.l.b16 %v5899
  %v5992 = vunpack.c.l.b16 %v5900
  %v5993 = vunpack.c.l.b16 %v5901
  %v5994 = vunpack.c.l.b16 %v5902
  %v5995 = vunpack.c.l.b16 %v5903
  %v5996 = vunpack.c.l.b16 %v5904
  %v5997 = vunpack.c.l.b16 %v5905
  %v5998 = vunpack.c.l.b16 %v5906
  %v5999 = vunpack.c.l.b16 %v5907
  %v6000 = vunpack.c.l.b16 %v5908
  %v6001 = vunpack.c.l.b16 %v5909
  %v6002 = vunpack.c.l.b16 %v5910
  %v6003 = vunpack.c.l.b16 %v5911
  %v6004 = vunpack.c.l.b16 %v5912
  %v6005 = vunpack.c.l.b16 %v5913
  %v6006 = vunpack.c.l.b16 %v5914
  %v6007 = vunpack.c.l.b16 %v5915
  %v6008 = vunpack.c.l.b16 %v5916
  %v6009 = vunpack.c.l.b16 %v5917
  %v6010 = vunpack.c.l.b16 %v5918
  %v6011 = vunpack.c.l.b16 %v5919
  %v6012 = vunpack.c.l.b16 %v5920
  %v6013 = vunpack.c.l.b16 %v5921
  %v6014 = vunpack.c.l.b16 %v5922
  %v6015 = vunpack.c.l.b16 %v5923
  %v6016 = vunpack.c.l.b16 %v5924
  %v6017 = vunpack.c.l.b16 %v5925
  %v6018 = vunpack.c.l.b16 %v5926
  %v6019 = vunpack.c.l.b16 %v5927
  %v6020 = vunpack.c.l.b16 %v5928
  %v6021 = vunpack.c.l.b16 %v5929
  %v6022 = vunpack.c.l.b16 %v5930
  %v6023 = vunpack.c.l.b16 %v5931
  %v6024 = vunpack.c.l.b16 %v5932
  %v6025 = vunpack.c.l.b16 %v5933
  %v6026 = vunpack.c.l.b16 %v5934
  %v6027 = vunpack.c.l.b16 %v5935
  %v6028 = vpack.c.b16 %v5983, %v5982
  %v6029 = vpack.c.b16 %v5985, %v5984
  %v6030 = vpack.c.b16 %v5987, %v5986
  %v6031 = vpack.c.b16 %v5989, %v5988
  %v6032 = vpack.c.b16 %v5991, %v5990
  %v6033 = vpack.c.b16 %v5993, %v5992
  %v6034 = vpack.c.b16 %v5995, %v5994
  %v6035 = vpack.c.b16 %v5997, %v5996
  %v6036 = vpack.c.b16 %v5999, %v5998
  %v6037 = vpack.c.b16 %v6001, %v6000
  %v6038 = vpack.c.b16 %v6003, %v6002
  %v6039 = vpack.c.b16 %v6005, %v6004
  %v6040 = vpack.c.b16 %v6007, %v6006
  %v6041 = vpack.c.b16 %v6009, %v6008
  %v6042 = vpack.c.b16 %v6011, %v6010
  %v6043 = vpack.c.b16 %v6013, %v6012
  %v6044 = vpack.c.b16 %v6015, %v6014
  %v6045 = vpack.c.b16 %v6017, %v6016
  %v6046 = vpack.c.b16 %v6019, %v6018
  %v6047 = vpack.c.b16 %v6021, %v6020
  %v6048 = vpack.c.b16 %v6023, %v6022
  %v6049 = vpack.c.b16 %v6025, %v6024
  %v6050 = vpack.c.b16 %v6027, %v6026
  %v6074 = vsel %vm5014, %v5888, 0
  %v6077 = vand.u32 %v6050, %v5021
  %6079 = vmatprep.subr.bf16.mxu0 0
  %6080 = vmatpush1.bf16.msra.mxu0 %v6028
  %6081 = vmatprep.subr.bf16.mxu0 0
  %6082 = vmatpush1.bf16.msra.mxu0 %v6029
  %6083 = vmatprep.subr.bf16.mxu0 0
  %6084 = vmatpush1.bf16.msra.mxu0 %v6030
  %6085 = vmatprep.subr.bf16.mxu0 0
  %6086 = vmatpush1.bf16.msra.mxu0 %v6031
  %6087 = vmatprep.subr.bf16.mxu0 0
  %6088 = vmatpush1.bf16.msra.mxu0 %v6032
  %6089 = vmatprep.subr.bf16.mxu0 0
  %6090 = vmatpush1.bf16.msra.mxu0 %v6033
  %6091 = vmatprep.subr.bf16.mxu0 0
  %6092 = vmatpush1.bf16.msra.mxu0 %v6034
  %6093 = vmatprep.subr.bf16.mxu0 0
  %6094 = vmatpush1.bf16.msra.mxu0 %v6035
  %6095 = vmatprep.subr.bf16.mxu0 0
  %6096 = vmatpush1.bf16.msra.mxu0 %v6036
  %6097 = vmatprep.subr.bf16.mxu0 0
  %6098 = vmatpush1.bf16.msra.mxu0 %v6037
  %6099 = vmatprep.subr.bf16.mxu0 0
  %6100 = vmatpush1.bf16.msra.mxu0 %v6038
  %6101 = vmatprep.subr.bf16.mxu0 0
  %6102 = vmatpush1.bf16.msra.mxu0 %v6039
  %6103 = vmatprep.subr.bf16.mxu0 0
  %6104 = vmatpush1.bf16.msra.mxu0 %v6040
  %6105 = vmatprep.subr.bf16.mxu0 0
  %6106 = vmatpush1.bf16.msra.mxu0 %v6041
  %6107 = vmatprep.subr.bf16.mxu0 0
  %6108 = vmatpush1.bf16.msra.mxu0 %v6042
  %6109 = vmatprep.subr.bf16.mxu0 0
  %6110 = vmatpush1.bf16.msra.mxu0 %v6043
  %6111 = vmatprep.mubr.bf16.mxu0 %v5887
  %6112 = vmatmul.mubr.bf16.gmra.mrb[0].mxu0 %v5886
  %v6113 = vpop.f32.mrb[0].mxu0
  %v6114 = vadd.f32 0.0, %v6113
  %v6115 = vpop.f32.mrb[0].mxu0
  %v6116 = vpop.f32.mrb[0].mxu0
  %v6117 = vadd.f32 0.0, %v6116
  %v6118 = vpop.f32.mrb[0].mxu0
  %6119 = vdwg.mxu0
  %6120 = vmatprep.subr.bf16.mxu0 0
  %6121 = vmatpush1.bf16.msra.mxu0 %v6044
  %6122 = vmatprep.subr.bf16.mxu0 0
  %6123 = vmatpush1.bf16.msra.mxu0 %v6045
  %6124 = vmatprep.subr.bf16.mxu0 0
  %6125 = vmatpush1.bf16.msra.mxu0 %v6046
  %6126 = vmatprep.subr.bf16.mxu0 0
  %6127 = vmatpush1.bf16.msra.mxu0 %v6047
  %6128 = vmatprep.subr.bf16.mxu0 0
  %6129 = vmatpush1.bf16.msra.mxu0 %v6048
  %6130 = vmatprep.subr.bf16.mxu0 0
  %6131 = vmatpush1.bf16.msra.mxu0 %v6049
  %6132 = vmatprep.subr.bf16.mxu0 0
  %6133 = vmatpush1.bf16.msra.mxu0 %v6077
  %6134 = vmatprep.subr.bf16.mxu0 0
  %6135 = vmatpush1.bf16.msra.mxu0 0
  %6136 = vmatprep.subr.bf16.mxu0 0
  %6137 = vmatpush1.bf16.msra.mxu0 0
  %6138 = vmatprep.subr.bf16.mxu0 0
  %6139 = vmatpush1.bf16.msra.mxu0 0
  %6140 = vmatprep.subr.bf16.mxu0 0
  %6141 = vmatpush1.bf16.msra.mxu0 0
  %6142 = vmatprep.subr.bf16.mxu0 0
  %6143 = vmatpush1.bf16.msra.mxu0 0
  %6144 = vmatprep.subr.bf16.mxu0 0
  %6145 = vmatpush1.bf16.msra.mxu0 0
  %6146 = vmatprep.subr.bf16.mxu0 0
  %6147 = vmatpush1.bf16.msra.mxu0 0
  %6148 = vmatprep.subr.bf16.mxu0 0
  %6149 = vmatpush1.bf16.msra.mxu0 0
  %6150 = vmatprep.subr.bf16.mxu0 0
  %6151 = vmatpush1.bf16.msra.mxu0 0
  %6152 = vmatprep.mubr.bf16.mxu0 0
  %6153 = vmatmul.mubr.bf16.gmra.mrb[0].mxu0 %v6074
  %v6154 = vpop.f32.mrb[0].mxu0
  %v6155 = vadd.f32 %v6114, %v6154
  %v6156 = vpop.f32.mrb[0].mxu0
  %v6157 = vpop.f32.mrb[0].mxu0
  %v6158 = vadd.f32 %v6117, %v6157
  %v6159 = vpop.f32.mrb[0].mxu0
  %6160 = vdwg.mxu0
  %v6161 = vadd.f32 %v5884, %v6155
  %v6162 = vadd.f32 %v5885, %v6158
  %v6163 = vpack.c.bf16 %v4775, %v4772
  %v6164 = vpack.c.bf16 %v4776, %v4773
  %v6165 = vpack.c.bf16 %v4777, %v4774
  %s6166 = scalar_lea.vmem %s3, 920
  %v6167 = vld [vmem:[%s6166] sm:$0xf]
  %v6168 = vld [vmem:[%s6166 + $0x4] sm:$0xf]
  %v6169 = vld [vmem:[%s6166 + $0x8] sm:$0xf]
  %v6170 = vld [vmem:[%s6166 + $0xc] sm:$0xf]
  %v6171 = vld [vmem:[%s6166 + $0x10] sm:$0xf]
  %v6172 = vld [vmem:[%s6166 + $0x14] sm:$0xf]
  %v6173 = vld [vmem:[%s6166 + $0x18] sm:$0xf]
  %v6174 = vld [vmem:[%s6166 + $0x1c] sm:$0xf]
  %v6175 = vld [vmem:[%s6166 + $0x20] sm:$0xf]
  %v6176 = vld [vmem:[%s6166 + $0x24] sm:$0xf]
  %v6177 = vld [vmem:[%s6166 + $0x28] sm:$0xf]
  %v6178 = vld [vmem:[%s6166 + $0x2c] sm:$0xf]
  %v6179 = vld [vmem:[%s6166 + $0x30] sm:$0xf]
  %v6180 = vld [vmem:[%s6166 + $0x34] sm:$0xf]
  %v6181 = vld [vmem:[%s6166 + $0x38] sm:$0xf]
  %v6182 = vld [vmem:[%s6166 + $0x3c] sm:$0xf]
  %v6183 = vld [vmem:[%s6166 + $0x40] sm:$0xf]
  %v6184 = vld [vmem:[%s6166 + $0x44] sm:$0xf]
  %v6185 = vld [vmem:[%s6166 + $0x48] sm:$0xf]
  %v6186 = vld [vmem:[%s6166 + $0x4c] sm:$0xf]
  %v6187 = vld [vmem:[%s6166 + $0x50] sm:$0xf]
  %v6188 = vld [vmem:[%s6166 + $0x54] sm:$0xf]
  %v6189 = vld [vmem:[%s6166 + $0x58] sm:$0xf]
  %v6190 = vld [vmem:[%s6166 + $0x5c] sm:$0xf]
  %v6191 = vld [vmem:[%s6166 + $0x60] sm:$0xf]
  %v6192 = vld [vmem:[%s6166 + $0x64] sm:$0xf]
  %v6193 = vld [vmem:[%s6166 + $0x68] sm:$0xf]
  %v6194 = vld [vmem:[%s6166 + $0x6c] sm:$0xf]
  %v6195 = vld [vmem:[%s6166 + $0x70] sm:$0xf]
  %v6196 = vld [vmem:[%s6166 + $0x74] sm:$0xf]
  %v6197 = vld [vmem:[%s6166 + $0x78] sm:$0xf]
  %v6198 = vld [vmem:[%s6166 + $0x7c] sm:$0xf]
  %v6199 = vld [vmem:[%s6166 + $0x80] sm:$0xf]
  %v6200 = vld [vmem:[%s6166 + $0x84] sm:$0xf]
  %v6201 = vld [vmem:[%s6166 + $0x88] sm:$0xf]
  %v6202 = vld [vmem:[%s6166 + $0x8c] sm:$0xf]
  %v6203 = vld [vmem:[%s6166 + $0x90] sm:$0xf]
  %v6204 = vld [vmem:[%s6166 + $0x94] sm:$0xf]
  %v6205 = vld [vmem:[%s6166 + $0x98] sm:$0xf]
  %v6206 = vld [vmem:[%s6166 + $0x9c] sm:$0xf]
  %v6207 = vld [vmem:[%s6166 + $0xa0] sm:$0xf]
  %v6208 = vld [vmem:[%s6166 + $0xa4] sm:$0xf]
  %v6209 = vld [vmem:[%s6166 + $0xa8] sm:$0xf]
  %v6210 = vld [vmem:[%s6166 + $0xac] sm:$0xf]
  %v6211 = vld [vmem:[%s6166 + $0xb0] sm:$0xf]
  %v6212 = vld [vmem:[%s6166 + $0xb4] sm:$0x3]
  %v6259 = vunpack.c.l.b16 %v6167
  %v6260 = vunpack.c.l.b16 %v6168
  %v6261 = vunpack.c.l.b16 %v6169
  %v6262 = vunpack.c.l.b16 %v6170
  %v6263 = vunpack.c.l.b16 %v6171
  %v6264 = vunpack.c.l.b16 %v6172
  %v6265 = vunpack.c.l.b16 %v6173
  %v6266 = vunpack.c.l.b16 %v6174
  %v6267 = vunpack.c.l.b16 %v6175
  %v6268 = vunpack.c.l.b16 %v6176
  %v6269 = vunpack.c.l.b16 %v6177
  %v6270 = vunpack.c.l.b16 %v6178
  %v6271 = vunpack.c.l.b16 %v6179
  %v6272 = vunpack.c.l.b16 %v6180
  %v6273 = vunpack.c.l.b16 %v6181
  %v6274 = vunpack.c.l.b16 %v6182
  %v6275 = vunpack.c.l.b16 %v6183
  %v6276 = vunpack.c.l.b16 %v6184
  %v6277 = vunpack.c.l.b16 %v6185
  %v6278 = vunpack.c.l.b16 %v6186
  %v6279 = vunpack.c.l.b16 %v6187
  %v6280 = vunpack.c.l.b16 %v6188
  %v6281 = vunpack.c.l.b16 %v6189
  %v6282 = vunpack.c.l.b16 %v6190
  %v6283 = vunpack.c.l.b16 %v6191
  %v6284 = vunpack.c.l.b16 %v6192
  %v6285 = vunpack.c.l.b16 %v6193
  %v6286 = vunpack.c.l.b16 %v6194
  %v6287 = vunpack.c.l.b16 %v6195
  %v6288 = vunpack.c.l.b16 %v6196
  %v6289 = vunpack.c.l.b16 %v6197
  %v6290 = vunpack.c.l.b16 %v6198
  %v6291 = vunpack.c.l.b16 %v6199
  %v6292 = vunpack.c.l.b16 %v6200
  %v6293 = vunpack.c.l.b16 %v6201
  %v6294 = vunpack.c.l.b16 %v6202
  %v6295 = vunpack.c.l.b16 %v6203
  %v6296 = vunpack.c.l.b16 %v6204
  %v6297 = vunpack.c.l.b16 %v6205
  %v6298 = vunpack.c.l.b16 %v6206
  %v6299 = vunpack.c.l.b16 %v6207
  %v6300 = vunpack.c.l.b16 %v6208
  %v6301 = vunpack.c.l.b16 %v6209
  %v6302 = vunpack.c.l.b16 %v6210
  %v6303 = vunpack.c.l.b16 %v6211
  %v6304 = vunpack.c.l.b16 %v6212
  %v6305 = vpack.c.b16 %v6260, %v6259
  %v6306 = vpack.c.b16 %v6262, %v6261
  %v6307 = vpack.c.b16 %v6264, %v6263
  %v6308 = vpack.c.b16 %v6266, %v6265
  %v6309 = vpack.c.b16 %v6268, %v6267
  %v6310 = vpack.c.b16 %v6270, %v6269
  %v6311 = vpack.c.b16 %v6272, %v6271
  %v6312 = vpack.c.b16 %v6274, %v6273
  %v6313 = vpack.c.b16 %v6276, %v6275
  %v6314 = vpack.c.b16 %v6278, %v6277
  %v6315 = vpack.c.b16 %v6280, %v6279
  %v6316 = vpack.c.b16 %v6282, %v6281
  %v6317 = vpack.c.b16 %v6284, %v6283
  %v6318 = vpack.c.b16 %v6286, %v6285
  %v6319 = vpack.c.b16 %v6288, %v6287
  %v6320 = vpack.c.b16 %v6290, %v6289
  %v6321 = vpack.c.b16 %v6292, %v6291
  %v6322 = vpack.c.b16 %v6294, %v6293
  %v6323 = vpack.c.b16 %v6296, %v6295
  %v6324 = vpack.c.b16 %v6298, %v6297
  %v6325 = vpack.c.b16 %v6300, %v6299
  %v6326 = vpack.c.b16 %v6302, %v6301
  %v6327 = vpack.c.b16 %v6304, %v6303
  %v6351 = vsel %vm5014, %v6165, 0
  %v6354 = vand.u32 %v6327, %v5021
  %6356 = vmatprep.subr.bf16.mxu0 0
  %6357 = vmatpush1.bf16.msra.mxu0 %v6305
  %6358 = vmatprep.subr.bf16.mxu0 0
  %6359 = vmatpush1.bf16.msra.mxu0 %v6306
  %6360 = vmatprep.subr.bf16.mxu0 0
  %6361 = vmatpush1.bf16.msra.mxu0 %v6307
  %6362 = vmatprep.subr.bf16.mxu0 0
  %6363 = vmatpush1.bf16.msra.mxu0 %v6308
  %6364 = vmatprep.subr.bf16.mxu0 0
  %6365 = vmatpush1.bf16.msra.mxu0 %v6309
  %6366 = vmatprep.subr.bf16.mxu0 0
  %6367 = vmatpush1.bf16.msra.mxu0 %v6310
  %6368 = vmatprep.subr.bf16.mxu0 0
  %6369 = vmatpush1.bf16.msra.mxu0 %v6311
  %6370 = vmatprep.subr.bf16.mxu0 0
  %6371 = vmatpush1.bf16.msra.mxu0 %v6312
  %6372 = vmatprep.subr.bf16.mxu0 0
  %6373 = vmatpush1.bf16.msra.mxu0 %v6313
  %6374 = vmatprep.subr.bf16.mxu0 0
  %6375 = vmatpush1.bf16.msra.mxu0 %v6314
  %6376 = vmatprep.subr.bf16.mxu0 0
  %6377 = vmatpush1.bf16.msra.mxu0 %v6315
  %6378 = vmatprep.subr.bf16.mxu0 0
  %6379 = vmatpush1.bf16.msra.mxu0 %v6316
  %6380 = vmatprep.subr.bf16.mxu0 0
  %6381 = vmatpush1.bf16.msra.mxu0 %v6317
  %6382 = vmatprep.subr.bf16.mxu0 0
  %6383 = vmatpush1.bf16.msra.mxu0 %v6318
  %6384 = vmatprep.subr.bf16.mxu0 0
  %6385 = vmatpush1.bf16.msra.mxu0 %v6319
  %6386 = vmatprep.subr.bf16.mxu0 0
  %6387 = vmatpush1.bf16.msra.mxu0 %v6320
  %6388 = vmatprep.mubr.bf16.mxu0 %v6164
  %6389 = vmatmul.mubr.bf16.gmra.mrb[0].mxu0 %v6163
  %v6390 = vpop.f32.mrb[0].mxu0
  %v6391 = vadd.f32 0.0, %v6390
  %v6392 = vpop.f32.mrb[0].mxu0
  %v6393 = vpop.f32.mrb[0].mxu0
  %v6394 = vadd.f32 0.0, %v6393
  %v6395 = vpop.f32.mrb[0].mxu0
  %6396 = vdwg.mxu0
  %6397 = vmatprep.subr.bf16.mxu0 0
  %6398 = vmatpush1.bf16.msra.mxu0 %v6321
  %6399 = vmatprep.subr.bf16.mxu0 0
  %6400 = vmatpush1.bf16.msra.mxu0 %v6322
  %6401 = vmatprep.subr.bf16.mxu0 0
  %6402 = vmatpush1.bf16.msra.mxu0 %v6323
  %6403 = vmatprep.subr.bf16.mxu0 0
  %6404 = vmatpush1.bf16.msra.mxu0 %v6324
  %6405 = vmatprep.subr.bf16.mxu0 0
  %6406 = vmatpush1.bf16.msra.mxu0 %v6325
  %6407 = vmatprep.subr.bf16.mxu0 0
  %6408 = vmatpush1.bf16.msra.mxu0 %v6326
  %6409 = vmatprep.subr.bf16.mxu0 0
  %6410 = vmatpush1.bf16.msra.mxu0 %v6354
  %6411 = vmatprep.subr.bf16.mxu0 0
  %6412 = vmatpush1.bf16.msra.mxu0 0
  %6413 = vmatprep.subr.bf16.mxu0 0
  %6414 = vmatpush1.bf16.msra.mxu0 0
  %6415 = vmatprep.subr.bf16.mxu0 0
  %6416 = vmatpush1.bf16.msra.mxu0 0
  %6417 = vmatprep.subr.bf16.mxu0 0
  %6418 = vmatpush1.bf16.msra.mxu0 0
  %6419 = vmatprep.subr.bf16.mxu0 0
  %6420 = vmatpush1.bf16.msra.mxu0 0
  %6421 = vmatprep.subr.bf16.mxu0 0
  %6422 = vmatpush1.bf16.msra.mxu0 0
  %6423 = vmatprep.subr.bf16.mxu0 0
  %6424 = vmatpush1.bf16.msra.mxu0 0
  %6425 = vmatprep.subr.bf16.mxu0 0
  %6426 = vmatpush1.bf16.msra.mxu0 0
  %6427 = vmatprep.subr.bf16.mxu0 0
  %6428 = vmatpush1.bf16.msra.mxu0 0
  %6429 = vmatprep.mubr.bf16.mxu0 0
  %6430 = vmatmul.mubr.bf16.gmra.mrb[0].mxu0 %v6351
  %v6431 = vpop.f32.mrb[0].mxu0
  %v6432 = vadd.f32 %v6391, %v6431
  %v6433 = vpop.f32.mrb[0].mxu0
  %v6434 = vpop.f32.mrb[0].mxu0
  %v6435 = vadd.f32 %v6394, %v6434
  %v6436 = vpop.f32.mrb[0].mxu0
  %6437 = vdwg.mxu0
  %v6438 = vadd.f32 %v6161, %v6432
  %v6439 = vadd.f32 %v6162, %v6435
  %v6440 = vld [vmem:[%s4] sm:$0x1]
  %v6442 = vlaneseq
  %v6443 = vshrl.u32 %v6442, 7
  %v6444 = vsub.s32 0, %v6443
  %v6445 = vrot.slane %v6440, %v6444
  %v6447 = vadd.f32 %v6438, %v6445
  %v6448 = vadd.f32 %v6439, %v6445
  %v6449 = vmax.f32 %v6447, 0.0
  %v6450 = vmax.f32 %v6448, 0.0
  %v6451 = vpack.c.bf16 %v6450, %v6449
  %v6452 = vld [vmem:[%s5] sm:$0xf]
  %v6453 = vld [vmem:[%s5 + $0x4] sm:$0xf]
  %v6454 = vld [vmem:[%s5 + $0x8] sm:$0xf]
  %v6455 = vld [vmem:[%s5 + $0xc] sm:$0xf]
  %v6456 = vld [vmem:[%s5 + $0x10] sm:$0xf]
  %v6457 = vld [vmem:[%s5 + $0x14] sm:$0xf]
  %v6458 = vld [vmem:[%s5 + $0x18] sm:$0xf]
  %v6459 = vld [vmem:[%s5 + $0x1c] sm:$0xf]
  %v6460 = vld [vmem:[%s5 + $0x20] sm:$0xf]
  %v6461 = vld [vmem:[%s5 + $0x24] sm:$0xf]
  %v6462 = vld [vmem:[%s5 + $0x28] sm:$0xf]
  %v6463 = vld [vmem:[%s5 + $0x2c] sm:$0xf]
  %v6464 = vld [vmem:[%s5 + $0x30] sm:$0xf]
  %v6465 = vld [vmem:[%s5 + $0x34] sm:$0xf]
  %v6466 = vld [vmem:[%s5 + $0x38] sm:$0xf]
  %v6467 = vld [vmem:[%s5 + $0x3c] sm:$0xf]
  %v6468 = vld [vmem:[%s6] sm:$0x1]
  %v6470 = vlaneseq
  %v6471 = vshrl.u32 %v6470, 7
  %v6472 = vsub.s32 0, %v6471
  %v6473 = vrot.slane %v6468, %v6472
  %v6491 = vunpack.c.l.b16 %v6452
  %v6492 = vunpack.c.l.b16 %v6453
  %v6493 = vunpack.c.l.b16 %v6454
  %v6494 = vunpack.c.l.b16 %v6455
  %v6495 = vunpack.c.l.b16 %v6456
  %v6496 = vunpack.c.l.b16 %v6457
  %v6497 = vunpack.c.l.b16 %v6458
  %v6498 = vunpack.c.l.b16 %v6459
  %v6499 = vunpack.c.l.b16 %v6460
  %v6500 = vunpack.c.l.b16 %v6461
  %v6501 = vunpack.c.l.b16 %v6462
  %v6502 = vunpack.c.l.b16 %v6463
  %v6503 = vunpack.c.l.b16 %v6464
  %v6504 = vunpack.c.l.b16 %v6465
  %v6505 = vunpack.c.l.b16 %v6466
  %v6506 = vunpack.c.l.b16 %v6467
  %v6507 = vpack.c.b16 %v6492, %v6491
  %v6508 = vpack.c.b16 %v6494, %v6493
  %v6509 = vpack.c.b16 %v6496, %v6495
  %v6510 = vpack.c.b16 %v6498, %v6497
  %v6511 = vpack.c.b16 %v6500, %v6499
  %v6512 = vpack.c.b16 %v6502, %v6501
  %v6513 = vpack.c.b16 %v6504, %v6503
  %v6514 = vpack.c.b16 %v6506, %v6505
  %6523 = vmatprep.subr.bf16.mxu0 0
  %6524 = vmatpush1.bf16.msra.mxu0 %v6507
  %6525 = vmatprep.subr.bf16.mxu0 0
  %6526 = vmatpush1.bf16.msra.mxu0 %v6508
  %6527 = vmatprep.subr.bf16.mxu0 0
  %6528 = vmatpush1.bf16.msra.mxu0 %v6509
  %6529 = vmatprep.subr.bf16.mxu0 0
  %6530 = vmatpush1.bf16.msra.mxu0 %v6510
  %6531 = vmatprep.subr.bf16.mxu0 0
  %6532 = vmatpush1.bf16.msra.mxu0 %v6511
  %6533 = vmatprep.subr.bf16.mxu0 0
  %6534 = vmatpush1.bf16.msra.mxu0 %v6512
  %6535 = vmatprep.subr.bf16.mxu0 0
  %6536 = vmatpush1.bf16.msra.mxu0 %v6513
  %6537 = vmatprep.subr.bf16.mxu0 0
  %6538 = vmatpush1.bf16.msra.mxu0 %v6514
  %6539 = vmatprep.subr.bf16.mxu0 0
  %6540 = vmatpush1.bf16.msra.mxu0 0
  %6541 = vmatprep.subr.bf16.mxu0 0
  %6542 = vmatpush1.bf16.msra.mxu0 0
  %6543 = vmatprep.subr.bf16.mxu0 0
  %6544 = vmatpush1.bf16.msra.mxu0 0
  %6545 = vmatprep.subr.bf16.mxu0 0
  %6546 = vmatpush1.bf16.msra.mxu0 0
  %6547 = vmatprep.subr.bf16.mxu0 0
  %6548 = vmatpush1.bf16.msra.mxu0 0
  %6549 = vmatprep.subr.bf16.mxu0 0
  %6550 = vmatpush1.bf16.msra.mxu0 0
  %6551 = vmatprep.subr.bf16.mxu0 0
  %6552 = vmatpush1.bf16.msra.mxu0 0
  %6553 = vmatprep.subr.bf16.mxu0 0
  %6554 = vmatpush1.bf16.msra.mxu0 0
  %6555 = vmatprep.mubr.bf16.mxu0 0
  %6556 = vmatmul.mubr.bf16.gmra.mrb[0].mxu0 %v6451
  %v6557 = vpop.f32.mrb[0].mxu0
  %v6558 = vadd.f32 %v6473, %v6557
  %v6559 = vpop.f32.mrb[0].mxu0
  %v6560 = vpop.f32.mrb[0].mxu0
  %v6561 = vadd.f32 %v6473, %v6560
  %v6562 = vpop.f32.mrb[0].mxu0
  %6563 = vdwg.mxu0
  %v6564 = vmax.f32 %v6558, 0.0
  %v6565 = vmax.f32 %v6561, 0.0
  %v6566 = vpack.c.bf16 %v6565, %v6564
  %v6567 = vld [vmem:[%s7] sm:$0xf]
  %v6568 = vld [vmem:[%s7 + $0x4] sm:$0xf]
  %v6569 = vld [vmem:[%s7 + $0x8] sm:$0xf]
  %v6570 = vld [vmem:[%s7 + $0xc] sm:$0xf]
  %v6571 = vld [vmem:[#allocation3] sm:$0x1]
  %v6573 = vlaneseq
  %v6574 = vshrl.u32 %v6573, 7
  %v6575 = vsub.s32 0, %v6574
  %v6576 = vrot.slane %v6571, %v6575
  %v6582 = vunpack.c.l.b16 %v6567
  %v6583 = vunpack.c.l.b16 %v6568
  %v6584 = vunpack.c.l.b16 %v6569
  %v6585 = vunpack.c.l.b16 %v6570
  %v6586 = vpack.c.b16 %v6583, %v6582
  %v6587 = vpack.c.b16 %v6585, %v6584
  %vm6590 = vcmask 261120
  %v6592 = vsel %vm6590, %v6566, 0
  %6594 = vmatprep.subr.bf16.mxu0 0
  %6595 = vmatpush1.bf16.msra.mxu0 %v6586
  %6596 = vmatprep.subr.bf16.mxu0 0
  %6597 = vmatpush1.bf16.msra.mxu0 %v6587
  %6598 = vmatprep.subr.bf16.mxu0 0
  %6599 = vmatpush1.bf16.msra.mxu0 0
  %6600 = vmatprep.subr.bf16.mxu0 0
  %6601 = vmatpush1.bf16.msra.mxu0 0
  %6602 = vmatprep.subr.bf16.mxu0 0
  %6603 = vmatpush1.bf16.msra.mxu0 0
  %6604 = vmatprep.subr.bf16.mxu0 0
  %6605 = vmatpush1.bf16.msra.mxu0 0
  %6606 = vmatprep.subr.bf16.mxu0 0
  %6607 = vmatpush1.bf16.msra.mxu0 0
  %6608 = vmatprep.subr.bf16.mxu0 0
  %6609 = vmatpush1.bf16.msra.mxu0 0
  %6610 = vmatprep.subr.bf16.mxu0 0
  %6611 = vmatpush1.bf16.msra.mxu0 0
  %6612 = vmatprep.subr.bf16.mxu0 0
  %6613 = vmatpush1.bf16.msra.mxu0 0
  %6614 = vmatprep.subr.bf16.mxu0 0
  %6615 = vmatpush1.bf16.msra.mxu0 0
  %6616 = vmatprep.subr.bf16.mxu0 0
  %6617 = vmatpush1.bf16.msra.mxu0 0
  %6618 = vmatprep.subr.bf16.mxu0 0
  %6619 = vmatpush1.bf16.msra.mxu0 0
  %6620 = vmatprep.subr.bf16.mxu0 0
  %6621 = vmatpush1.bf16.msra.mxu0 0
  %6622 = vmatprep.subr.bf16.mxu0 0
  %6623 = vmatpush1.bf16.msra.mxu0 0
  %6624 = vmatprep.subr.bf16.mxu0 0
  %6625 = vmatpush1.bf16.msra.mxu0 0
  %6626 = vmatprep.mubr.bf16.mxu0 0
  %6627 = vmatmul.mubr.bf16.gmra.mrb[0].mxu0 %v6592
  %v6628 = vpop.f32.mrb[0].mxu0
  %v6629 = vadd.f32 %v6576, %v6628
  %v6630 = vpop.f32.mrb[0].mxu0
  %v6631 = vpop.f32.mrb[0].mxu0
  %v6632 = vadd.f32 %v6576, %v6631
  %v6633 = vpop.f32.mrb[0].mxu0
  %6634 = vdwg.mxu0
  %vm6635 = vcmask 7168
  %6636 = vst.msk [vmem:[%s9] sm:$0xff] %vm6635, %v6629
  %6637 = vst.msk [vmem:[%s9 + $0x8] sm:$0xff] %vm6635, %v6632
  // Predicated region
  $region38: #{s1cnn_forward.1} parent=0 // pred_check
    _
  $region39: #{s1cnn_forward.1} parent=0 // pred_check_branch
    %6639 = sbr.rel (0) target = $region41
  $region40: #{s1cnn_forward.1} parent=0 // pred_region
    _
  $region41: #{s1cnn_forward.1} parent=0 // pred_fallthru
    _
  // Predicated region
  $region42: #{s1cnn_forward.1} parent=0 // pred_check
    _
  $region43: #{s1cnn_forward.1} parent=0 // pred_check_branch
    %6641 = sbr.rel (0) target = $region45
  $region44: #{s1cnn_forward.1} parent=0 // pred_region
    _
  $region45: #{s1cnn_forward.1} parent=0 // pred_fallthru
    _

</llo_original>
